<compile_context>
chip_gen: v7x
topology: tpu7x:2x2x1
jax: 0.10.0
libtpu: 0.0.40
codegen_flags: <defaults>
</compile_context>

<pallas_src>
import functools

import jax
import jax.numpy as jnp
from jax import lax
from jax.experimental import pallas as pl
from jax.experimental.pallas import tpu as pltpu

C_IN, C_HID, C_OUT = 515, 512, 3


def _fold2_kernel(x_ref, w1t_ref, b1_ref, w2_ref, b2_ref, w3_ref, b3_ref, o_ref):
    """Fused conv1(+ReLU) -> conv2(+ReLU) -> conv3 on one (batch, point-tile) slab.

    x_ref  : (C_IN, tn)   f32   NCW-native tile (channels on sublanes, points on lanes)
    w1t    : (C_IN, C_HID) bf16 W1 transposed -> K=515 on sublanes (minimal padding)
    w2     : (C_HID, C_HID) bf16
    w3     : (C_OUT, C_HID) bf16
    bK     : (C_out, 1)   f32
    o_ref  : (C_OUT, tn)  f32   lane-dense output tile
    """
    x = x_ref[...].astype(jnp.bfloat16)                              # in-kernel cast

    # conv1 + ReLU: contract dim 0 of both operands -> (C_HID, tn), f32 accumulate.
    h1 = lax.dot_general(w1t_ref[...], x, (((0,), (0,)), ((), ())),
                         preferred_element_type=jnp.float32)
    h1 = jnp.maximum(h1 + b1_ref[...], 0.0).astype(jnp.bfloat16)

    # conv2 + ReLU (K=512, lane-aligned).
    h2 = jnp.dot(w2_ref[...], h1, preferred_element_type=jnp.float32)
    h2 = jnp.maximum(h2 + b2_ref[...], 0.0).astype(jnp.bfloat16)

    # conv3 (no ReLU).
    h3 = jnp.dot(w3_ref[...], h2, preferred_element_type=jnp.float32)
    o_ref[...] = (h3 + b3_ref[...]).astype(o_ref.dtype)


def _round_up(x, m):
    return ((x + m - 1) // m) * m


@functools.partial(jax.jit, static_argnames=("tn",))
def folding_net_dec_fold2(x, params, *, tn=1024):
    """x: (B, 515, N) float32 (PyTorch NCW convention). Returns (B, 3, N) float32."""
    w1, b1, w2, b2, w3, b3 = params
    B, C, N = x.shape
    assert C == C_IN
    assert tn % 128 == 0, "point tile must be a multiple of 128 lanes"

    # Point-axis tile: no HBM padding -- Pallas masks the ragged edge block.
    n_tile = min(tn, _round_up(N, 128))
    # Keep >= 2 grid steps when possible so v7x's two TensorCores both get work.
    while B * (-(-N // n_tile)) < 2 and n_tile > 128:
        n_tile = max(128, _round_up(n_tile // 2, 128))
    grid = (B, pl.cdiv(N, n_tile))

    # Weights -> bf16 (tiny, ~0.5M params); W1 transposed so K=515 lands on sublanes.
    w1t = jnp.transpose(w1).astype(jnp.bfloat16)       # (C_IN, C_HID)
    w2b = w2.astype(jnp.bfloat16)                      # (C_HID, C_HID)
    w3b = w3.astype(jnp.bfloat16)                      # (C_OUT, C_HID)

    flops = 2 * B * N * (C_IN * C_HID + C_HID * C_HID + C_HID * C_OUT)
    bytes_accessed = (B * C_IN * N * 4                                  # x (f32 read)
                      + (w1t.size + w2b.size + w3b.size) * 2            # bf16 weights
                      + (b1.size + b2.size + b3.size) * 4               # f32 biases
                      + B * C_OUT * N * 4)                              # f32 output

    return pl.pallas_call(
        _fold2_kernel,
        out_shape=jax.ShapeDtypeStruct((B, C_OUT, N), jnp.float32),
        grid_spec=pltpu.PrefetchScalarGridSpec(
            num_scalar_prefetch=0,
            grid=grid,
            in_specs=[
                pl.BlockSpec((None, C_IN, n_tile), lambda b, j: (b, 0, j)),  # x tile (f32)
                pl.BlockSpec((C_IN, C_HID), lambda b, j: (0, 0)),            # W1^T
                pl.BlockSpec((C_HID, 1), lambda b, j: (0, 0)),               # b1
                pl.BlockSpec((C_HID, C_HID), lambda b, j: (0, 0)),           # W2
                pl.BlockSpec((C_HID, 1), lambda b, j: (0, 0)),               # b2
                pl.BlockSpec((C_OUT, C_HID), lambda b, j: (0, 0)),           # W3
                pl.BlockSpec((C_OUT, 1), lambda b, j: (0, 0)),               # b3
            ],
            out_specs=pl.BlockSpec((None, C_OUT, n_tile), lambda b, j: (b, 0, j)),
        ),
        compiler_params=pltpu.CompilerParams(
            dimension_semantics=("parallel", "parallel"),
            vmem_limit_bytes=48 * 1024 * 1024,
        ),
        cost_estimate=pl.CostEstimate(
            flops=flops, transcendentals=0, bytes_accessed=bytes_accessed),
    )(x, w1t, b1, w2b, b2, w3b, b3)


def init_params(key):
    """PyTorch-style Conv1d init: U(-1/sqrt(fan_in), 1/sqrt(fan_in)).

    Weights stored exactly as PyTorch, (c_out, c_in); biases as (c_out, 1) so the
    kernel can broadcast them directly over the lane (point) axis.
    """
    k1, k2, k3, k4, k5, k6 = jax.random.split(key, 6)

    def uinit(k, shape, fan_in):
        bound = float(fan_in) ** -0.5
        return jax.random.uniform(k, shape, jnp.float32, -bound, bound)

    w1 = uinit(k1, (C_HID, C_IN), C_IN)
    b1 = uinit(k2, (C_HID, 1), C_IN)
    w2 = uinit(k3, (C_HID, C_HID), C_HID)
    b2 = uinit(k4, (C_HID, 1), C_HID)
    w3 = uinit(k5, (C_OUT, C_HID), C_HID)
    b3 = uinit(k6, (C_OUT, 1), C_HID)
    return (w1, b1, w2, b2, w3, b3)


def _reference_f32(x, params):
    """Pure-JAX f32 reference of the PyTorch forward."""
    w1, b1, w2, b2, w3, b3 = params
    h = jnp.einsum("kc,bcn->bkn", w1, x) + b1[None]
    h = jnp.maximum(h, 0.0)
    h = jnp.einsum("kc,bcn->bkn", w2, h) + b2[None]
    h = jnp.maximum(h, 0.0)
    return jnp.einsum("kc,bcn->bkn", w3, h) + b3[None]


def _reference_matched(x, params):
    """Reference with the same precision policy as the kernel (bf16 ops, f32 acc)."""
    w1, b1, w2, b2, w3, b3 = params
    bf = jnp.bfloat16
    h = jnp.einsum("kc,bcn->bkn", w1.astype(bf), x.astype(bf),
                   preferred_element_type=jnp.float32) + b1[None]
    h = jnp.maximum(h, 0.0).astype(bf)
    h = jnp.einsum("kc,bcn->bkn", w2.astype(bf), h,
                   preferred_element_type=jnp.float32) + b2[None]
    h = jnp.maximum(h, 0.0).astype(bf)
    return jnp.einsum("kc,bcn->bkn", w3.astype(bf), h,
                      preferred_element_type=jnp.float32) + b3[None]


if __name__ == "__main__":
    key = jax.random.PRNGKey(0)
    kx, kp = jax.random.split(key)

    # Small shapes; N deliberately not a multiple of 128 to exercise the ragged edge block.
    B, N = 2, 300
    x = jax.random.normal(kx, (B, C_IN, N), jnp.float32)
    params = init_params(kp)

    out = folding_net_dec_fold2(x, params)
    out = jax.block_until_ready(out)
    assert out.shape == (B, C_OUT, N)

    # Tight check vs. a reference using the same bf16-operand / f32-accum policy.
    ref_matched = _reference_matched(x, params)
    assert jnp.allclose(out, ref_matched, atol=1e-2, rtol=1e-2), \
        "mismatch vs matched-precision reference"

    # Loose check vs. the full-f32 PyTorch-equivalent forward (bf16 rounding only).
    ref_f32 = _reference_f32(x, params)
    assert jnp.allclose(out, ref_f32, atol=1e-1, rtol=1e-1), \
        "mismatch vs f32 reference"

    print("KERNEL_OK")
</pallas_src>

<mosaic_0001>
module attributes {stable_mosaic.version = 11 : i64} {
  func.func @_fold2_kernel(%arg0: i32, %arg1: i32, %arg2: memref<1x515x384xf32, #tpu.memory_space<vmem>>, %arg3: memref<515x512xbf16, #tpu.memory_space<vmem>>, %arg4: memref<512x1xf32, #tpu.memory_space<vmem>>, %arg5: memref<512x512xbf16, #tpu.memory_space<vmem>>, %arg6: memref<512x1xf32, #tpu.memory_space<vmem>>, %arg7: memref<3x512xbf16, #tpu.memory_space<vmem>>, %arg8: memref<3x1xf32, #tpu.memory_space<vmem>>, %arg9: memref<1x3x384xf32, #tpu.memory_space<vmem>>) attributes {dimension_semantics = [#tpu.dimension_semantics<parallel>, #tpu.dimension_semantics<parallel>], iteration_bounds = array<i64: 2, 1>, scalar_prefetch = 0 : i64, scratch_operands = 0 : i64, tpu.core_type = #tpu.core_type<tc>, window_params = [{transform_indices = @transform_0, window_bounds = array<i64: 1, 515, 384>}, {pipeline_mode = #tpu.pipeline_mode<synchronous>, transform_indices = @transform_1, window_bounds = array<i64: 515, 512>}, {pipeline_mode = #tpu.pipeline_mode<synchronous>, transform_indices = @transform_2, window_bounds = array<i64: 512, 1>}, {pipeline_mode = #tpu.pipeline_mode<synchronous>, transform_indices = @transform_3, window_bounds = array<i64: 512, 512>}, {pipeline_mode = #tpu.pipeline_mode<synchronous>, transform_indices = @transform_4, window_bounds = array<i64: 512, 1>}, {pipeline_mode = #tpu.pipeline_mode<synchronous>, transform_indices = @transform_5, window_bounds = array<i64: 3, 512>}, {pipeline_mode = #tpu.pipeline_mode<synchronous>, transform_indices = @transform_6, window_bounds = array<i64: 3, 1>}, {transform_indices = @transform_7, window_bounds = array<i64: 1, 3, 384>}]} {
    %c0 = arith.constant 0 : index
    %c0_0 = arith.constant 0 : index
    %c0_1 = arith.constant 0 : index
    %0 = vector.load %arg2[%c0, %c0_0, %c0_1] : memref<1x515x384xf32, #tpu.memory_space<vmem>>, vector<1x515x384xf32>
    %1 = vector.shape_cast %0 : vector<1x515x384xf32> to vector<515x384xf32>
    %2 = arith.truncf %1 : vector<515x384xf32> to vector<515x384xbf16>
    %c0_2 = arith.constant 0 : index
    %c0_3 = arith.constant 0 : index
    %3 = vector.load %arg3[%c0_2, %c0_3] : memref<515x512xbf16, #tpu.memory_space<vmem>>, vector<515x512xbf16>
    %cst = arith.constant dense<0.000000e+00> : vector<512x384xf32>
    %4 = tpu.matmul %3, %2, %cst {dimension_numbers = #tpu.dot_dimension_numbers<[0], [0], [1], [1], [0, 1, 1, 1], [], []>} : vector<515x512xbf16>, vector<515x384xbf16>, vector<512x384xf32> -> vector<512x384xf32>
    %c0_4 = arith.constant 0 : index
    %c0_5 = arith.constant 0 : index
    %5 = vector.load %arg4[%c0_4, %c0_5] : memref<512x1xf32, #tpu.memory_space<vmem>>, vector<512x1xf32>
    %6 = vector.broadcast %5 : vector<512x1xf32> to vector<512x384xf32>
    %7 = arith.addf %4, %6 : vector<512x384xf32>
    %cst_6 = arith.constant 0.000000e+00 : f32
    %8 = vector.broadcast %cst_6 : f32 to vector<512x384xf32>
    %9 = arith.maximumf %7, %8 : vector<512x384xf32>
    %10 = arith.truncf %9 : vector<512x384xf32> to vector<512x384xbf16>
    %c0_7 = arith.constant 0 : index
    %c0_8 = arith.constant 0 : index
    %11 = vector.load %arg5[%c0_7, %c0_8] : memref<512x512xbf16, #tpu.memory_space<vmem>>, vector<512x512xbf16>
    %cst_9 = arith.constant dense<0.000000e+00> : vector<512x384xf32>
    %12 = tpu.matmul %11, %10, %cst_9 {dimension_numbers = #tpu.dot_dimension_numbers<[1], [0], [0], [1], [0, 0, 1, 1], [], []>} : vector<512x512xbf16>, vector<512x384xbf16>, vector<512x384xf32> -> vector<512x384xf32>
    %c0_10 = arith.constant 0 : index
    %c0_11 = arith.constant 0 : index
    %13 = vector.load %arg6[%c0_10, %c0_11] : memref<512x1xf32, #tpu.memory_space<vmem>>, vector<512x1xf32>
    %14 = vector.broadcast %13 : vector<512x1xf32> to vector<512x384xf32>
    %15 = arith.addf %12, %14 : vector<512x384xf32>
    %cst_12 = arith.constant 0.000000e+00 : f32
    %16 = vector.broadcast %cst_12 : f32 to vector<512x384xf32>
    %17 = arith.maximumf %15, %16 : vector<512x384xf32>
    %18 = arith.truncf %17 : vector<512x384xf32> to vector<512x384xbf16>
    %c0_13 = arith.constant 0 : index
    %c0_14 = arith.constant 0 : index
    %19 = vector.load %arg7[%c0_13, %c0_14] : memref<3x512xbf16, #tpu.memory_space<vmem>>, vector<3x512xbf16>
    %cst_15 = arith.constant dense<0.000000e+00> : vector<3x384xf32>
    %20 = tpu.matmul %19, %18, %cst_15 {dimension_numbers = #tpu.dot_dimension_numbers<[1], [0], [0], [1], [0, 0, 1, 1], [], []>} : vector<3x512xbf16>, vector<512x384xbf16>, vector<3x384xf32> -> vector<3x384xf32>
    %c0_16 = arith.constant 0 : index
    %c0_17 = arith.constant 0 : index
    %21 = vector.load %arg8[%c0_16, %c0_17] : memref<3x1xf32, #tpu.memory_space<vmem>>, vector<3x1xf32>
    %22 = vector.broadcast %21 : vector<3x1xf32> to vector<3x384xf32>
    %23 = arith.addf %20, %22 : vector<3x384xf32>
    %c0_18 = arith.constant 0 : index
    %c0_19 = arith.constant 0 : index
    %c0_20 = arith.constant 0 : index
    %24 = vector.load %arg9[%c0_18, %c0_19, %c0_20] : memref<1x3x384xf32, #tpu.memory_space<vmem>>, vector<1x3x384xf32>
    %25 = vector.shape_cast %24 : vector<1x3x384xf32> to vector<3x384xf32>
    %26 = vector.shape_cast %23 : vector<3x384xf32> to vector<1x3x384xf32>
    tpu.vector_store %arg9[%c0_18, %c0_19, %c0_20], %26 {strides = array<i32>} : memref<1x3x384xf32, #tpu.memory_space<vmem>>, vector<1x3x384xf32>,
    return
  }
  func.func @transform_0(%arg0: i32, %arg1: i32) -> (i32, i32, i32) {
    %c0_i32 = arith.constant 0 : i32
    %c0_i32_0 = arith.constant 0 : i32
    return %arg0, %c0_i32, %arg1 : i32, i32, i32
  }
  func.func @transform_1(%arg0: i32, %arg1: i32) -> (i32, i32) {
    %c0_i32 = arith.constant 0 : i32
    %c0_i32_0 = arith.constant 0 : i32
    %c0_i32_1 = arith.constant 0 : i32
    return %c0_i32, %c0_i32_0 : i32, i32
  }
  func.func @transform_2(%arg0: i32, %arg1: i32) -> (i32, i32) {
    %c0_i32 = arith.constant 0 : i32
    %c0_i32_0 = arith.constant 0 : i32
    %c0_i32_1 = arith.constant 0 : i32
    return %c0_i32, %c0_i32_0 : i32, i32
  }
  func.func @transform_3(%arg0: i32, %arg1: i32) -> (i32, i32) {
    %c0_i32 = arith.constant 0 : i32
    %c0_i32_0 = arith.constant 0 : i32
    %c0_i32_1 = arith.constant 0 : i32
    return %c0_i32, %c0_i32_0 : i32, i32
  }
  func.func @transform_4(%arg0: i32, %arg1: i32) -> (i32, i32) {
    %c0_i32 = arith.constant 0 : i32
    %c0_i32_0 = arith.constant 0 : i32
    %c0_i32_1 = arith.constant 0 : i32
    return %c0_i32, %c0_i32_0 : i32, i32
  }
  func.func @transform_5(%arg0: i32, %arg1: i32) -> (i32, i32) {
    %c0_i32 = arith.constant 0 : i32
    %c0_i32_0 = arith.constant 0 : i32
    %c0_i32_1 = arith.constant 0 : i32
    return %c0_i32, %c0_i32_0 : i32, i32
  }
  func.func @transform_6(%arg0: i32, %arg1: i32) -> (i32, i32) {
    %c0_i32 = arith.constant 0 : i32
    %c0_i32_0 = arith.constant 0 : i32
    %c0_i32_1 = arith.constant 0 : i32
    return %c0_i32, %c0_i32_0 : i32, i32
  }
  func.func @transform_7(%arg0: i32, %arg1: i32) -> (i32, i32, i32) {
    %c0_i32 = arith.constant 0 : i32
    %c0_i32_0 = arith.constant 0 : i32
    return %arg0, %c0_i32, %arg1 : i32, i32, i32
  }
}

</mosaic_0001>

<llo_original>
// kernel: folding_net_dec_fold2.1
$region0: #{folding_net_dec_fold2.1}
  #allocation0 [shape = 'u32[]', space=smem, size = 0x4, offset = 0x4, fixed_abs, tag = 'smem constant byte address 0x4 - core index']
  #allocation1 [shape = 'u32[144,128]{1,0:T(1,128)}', space=vmem, size = 0x12000, scoped, tag = 'internal scratch']
  %s0 = inlined_call_operand.vmem [shape: f32[2,515,300], index: 0, kind: input, shape index: {}]
  %s1 = inlined_call_operand.vmem [shape: bf16[515,512], index: 1, kind: input, shape index: {}]
  %s2 = inlined_call_operand.vmem [shape: f32[512,1], index: 2, kind: input, shape index: {}]
  %s3 = inlined_call_operand.vmem [shape: bf16[512,512], index: 3, kind: input, shape index: {}]
  %s4 = inlined_call_operand.vmem [shape: f32[512,1], index: 4, kind: input, shape index: {}]
  %s5 = inlined_call_operand.vmem [shape: bf16[3,512], index: 5, kind: input, shape index: {}]
  %s6 = inlined_call_operand.vmem [shape: f32[3,1], index: 6, kind: input, shape index: {}]
  %s7 = inlined_call_operand.vmem [shape: f32[2,3,300], index: 7, kind: output, shape index: {}]
  %s8 = sld [smem:[#allocation0]]
  $region61: #{folding_net_dec_fold2.1} parent=0
    _
  %s10 = ssub.s32 1, %s8
  %s11 = scalar_select 0, %s10, %s8
  loop: start=0, step=1, limit=4
  $region2: #{folding_net_dec_fold2.1} parent=0 // loop_pre_header
    _
  $region3: #{folding_net_dec_fold2.1} parent=0 // loop_header
    %s13 = sphi 0, %s17
    %p14 = scmp.ge.s32.totalorder %s13, 4
    %s20 = sphi 0, %s32
    %s21 = sphi 0, %s28
    %s22 = sphi 0, %s20
    %s23 = sphi 0, %s21
    %s24 = sphi 0, %s22
    %s25 = sphi 0, %s23
    %s37 = sphi 0, %s39
    %s40 = sphi 0, %s37
    %s41 = sphi 0, %s40
    %s57 = sphi 0, %s41
    %s61 = sphi 0, %s61
    %s63 = sphi 0, %s61
    %s64 = sphi 0, %s63
    %s78 = sphi 0, %s64
    %s82 = sphi 0, %s82
    %s84 = sphi 0, %s82
    %s85 = sphi 0, %s84
    %s99 = sphi 0, %s85
    %s103 = sphi 0, %s103
    %s105 = sphi 0, %s103
    %s106 = sphi 0, %s105
    %s120 = sphi 0, %s106
    %s124 = sphi 0, %s124
    %s126 = sphi 0, %s124
    %s127 = sphi 0, %s126
    %s141 = sphi 0, %s127
    %s145 = sphi 0, %s145
    %s147 = sphi 0, %s145
    %s148 = sphi 0, %s147
    %s162 = sphi 0, %s148
    %s166 = sphi 0, %s166
    %s168 = sphi 0, %s166
    %s169 = sphi 0, %s168
    %s183 = sphi 0, %s169
    %s191 = sphi 0, %s193
    %s194 = sphi 0, %s191
    %s195 = sphi 0, %s194
    %s211 = sphi 0, %s195
  $region4: #{folding_net_dec_fold2.1} parent=0 // loop_header_branch
    %16 = sbr.rel (%p14) target = $region8
  $region5: #{folding_net_dec_fold2.1} parent=0 // loop_body
    %s18 = ssub.s32 %s13, 1
    %s19 = ssub.s32 %s13, 2
    %s26 = sadd.s32 1, %s21
    %p27 = scmp.ge.s32.totalorder %s26, 1
    %s28 = scalar_select %p27, 0, %s26
    %s29 = sadd.s32 1, %s20
    %s30 = scalar_select %p27, %s29, %s20
    %p31 = scmp.ge.s32.totalorder %s30, 2
    %s32 = scalar_select %p31, 0, %s30
    %s33 = ssub.s32 %s20, %s32
    %s34 = ssub.s32 %s21, %s28
    %s35 = sor.u32 %s33, %s34
    %p36 = scmp.eq.s32.totalorder %s35, 0
    %s38 = sadd.s32 %s37, 1
    %s39 = scalar_select %p36, %s37, %s38
    %p42 = pneg %p36
    %p43 = scmp.eq.s32.totalorder %s13, 1
    %p44 = por %p42, %p43
    %p45 = scmp.ne.s32.totalorder %s37, %s40
    %p46 = scmp.eq.s32.totalorder %s13, 0
    %p47 = por %p45, %p46
    %p48 = scmp.ne.s32.totalorder %s37, %s40
    %p49 = scmp.eq.s32.totalorder %s18, 1
    %p50 = por %p48, %p49
    %p51 = scmp.ne.s32.totalorder %s40, %s41
    %p52 = scmp.eq.s32.totalorder %s18, 0
    %p53 = por %p51, %p52
    %p54 = scmp.ne.s32.totalorder %s40, %s41
    %p55 = scmp.eq.s32.totalorder %s19, 1
    %p56 = por %p54, %p55
    %p58 = scmp.ne.s32.totalorder %s41, %s57
    %p59 = scmp.eq.s32.totalorder %s19, 0
    %p60 = por %p58, %p59
    %s62 = sadd.s32 %s61, 1
    %p65 = scmp.eq.s32.totalorder %s13, 1
    %p66 = scmp.ne.s32.totalorder %s61, %s63
    %p67 = scmp.eq.s32.totalorder %s13, 0
    %p68 = por %p66, %p67
    %p69 = scmp.ne.s32.totalorder %s61, %s63
    %p70 = scmp.eq.s32.totalorder %s18, 1
    %p71 = por %p69, %p70
    %p72 = scmp.ne.s32.totalorder %s63, %s64
    %p73 = scmp.eq.s32.totalorder %s18, 0
    %p74 = por %p72, %p73
    %p75 = scmp.ne.s32.totalorder %s63, %s64
    %p76 = scmp.eq.s32.totalorder %s19, 1
    %p77 = por %p75, %p76
    %p79 = scmp.ne.s32.totalorder %s64, %s78
    %p80 = scmp.eq.s32.totalorder %s19, 0
    %p81 = por %p79, %p80
    %s83 = sadd.s32 %s82, 1
    %p86 = scmp.eq.s32.totalorder %s13, 1
    %p87 = scmp.ne.s32.totalorder %s82, %s84
    %p88 = scmp.eq.s32.totalorder %s13, 0
    %p89 = por %p87, %p88
    %p90 = scmp.ne.s32.totalorder %s82, %s84
    %p91 = scmp.eq.s32.totalorder %s18, 1
    %p92 = por %p90, %p91
    %p93 = scmp.ne.s32.totalorder %s84, %s85
    %p94 = scmp.eq.s32.totalorder %s18, 0
    %p95 = por %p93, %p94
    %p96 = scmp.ne.s32.totalorder %s84, %s85
    %p97 = scmp.eq.s32.totalorder %s19, 1
    %p98 = por %p96, %p97
    %p100 = scmp.ne.s32.totalorder %s85, %s99
    %p101 = scmp.eq.s32.totalorder %s19, 0
    %p102 = por %p100, %p101
    %s104 = sadd.s32 %s103, 1
    %p107 = scmp.eq.s32.totalorder %s13, 1
    %p108 = scmp.ne.s32.totalorder %s103, %s105
    %p109 = scmp.eq.s32.totalorder %s13, 0
    %p110 = por %p108, %p109
    %p111 = scmp.ne.s32.totalorder %s103, %s105
    %p112 = scmp.eq.s32.totalorder %s18, 1
    %p113 = por %p111, %p112
    %p114 = scmp.ne.s32.totalorder %s105, %s106
    %p115 = scmp.eq.s32.totalorder %s18, 0
    %p116 = por %p114, %p115
    %p117 = scmp.ne.s32.totalorder %s105, %s106
    %p118 = scmp.eq.s32.totalorder %s19, 1
    %p119 = por %p117, %p118
    %p121 = scmp.ne.s32.totalorder %s106, %s120
    %p122 = scmp.eq.s32.totalorder %s19, 0
    %p123 = por %p121, %p122
    %s125 = sadd.s32 %s124, 1
    %p128 = scmp.eq.s32.totalorder %s13, 1
    %p129 = scmp.ne.s32.totalorder %s124, %s126
    %p130 = scmp.eq.s32.totalorder %s13, 0
    %p131 = por %p129, %p130
    %p132 = scmp.ne.s32.totalorder %s124, %s126
    %p133 = scmp.eq.s32.totalorder %s18, 1
    %p134 = por %p132, %p133
    %p135 = scmp.ne.s32.totalorder %s126, %s127
    %p136 = scmp.eq.s32.totalorder %s18, 0
    %p137 = por %p135, %p136
    %p138 = scmp.ne.s32.totalorder %s126, %s127
    %p139 = scmp.eq.s32.totalorder %s19, 1
    %p140 = por %p138, %p139
    %p142 = scmp.ne.s32.totalorder %s127, %s141
    %p143 = scmp.eq.s32.totalorder %s19, 0
    %p144 = por %p142, %p143
    %s146 = sadd.s32 %s145, 1
    %p149 = scmp.eq.s32.totalorder %s13, 1
    %p150 = scmp.ne.s32.totalorder %s145, %s147
    %p151 = scmp.eq.s32.totalorder %s13, 0
    %p152 = por %p150, %p151
    %p153 = scmp.ne.s32.totalorder %s145, %s147
    %p154 = scmp.eq.s32.totalorder %s18, 1
    %p155 = por %p153, %p154
    %p156 = scmp.ne.s32.totalorder %s147, %s148
    %p157 = scmp.eq.s32.totalorder %s18, 0
    %p158 = por %p156, %p157
    %p159 = scmp.ne.s32.totalorder %s147, %s148
    %p160 = scmp.eq.s32.totalorder %s19, 1
    %p161 = por %p159, %p160
    %p163 = scmp.ne.s32.totalorder %s148, %s162
    %p164 = scmp.eq.s32.totalorder %s19, 0
    %p165 = por %p163, %p164
    %s167 = sadd.s32 %s166, 1
    %p170 = scmp.eq.s32.totalorder %s13, 1
    %p171 = scmp.ne.s32.totalorder %s166, %s168
    %p172 = scmp.eq.s32.totalorder %s13, 0
    %p173 = por %p171, %p172
    %p174 = scmp.ne.s32.totalorder %s166, %s168
    %p175 = scmp.eq.s32.totalorder %s18, 1
    %p176 = por %p174, %p175
    %p177 = scmp.ne.s32.totalorder %s168, %s169
    %p178 = scmp.eq.s32.totalorder %s18, 0
    %p179 = por %p177, %p178
    %p180 = scmp.ne.s32.totalorder %s168, %s169
    %p181 = scmp.eq.s32.totalorder %s19, 1
    %p182 = por %p180, %p181
    %p184 = scmp.ne.s32.totalorder %s169, %s183
    %p185 = scmp.eq.s32.totalorder %s19, 0
    %p186 = por %p184, %p185
    %s187 = ssub.s32 %s20, %s32
    %s188 = ssub.s32 %s21, %s28
    %s189 = sor.u32 %s187, %s188
    %p190 = scmp.eq.s32.totalorder %s189, 0
    %s192 = sadd.s32 %s191, 1
    %s193 = scalar_select %p190, %s191, %s192
    %p196 = pneg %p190
    %p197 = scmp.eq.s32.totalorder %s13, 1
    %p198 = por %p196, %p197
    %p199 = scmp.ne.s32.totalorder %s191, %s194
    %p200 = scmp.eq.s32.totalorder %s13, 0
    %p201 = por %p199, %p200
    %p202 = scmp.ne.s32.totalorder %s191, %s194
    %p203 = scmp.eq.s32.totalorder %s18, 1
    %p204 = por %p202, %p203
    %p205 = scmp.ne.s32.totalorder %s194, %s195
    %p206 = scmp.eq.s32.totalorder %s18, 0
    %p207 = por %p205, %p206
    %p208 = scmp.ne.s32.totalorder %s194, %s195
    %p209 = scmp.eq.s32.totalorder %s19, 1
    %p210 = por %p208, %p209
    %p212 = scmp.ne.s32.totalorder %s195, %s211
    %p213 = scmp.eq.s32.totalorder %s19, 0
    %p214 = por %p212, %p213
    %p215 = scmp.le.s32.totalorder 1, %s13
    %p216 = scmp.lt.s32.totalorder %s13, 3
    %p217 = pnand %p215, %p216
    %p218 = pneg %p217
    // Predicated region
    $region9: #{folding_net_dec_fold2.1} parent=5 // pred_check
      _
    $region10: #{folding_net_dec_fold2.1} parent=5 // pred_check_branch
      %220 = sbr.rel (%p217) target = $region12
    $region11: #{folding_net_dec_fold2.1} parent=5 // pred_region
      %s221 = ssub.s32 %s13, 1
      // Predicated region
      $region13: #{folding_net_dec_fold2.1} parent=11 // pred_check
        %p222 = pneg %p74
      $region14: #{folding_net_dec_fold2.1} parent=11 // pred_check_branch
        %224 = sbr.rel (%p222) target = $region16
      $region15: #{folding_net_dec_fold2.1} parent=11 // pred_region
        _
      $region16: #{folding_net_dec_fold2.1} parent=11 // pred_fallthru
        _
      // Predicated region
      $region17: #{folding_net_dec_fold2.1} parent=11 // pred_check
        %p225 = pneg %p95
      $region18: #{folding_net_dec_fold2.1} parent=11 // pred_check_branch
        %227 = sbr.rel (%p225) target = $region20
      $region19: #{folding_net_dec_fold2.1} parent=11 // pred_region
        _
      $region20: #{folding_net_dec_fold2.1} parent=11 // pred_fallthru
        _
      // Predicated region
      $region21: #{folding_net_dec_fold2.1} parent=11 // pred_check
        %p228 = pneg %p116
      $region22: #{folding_net_dec_fold2.1} parent=11 // pred_check_branch
        %230 = sbr.rel (%p228) target = $region24
      $region23: #{folding_net_dec_fold2.1} parent=11 // pred_region
        _
      $region24: #{folding_net_dec_fold2.1} parent=11 // pred_fallthru
        _
      // Predicated region
      $region25: #{folding_net_dec_fold2.1} parent=11 // pred_check
        %p231 = pneg %p137
      $region26: #{folding_net_dec_fold2.1} parent=11 // pred_check_branch
        %233 = sbr.rel (%p231) target = $region28
      $region27: #{folding_net_dec_fold2.1} parent=11 // pred_region
        _
      $region28: #{folding_net_dec_fold2.1} parent=11 // pred_fallthru
        _
      // Predicated region
      $region29: #{folding_net_dec_fold2.1} parent=11 // pred_check
        %p234 = pneg %p158
      $region30: #{folding_net_dec_fold2.1} parent=11 // pred_check_branch
        %236 = sbr.rel (%p234) target = $region32
      $region31: #{folding_net_dec_fold2.1} parent=11 // pred_region
        _
      $region32: #{folding_net_dec_fold2.1} parent=11 // pred_fallthru
        _
      // Predicated region
      $region33: #{folding_net_dec_fold2.1} parent=11 // pred_check
        %p237 = pneg %p179
      $region34: #{folding_net_dec_fold2.1} parent=11 // pred_check_branch
        %239 = sbr.rel (%p237) target = $region36
      $region35: #{folding_net_dec_fold2.1} parent=11 // pred_region
        _
      $region36: #{folding_net_dec_fold2.1} parent=11 // pred_fallthru
        _
    $region12: #{folding_net_dec_fold2.1} parent=5 // pred_fallthru
      _
    %p240 = scmp.lt.s32.totalorder %s13, 2
    // Predicated region
    $region37: #{folding_net_dec_fold2.1} parent=5 // pred_check
      %p241 = pneg %p240
    $region38: #{folding_net_dec_fold2.1} parent=5 // pred_check_branch
      %243 = sbr.rel (%p241) target = $region40
    $region39: #{folding_net_dec_fold2.1} parent=5 // pred_region
      // Predicated region
      $region41: #{folding_net_dec_fold2.1} parent=39 // pred_check
        %p244 = pneg %p47
      $region42: #{folding_net_dec_fold2.1} parent=39 // pred_check_branch
        %246 = sbr.rel (%p244) target = $region44
      $region43: #{folding_net_dec_fold2.1} parent=39 // pred_region
        %s247 = smul.u32 3, %s21
        %p248 = scmp.lt.s32.totalorder %s20, 1
        %s249 = scalar_select %p248, %s20, 1
        %p250 = scmp.lt.s32.totalorder %s247, 2
        %s251 = scalar_select %p250, %s247, 2
        %s252 = smul.addr %s249, 195
        %s253 = sadd.s32 %s251, %s252
        %s254 = smul.addr %s253, 8
        %s255 = scalar_lea.vmem %s0, %s254
        %s256 = smul.u32 3, %s21
      $region44: #{folding_net_dec_fold2.1} parent=39 // pred_fallthru
        _
    $region40: #{folding_net_dec_fold2.1} parent=5 // pred_fallthru
      _
    %p257 = scmp.le.s32.totalorder 1, %s13
    %p258 = scmp.lt.s32.totalorder %s13, 3
    %p259 = pnand %p257, %p258
    %p260 = pneg %p259
    // Predicated region
    $region45: #{folding_net_dec_fold2.1} parent=5 // pred_check
      _
    $region46: #{folding_net_dec_fold2.1} parent=5 // pred_check_branch
      %262 = sbr.rel (%p259) target = $region48
    $region47: #{folding_net_dec_fold2.1} parent=5 // pred_region
      %s263 = ssub.s32 %s13, 1
      %s264 = smul.u32 3, %s23
      %p265 = scmp.lt.s32.totalorder %s22, 1
      %s266 = scalar_select %p265, %s22, 1
      %p267 = scmp.lt.s32.totalorder %s264, 2
      %s268 = scalar_select %p267, %s264, 2
      %s269 = smul.addr %s266, 195
      %s270 = sadd.s32 %s268, %s269
      %s271 = smul.addr %s270, 8
      %s272 = scalar_lea.vmem %s0, %s271
      %p273 = pneg %p53
      %p274 = pneg %p50
      %p275 = pneg %p74
      %p276 = pneg %p71
      %p277 = pneg %p95
      %p278 = pneg %p92
      %p279 = pneg %p116
      %p280 = pneg %p113
      %p281 = pneg %p137
      %p282 = pneg %p134
      %p283 = pneg %p158
      %p284 = pneg %p155
      %p285 = pneg %p179
      %p286 = pneg %p176
      %p287 = pneg %p207
      %p288 = pneg %p204
      %s289 = smul.u32 3, %s23
      %p290 = scmp.lt.s32.totalorder %s22, 1
      %s291 = scalar_select %p290, %s22, 1
      %p292 = scmp.lt.s32.totalorder %s289, 2
      %s293 = scalar_select %p292, %s289, 2
      %s294 = smul.addr %s291, 3
      %s295 = sadd.s32 %s293, %s294
      %s296 = smul.addr %s295, 4
      %s297 = scalar_lea.vmem %s7, %s296
      %s298 = smul.u32 3, %s23
      %p299 = scmp.lt.s32.totalorder %s22, 1
      %s300 = scalar_select %p299, %s22, 1
      %p301 = scmp.lt.s32.totalorder %s298, 2
      %s302 = scalar_select %p301, %s298, 2
      %s303 = smul.addr %s300, 195
      %s304 = sadd.s32 %s302, %s303
      %s305 = smul.addr %s304, 8
      %s306 = scalar_lea.vmem %s0, %s305
      %s307 = smul.u32 3, %s23
      %s308 = smul.u32 3, %s23
      %p309 = scmp.lt.s32.totalorder %s22, 1
      %s310 = scalar_select %p309, %s22, 1
      %p311 = scmp.lt.s32.totalorder %s308, 2
      %s312 = scalar_select %p311, %s308, 2
      %s313 = smul.addr %s310, 3
      %s314 = sadd.s32 %s312, %s313
      %s315 = smul.addr %s314, 4
      %s316 = scalar_lea.vmem %s7, %s315
      %s317 = smul.u32 3, %s23
      %v319 = vld [vmem:[%s306] sm:$0xff]
      %v320 = vld [vmem:[%s306 + $0x8] sm:$0xff]
      %v321 = vld [vmem:[%s306 + $0x10] sm:$0xff]
      %v322 = vld [vmem:[%s306 + $0x18] sm:$0xff]
      %v323 = vld [vmem:[%s306 + $0x20] sm:$0xff]
      %v324 = vld [vmem:[%s306 + $0x28] sm:$0xff]
      %v325 = vld [vmem:[%s306 + $0x30] sm:$0xff]
      %v326 = vld [vmem:[%s306 + $0x38] sm:$0xff]
      %v327 = vld [vmem:[%s306 + $0x40] sm:$0xff]
      %v328 = vld [vmem:[%s306 + $0x48] sm:$0xff]
      %v329 = vld [vmem:[%s306 + $0x50] sm:$0xff]
      %v330 = vld [vmem:[%s306 + $0x58] sm:$0xff]
      %v331 = vld [vmem:[%s306 + $0x60] sm:$0xff]
      %v332 = vld [vmem:[%s306 + $0x68] sm:$0xff]
      %v333 = vld [vmem:[%s306 + $0x70] sm:$0xff]
      %v334 = vld [vmem:[%s306 + $0x78] sm:$0xff]
      %v335 = vld [vmem:[%s306 + $0x80] sm:$0xff]
      %v336 = vld [vmem:[%s306 + $0x88] sm:$0xff]
      %v337 = vld [vmem:[%s306 + $0x90] sm:$0xff]
      %v338 = vld [vmem:[%s306 + $0x98] sm:$0xff]
      %v339 = vld [vmem:[%s306 + $0xa0] sm:$0xff]
      %v340 = vld [vmem:[%s306 + $0xa8] sm:$0xff]
      %v341 = vld [vmem:[%s306 + $0xb0] sm:$0xff]
      %v342 = vld [vmem:[%s306 + $0xb8] sm:$0xff]
      %v343 = vld [vmem:[%s306 + $0xc0] sm:$0xff]
      %v344 = vld [vmem:[%s306 + $0xc8] sm:$0xff]
      %v345 = vld [vmem:[%s306 + $0xd0] sm:$0xff]
      %v346 = vld [vmem:[%s306 + $0xd8] sm:$0xff]
      %v347 = vld [vmem:[%s306 + $0xe0] sm:$0xff]
      %v348 = vld [vmem:[%s306 + $0xe8] sm:$0xff]
      %v349 = vld [vmem:[%s306 + $0xf0] sm:$0xff]
      %v350 = vld [vmem:[%s306 + $0xf8] sm:$0xff]
      %v351 = vld [vmem:[%s306 + $0x100] sm:$0xff]
      %v352 = vld [vmem:[%s306 + $0x108] sm:$0xff]
      %v353 = vld [vmem:[%s306 + $0x110] sm:$0xff]
      %v354 = vld [vmem:[%s306 + $0x118] sm:$0xff]
      %v355 = vld [vmem:[%s306 + $0x120] sm:$0xff]
      %v356 = vld [vmem:[%s306 + $0x128] sm:$0xff]
      %v357 = vld [vmem:[%s306 + $0x130] sm:$0xff]
      %v358 = vld [vmem:[%s306 + $0x138] sm:$0xff]
      %v359 = vld [vmem:[%s306 + $0x140] sm:$0xff]
      %v360 = vld [vmem:[%s306 + $0x148] sm:$0xff]
      %v361 = vld [vmem:[%s306 + $0x150] sm:$0xff]
      %v362 = vld [vmem:[%s306 + $0x158] sm:$0xff]
      %v363 = vld [vmem:[%s306 + $0x160] sm:$0xff]
      %v364 = vld [vmem:[%s306 + $0x168] sm:$0xff]
      %v365 = vld [vmem:[%s306 + $0x170] sm:$0xff]
      %v366 = vld [vmem:[%s306 + $0x178] sm:$0xff]
      %v367 = vld [vmem:[%s306 + $0x180] sm:$0xff]
      %v368 = vld [vmem:[%s306 + $0x188] sm:$0xff]
      %v369 = vld [vmem:[%s306 + $0x190] sm:$0xff]
      %v370 = vld [vmem:[%s306 + $0x198] sm:$0xff]
      %v371 = vld [vmem:[%s306 + $0x1a0] sm:$0xff]
      %v372 = vld [vmem:[%s306 + $0x1a8] sm:$0xff]
      %v373 = vld [vmem:[%s306 + $0x1b0] sm:$0xff]
      %v374 = vld [vmem:[%s306 + $0x1b8] sm:$0xff]
      %v375 = vld [vmem:[%s306 + $0x1c0] sm:$0xff]
      %v376 = vld [vmem:[%s306 + $0x1c8] sm:$0xff]
      %v377 = vld [vmem:[%s306 + $0x1d0] sm:$0xff]
      %v378 = vld [vmem:[%s306 + $0x1d8] sm:$0xff]
      %v379 = vld [vmem:[%s306 + $0x1e0] sm:$0xff]
      %v380 = vld [vmem:[%s306 + $0x1e8] sm:$0xff]
      %v381 = vld [vmem:[%s306 + $0x1f0] sm:$0xff]
      %v382 = vld [vmem:[%s306 + $0x1f8] sm:$0xff]
      %v383 = vld [vmem:[%s306 + $0x200] sm:$0xff]
      %v384 = vld [vmem:[%s306 + $0x208] sm:$0xff]
      %v385 = vld [vmem:[%s306 + $0x210] sm:$0xff]
      %v386 = vld [vmem:[%s306 + $0x218] sm:$0xff]
      %v387 = vld [vmem:[%s306 + $0x220] sm:$0xff]
      %v388 = vld [vmem:[%s306 + $0x228] sm:$0xff]
      %v389 = vld [vmem:[%s306 + $0x230] sm:$0xff]
      %v390 = vld [vmem:[%s306 + $0x238] sm:$0xff]
      %v391 = vld [vmem:[%s306 + $0x240] sm:$0xff]
      %v392 = vld [vmem:[%s306 + $0x248] sm:$0xff]
      %v393 = vld [vmem:[%s306 + $0x250] sm:$0xff]
      %v394 = vld [vmem:[%s306 + $0x258] sm:$0xff]
      %v395 = vld [vmem:[%s306 + $0x260] sm:$0xff]
      %v396 = vld [vmem:[%s306 + $0x268] sm:$0xff]
      %v397 = vld [vmem:[%s306 + $0x270] sm:$0xff]
      %v398 = vld [vmem:[%s306 + $0x278] sm:$0xff]
      %v399 = vld [vmem:[%s306 + $0x280] sm:$0xff]
      %v400 = vld [vmem:[%s306 + $0x288] sm:$0xff]
      %v401 = vld [vmem:[%s306 + $0x290] sm:$0xff]
      %v402 = vld [vmem:[%s306 + $0x298] sm:$0xff]
      %v403 = vld [vmem:[%s306 + $0x2a0] sm:$0xff]
      %v404 = vld [vmem:[%s306 + $0x2a8] sm:$0xff]
      %v405 = vld [vmem:[%s306 + $0x2b0] sm:$0xff]
      %v406 = vld [vmem:[%s306 + $0x2b8] sm:$0xff]
      %v407 = vld [vmem:[%s306 + $0x2c0] sm:$0xff]
      %v408 = vld [vmem:[%s306 + $0x2c8] sm:$0xff]
      %v409 = vld [vmem:[%s306 + $0x2d0] sm:$0xff]
      %v410 = vld [vmem:[%s306 + $0x2d8] sm:$0xff]
      %v411 = vld [vmem:[%s306 + $0x2e0] sm:$0xff]
      %v412 = vld [vmem:[%s306 + $0x2e8] sm:$0xff]
      %v413 = vld [vmem:[%s306 + $0x2f0] sm:$0xff]
      %v414 = vld [vmem:[%s306 + $0x2f8] sm:$0xff]
      %v415 = vld [vmem:[%s306 + $0x300] sm:$0xff]
      %v416 = vld [vmem:[%s306 + $0x308] sm:$0xff]
      %v417 = vld [vmem:[%s306 + $0x310] sm:$0xff]
      %v418 = vld [vmem:[%s306 + $0x318] sm:$0xff]
      %v419 = vld [vmem:[%s306 + $0x320] sm:$0xff]
      %v420 = vld [vmem:[%s306 + $0x328] sm:$0xff]
      %v421 = vld [vmem:[%s306 + $0x330] sm:$0xff]
      %v422 = vld [vmem:[%s306 + $0x338] sm:$0xff]
      %v423 = vld [vmem:[%s306 + $0x340] sm:$0xff]
      %v424 = vld [vmem:[%s306 + $0x348] sm:$0xff]
      %v425 = vld [vmem:[%s306 + $0x350] sm:$0xff]
      %v426 = vld [vmem:[%s306 + $0x358] sm:$0xff]
      %v427 = vld [vmem:[%s306 + $0x360] sm:$0xff]
      %v428 = vld [vmem:[%s306 + $0x368] sm:$0xff]
      %v429 = vld [vmem:[%s306 + $0x370] sm:$0xff]
      %v430 = vld [vmem:[%s306 + $0x378] sm:$0xff]
      %v431 = vld [vmem:[%s306 + $0x380] sm:$0xff]
      %v432 = vld [vmem:[%s306 + $0x388] sm:$0xff]
      %v433 = vld [vmem:[%s306 + $0x390] sm:$0xff]
      %v434 = vld [vmem:[%s306 + $0x398] sm:$0xff]
      %v435 = vld [vmem:[%s306 + $0x3a0] sm:$0xff]
      %v436 = vld [vmem:[%s306 + $0x3a8] sm:$0xff]
      %v437 = vld [vmem:[%s306 + $0x3b0] sm:$0xff]
      %v438 = vld [vmem:[%s306 + $0x3b8] sm:$0xff]
      %v439 = vld [vmem:[%s306 + $0x3c0] sm:$0xff]
      %v440 = vld [vmem:[%s306 + $0x3c8] sm:$0xff]
      %v441 = vld [vmem:[%s306 + $0x3d0] sm:$0xff]
      %v442 = vld [vmem:[%s306 + $0x3d8] sm:$0xff]
      %v443 = vld [vmem:[%s306 + $0x3e0] sm:$0xff]
      %v444 = vld [vmem:[%s306 + $0x3e8] sm:$0xff]
      %v445 = vld [vmem:[%s306 + $0x3f0] sm:$0xff]
      %v446 = vld [vmem:[%s306 + $0x3f8] sm:$0xff]
      %v447 = vld [vmem:[%s306 + $0x400] sm:$0xff]
      %v448 = vld [vmem:[%s306 + $0x408] sm:$0xff]
      %v449 = vld [vmem:[%s306 + $0x410] sm:$0xff]
      %v450 = vld [vmem:[%s306 + $0x418] sm:$0xff]
      %v451 = vld [vmem:[%s306 + $0x420] sm:$0xff]
      %v452 = vld [vmem:[%s306 + $0x428] sm:$0xff]
      %v453 = vld [vmem:[%s306 + $0x430] sm:$0xff]
      %v454 = vld [vmem:[%s306 + $0x438] sm:$0xff]
      %v455 = vld [vmem:[%s306 + $0x440] sm:$0xff]
      %v456 = vld [vmem:[%s306 + $0x448] sm:$0xff]
      %v457 = vld [vmem:[%s306 + $0x450] sm:$0xff]
      %v458 = vld [vmem:[%s306 + $0x458] sm:$0xff]
      %v459 = vld [vmem:[%s306 + $0x460] sm:$0xff]
      %v460 = vld [vmem:[%s306 + $0x468] sm:$0xff]
      %v461 = vld [vmem:[%s306 + $0x470] sm:$0xff]
      %v462 = vld [vmem:[%s306 + $0x478] sm:$0xff]
      %v463 = vld [vmem:[%s306 + $0x480] sm:$0xff]
      %v464 = vld [vmem:[%s306 + $0x488] sm:$0xff]
      %v465 = vld [vmem:[%s306 + $0x490] sm:$0xff]
      %v466 = vld [vmem:[%s306 + $0x498] sm:$0xff]
      %v467 = vld [vmem:[%s306 + $0x4a0] sm:$0xff]
      %v468 = vld [vmem:[%s306 + $0x4a8] sm:$0xff]
      %v469 = vld [vmem:[%s306 + $0x4b0] sm:$0xff]
      %v470 = vld [vmem:[%s306 + $0x4b8] sm:$0xff]
      %v471 = vld [vmem:[%s306 + $0x4c0] sm:$0xff]
      %v472 = vld [vmem:[%s306 + $0x4c8] sm:$0xff]
      %v473 = vld [vmem:[%s306 + $0x4d0] sm:$0xff]
      %v474 = vld [vmem:[%s306 + $0x4d8] sm:$0xff]
      %v475 = vld [vmem:[%s306 + $0x4e0] sm:$0xff]
      %v476 = vld [vmem:[%s306 + $0x4e8] sm:$0xff]
      %v477 = vld [vmem:[%s306 + $0x4f0] sm:$0xff]
      %v478 = vld [vmem:[%s306 + $0x4f8] sm:$0xff]
      %v479 = vld [vmem:[%s306 + $0x500] sm:$0xff]
      %v480 = vld [vmem:[%s306 + $0x508] sm:$0xff]
      %v481 = vld [vmem:[%s306 + $0x510] sm:$0xff]
      %v482 = vld [vmem:[%s306 + $0x518] sm:$0xff]
      %v483 = vld [vmem:[%s306 + $0x520] sm:$0xff]
      %v484 = vld [vmem:[%s306 + $0x528] sm:$0xff]
      %v485 = vld [vmem:[%s306 + $0x530] sm:$0xff]
      %v486 = vld [vmem:[%s306 + $0x538] sm:$0xff]
      %v487 = vld [vmem:[%s306 + $0x540] sm:$0xff]
      %v488 = vld [vmem:[%s306 + $0x548] sm:$0xff]
      %v489 = vld [vmem:[%s306 + $0x550] sm:$0xff]
      %v490 = vld [vmem:[%s306 + $0x558] sm:$0xff]
      %v491 = vld [vmem:[%s306 + $0x560] sm:$0xff]
      %v492 = vld [vmem:[%s306 + $0x568] sm:$0xff]
      %v493 = vld [vmem:[%s306 + $0x570] sm:$0xff]
      %v494 = vld [vmem:[%s306 + $0x578] sm:$0xff]
      %v495 = vld [vmem:[%s306 + $0x580] sm:$0xff]
      %v496 = vld [vmem:[%s306 + $0x588] sm:$0xff]
      %v497 = vld [vmem:[%s306 + $0x590] sm:$0xff]
      %v498 = vld [vmem:[%s306 + $0x598] sm:$0xff]
      %v499 = vld [vmem:[%s306 + $0x5a0] sm:$0xff]
      %v500 = vld [vmem:[%s306 + $0x5a8] sm:$0xff]
      %v501 = vld [vmem:[%s306 + $0x5b0] sm:$0xff]
      %v502 = vld [vmem:[%s306 + $0x5b8] sm:$0xff]
      %v503 = vld [vmem:[%s306 + $0x5c0] sm:$0xff]
      %v504 = vld [vmem:[%s306 + $0x5c8] sm:$0xff]
      %v505 = vld [vmem:[%s306 + $0x5d0] sm:$0xff]
      %v506 = vld [vmem:[%s306 + $0x5d8] sm:$0xff]
      %v507 = vld [vmem:[%s306 + $0x5e0] sm:$0xff]
      %v508 = vld [vmem:[%s306 + $0x5e8] sm:$0xff]
      %v509 = vld [vmem:[%s306 + $0x5f0] sm:$0xff]
      %v510 = vld [vmem:[%s306 + $0x5f8] sm:$0xff]
      %v511 = vld [vmem:[%s306 + $0x600] sm:$0x7]
      %v512 = vld [vmem:[%s306 + $0x608] sm:$0x7]
      %v513 = vld [vmem:[%s306 + $0x610] sm:$0x7]
      %v514 = vpack.c.bf16 %v322, %v319
      %v515 = vpack.c.bf16 %v323, %v320
      %v516 = vpack.c.bf16 %v324, %v321
      %v517 = vpack.c.bf16 %v328, %v325
      %v518 = vpack.c.bf16 %v329, %v326
      %v519 = vpack.c.bf16 %v330, %v327
      %v520 = vpack.c.bf16 %v334, %v331
      %v521 = vpack.c.bf16 %v335, %v332
      %v522 = vpack.c.bf16 %v336, %v333
      %v523 = vpack.c.bf16 %v340, %v337
      %v524 = vpack.c.bf16 %v341, %v338
      %v525 = vpack.c.bf16 %v342, %v339
      %v526 = vpack.c.bf16 %v346, %v343
      %v527 = vpack.c.bf16 %v347, %v344
      %v528 = vpack.c.bf16 %v348, %v345
      %v529 = vpack.c.bf16 %v352, %v349
      %v530 = vpack.c.bf16 %v353, %v350
      %v531 = vpack.c.bf16 %v354, %v351
      %v532 = vpack.c.bf16 %v358, %v355
      %v533 = vpack.c.bf16 %v359, %v356
      %v534 = vpack.c.bf16 %v360, %v357
      %v535 = vpack.c.bf16 %v364, %v361
      %v536 = vpack.c.bf16 %v365, %v362
      %v537 = vpack.c.bf16 %v366, %v363
      %v538 = vpack.c.bf16 %v370, %v367
      %v539 = vpack.c.bf16 %v371, %v368
      %v540 = vpack.c.bf16 %v372, %v369
      %v541 = vpack.c.bf16 %v376, %v373
      %v542 = vpack.c.bf16 %v377, %v374
      %v543 = vpack.c.bf16 %v378, %v375
      %v544 = vpack.c.bf16 %v382, %v379
      %v545 = vpack.c.bf16 %v383, %v380
      %v546 = vpack.c.bf16 %v384, %v381
      %v547 = vpack.c.bf16 %v388, %v385
      %v548 = vpack.c.bf16 %v389, %v386
      %v549 = vpack.c.bf16 %v390, %v387
      %v550 = vpack.c.bf16 %v394, %v391
      %v551 = vpack.c.bf16 %v395, %v392
      %v552 = vpack.c.bf16 %v396, %v393
      %v553 = vpack.c.bf16 %v400, %v397
      %v554 = vpack.c.bf16 %v401, %v398
      %v555 = vpack.c.bf16 %v402, %v399
      %v556 = vpack.c.bf16 %v406, %v403
      %v557 = vpack.c.bf16 %v407, %v404
      %v558 = vpack.c.bf16 %v408, %v405
      %v559 = vpack.c.bf16 %v412, %v409
      %v560 = vpack.c.bf16 %v413, %v410
      %v561 = vpack.c.bf16 %v414, %v411
      %v562 = vpack.c.bf16 %v418, %v415
      %v563 = vpack.c.bf16 %v419, %v416
      %v564 = vpack.c.bf16 %v420, %v417
      %v565 = vpack.c.bf16 %v424, %v421
      %v566 = vpack.c.bf16 %v425, %v422
      %v567 = vpack.c.bf16 %v426, %v423
      %v568 = vpack.c.bf16 %v430, %v427
      %v569 = vpack.c.bf16 %v431, %v428
      %v570 = vpack.c.bf16 %v432, %v429
      %v571 = vpack.c.bf16 %v436, %v433
      %v572 = vpack.c.bf16 %v437, %v434
      %v573 = vpack.c.bf16 %v438, %v435
      %v574 = vpack.c.bf16 %v442, %v439
      %v575 = vpack.c.bf16 %v443, %v440
      %v576 = vpack.c.bf16 %v444, %v441
      %v577 = vpack.c.bf16 %v448, %v445
      %v578 = vpack.c.bf16 %v449, %v446
      %v579 = vpack.c.bf16 %v450, %v447
      %v580 = vpack.c.bf16 %v454, %v451
      %v581 = vpack.c.bf16 %v455, %v452
      %v582 = vpack.c.bf16 %v456, %v453
      %v583 = vpack.c.bf16 %v460, %v457
      %v584 = vpack.c.bf16 %v461, %v458
      %v585 = vpack.c.bf16 %v462, %v459
      %v586 = vpack.c.bf16 %v466, %v463
      %v587 = vpack.c.bf16 %v467, %v464
      %v588 = vpack.c.bf16 %v468, %v465
      %v589 = vpack.c.bf16 %v472, %v469
      %v590 = vpack.c.bf16 %v473, %v470
      %v591 = vpack.c.bf16 %v474, %v471
      %v592 = vpack.c.bf16 %v478, %v475
      %v593 = vpack.c.bf16 %v479, %v476
      %v594 = vpack.c.bf16 %v480, %v477
      %v595 = vpack.c.bf16 %v484, %v481
      %v596 = vpack.c.bf16 %v485, %v482
      %v597 = vpack.c.bf16 %v486, %v483
      %v598 = vpack.c.bf16 %v490, %v487
      %v599 = vpack.c.bf16 %v491, %v488
      %v600 = vpack.c.bf16 %v492, %v489
      %v601 = vpack.c.bf16 %v496, %v493
      %v602 = vpack.c.bf16 %v497, %v494
      %v603 = vpack.c.bf16 %v498, %v495
      %v604 = vpack.c.bf16 %v502, %v499
      %v605 = vpack.c.bf16 %v503, %v500
      %v606 = vpack.c.bf16 %v504, %v501
      %v607 = vpack.c.bf16 %v508, %v505
      %v608 = vpack.c.bf16 %v509, %v506
      %v609 = vpack.c.bf16 %v510, %v507
      %v610 = vpack.c.bf16 %v511, %v511
      %v611 = vpack.c.bf16 %v512, %v512
      %v612 = vpack.c.bf16 %v513, %v513
      %v613 = vld [vmem:[%s1] sm:$0xff]
      %v614 = vld [vmem:[%s1 + $0x8] sm:$0xff]
      %v615 = vld [vmem:[%s1 + $0x10] sm:$0xff]
      %v616 = vld [vmem:[%s1 + $0x18] sm:$0xff]
      %v617 = vld [vmem:[%s1 + $0x20] sm:$0xff]
      %v618 = vld [vmem:[%s1 + $0x28] sm:$0xff]
      %v619 = vld [vmem:[%s1 + $0x30] sm:$0xff]
      %v620 = vld [vmem:[%s1 + $0x38] sm:$0xff]
      %v621 = vld [vmem:[%s1 + $0x40] sm:$0xff]
      %v622 = vld [vmem:[%s1 + $0x48] sm:$0xff]
      %v623 = vld [vmem:[%s1 + $0x50] sm:$0xff]
      %v624 = vld [vmem:[%s1 + $0x58] sm:$0xff]
      %v625 = vld [vmem:[%s1 + $0x60] sm:$0xff]
      %v626 = vld [vmem:[%s1 + $0x68] sm:$0xff]
      %v627 = vld [vmem:[%s1 + $0x70] sm:$0xff]
      %v628 = vld [vmem:[%s1 + $0x78] sm:$0xff]
      %v629 = vld [vmem:[%s1 + $0x80] sm:$0xff]
      %v630 = vld [vmem:[%s1 + $0x88] sm:$0xff]
      %v631 = vld [vmem:[%s1 + $0x90] sm:$0xff]
      %v632 = vld [vmem:[%s1 + $0x98] sm:$0xff]
      %v633 = vld [vmem:[%s1 + $0xa0] sm:$0xff]
      %v634 = vld [vmem:[%s1 + $0xa8] sm:$0xff]
      %v635 = vld [vmem:[%s1 + $0xb0] sm:$0xff]
      %v636 = vld [vmem:[%s1 + $0xb8] sm:$0xff]
      %v637 = vld [vmem:[%s1 + $0xc0] sm:$0xff]
      %v638 = vld [vmem:[%s1 + $0xc8] sm:$0xff]
      %v639 = vld [vmem:[%s1 + $0xd0] sm:$0xff]
      %v640 = vld [vmem:[%s1 + $0xd8] sm:$0xff]
      %v641 = vld [vmem:[%s1 + $0xe0] sm:$0xff]
      %v642 = vld [vmem:[%s1 + $0xe8] sm:$0xff]
      %v643 = vld [vmem:[%s1 + $0xf0] sm:$0xff]
      %v644 = vld [vmem:[%s1 + $0xf8] sm:$0xff]
      %v645 = vld [vmem:[%s1 + $0x100] sm:$0xff]
      %v646 = vld [vmem:[%s1 + $0x108] sm:$0xff]
      %v647 = vld [vmem:[%s1 + $0x110] sm:$0xff]
      %v648 = vld [vmem:[%s1 + $0x118] sm:$0xff]
      %v649 = vld [vmem:[%s1 + $0x120] sm:$0xff]
      %v650 = vld [vmem:[%s1 + $0x128] sm:$0xff]
      %v651 = vld [vmem:[%s1 + $0x130] sm:$0xff]
      %v652 = vld [vmem:[%s1 + $0x138] sm:$0xff]
      %v653 = vld [vmem:[%s1 + $0x140] sm:$0xff]
      %v654 = vld [vmem:[%s1 + $0x148] sm:$0xff]
      %v655 = vld [vmem:[%s1 + $0x150] sm:$0xff]
      %v656 = vld [vmem:[%s1 + $0x158] sm:$0xff]
      %v657 = vld [vmem:[%s1 + $0x160] sm:$0xff]
      %v658 = vld [vmem:[%s1 + $0x168] sm:$0xff]
      %v659 = vld [vmem:[%s1 + $0x170] sm:$0xff]
      %v660 = vld [vmem:[%s1 + $0x178] sm:$0xff]
      %v661 = vld [vmem:[%s1 + $0x180] sm:$0xff]
      %v662 = vld [vmem:[%s1 + $0x188] sm:$0xff]
      %v663 = vld [vmem:[%s1 + $0x190] sm:$0xff]
      %v664 = vld [vmem:[%s1 + $0x198] sm:$0xff]
      %v665 = vld [vmem:[%s1 + $0x1a0] sm:$0xff]
      %v666 = vld [vmem:[%s1 + $0x1a8] sm:$0xff]
      %v667 = vld [vmem:[%s1 + $0x1b0] sm:$0xff]
      %v668 = vld [vmem:[%s1 + $0x1b8] sm:$0xff]
      %v669 = vld [vmem:[%s1 + $0x1c0] sm:$0xff]
      %v670 = vld [vmem:[%s1 + $0x1c8] sm:$0xff]
      %v671 = vld [vmem:[%s1 + $0x1d0] sm:$0xff]
      %v672 = vld [vmem:[%s1 + $0x1d8] sm:$0xff]
      %v673 = vld [vmem:[%s1 + $0x1e0] sm:$0xff]
      %v674 = vld [vmem:[%s1 + $0x1e8] sm:$0xff]
      %v675 = vld [vmem:[%s1 + $0x1f0] sm:$0xff]
      %v676 = vld [vmem:[%s1 + $0x1f8] sm:$0xff]
      %v677 = vld [vmem:[%s1 + $0x200] sm:$0xff]
      %v678 = vld [vmem:[%s1 + $0x208] sm:$0xff]
      %v679 = vld [vmem:[%s1 + $0x210] sm:$0xff]
      %v680 = vld [vmem:[%s1 + $0x218] sm:$0xff]
      %v681 = vld [vmem:[%s1 + $0x220] sm:$0xff]
      %v682 = vld [vmem:[%s1 + $0x228] sm:$0xff]
      %v683 = vld [vmem:[%s1 + $0x230] sm:$0xff]
      %v684 = vld [vmem:[%s1 + $0x238] sm:$0xff]
      %v685 = vld [vmem:[%s1 + $0x240] sm:$0xff]
      %v686 = vld [vmem:[%s1 + $0x248] sm:$0xff]
      %v687 = vld [vmem:[%s1 + $0x250] sm:$0xff]
      %v688 = vld [vmem:[%s1 + $0x258] sm:$0xff]
      %v689 = vld [vmem:[%s1 + $0x260] sm:$0xff]
      %v690 = vld [vmem:[%s1 + $0x268] sm:$0xff]
      %v691 = vld [vmem:[%s1 + $0x270] sm:$0xff]
      %v692 = vld [vmem:[%s1 + $0x278] sm:$0xff]
      %v693 = vld [vmem:[%s1 + $0x280] sm:$0xff]
      %v694 = vld [vmem:[%s1 + $0x288] sm:$0xff]
      %v695 = vld [vmem:[%s1 + $0x290] sm:$0xff]
      %v696 = vld [vmem:[%s1 + $0x298] sm:$0xff]
      %v697 = vld [vmem:[%s1 + $0x2a0] sm:$0xff]
      %v698 = vld [vmem:[%s1 + $0x2a8] sm:$0xff]
      %v699 = vld [vmem:[%s1 + $0x2b0] sm:$0xff]
      %v700 = vld [vmem:[%s1 + $0x2b8] sm:$0xff]
      %v701 = vld [vmem:[%s1 + $0x2c0] sm:$0xff]
      %v702 = vld [vmem:[%s1 + $0x2c8] sm:$0xff]
      %v703 = vld [vmem:[%s1 + $0x2d0] sm:$0xff]
      %v704 = vld [vmem:[%s1 + $0x2d8] sm:$0xff]
      %v705 = vld [vmem:[%s1 + $0x2e0] sm:$0xff]
      %v706 = vld [vmem:[%s1 + $0x2e8] sm:$0xff]
      %v707 = vld [vmem:[%s1 + $0x2f0] sm:$0xff]
      %v708 = vld [vmem:[%s1 + $0x2f8] sm:$0xff]
      %v709 = vld [vmem:[%s1 + $0x300] sm:$0xff]
      %v710 = vld [vmem:[%s1 + $0x308] sm:$0xff]
      %v711 = vld [vmem:[%s1 + $0x310] sm:$0xff]
      %v712 = vld [vmem:[%s1 + $0x318] sm:$0xff]
      %v713 = vld [vmem:[%s1 + $0x320] sm:$0xff]
      %v714 = vld [vmem:[%s1 + $0x328] sm:$0xff]
      %v715 = vld [vmem:[%s1 + $0x330] sm:$0xff]
      %v716 = vld [vmem:[%s1 + $0x338] sm:$0xff]
      %v717 = vld [vmem:[%s1 + $0x340] sm:$0xff]
      %v718 = vld [vmem:[%s1 + $0x348] sm:$0xff]
      %v719 = vld [vmem:[%s1 + $0x350] sm:$0xff]
      %v720 = vld [vmem:[%s1 + $0x358] sm:$0xff]
      %v721 = vld [vmem:[%s1 + $0x360] sm:$0xff]
      %v722 = vld [vmem:[%s1 + $0x368] sm:$0xff]
      %v723 = vld [vmem:[%s1 + $0x370] sm:$0xff]
      %v724 = vld [vmem:[%s1 + $0x378] sm:$0xff]
      %v725 = vld [vmem:[%s1 + $0x380] sm:$0xff]
      %v726 = vld [vmem:[%s1 + $0x388] sm:$0xff]
      %v727 = vld [vmem:[%s1 + $0x390] sm:$0xff]
      %v728 = vld [vmem:[%s1 + $0x398] sm:$0xff]
      %v729 = vld [vmem:[%s1 + $0x3a0] sm:$0xff]
      %v730 = vld [vmem:[%s1 + $0x3a8] sm:$0xff]
      %v731 = vld [vmem:[%s1 + $0x3b0] sm:$0xff]
      %v732 = vld [vmem:[%s1 + $0x3b8] sm:$0xff]
      %v733 = vld [vmem:[%s1 + $0x3c0] sm:$0xff]
      %v734 = vld [vmem:[%s1 + $0x3c8] sm:$0xff]
      %v735 = vld [vmem:[%s1 + $0x3d0] sm:$0xff]
      %v736 = vld [vmem:[%s1 + $0x3d8] sm:$0xff]
      %v737 = vld [vmem:[%s1 + $0x3e0] sm:$0xff]
      %v738 = vld [vmem:[%s1 + $0x3e8] sm:$0xff]
      %v739 = vld [vmem:[%s1 + $0x3f0] sm:$0xff]
      %v740 = vld [vmem:[%s1 + $0x3f8] sm:$0xff]
      %v741 = vld [vmem:[%s1 + $0x400] sm:$0x33]
      %v742 = vld [vmem:[%s1 + $0x408] sm:$0x33]
      %v743 = vld [vmem:[%s2] sm:$0xff]
      %v744 = vld [vmem:[%s2 + $0x8] sm:$0xff]
      %v745 = vld [vmem:[%s2 + $0x10] sm:$0xff]
      %v746 = vld [vmem:[%s2 + $0x18] sm:$0xff]
      %v747 = vld [vmem:[%s2 + $0x20] sm:$0xff]
      %v748 = vld [vmem:[%s2 + $0x28] sm:$0xff]
      %v749 = vld [vmem:[%s2 + $0x30] sm:$0xff]
      %v750 = vld [vmem:[%s2 + $0x38] sm:$0xff]
      %v751 = vld [vmem:[%s2 + $0x40] sm:$0xff]
      %v752 = vld [vmem:[%s2 + $0x48] sm:$0xff]
      %v753 = vld [vmem:[%s2 + $0x50] sm:$0xff]
      %v754 = vld [vmem:[%s2 + $0x58] sm:$0xff]
      %v755 = vld [vmem:[%s2 + $0x60] sm:$0xff]
      %v756 = vld [vmem:[%s2 + $0x68] sm:$0xff]
      %v757 = vld [vmem:[%s2 + $0x70] sm:$0xff]
      %v758 = vld [vmem:[%s2 + $0x78] sm:$0xff]
      %v759 = vld [vmem:[%s2 + $0x80] sm:$0xff]
      %v760 = vld [vmem:[%s2 + $0x88] sm:$0xff]
      %v761 = vld [vmem:[%s2 + $0x90] sm:$0xff]
      %v762 = vld [vmem:[%s2 + $0x98] sm:$0xff]
      %v763 = vld [vmem:[%s2 + $0xa0] sm:$0xff]
      %v764 = vld [vmem:[%s2 + $0xa8] sm:$0xff]
      %v765 = vld [vmem:[%s2 + $0xb0] sm:$0xff]
      %v766 = vld [vmem:[%s2 + $0xb8] sm:$0xff]
      %v767 = vld [vmem:[%s2 + $0xc0] sm:$0xff]
      %v768 = vld [vmem:[%s2 + $0xc8] sm:$0xff]
      %v769 = vld [vmem:[%s2 + $0xd0] sm:$0xff]
      %v770 = vld [vmem:[%s2 + $0xd8] sm:$0xff]
      %v771 = vld [vmem:[%s2 + $0xe0] sm:$0xff]
      %v772 = vld [vmem:[%s2 + $0xe8] sm:$0xff]
      %v773 = vld [vmem:[%s2 + $0xf0] sm:$0xff]
      %v774 = vld [vmem:[%s2 + $0xf8] sm:$0xff]
      %v775 = vld [vmem:[%s2 + $0x100] sm:$0xff]
      %v776 = vld [vmem:[%s2 + $0x108] sm:$0xff]
      %v777 = vld [vmem:[%s2 + $0x110] sm:$0xff]
      %v778 = vld [vmem:[%s2 + $0x118] sm:$0xff]
      %v779 = vld [vmem:[%s2 + $0x120] sm:$0xff]
      %v780 = vld [vmem:[%s2 + $0x128] sm:$0xff]
      %v781 = vld [vmem:[%s2 + $0x130] sm:$0xff]
      %v782 = vld [vmem:[%s2 + $0x138] sm:$0xff]
      %v783 = vld [vmem:[%s2 + $0x140] sm:$0xff]
      %v784 = vld [vmem:[%s2 + $0x148] sm:$0xff]
      %v785 = vld [vmem:[%s2 + $0x150] sm:$0xff]
      %v786 = vld [vmem:[%s2 + $0x158] sm:$0xff]
      %v787 = vld [vmem:[%s2 + $0x160] sm:$0xff]
      %v788 = vld [vmem:[%s2 + $0x168] sm:$0xff]
      %v789 = vld [vmem:[%s2 + $0x170] sm:$0xff]
      %v790 = vld [vmem:[%s2 + $0x178] sm:$0xff]
      %v791 = vld [vmem:[%s2 + $0x180] sm:$0xff]
      %v792 = vld [vmem:[%s2 + $0x188] sm:$0xff]
      %v793 = vld [vmem:[%s2 + $0x190] sm:$0xff]
      %v794 = vld [vmem:[%s2 + $0x198] sm:$0xff]
      %v795 = vld [vmem:[%s2 + $0x1a0] sm:$0xff]
      %v796 = vld [vmem:[%s2 + $0x1a8] sm:$0xff]
      %v797 = vld [vmem:[%s2 + $0x1b0] sm:$0xff]
      %v798 = vld [vmem:[%s2 + $0x1b8] sm:$0xff]
      %v799 = vld [vmem:[%s2 + $0x1c0] sm:$0xff]
      %v800 = vld [vmem:[%s2 + $0x1c8] sm:$0xff]
      %v801 = vld [vmem:[%s2 + $0x1d0] sm:$0xff]
      %v802 = vld [vmem:[%s2 + $0x1d8] sm:$0xff]
      %v803 = vld [vmem:[%s2 + $0x1e0] sm:$0xff]
      %v804 = vld [vmem:[%s2 + $0x1e8] sm:$0xff]
      %v805 = vld [vmem:[%s2 + $0x1f0] sm:$0xff]
      %v806 = vld [vmem:[%s2 + $0x1f8] sm:$0xff]
      %808 = vset.pattern.permute.xlu0 0
      %809 = vperm.xlu0 %808, %v743
      %v810 = vpop.permute.xlu0 %809
      %813 = vset.pattern.permute.xlu0 0
      %814 = vperm.xlu0 %813, %v744
      %v815 = vpop.permute.xlu0 %814
      %818 = vset.pattern.permute.xlu0 0
      %819 = vperm.xlu0 %818, %v745
      %v820 = vpop.permute.xlu0 %819
      %823 = vset.pattern.permute.xlu0 0
      %824 = vperm.xlu0 %823, %v746
      %v825 = vpop.permute.xlu0 %824
      %828 = vset.pattern.permute.xlu0 0
      %829 = vperm.xlu0 %828, %v747
      %v830 = vpop.permute.xlu0 %829
      %833 = vset.pattern.permute.xlu0 0
      %834 = vperm.xlu0 %833, %v748
      %v835 = vpop.permute.xlu0 %834
      %838 = vset.pattern.permute.xlu0 0
      %839 = vperm.xlu0 %838, %v749
      %v840 = vpop.permute.xlu0 %839
      %843 = vset.pattern.permute.xlu0 0
      %844 = vperm.xlu0 %843, %v750
      %v845 = vpop.permute.xlu0 %844
      %848 = vset.pattern.permute.xlu0 0
      %849 = vperm.xlu0 %848, %v751
      %v850 = vpop.permute.xlu0 %849
      %853 = vset.pattern.permute.xlu0 0
      %854 = vperm.xlu0 %853, %v752
      %v855 = vpop.permute.xlu0 %854
      %858 = vset.pattern.permute.xlu0 0
      %859 = vperm.xlu0 %858, %v753
      %v860 = vpop.permute.xlu0 %859
      %863 = vset.pattern.permute.xlu0 0
      %864 = vperm.xlu0 %863, %v754
      %v865 = vpop.permute.xlu0 %864
      %868 = vset.pattern.permute.xlu0 0
      %869 = vperm.xlu0 %868, %v755
      %v870 = vpop.permute.xlu0 %869
      %873 = vset.pattern.permute.xlu0 0
      %874 = vperm.xlu0 %873, %v756
      %v875 = vpop.permute.xlu0 %874
      %878 = vset.pattern.permute.xlu0 0
      %879 = vperm.xlu0 %878, %v757
      %v880 = vpop.permute.xlu0 %879
      %883 = vset.pattern.permute.xlu0 0
      %884 = vperm.xlu0 %883, %v758
      %v885 = vpop.permute.xlu0 %884
      %888 = vset.pattern.permute.xlu0 0
      %889 = vperm.xlu0 %888, %v759
      %v890 = vpop.permute.xlu0 %889
      %893 = vset.pattern.permute.xlu0 0
      %894 = vperm.xlu0 %893, %v760
      %v895 = vpop.permute.xlu0 %894
      %898 = vset.pattern.permute.xlu0 0
      %899 = vperm.xlu0 %898, %v761
      %v900 = vpop.permute.xlu0 %899
      %903 = vset.pattern.permute.xlu0 0
      %904 = vperm.xlu0 %903, %v762
      %v905 = vpop.permute.xlu0 %904
      %908 = vset.pattern.permute.xlu0 0
      %909 = vperm.xlu0 %908, %v763
      %v910 = vpop.permute.xlu0 %909
      %913 = vset.pattern.permute.xlu0 0
      %914 = vperm.xlu0 %913, %v764
      %v915 = vpop.permute.xlu0 %914
      %918 = vset.pattern.permute.xlu0 0
      %919 = vperm.xlu0 %918, %v765
      %v920 = vpop.permute.xlu0 %919
      %923 = vset.pattern.permute.xlu0 0
      %924 = vperm.xlu0 %923, %v766
      %v925 = vpop.permute.xlu0 %924
      %928 = vset.pattern.permute.xlu0 0
      %929 = vperm.xlu0 %928, %v767
      %v930 = vpop.permute.xlu0 %929
      %933 = vset.pattern.permute.xlu0 0
      %934 = vperm.xlu0 %933, %v768
      %v935 = vpop.permute.xlu0 %934
      %938 = vset.pattern.permute.xlu0 0
      %939 = vperm.xlu0 %938, %v769
      %v940 = vpop.permute.xlu0 %939
      %943 = vset.pattern.permute.xlu0 0
      %944 = vperm.xlu0 %943, %v770
      %v945 = vpop.permute.xlu0 %944
      %948 = vset.pattern.permute.xlu0 0
      %949 = vperm.xlu0 %948, %v771
      %v950 = vpop.permute.xlu0 %949
      %953 = vset.pattern.permute.xlu0 0
      %954 = vperm.xlu0 %953, %v772
      %v955 = vpop.permute.xlu0 %954
      %958 = vset.pattern.permute.xlu0 0
      %959 = vperm.xlu0 %958, %v773
      %v960 = vpop.permute.xlu0 %959
      %963 = vset.pattern.permute.xlu0 0
      %964 = vperm.xlu0 %963, %v774
      %v965 = vpop.permute.xlu0 %964
      %968 = vset.pattern.permute.xlu0 0
      %969 = vperm.xlu0 %968, %v775
      %v970 = vpop.permute.xlu0 %969
      %973 = vset.pattern.permute.xlu0 0
      %974 = vperm.xlu0 %973, %v776
      %v975 = vpop.permute.xlu0 %974
      %978 = vset.pattern.permute.xlu0 0
      %979 = vperm.xlu0 %978, %v777
      %v980 = vpop.permute.xlu0 %979
      %983 = vset.pattern.permute.xlu0 0
      %984 = vperm.xlu0 %983, %v778
      %v985 = vpop.permute.xlu0 %984
      %988 = vset.pattern.permute.xlu0 0
      %989 = vperm.xlu0 %988, %v779
      %v990 = vpop.permute.xlu0 %989
      %993 = vset.pattern.permute.xlu0 0
      %994 = vperm.xlu0 %993, %v780
      %v995 = vpop.permute.xlu0 %994
      %998 = vset.pattern.permute.xlu0 0
      %999 = vperm.xlu0 %998, %v781
      %v1000 = vpop.permute.xlu0 %999
      %1003 = vset.pattern.permute.xlu0 0
      %1004 = vperm.xlu0 %1003, %v782
      %v1005 = vpop.permute.xlu0 %1004
      %1008 = vset.pattern.permute.xlu0 0
      %1009 = vperm.xlu0 %1008, %v783
      %v1010 = vpop.permute.xlu0 %1009
      %1013 = vset.pattern.permute.xlu0 0
      %1014 = vperm.xlu0 %1013, %v784
      %v1015 = vpop.permute.xlu0 %1014
      %1018 = vset.pattern.permute.xlu0 0
      %1019 = vperm.xlu0 %1018, %v785
      %v1020 = vpop.permute.xlu0 %1019
      %1023 = vset.pattern.permute.xlu0 0
      %1024 = vperm.xlu0 %1023, %v786
      %v1025 = vpop.permute.xlu0 %1024
      %1028 = vset.pattern.permute.xlu0 0
      %1029 = vperm.xlu0 %1028, %v787
      %v1030 = vpop.permute.xlu0 %1029
      %1033 = vset.pattern.permute.xlu0 0
      %1034 = vperm.xlu0 %1033, %v788
      %v1035 = vpop.permute.xlu0 %1034
      %1038 = vset.pattern.permute.xlu0 0
      %1039 = vperm.xlu0 %1038, %v789
      %v1040 = vpop.permute.xlu0 %1039
      %1043 = vset.pattern.permute.xlu0 0
      %1044 = vperm.xlu0 %1043, %v790
      %v1045 = vpop.permute.xlu0 %1044
      %1048 = vset.pattern.permute.xlu0 0
      %1049 = vperm.xlu0 %1048, %v791
      %v1050 = vpop.permute.xlu0 %1049
      %1053 = vset.pattern.permute.xlu0 0
      %1054 = vperm.xlu0 %1053, %v792
      %v1055 = vpop.permute.xlu0 %1054
      %1058 = vset.pattern.permute.xlu0 0
      %1059 = vperm.xlu0 %1058, %v793
      %v1060 = vpop.permute.xlu0 %1059
      %1063 = vset.pattern.permute.xlu0 0
      %1064 = vperm.xlu0 %1063, %v794
      %v1065 = vpop.permute.xlu0 %1064
      %1068 = vset.pattern.permute.xlu0 0
      %1069 = vperm.xlu0 %1068, %v795
      %v1070 = vpop.permute.xlu0 %1069
      %1073 = vset.pattern.permute.xlu0 0
      %1074 = vperm.xlu0 %1073, %v796
      %v1075 = vpop.permute.xlu0 %1074
      %1078 = vset.pattern.permute.xlu0 0
      %1079 = vperm.xlu0 %1078, %v797
      %v1080 = vpop.permute.xlu0 %1079
      %1083 = vset.pattern.permute.xlu0 0
      %1084 = vperm.xlu0 %1083, %v798
      %v1085 = vpop.permute.xlu0 %1084
      %1088 = vset.pattern.permute.xlu0 0
      %1089 = vperm.xlu0 %1088, %v799
      %v1090 = vpop.permute.xlu0 %1089
      %1093 = vset.pattern.permute.xlu0 0
      %1094 = vperm.xlu0 %1093, %v800
      %v1095 = vpop.permute.xlu0 %1094
      %1098 = vset.pattern.permute.xlu0 0
      %1099 = vperm.xlu0 %1098, %v801
      %v1100 = vpop.permute.xlu0 %1099
      %1103 = vset.pattern.permute.xlu0 0
      %1104 = vperm.xlu0 %1103, %v802
      %v1105 = vpop.permute.xlu0 %1104
      %1108 = vset.pattern.permute.xlu0 0
      %1109 = vperm.xlu0 %1108, %v803
      %v1110 = vpop.permute.xlu0 %1109
      %1113 = vset.pattern.permute.xlu0 0
      %1114 = vperm.xlu0 %1113, %v804
      %v1115 = vpop.permute.xlu0 %1114
      %1118 = vset.pattern.permute.xlu0 0
      %1119 = vperm.xlu0 %1118, %v805
      %v1120 = vpop.permute.xlu0 %1119
      %1123 = vset.pattern.permute.xlu0 0
      %1124 = vperm.xlu0 %1123, %v806
      %v1125 = vpop.permute.xlu0 %1124
      %v1257 = vunpack.c.l.b16 %v613
      %v1258 = vunpack.c.h.b16 %v613
      %v1259 = vunpack.c.l.b16 %v614
      %v1260 = vunpack.c.h.b16 %v614
      %v1261 = vunpack.c.l.b16 %v615
      %v1262 = vunpack.c.h.b16 %v615
      %v1263 = vunpack.c.l.b16 %v616
      %v1264 = vunpack.c.h.b16 %v616
      %v1265 = vunpack.c.l.b16 %v617
      %v1266 = vunpack.c.h.b16 %v617
      %v1267 = vunpack.c.l.b16 %v618
      %v1268 = vunpack.c.h.b16 %v618
      %v1269 = vunpack.c.l.b16 %v619
      %v1270 = vunpack.c.h.b16 %v619
      %v1271 = vunpack.c.l.b16 %v620
      %v1272 = vunpack.c.h.b16 %v620
      %v1273 = vunpack.c.l.b16 %v621
      %v1274 = vunpack.c.h.b16 %v621
      %v1275 = vunpack.c.l.b16 %v622
      %v1276 = vunpack.c.h.b16 %v622
      %v1277 = vunpack.c.l.b16 %v623
      %v1278 = vunpack.c.h.b16 %v623
      %v1279 = vunpack.c.l.b16 %v624
      %v1280 = vunpack.c.h.b16 %v624
      %v1281 = vunpack.c.l.b16 %v625
      %v1282 = vunpack.c.h.b16 %v625
      %v1283 = vunpack.c.l.b16 %v626
      %v1284 = vunpack.c.h.b16 %v626
      %v1285 = vunpack.c.l.b16 %v627
      %v1286 = vunpack.c.h.b16 %v627
      %v1287 = vunpack.c.l.b16 %v628
      %v1288 = vunpack.c.h.b16 %v628
      %v1289 = vunpack.c.l.b16 %v629
      %v1290 = vunpack.c.h.b16 %v629
      %v1291 = vunpack.c.l.b16 %v630
      %v1292 = vunpack.c.h.b16 %v630
      %v1293 = vunpack.c.l.b16 %v631
      %v1294 = vunpack.c.h.b16 %v631
      %v1295 = vunpack.c.l.b16 %v632
      %v1296 = vunpack.c.h.b16 %v632
      %v1297 = vunpack.c.l.b16 %v633
      %v1298 = vunpack.c.h.b16 %v633
      %v1299 = vunpack.c.l.b16 %v634
      %v1300 = vunpack.c.h.b16 %v634
      %v1301 = vunpack.c.l.b16 %v635
      %v1302 = vunpack.c.h.b16 %v635
      %v1303 = vunpack.c.l.b16 %v636
      %v1304 = vunpack.c.h.b16 %v636
      %v1305 = vunpack.c.l.b16 %v637
      %v1306 = vunpack.c.h.b16 %v637
      %v1307 = vunpack.c.l.b16 %v638
      %v1308 = vunpack.c.h.b16 %v638
      %v1309 = vunpack.c.l.b16 %v639
      %v1310 = vunpack.c.h.b16 %v639
      %v1311 = vunpack.c.l.b16 %v640
      %v1312 = vunpack.c.h.b16 %v640
      %v1313 = vunpack.c.l.b16 %v641
      %v1314 = vunpack.c.h.b16 %v641
      %v1315 = vunpack.c.l.b16 %v642
      %v1316 = vunpack.c.h.b16 %v642
      %v1317 = vunpack.c.l.b16 %v643
      %v1318 = vunpack.c.h.b16 %v643
      %v1319 = vunpack.c.l.b16 %v644
      %v1320 = vunpack.c.h.b16 %v644
      %v1321 = vunpack.c.l.b16 %v645
      %v1322 = vunpack.c.h.b16 %v645
      %v1323 = vunpack.c.l.b16 %v646
      %v1324 = vunpack.c.h.b16 %v646
      %v1325 = vunpack.c.l.b16 %v647
      %v1326 = vunpack.c.h.b16 %v647
      %v1327 = vunpack.c.l.b16 %v648
      %v1328 = vunpack.c.h.b16 %v648
      %v1329 = vunpack.c.l.b16 %v649
      %v1330 = vunpack.c.h.b16 %v649
      %v1331 = vunpack.c.l.b16 %v650
      %v1332 = vunpack.c.h.b16 %v650
      %v1333 = vunpack.c.l.b16 %v651
      %v1334 = vunpack.c.h.b16 %v651
      %v1335 = vunpack.c.l.b16 %v652
      %v1336 = vunpack.c.h.b16 %v652
      %v1337 = vunpack.c.l.b16 %v653
      %v1338 = vunpack.c.h.b16 %v653
      %v1339 = vunpack.c.l.b16 %v654
      %v1340 = vunpack.c.h.b16 %v654
      %v1341 = vunpack.c.l.b16 %v655
      %v1342 = vunpack.c.h.b16 %v655
      %v1343 = vunpack.c.l.b16 %v656
      %v1344 = vunpack.c.h.b16 %v656
      %v1345 = vunpack.c.l.b16 %v657
      %v1346 = vunpack.c.h.b16 %v657
      %v1347 = vunpack.c.l.b16 %v658
      %v1348 = vunpack.c.h.b16 %v658
      %v1349 = vunpack.c.l.b16 %v659
      %v1350 = vunpack.c.h.b16 %v659
      %v1351 = vunpack.c.l.b16 %v660
      %v1352 = vunpack.c.h.b16 %v660
      %v1353 = vunpack.c.l.b16 %v661
      %v1354 = vunpack.c.h.b16 %v661
      %v1355 = vunpack.c.l.b16 %v662
      %v1356 = vunpack.c.h.b16 %v662
      %v1357 = vunpack.c.l.b16 %v663
      %v1358 = vunpack.c.h.b16 %v663
      %v1359 = vunpack.c.l.b16 %v664
      %v1360 = vunpack.c.h.b16 %v664
      %v1361 = vunpack.c.l.b16 %v665
      %v1362 = vunpack.c.h.b16 %v665
      %v1363 = vunpack.c.l.b16 %v666
      %v1364 = vunpack.c.h.b16 %v666
      %v1365 = vunpack.c.l.b16 %v667
      %v1366 = vunpack.c.h.b16 %v667
      %v1367 = vunpack.c.l.b16 %v668
      %v1368 = vunpack.c.h.b16 %v668
      %v1369 = vunpack.c.l.b16 %v669
      %v1370 = vunpack.c.h.b16 %v669
      %v1371 = vunpack.c.l.b16 %v670
      %v1372 = vunpack.c.h.b16 %v670
      %v1373 = vunpack.c.l.b16 %v671
      %v1374 = vunpack.c.h.b16 %v671
      %v1375 = vunpack.c.l.b16 %v672
      %v1376 = vunpack.c.h.b16 %v672
      %v1377 = vunpack.c.l.b16 %v673
      %v1378 = vunpack.c.h.b16 %v673
      %v1379 = vunpack.c.l.b16 %v674
      %v1380 = vunpack.c.h.b16 %v674
      %v1381 = vunpack.c.l.b16 %v675
      %v1382 = vunpack.c.h.b16 %v675
      %v1383 = vunpack.c.l.b16 %v676
      %v1384 = vunpack.c.h.b16 %v676
      %v1385 = vunpack.c.l.b16 %v677
      %v1386 = vunpack.c.h.b16 %v677
      %v1387 = vunpack.c.l.b16 %v678
      %v1388 = vunpack.c.h.b16 %v678
      %v1389 = vunpack.c.l.b16 %v679
      %v1390 = vunpack.c.h.b16 %v679
      %v1391 = vunpack.c.l.b16 %v680
      %v1392 = vunpack.c.h.b16 %v680
      %v1393 = vunpack.c.l.b16 %v681
      %v1394 = vunpack.c.h.b16 %v681
      %v1395 = vunpack.c.l.b16 %v682
      %v1396 = vunpack.c.h.b16 %v682
      %v1397 = vunpack.c.l.b16 %v683
      %v1398 = vunpack.c.h.b16 %v683
      %v1399 = vunpack.c.l.b16 %v684
      %v1400 = vunpack.c.h.b16 %v684
      %v1401 = vunpack.c.l.b16 %v685
      %v1402 = vunpack.c.h.b16 %v685
      %v1403 = vunpack.c.l.b16 %v686
      %v1404 = vunpack.c.h.b16 %v686
      %v1405 = vunpack.c.l.b16 %v687
      %v1406 = vunpack.c.h.b16 %v687
      %v1407 = vunpack.c.l.b16 %v688
      %v1408 = vunpack.c.h.b16 %v688
      %v1409 = vunpack.c.l.b16 %v689
      %v1410 = vunpack.c.h.b16 %v689
      %v1411 = vunpack.c.l.b16 %v690
      %v1412 = vunpack.c.h.b16 %v690
      %v1413 = vunpack.c.l.b16 %v691
      %v1414 = vunpack.c.h.b16 %v691
      %v1415 = vunpack.c.l.b16 %v692
      %v1416 = vunpack.c.h.b16 %v692
      %v1417 = vunpack.c.l.b16 %v693
      %v1418 = vunpack.c.h.b16 %v693
      %v1419 = vunpack.c.l.b16 %v694
      %v1420 = vunpack.c.h.b16 %v694
      %v1421 = vunpack.c.l.b16 %v695
      %v1422 = vunpack.c.h.b16 %v695
      %v1423 = vunpack.c.l.b16 %v696
      %v1424 = vunpack.c.h.b16 %v696
      %v1425 = vunpack.c.l.b16 %v697
      %v1426 = vunpack.c.h.b16 %v697
      %v1427 = vunpack.c.l.b16 %v698
      %v1428 = vunpack.c.h.b16 %v698
      %v1429 = vunpack.c.l.b16 %v699
      %v1430 = vunpack.c.h.b16 %v699
      %v1431 = vunpack.c.l.b16 %v700
      %v1432 = vunpack.c.h.b16 %v700
      %v1433 = vunpack.c.l.b16 %v701
      %v1434 = vunpack.c.h.b16 %v701
      %v1435 = vunpack.c.l.b16 %v702
      %v1436 = vunpack.c.h.b16 %v702
      %v1437 = vunpack.c.l.b16 %v703
      %v1438 = vunpack.c.h.b16 %v703
      %v1439 = vunpack.c.l.b16 %v704
      %v1440 = vunpack.c.h.b16 %v704
      %v1441 = vunpack.c.l.b16 %v705
      %v1442 = vunpack.c.h.b16 %v705
      %v1443 = vunpack.c.l.b16 %v706
      %v1444 = vunpack.c.h.b16 %v706
      %v1445 = vunpack.c.l.b16 %v707
      %v1446 = vunpack.c.h.b16 %v707
      %v1447 = vunpack.c.l.b16 %v708
      %v1448 = vunpack.c.h.b16 %v708
      %v1449 = vunpack.c.l.b16 %v709
      %v1450 = vunpack.c.h.b16 %v709
      %v1451 = vunpack.c.l.b16 %v710
      %v1452 = vunpack.c.h.b16 %v710
      %v1453 = vunpack.c.l.b16 %v711
      %v1454 = vunpack.c.h.b16 %v711
      %v1455 = vunpack.c.l.b16 %v712
      %v1456 = vunpack.c.h.b16 %v712
      %v1457 = vunpack.c.l.b16 %v713
      %v1458 = vunpack.c.h.b16 %v713
      %v1459 = vunpack.c.l.b16 %v714
      %v1460 = vunpack.c.h.b16 %v714
      %v1461 = vunpack.c.l.b16 %v715
      %v1462 = vunpack.c.h.b16 %v715
      %v1463 = vunpack.c.l.b16 %v716
      %v1464 = vunpack.c.h.b16 %v716
      %v1465 = vunpack.c.l.b16 %v717
      %v1466 = vunpack.c.h.b16 %v717
      %v1467 = vunpack.c.l.b16 %v718
      %v1468 = vunpack.c.h.b16 %v718
      %v1469 = vunpack.c.l.b16 %v719
      %v1470 = vunpack.c.h.b16 %v719
      %v1471 = vunpack.c.l.b16 %v720
      %v1472 = vunpack.c.h.b16 %v720
      %v1473 = vunpack.c.l.b16 %v721
      %v1474 = vunpack.c.h.b16 %v721
      %v1475 = vunpack.c.l.b16 %v722
      %v1476 = vunpack.c.h.b16 %v722
      %v1477 = vunpack.c.l.b16 %v723
      %v1478 = vunpack.c.h.b16 %v723
      %v1479 = vunpack.c.l.b16 %v724
      %v1480 = vunpack.c.h.b16 %v724
      %v1481 = vunpack.c.l.b16 %v725
      %v1482 = vunpack.c.h.b16 %v725
      %v1483 = vunpack.c.l.b16 %v726
      %v1484 = vunpack.c.h.b16 %v726
      %v1485 = vunpack.c.l.b16 %v727
      %v1486 = vunpack.c.h.b16 %v727
      %v1487 = vunpack.c.l.b16 %v728
      %v1488 = vunpack.c.h.b16 %v728
      %v1489 = vunpack.c.l.b16 %v729
      %v1490 = vunpack.c.h.b16 %v729
      %v1491 = vunpack.c.l.b16 %v730
      %v1492 = vunpack.c.h.b16 %v730
      %v1493 = vunpack.c.l.b16 %v731
      %v1494 = vunpack.c.h.b16 %v731
      %v1495 = vunpack.c.l.b16 %v732
      %v1496 = vunpack.c.h.b16 %v732
      %v1497 = vunpack.c.l.b16 %v733
      %v1498 = vunpack.c.h.b16 %v733
      %v1499 = vunpack.c.l.b16 %v734
      %v1500 = vunpack.c.h.b16 %v734
      %v1501 = vunpack.c.l.b16 %v735
      %v1502 = vunpack.c.h.b16 %v735
      %v1503 = vunpack.c.l.b16 %v736
      %v1504 = vunpack.c.h.b16 %v736
      %v1505 = vunpack.c.l.b16 %v737
      %v1506 = vunpack.c.h.b16 %v737
      %v1507 = vunpack.c.l.b16 %v738
      %v1508 = vunpack.c.h.b16 %v738
      %v1509 = vunpack.c.l.b16 %v739
      %v1510 = vunpack.c.h.b16 %v739
      %v1511 = vunpack.c.l.b16 %v740
      %v1512 = vunpack.c.h.b16 %v740
      %v1513 = vunpack.c.l.b16 %v741
      %v1514 = vunpack.c.h.b16 %v741
      %v1515 = vunpack.c.l.b16 %v742
      %v1516 = vunpack.c.h.b16 %v742
      %v1517 = vpack.c.b16 %v1261, %v1257
      %v1518 = vpack.c.b16 %v1262, %v1258
      %v1519 = vpack.c.b16 %v1263, %v1259
      %v1520 = vpack.c.b16 %v1264, %v1260
      %v1521 = vpack.c.b16 %v1269, %v1265
      %v1522 = vpack.c.b16 %v1270, %v1266
      %v1523 = vpack.c.b16 %v1271, %v1267
      %v1524 = vpack.c.b16 %v1272, %v1268
      %v1525 = vpack.c.b16 %v1277, %v1273
      %v1526 = vpack.c.b16 %v1278, %v1274
      %v1527 = vpack.c.b16 %v1279, %v1275
      %v1528 = vpack.c.b16 %v1280, %v1276
      %v1529 = vpack.c.b16 %v1285, %v1281
      %v1530 = vpack.c.b16 %v1286, %v1282
      %v1531 = vpack.c.b16 %v1287, %v1283
      %v1532 = vpack.c.b16 %v1288, %v1284
      %v1533 = vpack.c.b16 %v1293, %v1289
      %v1534 = vpack.c.b16 %v1294, %v1290
      %v1535 = vpack.c.b16 %v1295, %v1291
      %v1536 = vpack.c.b16 %v1296, %v1292
      %v1537 = vpack.c.b16 %v1301, %v1297
      %v1538 = vpack.c.b16 %v1302, %v1298
      %v1539 = vpack.c.b16 %v1303, %v1299
      %v1540 = vpack.c.b16 %v1304, %v1300
      %v1541 = vpack.c.b16 %v1309, %v1305
      %v1542 = vpack.c.b16 %v1310, %v1306
      %v1543 = vpack.c.b16 %v1311, %v1307
      %v1544 = vpack.c.b16 %v1312, %v1308
      %v1545 = vpack.c.b16 %v1317, %v1313
      %v1546 = vpack.c.b16 %v1318, %v1314
      %v1547 = vpack.c.b16 %v1319, %v1315
      %v1548 = vpack.c.b16 %v1320, %v1316
      %v1549 = vpack.c.b16 %v1325, %v1321
      %v1550 = vpack.c.b16 %v1326, %v1322
      %v1551 = vpack.c.b16 %v1327, %v1323
      %v1552 = vpack.c.b16 %v1328, %v1324
      %v1553 = vpack.c.b16 %v1333, %v1329
      %v1554 = vpack.c.b16 %v1334, %v1330
      %v1555 = vpack.c.b16 %v1335, %v1331
      %v1556 = vpack.c.b16 %v1336, %v1332
      %v1557 = vpack.c.b16 %v1341, %v1337
      %v1558 = vpack.c.b16 %v1342, %v1338
      %v1559 = vpack.c.b16 %v1343, %v1339
      %v1560 = vpack.c.b16 %v1344, %v1340
      %v1561 = vpack.c.b16 %v1349, %v1345
      %v1562 = vpack.c.b16 %v1350, %v1346
      %v1563 = vpack.c.b16 %v1351, %v1347
      %v1564 = vpack.c.b16 %v1352, %v1348
      %v1565 = vpack.c.b16 %v1357, %v1353
      %v1566 = vpack.c.b16 %v1358, %v1354
      %v1567 = vpack.c.b16 %v1359, %v1355
      %v1568 = vpack.c.b16 %v1360, %v1356
      %v1569 = vpack.c.b16 %v1365, %v1361
      %v1570 = vpack.c.b16 %v1366, %v1362
      %v1571 = vpack.c.b16 %v1367, %v1363
      %v1572 = vpack.c.b16 %v1368, %v1364
      %v1573 = vpack.c.b16 %v1373, %v1369
      %v1574 = vpack.c.b16 %v1374, %v1370
      %v1575 = vpack.c.b16 %v1375, %v1371
      %v1576 = vpack.c.b16 %v1376, %v1372
      %v1577 = vpack.c.b16 %v1381, %v1377
      %v1578 = vpack.c.b16 %v1382, %v1378
      %v1579 = vpack.c.b16 %v1383, %v1379
      %v1580 = vpack.c.b16 %v1384, %v1380
      %v1581 = vpack.c.b16 %v1389, %v1385
      %v1582 = vpack.c.b16 %v1390, %v1386
      %v1583 = vpack.c.b16 %v1391, %v1387
      %v1584 = vpack.c.b16 %v1392, %v1388
      %v1585 = vpack.c.b16 %v1397, %v1393
      %v1586 = vpack.c.b16 %v1398, %v1394
      %v1587 = vpack.c.b16 %v1399, %v1395
      %v1588 = vpack.c.b16 %v1400, %v1396
      %v1589 = vpack.c.b16 %v1405, %v1401
      %v1590 = vpack.c.b16 %v1406, %v1402
      %v1591 = vpack.c.b16 %v1407, %v1403
      %v1592 = vpack.c.b16 %v1408, %v1404
      %v1593 = vpack.c.b16 %v1413, %v1409
      %v1594 = vpack.c.b16 %v1414, %v1410
      %v1595 = vpack.c.b16 %v1415, %v1411
      %v1596 = vpack.c.b16 %v1416, %v1412
      %v1597 = vpack.c.b16 %v1421, %v1417
      %v1598 = vpack.c.b16 %v1422, %v1418
      %v1599 = vpack.c.b16 %v1423, %v1419
      %v1600 = vpack.c.b16 %v1424, %v1420
      %v1601 = vpack.c.b16 %v1429, %v1425
      %v1602 = vpack.c.b16 %v1430, %v1426
      %v1603 = vpack.c.b16 %v1431, %v1427
      %v1604 = vpack.c.b16 %v1432, %v1428
      %v1605 = vpack.c.b16 %v1437, %v1433
      %v1606 = vpack.c.b16 %v1438, %v1434
      %v1607 = vpack.c.b16 %v1439, %v1435
      %v1608 = vpack.c.b16 %v1440, %v1436
      %v1609 = vpack.c.b16 %v1445, %v1441
      %v1610 = vpack.c.b16 %v1446, %v1442
      %v1611 = vpack.c.b16 %v1447, %v1443
      %v1612 = vpack.c.b16 %v1448, %v1444
      %v1613 = vpack.c.b16 %v1453, %v1449
      %v1614 = vpack.c.b16 %v1454, %v1450
      %v1615 = vpack.c.b16 %v1455, %v1451
      %v1616 = vpack.c.b16 %v1456, %v1452
      %v1617 = vpack.c.b16 %v1461, %v1457
      %v1618 = vpack.c.b16 %v1462, %v1458
      %v1619 = vpack.c.b16 %v1463, %v1459
      %v1620 = vpack.c.b16 %v1464, %v1460
      %v1621 = vpack.c.b16 %v1469, %v1465
      %v1622 = vpack.c.b16 %v1470, %v1466
      %v1623 = vpack.c.b16 %v1471, %v1467
      %v1624 = vpack.c.b16 %v1472, %v1468
      %v1625 = vpack.c.b16 %v1477, %v1473
      %v1626 = vpack.c.b16 %v1478, %v1474
      %v1627 = vpack.c.b16 %v1479, %v1475
      %v1628 = vpack.c.b16 %v1480, %v1476
      %v1629 = vpack.c.b16 %v1485, %v1481
      %v1630 = vpack.c.b16 %v1486, %v1482
      %v1631 = vpack.c.b16 %v1487, %v1483
      %v1632 = vpack.c.b16 %v1488, %v1484
      %v1633 = vpack.c.b16 %v1493, %v1489
      %v1634 = vpack.c.b16 %v1494, %v1490
      %v1635 = vpack.c.b16 %v1495, %v1491
      %v1636 = vpack.c.b16 %v1496, %v1492
      %v1637 = vpack.c.b16 %v1501, %v1497
      %v1638 = vpack.c.b16 %v1502, %v1498
      %v1639 = vpack.c.b16 %v1503, %v1499
      %v1640 = vpack.c.b16 %v1504, %v1500
      %v1641 = vpack.c.b16 %v1509, %v1505
      %v1642 = vpack.c.b16 %v1510, %v1506
      %v1643 = vpack.c.b16 %v1511, %v1507
      %v1644 = vpack.c.b16 %v1512, %v1508
      %v1645 = vpack.c.b16 %v1513, %v1513
      %v1646 = vpack.c.b16 %v1514, %v1514
      %v1647 = vpack.c.b16 %v1515, %v1515
      %v1648 = vpack.c.b16 %v1516, %v1516
      %1781 = vxpose.xlu0.c.b16.start [1/8] %v1517, 128
      %1782 = vxpose.xlu0.c.b16.cont [2/8] %v1521, 128
      %1783 = vxpose.xlu0.c.b16.cont [3/8] %v1525, 128
      %1784 = vxpose.xlu0.c.b16.cont [4/8] %v1529, 128
      %1785 = vxpose.xlu0.c.b16.cont [5/8] %v1533, 128
      %1786 = vxpose.xlu0.c.b16.cont [6/8] %v1537, 128
      %1787 = vxpose.xlu0.c.b16.cont [7/8] %v1541, 128
      %1788 = vxpose.xlu0.c.b16.end [8/8] %v1545, 128
      %v1789 = vpop.trf.xlu0
      %v1790 = vpop.trf.xlu0
      %v1791 = vpop.trf.xlu0
      %v1792 = vpop.trf.xlu0
      %v1793 = vpop.trf.xlu0
      %v1794 = vpop.trf.xlu0
      %v1795 = vpop.trf.xlu0
      %v1796 = vpop.trf.xlu0
      %1797 = vxpose.xlu0.c.b16.start [1/8] %v1518, 128
      %1798 = vxpose.xlu0.c.b16.cont [2/8] %v1522, 128
      %1799 = vxpose.xlu0.c.b16.cont [3/8] %v1526, 128
      %1800 = vxpose.xlu0.c.b16.cont [4/8] %v1530, 128
      %1801 = vxpose.xlu0.c.b16.cont [5/8] %v1534, 128
      %1802 = vxpose.xlu0.c.b16.cont [6/8] %v1538, 128
      %1803 = vxpose.xlu0.c.b16.cont [7/8] %v1542, 128
      %1804 = vxpose.xlu0.c.b16.end [8/8] %v1546, 128
      %v1805 = vpop.trf.xlu0
      %v1806 = vpop.trf.xlu0
      %v1807 = vpop.trf.xlu0
      %v1808 = vpop.trf.xlu0
      %v1809 = vpop.trf.xlu0
      %v1810 = vpop.trf.xlu0
      %v1811 = vpop.trf.xlu0
      %v1812 = vpop.trf.xlu0
      %1813 = vxpose.xlu0.c.b16.start [1/8] %v1519, 128
      %1814 = vxpose.xlu0.c.b16.cont [2/8] %v1523, 128
      %1815 = vxpose.xlu0.c.b16.cont [3/8] %v1527, 128
      %1816 = vxpose.xlu0.c.b16.cont [4/8] %v1531, 128
      %1817 = vxpose.xlu0.c.b16.cont [5/8] %v1535, 128
      %1818 = vxpose.xlu0.c.b16.cont [6/8] %v1539, 128
      %1819 = vxpose.xlu0.c.b16.cont [7/8] %v1543, 128
      %1820 = vxpose.xlu0.c.b16.end [8/8] %v1547, 128
      %v1821 = vpop.trf.xlu0
      %v1822 = vpop.trf.xlu0
      %v1823 = vpop.trf.xlu0
      %v1824 = vpop.trf.xlu0
      %v1825 = vpop.trf.xlu0
      %v1826 = vpop.trf.xlu0
      %v1827 = vpop.trf.xlu0
      %v1828 = vpop.trf.xlu0
      %1829 = vxpose.xlu0.c.b16.start [1/8] %v1520, 128
      %1830 = vxpose.xlu0.c.b16.cont [2/8] %v1524, 128
      %1831 = vxpose.xlu0.c.b16.cont [3/8] %v1528, 128
      %1832 = vxpose.xlu0.c.b16.cont [4/8] %v1532, 128
      %1833 = vxpose.xlu0.c.b16.cont [5/8] %v1536, 128
      %1834 = vxpose.xlu0.c.b16.cont [6/8] %v1540, 128
      %1835 = vxpose.xlu0.c.b16.cont [7/8] %v1544, 128
      %1836 = vxpose.xlu0.c.b16.end [8/8] %v1548, 128
      %v1837 = vpop.trf.xlu0
      %v1838 = vpop.trf.xlu0
      %v1839 = vpop.trf.xlu0
      %v1840 = vpop.trf.xlu0
      %v1841 = vpop.trf.xlu0
      %v1842 = vpop.trf.xlu0
      %v1843 = vpop.trf.xlu0
      %v1844 = vpop.trf.xlu0
      %1845 = vxpose.xlu0.c.b16.start [1/8] %v1549, 128
      %1846 = vxpose.xlu0.c.b16.cont [2/8] %v1553, 128
      %1847 = vxpose.xlu0.c.b16.cont [3/8] %v1557, 128
      %1848 = vxpose.xlu0.c.b16.cont [4/8] %v1561, 128
      %1849 = vxpose.xlu0.c.b16.cont [5/8] %v1565, 128
      %1850 = vxpose.xlu0.c.b16.cont [6/8] %v1569, 128
      %1851 = vxpose.xlu0.c.b16.cont [7/8] %v1573, 128
      %1852 = vxpose.xlu0.c.b16.end [8/8] %v1577, 128
      %v1853 = vpop.trf.xlu0
      %v1854 = vpop.trf.xlu0
      %v1855 = vpop.trf.xlu0
      %v1856 = vpop.trf.xlu0
      %v1857 = vpop.trf.xlu0
      %v1858 = vpop.trf.xlu0
      %v1859 = vpop.trf.xlu0
      %v1860 = vpop.trf.xlu0
      %1861 = vxpose.xlu0.c.b16.start [1/8] %v1550, 128
      %1862 = vxpose.xlu0.c.b16.cont [2/8] %v1554, 128
      %1863 = vxpose.xlu0.c.b16.cont [3/8] %v1558, 128
      %1864 = vxpose.xlu0.c.b16.cont [4/8] %v1562, 128
      %1865 = vxpose.xlu0.c.b16.cont [5/8] %v1566, 128
      %1866 = vxpose.xlu0.c.b16.cont [6/8] %v1570, 128
      %1867 = vxpose.xlu0.c.b16.cont [7/8] %v1574, 128
      %1868 = vxpose.xlu0.c.b16.end [8/8] %v1578, 128
      %v1869 = vpop.trf.xlu0
      %v1870 = vpop.trf.xlu0
      %v1871 = vpop.trf.xlu0
      %v1872 = vpop.trf.xlu0
      %v1873 = vpop.trf.xlu0
      %v1874 = vpop.trf.xlu0
      %v1875 = vpop.trf.xlu0
      %v1876 = vpop.trf.xlu0
      %1877 = vxpose.xlu0.c.b16.start [1/8] %v1551, 128
      %1878 = vxpose.xlu0.c.b16.cont [2/8] %v1555, 128
      %1879 = vxpose.xlu0.c.b16.cont [3/8] %v1559, 128
      %1880 = vxpose.xlu0.c.b16.cont [4/8] %v1563, 128
      %1881 = vxpose.xlu0.c.b16.cont [5/8] %v1567, 128
      %1882 = vxpose.xlu0.c.b16.cont [6/8] %v1571, 128
      %1883 = vxpose.xlu0.c.b16.cont [7/8] %v1575, 128
      %1884 = vxpose.xlu0.c.b16.end [8/8] %v1579, 128
      %v1885 = vpop.trf.xlu0
      %v1886 = vpop.trf.xlu0
      %v1887 = vpop.trf.xlu0
      %v1888 = vpop.trf.xlu0
      %v1889 = vpop.trf.xlu0
      %v1890 = vpop.trf.xlu0
      %v1891 = vpop.trf.xlu0
      %v1892 = vpop.trf.xlu0
      %1893 = vxpose.xlu0.c.b16.start [1/8] %v1552, 128
      %1894 = vxpose.xlu0.c.b16.cont [2/8] %v1556, 128
      %1895 = vxpose.xlu0.c.b16.cont [3/8] %v1560, 128
      %1896 = vxpose.xlu0.c.b16.cont [4/8] %v1564, 128
      %1897 = vxpose.xlu0.c.b16.cont [5/8] %v1568, 128
      %1898 = vxpose.xlu0.c.b16.cont [6/8] %v1572, 128
      %1899 = vxpose.xlu0.c.b16.cont [7/8] %v1576, 128
      %1900 = vxpose.xlu0.c.b16.end [8/8] %v1580, 128
      %v1901 = vpop.trf.xlu0
      %v1902 = vpop.trf.xlu0
      %v1903 = vpop.trf.xlu0
      %v1904 = vpop.trf.xlu0
      %v1905 = vpop.trf.xlu0
      %v1906 = vpop.trf.xlu0
      %v1907 = vpop.trf.xlu0
      %v1908 = vpop.trf.xlu0
      %1909 = vxpose.xlu0.c.b16.start [1/8] %v1581, 128
      %1910 = vxpose.xlu0.c.b16.cont [2/8] %v1585, 128
      %1911 = vxpose.xlu0.c.b16.cont [3/8] %v1589, 128
      %1912 = vxpose.xlu0.c.b16.cont [4/8] %v1593, 128
      %1913 = vxpose.xlu0.c.b16.cont [5/8] %v1597, 128
      %1914 = vxpose.xlu0.c.b16.cont [6/8] %v1601, 128
      %1915 = vxpose.xlu0.c.b16.cont [7/8] %v1605, 128
      %1916 = vxpose.xlu0.c.b16.end [8/8] %v1609, 128
      %v1917 = vpop.trf.xlu0
      %v1918 = vpop.trf.xlu0
      %v1919 = vpop.trf.xlu0
      %v1920 = vpop.trf.xlu0
      %v1921 = vpop.trf.xlu0
      %v1922 = vpop.trf.xlu0
      %v1923 = vpop.trf.xlu0
      %v1924 = vpop.trf.xlu0
      %1925 = vxpose.xlu0.c.b16.start [1/8] %v1582, 128
      %1926 = vxpose.xlu0.c.b16.cont [2/8] %v1586, 128
      %1927 = vxpose.xlu0.c.b16.cont [3/8] %v1590, 128
      %1928 = vxpose.xlu0.c.b16.cont [4/8] %v1594, 128
      %1929 = vxpose.xlu0.c.b16.cont [5/8] %v1598, 128
      %1930 = vxpose.xlu0.c.b16.cont [6/8] %v1602, 128
      %1931 = vxpose.xlu0.c.b16.cont [7/8] %v1606, 128
      %1932 = vxpose.xlu0.c.b16.end [8/8] %v1610, 128
      %v1933 = vpop.trf.xlu0
      %v1934 = vpop.trf.xlu0
      %v1935 = vpop.trf.xlu0
      %v1936 = vpop.trf.xlu0
      %v1937 = vpop.trf.xlu0
      %v1938 = vpop.trf.xlu0
      %v1939 = vpop.trf.xlu0
      %v1940 = vpop.trf.xlu0
      %1941 = vxpose.xlu0.c.b16.start [1/8] %v1583, 128
      %1942 = vxpose.xlu0.c.b16.cont [2/8] %v1587, 128
      %1943 = vxpose.xlu0.c.b16.cont [3/8] %v1591, 128
      %1944 = vxpose.xlu0.c.b16.cont [4/8] %v1595, 128
      %1945 = vxpose.xlu0.c.b16.cont [5/8] %v1599, 128
      %1946 = vxpose.xlu0.c.b16.cont [6/8] %v1603, 128
      %1947 = vxpose.xlu0.c.b16.cont [7/8] %v1607, 128
      %1948 = vxpose.xlu0.c.b16.end [8/8] %v1611, 128
      %v1949 = vpop.trf.xlu0
      %v1950 = vpop.trf.xlu0
      %v1951 = vpop.trf.xlu0
      %v1952 = vpop.trf.xlu0
      %v1953 = vpop.trf.xlu0
      %v1954 = vpop.trf.xlu0
      %v1955 = vpop.trf.xlu0
      %v1956 = vpop.trf.xlu0
      %1957 = vxpose.xlu0.c.b16.start [1/8] %v1584, 128
      %1958 = vxpose.xlu0.c.b16.cont [2/8] %v1588, 128
      %1959 = vxpose.xlu0.c.b16.cont [3/8] %v1592, 128
      %1960 = vxpose.xlu0.c.b16.cont [4/8] %v1596, 128
      %1961 = vxpose.xlu0.c.b16.cont [5/8] %v1600, 128
      %1962 = vxpose.xlu0.c.b16.cont [6/8] %v1604, 128
      %1963 = vxpose.xlu0.c.b16.cont [7/8] %v1608, 128
      %1964 = vxpose.xlu0.c.b16.end [8/8] %v1612, 128
      %v1965 = vpop.trf.xlu0
      %v1966 = vpop.trf.xlu0
      %v1967 = vpop.trf.xlu0
      %v1968 = vpop.trf.xlu0
      %v1969 = vpop.trf.xlu0
      %v1970 = vpop.trf.xlu0
      %v1971 = vpop.trf.xlu0
      %v1972 = vpop.trf.xlu0
      %1973 = vxpose.xlu0.c.b16.start [1/8] %v1613, 128
      %1974 = vxpose.xlu0.c.b16.cont [2/8] %v1617, 128
      %1975 = vxpose.xlu0.c.b16.cont [3/8] %v1621, 128
      %1976 = vxpose.xlu0.c.b16.cont [4/8] %v1625, 128
      %1977 = vxpose.xlu0.c.b16.cont [5/8] %v1629, 128
      %1978 = vxpose.xlu0.c.b16.cont [6/8] %v1633, 128
      %1979 = vxpose.xlu0.c.b16.cont [7/8] %v1637, 128
      %1980 = vxpose.xlu0.c.b16.end [8/8] %v1641, 128
      %v1981 = vpop.trf.xlu0
      %v1982 = vpop.trf.xlu0
      %v1983 = vpop.trf.xlu0
      %v1984 = vpop.trf.xlu0
      %v1985 = vpop.trf.xlu0
      %v1986 = vpop.trf.xlu0
      %v1987 = vpop.trf.xlu0
      %v1988 = vpop.trf.xlu0
      %1989 = vxpose.xlu0.c.b16.start [1/8] %v1614, 128
      %1990 = vxpose.xlu0.c.b16.cont [2/8] %v1618, 128
      %1991 = vxpose.xlu0.c.b16.cont [3/8] %v1622, 128
      %1992 = vxpose.xlu0.c.b16.cont [4/8] %v1626, 128
      %1993 = vxpose.xlu0.c.b16.cont [5/8] %v1630, 128
      %1994 = vxpose.xlu0.c.b16.cont [6/8] %v1634, 128
      %1995 = vxpose.xlu0.c.b16.cont [7/8] %v1638, 128
      %1996 = vxpose.xlu0.c.b16.end [8/8] %v1642, 128
      %v1997 = vpop.trf.xlu0
      %v1998 = vpop.trf.xlu0
      %v1999 = vpop.trf.xlu0
      %v2000 = vpop.trf.xlu0
      %v2001 = vpop.trf.xlu0
      %v2002 = vpop.trf.xlu0
      %v2003 = vpop.trf.xlu0
      %v2004 = vpop.trf.xlu0
      %2005 = vxpose.xlu0.c.b16.start [1/8] %v1615, 128
      %2006 = vxpose.xlu0.c.b16.cont [2/8] %v1619, 128
      %2007 = vxpose.xlu0.c.b16.cont [3/8] %v1623, 128
      %2008 = vxpose.xlu0.c.b16.cont [4/8] %v1627, 128
      %2009 = vxpose.xlu0.c.b16.cont [5/8] %v1631, 128
      %2010 = vxpose.xlu0.c.b16.cont [6/8] %v1635, 128
      %2011 = vxpose.xlu0.c.b16.cont [7/8] %v1639, 128
      %2012 = vxpose.xlu0.c.b16.end [8/8] %v1643, 128
      %v2013 = vpop.trf.xlu0
      %v2014 = vpop.trf.xlu0
      %v2015 = vpop.trf.xlu0
      %v2016 = vpop.trf.xlu0
      %v2017 = vpop.trf.xlu0
      %v2018 = vpop.trf.xlu0
      %v2019 = vpop.trf.xlu0
      %v2020 = vpop.trf.xlu0
      %2021 = vxpose.xlu0.c.b16.start [1/8] %v1616, 128
      %2022 = vxpose.xlu0.c.b16.cont [2/8] %v1620, 128
      %2023 = vxpose.xlu0.c.b16.cont [3/8] %v1624, 128
      %2024 = vxpose.xlu0.c.b16.cont [4/8] %v1628, 128
      %2025 = vxpose.xlu0.c.b16.cont [5/8] %v1632, 128
      %2026 = vxpose.xlu0.c.b16.cont [6/8] %v1636, 128
      %2027 = vxpose.xlu0.c.b16.cont [7/8] %v1640, 128
      %2028 = vxpose.xlu0.c.b16.end [8/8] %v1644, 128
      %v2029 = vpop.trf.xlu0
      %v2030 = vpop.trf.xlu0
      %v2031 = vpop.trf.xlu0
      %v2032 = vpop.trf.xlu0
      %v2033 = vpop.trf.xlu0
      %v2034 = vpop.trf.xlu0
      %v2035 = vpop.trf.xlu0
      %v2036 = vpop.trf.xlu0
      %2037 = vxpose.xlu0.c.b16.start [1/8] %v1645, 128
      %2038 = vxpose.xlu0.c.b16.cont [2/8] 0, 128
      %2039 = vxpose.xlu0.c.b16.cont [3/8] 0, 128
      %2040 = vxpose.xlu0.c.b16.cont [4/8] 0, 128
      %2041 = vxpose.xlu0.c.b16.cont [5/8] 0, 128
      %2042 = vxpose.xlu0.c.b16.cont [6/8] 0, 128
      %2043 = vxpose.xlu0.c.b16.cont [7/8] 0, 128
      %2044 = vxpose.xlu0.c.b16.end [8/8] 0, 128
      %v2045 = vpop.trf.xlu0
      %v2046 = vpop.trf.xlu0
      %v2047 = vpop.trf.xlu0
      %v2048 = vpop.trf.xlu0
      %v2049 = vpop.trf.xlu0
      %v2050 = vpop.trf.xlu0
      %v2051 = vpop.trf.xlu0
      %v2052 = vpop.trf.xlu0
      %2053 = vxpose.xlu0.c.b16.start [1/8] %v1646, 128
      %2054 = vxpose.xlu0.c.b16.cont [2/8] 0, 128
      %2055 = vxpose.xlu0.c.b16.cont [3/8] 0, 128
      %2056 = vxpose.xlu0.c.b16.cont [4/8] 0, 128
      %2057 = vxpose.xlu0.c.b16.cont [5/8] 0, 128
      %2058 = vxpose.xlu0.c.b16.cont [6/8] 0, 128
      %2059 = vxpose.xlu0.c.b16.cont [7/8] 0, 128
      %2060 = vxpose.xlu0.c.b16.end [8/8] 0, 128
      %v2061 = vpop.trf.xlu0
      %v2062 = vpop.trf.xlu0
      %v2063 = vpop.trf.xlu0
      %v2064 = vpop.trf.xlu0
      %v2065 = vpop.trf.xlu0
      %v2066 = vpop.trf.xlu0
      %v2067 = vpop.trf.xlu0
      %v2068 = vpop.trf.xlu0
      %2069 = vxpose.xlu0.c.b16.start [1/8] %v1647, 128
      %2070 = vxpose.xlu0.c.b16.cont [2/8] 0, 128
      %2071 = vxpose.xlu0.c.b16.cont [3/8] 0, 128
      %2072 = vxpose.xlu0.c.b16.cont [4/8] 0, 128
      %2073 = vxpose.xlu0.c.b16.cont [5/8] 0, 128
      %2074 = vxpose.xlu0.c.b16.cont [6/8] 0, 128
      %2075 = vxpose.xlu0.c.b16.cont [7/8] 0, 128
      %2076 = vxpose.xlu0.c.b16.end [8/8] 0, 128
      %v2077 = vpop.trf.xlu0
      %v2078 = vpop.trf.xlu0
      %v2079 = vpop.trf.xlu0
      %v2080 = vpop.trf.xlu0
      %v2081 = vpop.trf.xlu0
      %v2082 = vpop.trf.xlu0
      %v2083 = vpop.trf.xlu0
      %v2084 = vpop.trf.xlu0
      %2085 = vxpose.xlu0.c.b16.start [1/8] %v1648, 128
      %2086 = vxpose.xlu0.c.b16.cont [2/8] 0, 128
      %2087 = vxpose.xlu0.c.b16.cont [3/8] 0, 128
      %2088 = vxpose.xlu0.c.b16.cont [4/8] 0, 128
      %2089 = vxpose.xlu0.c.b16.cont [5/8] 0, 128
      %2090 = vxpose.xlu0.c.b16.cont [6/8] 0, 128
      %2091 = vxpose.xlu0.c.b16.cont [7/8] 0, 128
      %2092 = vxpose.xlu0.c.b16.end [8/8] 0, 128
      %v2093 = vpop.trf.xlu0
      %v2094 = vpop.trf.xlu0
      %v2095 = vpop.trf.xlu0
      %v2096 = vpop.trf.xlu0
      %v2097 = vpop.trf.xlu0
      %v2098 = vpop.trf.xlu0
      %v2099 = vpop.trf.xlu0
      %v2100 = vpop.trf.xlu0
      %vm2101 = vcmask 23552
      %v2103 = vsel %vm2101, %v2045, 0
      %v2106 = vsel %vm2101, %v2046, 0
      %v2109 = vsel %vm2101, %v2047, 0
      %v2112 = vsel %vm2101, %v2048, 0
      %v2115 = vsel %vm2101, %v2049, 0
      %v2118 = vsel %vm2101, %v2050, 0
      %v2121 = vsel %vm2101, %v2051, 0
      %v2124 = vsel %vm2101, %v2052, 0
      %v2127 = vsel %vm2101, %v2061, 0
      %v2130 = vsel %vm2101, %v2062, 0
      %v2133 = vsel %vm2101, %v2063, 0
      %v2136 = vsel %vm2101, %v2064, 0
      %v2139 = vsel %vm2101, %v2065, 0
      %v2142 = vsel %vm2101, %v2066, 0
      %v2145 = vsel %vm2101, %v2067, 0
      %v2148 = vsel %vm2101, %v2068, 0
      %v2151 = vsel %vm2101, %v2077, 0
      %v2154 = vsel %vm2101, %v2078, 0
      %v2157 = vsel %vm2101, %v2079, 0
      %v2160 = vsel %vm2101, %v2080, 0
      %v2163 = vsel %vm2101, %v2081, 0
      %v2166 = vsel %vm2101, %v2082, 0
      %v2169 = vsel %vm2101, %v2083, 0
      %v2172 = vsel %vm2101, %v2084, 0
      %v2175 = vsel %vm2101, %v2093, 0
      %v2178 = vsel %vm2101, %v2094, 0
      %v2181 = vsel %vm2101, %v2095, 0
      %v2184 = vsel %vm2101, %v2096, 0
      %v2187 = vsel %vm2101, %v2097, 0
      %v2190 = vsel %vm2101, %v2098, 0
      %v2193 = vsel %vm2101, %v2099, 0
      %v2196 = vsel %vm2101, %v2100, 0
      %vm2198 = vcmask 1040384
      %vm2199 = vcmask 1041408
      %v2200 = vsel %vm2198, 4294967295, 65535
      %v2201 = vsel %vm2199, %v2200, 0
      %v2203 = vand.u32 %v610, %v2201
      %v2206 = vand.u32 %v611, %v2201
      %v2209 = vand.u32 %v612, %v2201
      %2211 = vmatprep.subr.bf16.mxu0 %v515
      %2212 = vmatpush1.bf16.msra.mxu0 %v514
      %2213 = vmatprep.subr.bf16.mxu0 %v518
      %2214 = vmatpush1.bf16.msra.mxu0 %v517
      %2215 = vmatprep.subr.bf16.mxu0 %v521
      %2216 = vmatpush1.bf16.msra.mxu0 %v520
      %2217 = vmatprep.subr.bf16.mxu0 %v524
      %2218 = vmatpush1.bf16.msra.mxu0 %v523
      %2219 = vmatprep.subr.bf16.mxu0 %v527
      %2220 = vmatpush1.bf16.msra.mxu0 %v526
      %2221 = vmatprep.subr.bf16.mxu0 %v530
      %2222 = vmatpush1.bf16.msra.mxu0 %v529
      %2223 = vmatprep.subr.bf16.mxu0 %v533
      %2224 = vmatpush1.bf16.msra.mxu0 %v532
      %2225 = vmatprep.subr.bf16.mxu0 %v536
      %2226 = vmatpush1.bf16.msra.mxu0 %v535
      %2227 = vmatprep.subr.bf16.mxu0 %v539
      %2228 = vmatpush1.bf16.msra.mxu0 %v538
      %2229 = vmatprep.subr.bf16.mxu0 %v542
      %2230 = vmatpush1.bf16.msra.mxu0 %v541
      %2231 = vmatprep.subr.bf16.mxu0 %v545
      %2232 = vmatpush1.bf16.msra.mxu0 %v544
      %2233 = vmatprep.subr.bf16.mxu0 %v548
      %2234 = vmatpush1.bf16.msra.mxu0 %v547
      %2235 = vmatprep.subr.bf16.mxu0 %v551
      %2236 = vmatpush1.bf16.msra.mxu0 %v550
      %2237 = vmatprep.subr.bf16.mxu0 %v554
      %2238 = vmatpush1.bf16.msra.mxu0 %v553
      %2239 = vmatprep.subr.bf16.mxu0 %v557
      %2240 = vmatpush1.bf16.msra.mxu0 %v556
      %2241 = vmatprep.subr.bf16.mxu0 %v560
      %2242 = vmatpush1.bf16.msra.mxu0 %v559
      %2243 = vmatprep.mubr.bf16.mxu0 %v1853
      %2244 = vmatmul.mubr.bf16.gmra.mrb[0].mxu0 %v1789
      %v2245 = vpop.f32.mrb[0].mxu0
      %v2246 = vadd.f32 %v810, %v2245
      %v2247 = vpop.f32.mrb[0].mxu0
      %v2248 = vadd.f32 %v810, %v2247
      %v2249 = vpop.f32.mrb[0].mxu0
      %v2250 = vadd.f32 %v815, %v2249
      %v2251 = vpop.f32.mrb[0].mxu0
      %v2252 = vadd.f32 %v815, %v2251
      %2253 = vmatprep.mubr.bf16.mxu0 %v1854
      %2254 = vmatmul.mubr.bf16.gmra.mrb[0].mxu0 %v1790
      %v2255 = vpop.f32.mrb[0].mxu0
      %v2256 = vadd.f32 %v820, %v2255
      %v2257 = vpop.f32.mrb[0].mxu0
      %v2258 = vadd.f32 %v820, %v2257
      %v2259 = vpop.f32.mrb[0].mxu0
      %v2260 = vadd.f32 %v825, %v2259
      %v2261 = vpop.f32.mrb[0].mxu0
      %v2262 = vadd.f32 %v825, %v2261
      %2263 = vmatprep.mubr.bf16.mxu0 %v1855
      %2264 = vmatmul.mubr.bf16.gmra.mrb[0].mxu0 %v1791
      %v2265 = vpop.f32.mrb[0].mxu0
      %v2266 = vadd.f32 %v830, %v2265
      %v2267 = vpop.f32.mrb[0].mxu0
      %v2268 = vadd.f32 %v830, %v2267
      %v2269 = vpop.f32.mrb[0].mxu0
      %v2270 = vadd.f32 %v835, %v2269
      %v2271 = vpop.f32.mrb[0].mxu0
      %v2272 = vadd.f32 %v835, %v2271
      %2273 = vmatprep.mubr.bf16.mxu0 %v1856
      %2274 = vmatmul.mubr.bf16.gmra.mrb[0].mxu0 %v1792
      %v2275 = vpop.f32.mrb[0].mxu0
      %v2276 = vadd.f32 %v840, %v2275
      %v2277 = vpop.f32.mrb[0].mxu0
      %v2278 = vadd.f32 %v840, %v2277
      %v2279 = vpop.f32.mrb[0].mxu0
      %v2280 = vadd.f32 %v845, %v2279
      %v2281 = vpop.f32.mrb[0].mxu0
      %v2282 = vadd.f32 %v845, %v2281
      %2283 = vmatprep.mubr.bf16.mxu0 %v1857
      %2284 = vmatmul.mubr.bf16.gmra.mrb[0].mxu0 %v1793
      %v2285 = vpop.f32.mrb[0].mxu0
      %v2286 = vadd.f32 %v850, %v2285
      %v2287 = vpop.f32.mrb[0].mxu0
      %v2288 = vadd.f32 %v850, %v2287
      %v2289 = vpop.f32.mrb[0].mxu0
      %v2290 = vadd.f32 %v855, %v2289
      %v2291 = vpop.f32.mrb[0].mxu0
      %v2292 = vadd.f32 %v855, %v2291
      %2293 = vmatprep.mubr.bf16.mxu0 %v1858
      %2294 = vmatmul.mubr.bf16.gmra.mrb[0].mxu0 %v1794
      %v2295 = vpop.f32.mrb[0].mxu0
      %v2296 = vadd.f32 %v860, %v2295
      %v2297 = vpop.f32.mrb[0].mxu0
      %v2298 = vadd.f32 %v860, %v2297
      %v2299 = vpop.f32.mrb[0].mxu0
      %v2300 = vadd.f32 %v865, %v2299
      %v2301 = vpop.f32.mrb[0].mxu0
      %v2302 = vadd.f32 %v865, %v2301
      %2303 = vmatprep.mubr.bf16.mxu0 %v1859
      %2304 = vmatmul.mubr.bf16.gmra.mrb[0].mxu0 %v1795
      %v2305 = vpop.f32.mrb[0].mxu0
      %v2306 = vadd.f32 %v870, %v2305
      %v2307 = vpop.f32.mrb[0].mxu0
      %v2308 = vadd.f32 %v870, %v2307
      %v2309 = vpop.f32.mrb[0].mxu0
      %v2310 = vadd.f32 %v875, %v2309
      %v2311 = vpop.f32.mrb[0].mxu0
      %v2312 = vadd.f32 %v875, %v2311
      %2313 = vmatprep.mubr.bf16.mxu0 %v1860
      %2314 = vmatmul.mubr.bf16.gmra.mrb[0].mxu0 %v1796
      %v2315 = vpop.f32.mrb[0].mxu0
      %v2316 = vadd.f32 %v880, %v2315
      %v2317 = vpop.f32.mrb[0].mxu0
      %v2318 = vadd.f32 %v880, %v2317
      %v2319 = vpop.f32.mrb[0].mxu0
      %v2320 = vadd.f32 %v885, %v2319
      %v2321 = vpop.f32.mrb[0].mxu0
      %v2322 = vadd.f32 %v885, %v2321
      %2323 = vmatprep.mubr.bf16.mxu0 %v1869
      %2324 = vmatmul.mubr.bf16.gmra.mrb[0].mxu0 %v1805
      %v2325 = vpop.f32.mrb[0].mxu0
      %v2326 = vadd.f32 %v890, %v2325
      %v2327 = vpop.f32.mrb[0].mxu0
      %v2328 = vadd.f32 %v890, %v2327
      %v2329 = vpop.f32.mrb[0].mxu0
      %v2330 = vadd.f32 %v895, %v2329
      %v2331 = vpop.f32.mrb[0].mxu0
      %v2332 = vadd.f32 %v895, %v2331
      %2333 = vmatprep.mubr.bf16.mxu0 %v1870
      %2334 = vmatmul.mubr.bf16.gmra.mrb[0].mxu0 %v1806
      %v2335 = vpop.f32.mrb[0].mxu0
      %v2336 = vadd.f32 %v900, %v2335
      %v2337 = vpop.f32.mrb[0].mxu0
      %v2338 = vadd.f32 %v900, %v2337
      %v2339 = vpop.f32.mrb[0].mxu0
      %v2340 = vadd.f32 %v905, %v2339
      %v2341 = vpop.f32.mrb[0].mxu0
      %v2342 = vadd.f32 %v905, %v2341
      %2343 = vmatprep.mubr.bf16.mxu0 %v1871
      %2344 = vmatmul.mubr.bf16.gmra.mrb[0].mxu0 %v1807
      %v2345 = vpop.f32.mrb[0].mxu0
      %v2346 = vadd.f32 %v910, %v2345
      %v2347 = vpop.f32.mrb[0].mxu0
      %v2348 = vadd.f32 %v910, %v2347
      %v2349 = vpop.f32.mrb[0].mxu0
      %v2350 = vadd.f32 %v915, %v2349
      %v2351 = vpop.f32.mrb[0].mxu0
      %v2352 = vadd.f32 %v915, %v2351
      %2353 = vmatprep.mubr.bf16.mxu0 %v1872
      %2354 = vmatmul.mubr.bf16.gmra.mrb[0].mxu0 %v1808
      %v2355 = vpop.f32.mrb[0].mxu0
      %v2356 = vadd.f32 %v920, %v2355
      %v2357 = vpop.f32.mrb[0].mxu0
      %v2358 = vadd.f32 %v920, %v2357
      %v2359 = vpop.f32.mrb[0].mxu0
      %v2360 = vadd.f32 %v925, %v2359
      %v2361 = vpop.f32.mrb[0].mxu0
      %v2362 = vadd.f32 %v925, %v2361
      %2363 = vmatprep.mubr.bf16.mxu0 %v1873
      %2364 = vmatmul.mubr.bf16.gmra.mrb[0].mxu0 %v1809
      %v2365 = vpop.f32.mrb[0].mxu0
      %v2366 = vadd.f32 %v930, %v2365
      %v2367 = vpop.f32.mrb[0].mxu0
      %v2368 = vadd.f32 %v930, %v2367
      %v2369 = vpop.f32.mrb[0].mxu0
      %v2370 = vadd.f32 %v935, %v2369
      %v2371 = vpop.f32.mrb[0].mxu0
      %v2372 = vadd.f32 %v935, %v2371
      %2373 = vmatprep.mubr.bf16.mxu0 %v1874
      %2374 = vmatmul.mubr.bf16.gmra.mrb[0].mxu0 %v1810
      %v2375 = vpop.f32.mrb[0].mxu0
      %v2376 = vadd.f32 %v940, %v2375
      %v2377 = vpop.f32.mrb[0].mxu0
      %v2378 = vadd.f32 %v940, %v2377
      %v2379 = vpop.f32.mrb[0].mxu0
      %v2380 = vadd.f32 %v945, %v2379
      %v2381 = vpop.f32.mrb[0].mxu0
      %v2382 = vadd.f32 %v945, %v2381
      %2383 = vmatprep.mubr.bf16.mxu0 %v1875
      %2384 = vmatmul.mubr.bf16.gmra.mrb[0].mxu0 %v1811
      %v2385 = vpop.f32.mrb[0].mxu0
      %v2386 = vadd.f32 %v950, %v2385
      %v2387 = vpop.f32.mrb[0].mxu0
      %v2388 = vadd.f32 %v950, %v2387
      %v2389 = vpop.f32.mrb[0].mxu0
      %v2390 = vadd.f32 %v955, %v2389
      %v2391 = vpop.f32.mrb[0].mxu0
      %v2392 = vadd.f32 %v955, %v2391
      %2393 = vmatprep.mubr.bf16.mxu0 %v1876
      %2394 = vmatmul.mubr.bf16.gmra.mrb[0].mxu0 %v1812
      %v2395 = vpop.f32.mrb[0].mxu0
      %v2396 = vadd.f32 %v960, %v2395
      %v2397 = vpop.f32.mrb[0].mxu0
      %v2398 = vadd.f32 %v960, %v2397
      %v2399 = vpop.f32.mrb[0].mxu0
      %v2400 = vadd.f32 %v965, %v2399
      %v2401 = vpop.f32.mrb[0].mxu0
      %v2402 = vadd.f32 %v965, %v2401
      %2403 = vmatprep.mubr.bf16.mxu0 %v1885
      %2404 = vmatmul.mubr.bf16.gmra.mrb[0].mxu0 %v1821
      %v2405 = vpop.f32.mrb[0].mxu0
      %v2406 = vadd.f32 %v970, %v2405
      %v2407 = vpop.f32.mrb[0].mxu0
      %v2408 = vadd.f32 %v970, %v2407
      %v2409 = vpop.f32.mrb[0].mxu0
      %v2410 = vadd.f32 %v975, %v2409
      %v2411 = vpop.f32.mrb[0].mxu0
      %v2412 = vadd.f32 %v975, %v2411
      %2413 = vmatprep.mubr.bf16.mxu0 %v1886
      %2414 = vmatmul.mubr.bf16.gmra.mrb[0].mxu0 %v1822
      %v2415 = vpop.f32.mrb[0].mxu0
      %v2416 = vadd.f32 %v980, %v2415
      %v2417 = vpop.f32.mrb[0].mxu0
      %v2418 = vadd.f32 %v980, %v2417
      %v2419 = vpop.f32.mrb[0].mxu0
      %v2420 = vadd.f32 %v985, %v2419
      %v2421 = vpop.f32.mrb[0].mxu0
      %v2422 = vadd.f32 %v985, %v2421
      %2423 = vmatprep.mubr.bf16.mxu0 %v1887
      %2424 = vmatmul.mubr.bf16.gmra.mrb[0].mxu0 %v1823
      %v2425 = vpop.f32.mrb[0].mxu0
      %v2426 = vadd.f32 %v990, %v2425
      %v2427 = vpop.f32.mrb[0].mxu0
      %v2428 = vadd.f32 %v990, %v2427
      %v2429 = vpop.f32.mrb[0].mxu0
      %v2430 = vadd.f32 %v995, %v2429
      %v2431 = vpop.f32.mrb[0].mxu0
      %v2432 = vadd.f32 %v995, %v2431
      %2433 = vmatprep.mubr.bf16.mxu0 %v1888
      %2434 = vmatmul.mubr.bf16.gmra.mrb[0].mxu0 %v1824
      %v2435 = vpop.f32.mrb[0].mxu0
      %v2436 = vadd.f32 %v1000, %v2435
      %v2437 = vpop.f32.mrb[0].mxu0
      %v2438 = vadd.f32 %v1000, %v2437
      %v2439 = vpop.f32.mrb[0].mxu0
      %v2440 = vadd.f32 %v1005, %v2439
      %v2441 = vpop.f32.mrb[0].mxu0
      %v2442 = vadd.f32 %v1005, %v2441
      %2443 = vmatprep.mubr.bf16.mxu0 %v1889
      %2444 = vmatmul.mubr.bf16.gmra.mrb[0].mxu0 %v1825
      %v2445 = vpop.f32.mrb[0].mxu0
      %v2446 = vadd.f32 %v1010, %v2445
      %v2447 = vpop.f32.mrb[0].mxu0
      %v2448 = vadd.f32 %v1010, %v2447
      %v2449 = vpop.f32.mrb[0].mxu0
      %v2450 = vadd.f32 %v1015, %v2449
      %v2451 = vpop.f32.mrb[0].mxu0
      %v2452 = vadd.f32 %v1015, %v2451
      %2453 = vmatprep.mubr.bf16.mxu0 %v1890
      %2454 = vmatmul.mubr.bf16.gmra.mrb[0].mxu0 %v1826
      %v2455 = vpop.f32.mrb[0].mxu0
      %v2456 = vadd.f32 %v1020, %v2455
      %v2457 = vpop.f32.mrb[0].mxu0
      %v2458 = vadd.f32 %v1020, %v2457
      %v2459 = vpop.f32.mrb[0].mxu0
      %v2460 = vadd.f32 %v1025, %v2459
      %v2461 = vpop.f32.mrb[0].mxu0
      %v2462 = vadd.f32 %v1025, %v2461
      %2463 = vmatprep.mubr.bf16.mxu0 %v1891
      %2464 = vmatmul.mubr.bf16.gmra.mrb[0].mxu0 %v1827
      %v2465 = vpop.f32.mrb[0].mxu0
      %v2466 = vadd.f32 %v1030, %v2465
      %v2467 = vpop.f32.mrb[0].mxu0
      %v2468 = vadd.f32 %v1030, %v2467
      %v2469 = vpop.f32.mrb[0].mxu0
      %v2470 = vadd.f32 %v1035, %v2469
      %v2471 = vpop.f32.mrb[0].mxu0
      %v2472 = vadd.f32 %v1035, %v2471
      %2473 = vmatprep.mubr.bf16.mxu0 %v1892
      %2474 = vmatmul.mubr.bf16.gmra.mrb[0].mxu0 %v1828
      %v2475 = vpop.f32.mrb[0].mxu0
      %v2476 = vadd.f32 %v1040, %v2475
      %v2477 = vpop.f32.mrb[0].mxu0
      %v2478 = vadd.f32 %v1040, %v2477
      %v2479 = vpop.f32.mrb[0].mxu0
      %v2480 = vadd.f32 %v1045, %v2479
      %v2481 = vpop.f32.mrb[0].mxu0
      %v2482 = vadd.f32 %v1045, %v2481
      %2483 = vmatprep.mubr.bf16.mxu0 %v1901
      %2484 = vmatmul.mubr.bf16.gmra.mrb[0].mxu0 %v1837
      %v2485 = vpop.f32.mrb[0].mxu0
      %v2486 = vadd.f32 %v1050, %v2485
      %v2487 = vpop.f32.mrb[0].mxu0
      %v2488 = vadd.f32 %v1050, %v2487
      %v2489 = vpop.f32.mrb[0].mxu0
      %v2490 = vadd.f32 %v1055, %v2489
      %v2491 = vpop.f32.mrb[0].mxu0
      %v2492 = vadd.f32 %v1055, %v2491
      %2493 = vmatprep.mubr.bf16.mxu0 %v1902
      %2494 = vmatmul.mubr.bf16.gmra.mrb[0].mxu0 %v1838
      %v2495 = vpop.f32.mrb[0].mxu0
      %v2496 = vadd.f32 %v1060, %v2495
      %v2497 = vpop.f32.mrb[0].mxu0
      %v2498 = vadd.f32 %v1060, %v2497
      %v2499 = vpop.f32.mrb[0].mxu0
      %v2500 = vadd.f32 %v1065, %v2499
      %v2501 = vpop.f32.mrb[0].mxu0
      %v2502 = vadd.f32 %v1065, %v2501
      %2503 = vmatprep.mubr.bf16.mxu0 %v1903
      %2504 = vmatmul.mubr.bf16.gmra.mrb[0].mxu0 %v1839
      %v2505 = vpop.f32.mrb[0].mxu0
      %v2506 = vadd.f32 %v1070, %v2505
      %v2507 = vpop.f32.mrb[0].mxu0
      %v2508 = vadd.f32 %v1070, %v2507
      %v2509 = vpop.f32.mrb[0].mxu0
      %v2510 = vadd.f32 %v1075, %v2509
      %v2511 = vpop.f32.mrb[0].mxu0
      %v2512 = vadd.f32 %v1075, %v2511
      %2513 = vmatprep.mubr.bf16.mxu0 %v1904
      %2514 = vmatmul.mubr.bf16.gmra.mrb[0].mxu0 %v1840
      %v2515 = vpop.f32.mrb[0].mxu0
      %v2516 = vadd.f32 %v1080, %v2515
      %v2517 = vpop.f32.mrb[0].mxu0
      %v2518 = vadd.f32 %v1080, %v2517
      %v2519 = vpop.f32.mrb[0].mxu0
      %v2520 = vadd.f32 %v1085, %v2519
      %v2521 = vpop.f32.mrb[0].mxu0
      %v2522 = vadd.f32 %v1085, %v2521
      %2523 = vmatprep.mubr.bf16.mxu0 %v1905
      %2524 = vmatmul.mubr.bf16.gmra.mrb[0].mxu0 %v1841
      %v2525 = vpop.f32.mrb[0].mxu0
      %v2526 = vadd.f32 %v1090, %v2525
      %v2527 = vpop.f32.mrb[0].mxu0
      %v2528 = vadd.f32 %v1090, %v2527
      %v2529 = vpop.f32.mrb[0].mxu0
      %v2530 = vadd.f32 %v1095, %v2529
      %v2531 = vpop.f32.mrb[0].mxu0
      %v2532 = vadd.f32 %v1095, %v2531
      %2533 = vmatprep.mubr.bf16.mxu0 %v1906
      %2534 = vmatmul.mubr.bf16.gmra.mrb[0].mxu0 %v1842
      %v2535 = vpop.f32.mrb[0].mxu0
      %v2536 = vadd.f32 %v1100, %v2535
      %v2537 = vpop.f32.mrb[0].mxu0
      %v2538 = vadd.f32 %v1100, %v2537
      %v2539 = vpop.f32.mrb[0].mxu0
      %v2540 = vadd.f32 %v1105, %v2539
      %v2541 = vpop.f32.mrb[0].mxu0
      %v2542 = vadd.f32 %v1105, %v2541
      %2543 = vmatprep.mubr.bf16.mxu0 %v1907
      %2544 = vmatmul.mubr.bf16.gmra.mrb[0].mxu0 %v1843
      %v2545 = vpop.f32.mrb[0].mxu0
      %v2546 = vadd.f32 %v1110, %v2545
      %v2547 = vpop.f32.mrb[0].mxu0
      %v2548 = vadd.f32 %v1110, %v2547
      %v2549 = vpop.f32.mrb[0].mxu0
      %v2550 = vadd.f32 %v1115, %v2549
      %v2551 = vpop.f32.mrb[0].mxu0
      %v2552 = vadd.f32 %v1115, %v2551
      %2553 = vmatprep.mubr.bf16.mxu0 %v1908
      %2554 = vmatmul.mubr.bf16.gmra.mrb[0].mxu0 %v1844
      %v2555 = vpop.f32.mrb[0].mxu0
      %v2556 = vadd.f32 %v1120, %v2555
      %v2557 = vpop.f32.mrb[0].mxu0
      %v2558 = vadd.f32 %v1120, %v2557
      %v2559 = vpop.f32.mrb[0].mxu0
      %v2560 = vadd.f32 %v1125, %v2559
      %v2561 = vpop.f32.mrb[0].mxu0
      %v2562 = vadd.f32 %v1125, %v2561
      %2563 = vdwg.mxu0
      %2564 = vmatprep.subr.bf16.mxu0 %v563
      %2565 = vmatpush1.bf16.msra.mxu0 %v562
      %2566 = vmatprep.subr.bf16.mxu0 %v566
      %2567 = vmatpush1.bf16.msra.mxu0 %v565
      %2568 = vmatprep.subr.bf16.mxu0 %v569
      %2569 = vmatpush1.bf16.msra.mxu0 %v568
      %2570 = vmatprep.subr.bf16.mxu0 %v572
      %2571 = vmatpush1.bf16.msra.mxu0 %v571
      %2572 = vmatprep.subr.bf16.mxu0 %v575
      %2573 = vmatpush1.bf16.msra.mxu0 %v574
      %2574 = vmatprep.subr.bf16.mxu0 %v578
      %2575 = vmatpush1.bf16.msra.mxu0 %v577
      %2576 = vmatprep.subr.bf16.mxu0 %v581
      %2577 = vmatpush1.bf16.msra.mxu0 %v580
      %2578 = vmatprep.subr.bf16.mxu0 %v584
      %2579 = vmatpush1.bf16.msra.mxu0 %v583
      %2580 = vmatprep.subr.bf16.mxu0 %v587
      %2581 = vmatpush1.bf16.msra.mxu0 %v586
      %2582 = vmatprep.subr.bf16.mxu0 %v590
      %2583 = vmatpush1.bf16.msra.mxu0 %v589
      %2584 = vmatprep.subr.bf16.mxu0 %v593
      %2585 = vmatpush1.bf16.msra.mxu0 %v592
      %2586 = vmatprep.subr.bf16.mxu0 %v596
      %2587 = vmatpush1.bf16.msra.mxu0 %v595
      %2588 = vmatprep.subr.bf16.mxu0 %v599
      %2589 = vmatpush1.bf16.msra.mxu0 %v598
      %2590 = vmatprep.subr.bf16.mxu0 %v602
      %2591 = vmatpush1.bf16.msra.mxu0 %v601
      %2592 = vmatprep.subr.bf16.mxu0 %v605
      %2593 = vmatpush1.bf16.msra.mxu0 %v604
      %2594 = vmatprep.subr.bf16.mxu0 %v608
      %2595 = vmatpush1.bf16.msra.mxu0 %v607
      %2596 = vmatprep.mubr.bf16.mxu0 %v1981
      %2597 = vmatmul.mubr.bf16.gmra.mrb[0].mxu0 %v1917
      %v2598 = vpop.f32.mrb[0].mxu0
      %v2599 = vadd.f32 %v2246, %v2598
      %v2600 = vpop.f32.mrb[0].mxu0
      %v2601 = vadd.f32 %v2248, %v2600
      %v2602 = vpop.f32.mrb[0].mxu0
      %v2603 = vadd.f32 %v2250, %v2602
      %v2604 = vpop.f32.mrb[0].mxu0
      %v2605 = vadd.f32 %v2252, %v2604
      %2606 = vmatprep.mubr.bf16.mxu0 %v1982
      %2607 = vmatmul.mubr.bf16.gmra.mrb[0].mxu0 %v1918
      %v2608 = vpop.f32.mrb[0].mxu0
      %v2609 = vadd.f32 %v2256, %v2608
      %v2610 = vpop.f32.mrb[0].mxu0
      %v2611 = vadd.f32 %v2258, %v2610
      %v2612 = vpop.f32.mrb[0].mxu0
      %v2613 = vadd.f32 %v2260, %v2612
      %v2614 = vpop.f32.mrb[0].mxu0
      %v2615 = vadd.f32 %v2262, %v2614
      %2616 = vmatprep.mubr.bf16.mxu0 %v1983
      %2617 = vmatmul.mubr.bf16.gmra.mrb[0].mxu0 %v1919
      %v2618 = vpop.f32.mrb[0].mxu0
      %v2619 = vadd.f32 %v2266, %v2618
      %v2620 = vpop.f32.mrb[0].mxu0
      %v2621 = vadd.f32 %v2268, %v2620
      %v2622 = vpop.f32.mrb[0].mxu0
      %v2623 = vadd.f32 %v2270, %v2622
      %v2624 = vpop.f32.mrb[0].mxu0
      %v2625 = vadd.f32 %v2272, %v2624
      %2626 = vmatprep.mubr.bf16.mxu0 %v1984
      %2627 = vmatmul.mubr.bf16.gmra.mrb[0].mxu0 %v1920
      %v2628 = vpop.f32.mrb[0].mxu0
      %v2629 = vadd.f32 %v2276, %v2628
      %v2630 = vpop.f32.mrb[0].mxu0
      %v2631 = vadd.f32 %v2278, %v2630
      %v2632 = vpop.f32.mrb[0].mxu0
      %v2633 = vadd.f32 %v2280, %v2632
      %v2634 = vpop.f32.mrb[0].mxu0
      %v2635 = vadd.f32 %v2282, %v2634
      %2636 = vmatprep.mubr.bf16.mxu0 %v1985
      %2637 = vmatmul.mubr.bf16.gmra.mrb[0].mxu0 %v1921
      %v2638 = vpop.f32.mrb[0].mxu0
      %v2639 = vadd.f32 %v2286, %v2638
      %v2640 = vpop.f32.mrb[0].mxu0
      %v2641 = vadd.f32 %v2288, %v2640
      %v2642 = vpop.f32.mrb[0].mxu0
      %v2643 = vadd.f32 %v2290, %v2642
      %v2644 = vpop.f32.mrb[0].mxu0
      %v2645 = vadd.f32 %v2292, %v2644
      %2646 = vmatprep.mubr.bf16.mxu0 %v1986
      %2647 = vmatmul.mubr.bf16.gmra.mrb[0].mxu0 %v1922
      %v2648 = vpop.f32.mrb[0].mxu0
      %v2649 = vadd.f32 %v2296, %v2648
      %v2650 = vpop.f32.mrb[0].mxu0
      %v2651 = vadd.f32 %v2298, %v2650
      %v2652 = vpop.f32.mrb[0].mxu0
      %v2653 = vadd.f32 %v2300, %v2652
      %v2654 = vpop.f32.mrb[0].mxu0
      %v2655 = vadd.f32 %v2302, %v2654
      %2656 = vmatprep.mubr.bf16.mxu0 %v1987
      %2657 = vmatmul.mubr.bf16.gmra.mrb[0].mxu0 %v1923
      %v2658 = vpop.f32.mrb[0].mxu0
      %v2659 = vadd.f32 %v2306, %v2658
      %v2660 = vpop.f32.mrb[0].mxu0
      %v2661 = vadd.f32 %v2308, %v2660
      %v2662 = vpop.f32.mrb[0].mxu0
      %v2663 = vadd.f32 %v2310, %v2662
      %v2664 = vpop.f32.mrb[0].mxu0
      %v2665 = vadd.f32 %v2312, %v2664
      %2666 = vmatprep.mubr.bf16.mxu0 %v1988
      %2667 = vmatmul.mubr.bf16.gmra.mrb[0].mxu0 %v1924
      %v2668 = vpop.f32.mrb[0].mxu0
      %v2669 = vadd.f32 %v2316, %v2668
      %v2670 = vpop.f32.mrb[0].mxu0
      %v2671 = vadd.f32 %v2318, %v2670
      %v2672 = vpop.f32.mrb[0].mxu0
      %v2673 = vadd.f32 %v2320, %v2672
      %v2674 = vpop.f32.mrb[0].mxu0
      %v2675 = vadd.f32 %v2322, %v2674
      %2676 = vmatprep.mubr.bf16.mxu0 %v1997
      %2677 = vmatmul.mubr.bf16.gmra.mrb[0].mxu0 %v1933
      %v2678 = vpop.f32.mrb[0].mxu0
      %v2679 = vadd.f32 %v2326, %v2678
      %v2680 = vpop.f32.mrb[0].mxu0
      %v2681 = vadd.f32 %v2328, %v2680
      %v2682 = vpop.f32.mrb[0].mxu0
      %v2683 = vadd.f32 %v2330, %v2682
      %v2684 = vpop.f32.mrb[0].mxu0
      %v2685 = vadd.f32 %v2332, %v2684
      %2686 = vmatprep.mubr.bf16.mxu0 %v1998
      %2687 = vmatmul.mubr.bf16.gmra.mrb[0].mxu0 %v1934
      %v2688 = vpop.f32.mrb[0].mxu0
      %v2689 = vadd.f32 %v2336, %v2688
      %v2690 = vpop.f32.mrb[0].mxu0
      %v2691 = vadd.f32 %v2338, %v2690
      %v2692 = vpop.f32.mrb[0].mxu0
      %v2693 = vadd.f32 %v2340, %v2692
      %v2694 = vpop.f32.mrb[0].mxu0
      %v2695 = vadd.f32 %v2342, %v2694
      %2696 = vmatprep.mubr.bf16.mxu0 %v1999
      %2697 = vmatmul.mubr.bf16.gmra.mrb[0].mxu0 %v1935
      %v2698 = vpop.f32.mrb[0].mxu0
      %v2699 = vadd.f32 %v2346, %v2698
      %v2700 = vpop.f32.mrb[0].mxu0
      %v2701 = vadd.f32 %v2348, %v2700
      %v2702 = vpop.f32.mrb[0].mxu0
      %v2703 = vadd.f32 %v2350, %v2702
      %v2704 = vpop.f32.mrb[0].mxu0
      %v2705 = vadd.f32 %v2352, %v2704
      %2706 = vmatprep.mubr.bf16.mxu0 %v2000
      %2707 = vmatmul.mubr.bf16.gmra.mrb[0].mxu0 %v1936
      %v2708 = vpop.f32.mrb[0].mxu0
      %v2709 = vadd.f32 %v2356, %v2708
      %v2710 = vpop.f32.mrb[0].mxu0
      %v2711 = vadd.f32 %v2358, %v2710
      %v2712 = vpop.f32.mrb[0].mxu0
      %v2713 = vadd.f32 %v2360, %v2712
      %v2714 = vpop.f32.mrb[0].mxu0
      %v2715 = vadd.f32 %v2362, %v2714
      %2716 = vmatprep.mubr.bf16.mxu0 %v2001
      %2717 = vmatmul.mubr.bf16.gmra.mrb[0].mxu0 %v1937
      %v2718 = vpop.f32.mrb[0].mxu0
      %v2719 = vadd.f32 %v2366, %v2718
      %v2720 = vpop.f32.mrb[0].mxu0
      %v2721 = vadd.f32 %v2368, %v2720
      %v2722 = vpop.f32.mrb[0].mxu0
      %v2723 = vadd.f32 %v2370, %v2722
      %v2724 = vpop.f32.mrb[0].mxu0
      %v2725 = vadd.f32 %v2372, %v2724
      %2726 = vmatprep.mubr.bf16.mxu0 %v2002
      %2727 = vmatmul.mubr.bf16.gmra.mrb[0].mxu0 %v1938
      %v2728 = vpop.f32.mrb[0].mxu0
      %v2729 = vadd.f32 %v2376, %v2728
      %v2730 = vpop.f32.mrb[0].mxu0
      %v2731 = vadd.f32 %v2378, %v2730
      %v2732 = vpop.f32.mrb[0].mxu0
      %v2733 = vadd.f32 %v2380, %v2732
      %v2734 = vpop.f32.mrb[0].mxu0
      %v2735 = vadd.f32 %v2382, %v2734
      %2736 = vmatprep.mubr.bf16.mxu0 %v2003
      %2737 = vmatmul.mubr.bf16.gmra.mrb[0].mxu0 %v1939
      %v2738 = vpop.f32.mrb[0].mxu0
      %v2739 = vadd.f32 %v2386, %v2738
      %v2740 = vpop.f32.mrb[0].mxu0
      %v2741 = vadd.f32 %v2388, %v2740
      %v2742 = vpop.f32.mrb[0].mxu0
      %v2743 = vadd.f32 %v2390, %v2742
      %v2744 = vpop.f32.mrb[0].mxu0
      %v2745 = vadd.f32 %v2392, %v2744
      %2746 = vmatprep.mubr.bf16.mxu0 %v2004
      %2747 = vmatmul.mubr.bf16.gmra.mrb[0].mxu0 %v1940
      %v2748 = vpop.f32.mrb[0].mxu0
      %v2749 = vadd.f32 %v2396, %v2748
      %v2750 = vpop.f32.mrb[0].mxu0
      %v2751 = vadd.f32 %v2398, %v2750
      %v2752 = vpop.f32.mrb[0].mxu0
      %v2753 = vadd.f32 %v2400, %v2752
      %v2754 = vpop.f32.mrb[0].mxu0
      %v2755 = vadd.f32 %v2402, %v2754
      %2756 = vmatprep.mubr.bf16.mxu0 %v2013
      %2757 = vmatmul.mubr.bf16.gmra.mrb[0].mxu0 %v1949
      %v2758 = vpop.f32.mrb[0].mxu0
      %v2759 = vadd.f32 %v2406, %v2758
      %v2760 = vpop.f32.mrb[0].mxu0
      %v2761 = vadd.f32 %v2408, %v2760
      %v2762 = vpop.f32.mrb[0].mxu0
      %v2763 = vadd.f32 %v2410, %v2762
      %v2764 = vpop.f32.mrb[0].mxu0
      %v2765 = vadd.f32 %v2412, %v2764
      %2766 = vmatprep.mubr.bf16.mxu0 %v2014
      %2767 = vmatmul.mubr.bf16.gmra.mrb[0].mxu0 %v1950
      %v2768 = vpop.f32.mrb[0].mxu0
      %v2769 = vadd.f32 %v2416, %v2768
      %v2770 = vpop.f32.mrb[0].mxu0
      %v2771 = vadd.f32 %v2418, %v2770
      %v2772 = vpop.f32.mrb[0].mxu0
      %v2773 = vadd.f32 %v2420, %v2772
      %v2774 = vpop.f32.mrb[0].mxu0
      %v2775 = vadd.f32 %v2422, %v2774
      %2776 = vmatprep.mubr.bf16.mxu0 %v2015
      %2777 = vmatmul.mubr.bf16.gmra.mrb[0].mxu0 %v1951
      %v2778 = vpop.f32.mrb[0].mxu0
      %v2779 = vadd.f32 %v2426, %v2778
      %v2780 = vpop.f32.mrb[0].mxu0
      %v2781 = vadd.f32 %v2428, %v2780
      %v2782 = vpop.f32.mrb[0].mxu0
      %v2783 = vadd.f32 %v2430, %v2782
      %v2784 = vpop.f32.mrb[0].mxu0
      %v2785 = vadd.f32 %v2432, %v2784
      %2786 = vmatprep.mubr.bf16.mxu0 %v2016
      %2787 = vmatmul.mubr.bf16.gmra.mrb[0].mxu0 %v1952
      %v2788 = vpop.f32.mrb[0].mxu0
      %v2789 = vadd.f32 %v2436, %v2788
      %v2790 = vpop.f32.mrb[0].mxu0
      %v2791 = vadd.f32 %v2438, %v2790
      %v2792 = vpop.f32.mrb[0].mxu0
      %v2793 = vadd.f32 %v2440, %v2792
      %v2794 = vpop.f32.mrb[0].mxu0
      %v2795 = vadd.f32 %v2442, %v2794
      %2796 = vmatprep.mubr.bf16.mxu0 %v2017
      %2797 = vmatmul.mubr.bf16.gmra.mrb[0].mxu0 %v1953
      %v2798 = vpop.f32.mrb[0].mxu0
      %v2799 = vadd.f32 %v2446, %v2798
      %v2800 = vpop.f32.mrb[0].mxu0
      %v2801 = vadd.f32 %v2448, %v2800
      %v2802 = vpop.f32.mrb[0].mxu0
      %v2803 = vadd.f32 %v2450, %v2802
      %v2804 = vpop.f32.mrb[0].mxu0
      %v2805 = vadd.f32 %v2452, %v2804
      %2806 = vmatprep.mubr.bf16.mxu0 %v2018
      %2807 = vmatmul.mubr.bf16.gmra.mrb[0].mxu0 %v1954
      %v2808 = vpop.f32.mrb[0].mxu0
      %v2809 = vadd.f32 %v2456, %v2808
      %v2810 = vpop.f32.mrb[0].mxu0
      %v2811 = vadd.f32 %v2458, %v2810
      %v2812 = vpop.f32.mrb[0].mxu0
      %v2813 = vadd.f32 %v2460, %v2812
      %v2814 = vpop.f32.mrb[0].mxu0
      %v2815 = vadd.f32 %v2462, %v2814
      %2816 = vmatprep.mubr.bf16.mxu0 %v2019
      %2817 = vmatmul.mubr.bf16.gmra.mrb[0].mxu0 %v1955
      %v2818 = vpop.f32.mrb[0].mxu0
      %v2819 = vadd.f32 %v2466, %v2818
      %v2820 = vpop.f32.mrb[0].mxu0
      %v2821 = vadd.f32 %v2468, %v2820
      %v2822 = vpop.f32.mrb[0].mxu0
      %v2823 = vadd.f32 %v2470, %v2822
      %v2824 = vpop.f32.mrb[0].mxu0
      %v2825 = vadd.f32 %v2472, %v2824
      %2826 = vmatprep.mubr.bf16.mxu0 %v2020
      %2827 = vmatmul.mubr.bf16.gmra.mrb[0].mxu0 %v1956
      %v2828 = vpop.f32.mrb[0].mxu0
      %v2829 = vadd.f32 %v2476, %v2828
      %v2830 = vpop.f32.mrb[0].mxu0
      %v2831 = vadd.f32 %v2478, %v2830
      %v2832 = vpop.f32.mrb[0].mxu0
      %v2833 = vadd.f32 %v2480, %v2832
      %v2834 = vpop.f32.mrb[0].mxu0
      %v2835 = vadd.f32 %v2482, %v2834
      %2836 = vmatprep.mubr.bf16.mxu0 %v2029
      %2837 = vmatmul.mubr.bf16.gmra.mrb[0].mxu0 %v1965
      %v2838 = vpop.f32.mrb[0].mxu0
      %v2839 = vadd.f32 %v2486, %v2838
      %v2840 = vpop.f32.mrb[0].mxu0
      %v2841 = vadd.f32 %v2488, %v2840
      %v2842 = vpop.f32.mrb[0].mxu0
      %v2843 = vadd.f32 %v2490, %v2842
      %v2844 = vpop.f32.mrb[0].mxu0
      %v2845 = vadd.f32 %v2492, %v2844
      %2846 = vmatprep.mubr.bf16.mxu0 %v2030
      %2847 = vmatmul.mubr.bf16.gmra.mrb[0].mxu0 %v1966
      %v2848 = vpop.f32.mrb[0].mxu0
      %v2849 = vadd.f32 %v2496, %v2848
      %v2850 = vpop.f32.mrb[0].mxu0
      %v2851 = vadd.f32 %v2498, %v2850
      %v2852 = vpop.f32.mrb[0].mxu0
      %v2853 = vadd.f32 %v2500, %v2852
      %v2854 = vpop.f32.mrb[0].mxu0
      %v2855 = vadd.f32 %v2502, %v2854
      %2856 = vmatprep.mubr.bf16.mxu0 %v2031
      %2857 = vmatmul.mubr.bf16.gmra.mrb[0].mxu0 %v1967
      %v2858 = vpop.f32.mrb[0].mxu0
      %v2859 = vadd.f32 %v2506, %v2858
      %v2860 = vpop.f32.mrb[0].mxu0
      %v2861 = vadd.f32 %v2508, %v2860
      %v2862 = vpop.f32.mrb[0].mxu0
      %v2863 = vadd.f32 %v2510, %v2862
      %v2864 = vpop.f32.mrb[0].mxu0
      %v2865 = vadd.f32 %v2512, %v2864
      %2866 = vmatprep.mubr.bf16.mxu0 %v2032
      %2867 = vmatmul.mubr.bf16.gmra.mrb[0].mxu0 %v1968
      %v2868 = vpop.f32.mrb[0].mxu0
      %v2869 = vadd.f32 %v2516, %v2868
      %v2870 = vpop.f32.mrb[0].mxu0
      %v2871 = vadd.f32 %v2518, %v2870
      %v2872 = vpop.f32.mrb[0].mxu0
      %v2873 = vadd.f32 %v2520, %v2872
      %v2874 = vpop.f32.mrb[0].mxu0
      %v2875 = vadd.f32 %v2522, %v2874
      %2876 = vmatprep.mubr.bf16.mxu0 %v2033
      %2877 = vmatmul.mubr.bf16.gmra.mrb[0].mxu0 %v1969
      %v2878 = vpop.f32.mrb[0].mxu0
      %v2879 = vadd.f32 %v2526, %v2878
      %v2880 = vpop.f32.mrb[0].mxu0
      %v2881 = vadd.f32 %v2528, %v2880
      %v2882 = vpop.f32.mrb[0].mxu0
      %v2883 = vadd.f32 %v2530, %v2882
      %v2884 = vpop.f32.mrb[0].mxu0
      %v2885 = vadd.f32 %v2532, %v2884
      %2886 = vmatprep.mubr.bf16.mxu0 %v2034
      %2887 = vmatmul.mubr.bf16.gmra.mrb[0].mxu0 %v1970
      %v2888 = vpop.f32.mrb[0].mxu0
      %v2889 = vadd.f32 %v2536, %v2888
      %v2890 = vpop.f32.mrb[0].mxu0
      %v2891 = vadd.f32 %v2538, %v2890
      %v2892 = vpop.f32.mrb[0].mxu0
      %v2893 = vadd.f32 %v2540, %v2892
      %v2894 = vpop.f32.mrb[0].mxu0
      %v2895 = vadd.f32 %v2542, %v2894
      %2896 = vmatprep.mubr.bf16.mxu0 %v2035
      %2897 = vmatmul.mubr.bf16.gmra.mrb[0].mxu0 %v1971
      %v2898 = vpop.f32.mrb[0].mxu0
      %v2899 = vadd.f32 %v2546, %v2898
      %v2900 = vpop.f32.mrb[0].mxu0
      %v2901 = vadd.f32 %v2548, %v2900
      %v2902 = vpop.f32.mrb[0].mxu0
      %v2903 = vadd.f32 %v2550, %v2902
      %v2904 = vpop.f32.mrb[0].mxu0
      %v2905 = vadd.f32 %v2552, %v2904
      %2906 = vmatprep.mubr.bf16.mxu0 %v2036
      %2907 = vmatmul.mubr.bf16.gmra.mrb[0].mxu0 %v1972
      %v2908 = vpop.f32.mrb[0].mxu0
      %v2909 = vadd.f32 %v2556, %v2908
      %v2910 = vpop.f32.mrb[0].mxu0
      %v2911 = vadd.f32 %v2558, %v2910
      %v2912 = vpop.f32.mrb[0].mxu0
      %v2913 = vadd.f32 %v2560, %v2912
      %v2914 = vpop.f32.mrb[0].mxu0
      %v2915 = vadd.f32 %v2562, %v2914
      %2916 = vdwg.mxu0
      %2917 = vmatprep.subr.bf16.mxu0 %v2206
      %2918 = vmatpush1.bf16.msra.mxu0 %v2203
      %2919 = vmatprep.subr.bf16.mxu0 0
      %2920 = vmatpush1.bf16.msra.mxu0 0
      %2921 = vmatprep.subr.bf16.mxu0 0
      %2922 = vmatpush1.bf16.msra.mxu0 0
      %2923 = vmatprep.subr.bf16.mxu0 0
      %2924 = vmatpush1.bf16.msra.mxu0 0
      %2925 = vmatprep.subr.bf16.mxu0 0
      %2926 = vmatpush1.bf16.msra.mxu0 0
      %2927 = vmatprep.subr.bf16.mxu0 0
      %2928 = vmatpush1.bf16.msra.mxu0 0
      %2929 = vmatprep.subr.bf16.mxu0 0
      %2930 = vmatpush1.bf16.msra.mxu0 0
      %2931 = vmatprep.subr.bf16.mxu0 0
      %2932 = vmatpush1.bf16.msra.mxu0 0
      %2933 = vmatprep.subr.bf16.mxu0 0
      %2934 = vmatpush1.bf16.msra.mxu0 0
      %2935 = vmatprep.subr.bf16.mxu0 0
      %2936 = vmatpush1.bf16.msra.mxu0 0
      %2937 = vmatprep.subr.bf16.mxu0 0
      %2938 = vmatpush1.bf16.msra.mxu0 0
      %2939 = vmatprep.subr.bf16.mxu0 0
      %2940 = vmatpush1.bf16.msra.mxu0 0
      %2941 = vmatprep.subr.bf16.mxu0 0
      %2942 = vmatpush1.bf16.msra.mxu0 0
      %2943 = vmatprep.subr.bf16.mxu0 0
      %2944 = vmatpush1.bf16.msra.mxu0 0
      %2945 = vmatprep.subr.bf16.mxu0 0
      %2946 = vmatpush1.bf16.msra.mxu0 0
      %2947 = vmatprep.subr.bf16.mxu0 0
      %2948 = vmatpush1.bf16.msra.mxu0 0
      %2949 = vmatprep.mubr.bf16.mxu0 0
      %2950 = vmatmul.mubr.bf16.gmra.mrb[0].mxu0 %v2103
      %v2951 = vpop.f32.mrb[0].mxu0
      %v2952 = vadd.f32 %v2599, %v2951
      %v2953 = vpop.f32.mrb[0].mxu0
      %v2954 = vadd.f32 %v2601, %v2953
      %v2955 = vpop.f32.mrb[0].mxu0
      %v2956 = vadd.f32 %v2603, %v2955
      %v2957 = vpop.f32.mrb[0].mxu0
      %v2958 = vadd.f32 %v2605, %v2957
      %2959 = vmatprep.mubr.bf16.mxu0 0
      %2960 = vmatmul.mubr.bf16.gmra.mrb[0].mxu0 %v2106
      %v2961 = vpop.f32.mrb[0].mxu0
      %v2962 = vadd.f32 %v2609, %v2961
      %v2963 = vpop.f32.mrb[0].mxu0
      %v2964 = vadd.f32 %v2611, %v2963
      %v2965 = vpop.f32.mrb[0].mxu0
      %v2966 = vadd.f32 %v2613, %v2965
      %v2967 = vpop.f32.mrb[0].mxu0
      %v2968 = vadd.f32 %v2615, %v2967
      %2969 = vmatprep.mubr.bf16.mxu0 0
      %2970 = vmatmul.mubr.bf16.gmra.mrb[0].mxu0 %v2109
      %v2971 = vpop.f32.mrb[0].mxu0
      %v2972 = vadd.f32 %v2619, %v2971
      %v2973 = vpop.f32.mrb[0].mxu0
      %v2974 = vadd.f32 %v2621, %v2973
      %v2975 = vpop.f32.mrb[0].mxu0
      %v2976 = vadd.f32 %v2623, %v2975
      %v2977 = vpop.f32.mrb[0].mxu0
      %v2978 = vadd.f32 %v2625, %v2977
      %2979 = vmatprep.mubr.bf16.mxu0 0
      %2980 = vmatmul.mubr.bf16.gmra.mrb[0].mxu0 %v2112
      %v2981 = vpop.f32.mrb[0].mxu0
      %v2982 = vadd.f32 %v2629, %v2981
      %v2983 = vpop.f32.mrb[0].mxu0
      %v2984 = vadd.f32 %v2631, %v2983
      %v2985 = vpop.f32.mrb[0].mxu0
      %v2986 = vadd.f32 %v2633, %v2985
      %v2987 = vpop.f32.mrb[0].mxu0
      %v2988 = vadd.f32 %v2635, %v2987
      %2989 = vmatprep.mubr.bf16.mxu0 0
      %2990 = vmatmul.mubr.bf16.gmra.mrb[0].mxu0 %v2115
      %v2991 = vpop.f32.mrb[0].mxu0
      %v2992 = vadd.f32 %v2639, %v2991
      %v2993 = vpop.f32.mrb[0].mxu0
      %v2994 = vadd.f32 %v2641, %v2993
      %v2995 = vpop.f32.mrb[0].mxu0
      %v2996 = vadd.f32 %v2643, %v2995
      %v2997 = vpop.f32.mrb[0].mxu0
      %v2998 = vadd.f32 %v2645, %v2997
      %2999 = vmatprep.mubr.bf16.mxu0 0
      %3000 = vmatmul.mubr.bf16.gmra.mrb[0].mxu0 %v2118
      %v3001 = vpop.f32.mrb[0].mxu0
      %v3002 = vadd.f32 %v2649, %v3001
      %v3003 = vpop.f32.mrb[0].mxu0
      %v3004 = vadd.f32 %v2651, %v3003
      %v3005 = vpop.f32.mrb[0].mxu0
      %v3006 = vadd.f32 %v2653, %v3005
      %v3007 = vpop.f32.mrb[0].mxu0
      %v3008 = vadd.f32 %v2655, %v3007
      %3009 = vmatprep.mubr.bf16.mxu0 0
      %3010 = vmatmul.mubr.bf16.gmra.mrb[0].mxu0 %v2121
      %v3011 = vpop.f32.mrb[0].mxu0
      %v3012 = vadd.f32 %v2659, %v3011
      %v3013 = vpop.f32.mrb[0].mxu0
      %v3014 = vadd.f32 %v2661, %v3013
      %v3015 = vpop.f32.mrb[0].mxu0
      %v3016 = vadd.f32 %v2663, %v3015
      %v3017 = vpop.f32.mrb[0].mxu0
      %v3018 = vadd.f32 %v2665, %v3017
      %3019 = vmatprep.mubr.bf16.mxu0 0
      %3020 = vmatmul.mubr.bf16.gmra.mrb[0].mxu0 %v2124
      %v3021 = vpop.f32.mrb[0].mxu0
      %v3022 = vadd.f32 %v2669, %v3021
      %v3023 = vpop.f32.mrb[0].mxu0
      %v3024 = vadd.f32 %v2671, %v3023
      %v3025 = vpop.f32.mrb[0].mxu0
      %v3026 = vadd.f32 %v2673, %v3025
      %v3027 = vpop.f32.mrb[0].mxu0
      %v3028 = vadd.f32 %v2675, %v3027
      %3029 = vmatprep.mubr.bf16.mxu0 0
      %3030 = vmatmul.mubr.bf16.gmra.mrb[0].mxu0 %v2127
      %v3031 = vpop.f32.mrb[0].mxu0
      %v3032 = vadd.f32 %v2679, %v3031
      %v3033 = vpop.f32.mrb[0].mxu0
      %v3034 = vadd.f32 %v2681, %v3033
      %v3035 = vpop.f32.mrb[0].mxu0
      %v3036 = vadd.f32 %v2683, %v3035
      %v3037 = vpop.f32.mrb[0].mxu0
      %v3038 = vadd.f32 %v2685, %v3037
      %3039 = vmatprep.mubr.bf16.mxu0 0
      %3040 = vmatmul.mubr.bf16.gmra.mrb[0].mxu0 %v2130
      %v3041 = vpop.f32.mrb[0].mxu0
      %v3042 = vadd.f32 %v2689, %v3041
      %v3043 = vpop.f32.mrb[0].mxu0
      %v3044 = vadd.f32 %v2691, %v3043
      %v3045 = vpop.f32.mrb[0].mxu0
      %v3046 = vadd.f32 %v2693, %v3045
      %v3047 = vpop.f32.mrb[0].mxu0
      %v3048 = vadd.f32 %v2695, %v3047
      %3049 = vmatprep.mubr.bf16.mxu0 0
      %3050 = vmatmul.mubr.bf16.gmra.mrb[0].mxu0 %v2133
      %v3051 = vpop.f32.mrb[0].mxu0
      %v3052 = vadd.f32 %v2699, %v3051
      %v3053 = vpop.f32.mrb[0].mxu0
      %v3054 = vadd.f32 %v2701, %v3053
      %v3055 = vpop.f32.mrb[0].mxu0
      %v3056 = vadd.f32 %v2703, %v3055
      %v3057 = vpop.f32.mrb[0].mxu0
      %v3058 = vadd.f32 %v2705, %v3057
      %3059 = vmatprep.mubr.bf16.mxu0 0
      %3060 = vmatmul.mubr.bf16.gmra.mrb[0].mxu0 %v2136
      %v3061 = vpop.f32.mrb[0].mxu0
      %v3062 = vadd.f32 %v2709, %v3061
      %v3063 = vpop.f32.mrb[0].mxu0
      %v3064 = vadd.f32 %v2711, %v3063
      %v3065 = vpop.f32.mrb[0].mxu0
      %v3066 = vadd.f32 %v2713, %v3065
      %v3067 = vpop.f32.mrb[0].mxu0
      %v3068 = vadd.f32 %v2715, %v3067
      %3069 = vmatprep.mubr.bf16.mxu0 0
      %3070 = vmatmul.mubr.bf16.gmra.mrb[0].mxu0 %v2139
      %v3071 = vpop.f32.mrb[0].mxu0
      %v3072 = vadd.f32 %v2719, %v3071
      %v3073 = vpop.f32.mrb[0].mxu0
      %v3074 = vadd.f32 %v2721, %v3073
      %v3075 = vpop.f32.mrb[0].mxu0
      %v3076 = vadd.f32 %v2723, %v3075
      %v3077 = vpop.f32.mrb[0].mxu0
      %v3078 = vadd.f32 %v2725, %v3077
      %3079 = vmatprep.mubr.bf16.mxu0 0
      %3080 = vmatmul.mubr.bf16.gmra.mrb[0].mxu0 %v2142
      %v3081 = vpop.f32.mrb[0].mxu0
      %v3082 = vadd.f32 %v2729, %v3081
      %v3083 = vpop.f32.mrb[0].mxu0
      %v3084 = vadd.f32 %v2731, %v3083
      %v3085 = vpop.f32.mrb[0].mxu0
      %v3086 = vadd.f32 %v2733, %v3085
      %v3087 = vpop.f32.mrb[0].mxu0
      %v3088 = vadd.f32 %v2735, %v3087
      %3089 = vmatprep.mubr.bf16.mxu0 0
      %3090 = vmatmul.mubr.bf16.gmra.mrb[0].mxu0 %v2145
      %v3091 = vpop.f32.mrb[0].mxu0
      %v3092 = vadd.f32 %v2739, %v3091
      %v3093 = vpop.f32.mrb[0].mxu0
      %v3094 = vadd.f32 %v2741, %v3093
      %v3095 = vpop.f32.mrb[0].mxu0
      %v3096 = vadd.f32 %v2743, %v3095
      %v3097 = vpop.f32.mrb[0].mxu0
      %v3098 = vadd.f32 %v2745, %v3097
      %3099 = vmatprep.mubr.bf16.mxu0 0
      %3100 = vmatmul.mubr.bf16.gmra.mrb[0].mxu0 %v2148
      %v3101 = vpop.f32.mrb[0].mxu0
      %v3102 = vadd.f32 %v2749, %v3101
      %v3103 = vpop.f32.mrb[0].mxu0
      %v3104 = vadd.f32 %v2751, %v3103
      %v3105 = vpop.f32.mrb[0].mxu0
      %v3106 = vadd.f32 %v2753, %v3105
      %v3107 = vpop.f32.mrb[0].mxu0
      %v3108 = vadd.f32 %v2755, %v3107
      %3109 = vmatprep.mubr.bf16.mxu0 0
      %3110 = vmatmul.mubr.bf16.gmra.mrb[0].mxu0 %v2151
      %v3111 = vpop.f32.mrb[0].mxu0
      %v3112 = vadd.f32 %v2759, %v3111
      %v3113 = vpop.f32.mrb[0].mxu0
      %v3114 = vadd.f32 %v2761, %v3113
      %v3115 = vpop.f32.mrb[0].mxu0
      %v3116 = vadd.f32 %v2763, %v3115
      %v3117 = vpop.f32.mrb[0].mxu0
      %v3118 = vadd.f32 %v2765, %v3117
      %3119 = vmatprep.mubr.bf16.mxu0 0
      %3120 = vmatmul.mubr.bf16.gmra.mrb[0].mxu0 %v2154
      %v3121 = vpop.f32.mrb[0].mxu0
      %v3122 = vadd.f32 %v2769, %v3121
      %v3123 = vpop.f32.mrb[0].mxu0
      %v3124 = vadd.f32 %v2771, %v3123
      %v3125 = vpop.f32.mrb[0].mxu0
      %v3126 = vadd.f32 %v2773, %v3125
      %v3127 = vpop.f32.mrb[0].mxu0
      %v3128 = vadd.f32 %v2775, %v3127
      %3129 = vmatprep.mubr.bf16.mxu0 0
      %3130 = vmatmul.mubr.bf16.gmra.mrb[0].mxu0 %v2157
      %v3131 = vpop.f32.mrb[0].mxu0
      %v3132 = vadd.f32 %v2779, %v3131
      %v3133 = vpop.f32.mrb[0].mxu0
      %v3134 = vadd.f32 %v2781, %v3133
      %v3135 = vpop.f32.mrb[0].mxu0
      %v3136 = vadd.f32 %v2783, %v3135
      %v3137 = vpop.f32.mrb[0].mxu0
      %v3138 = vadd.f32 %v2785, %v3137
      %3139 = vmatprep.mubr.bf16.mxu0 0
      %3140 = vmatmul.mubr.bf16.gmra.mrb[0].mxu0 %v2160
      %v3141 = vpop.f32.mrb[0].mxu0
      %v3142 = vadd.f32 %v2789, %v3141
      %v3143 = vpop.f32.mrb[0].mxu0
      %v3144 = vadd.f32 %v2791, %v3143
      %v3145 = vpop.f32.mrb[0].mxu0
      %v3146 = vadd.f32 %v2793, %v3145
      %v3147 = vpop.f32.mrb[0].mxu0
      %v3148 = vadd.f32 %v2795, %v3147
      %3149 = vmatprep.mubr.bf16.mxu0 0
      %3150 = vmatmul.mubr.bf16.gmra.mrb[0].mxu0 %v2163
      %v3151 = vpop.f32.mrb[0].mxu0
      %v3152 = vadd.f32 %v2799, %v3151
      %v3153 = vpop.f32.mrb[0].mxu0
      %v3154 = vadd.f32 %v2801, %v3153
      %v3155 = vpop.f32.mrb[0].mxu0
      %v3156 = vadd.f32 %v2803, %v3155
      %v3157 = vpop.f32.mrb[0].mxu0
      %v3158 = vadd.f32 %v2805, %v3157
      %3159 = vmatprep.mubr.bf16.mxu0 0
      %3160 = vmatmul.mubr.bf16.gmra.mrb[0].mxu0 %v2166
      %v3161 = vpop.f32.mrb[0].mxu0
      %v3162 = vadd.f32 %v2809, %v3161
      %v3163 = vpop.f32.mrb[0].mxu0
      %v3164 = vadd.f32 %v2811, %v3163
      %v3165 = vpop.f32.mrb[0].mxu0
      %v3166 = vadd.f32 %v2813, %v3165
      %v3167 = vpop.f32.mrb[0].mxu0
      %v3168 = vadd.f32 %v2815, %v3167
      %3169 = vmatprep.mubr.bf16.mxu0 0
      %3170 = vmatmul.mubr.bf16.gmra.mrb[0].mxu0 %v2169
      %v3171 = vpop.f32.mrb[0].mxu0
      %v3172 = vadd.f32 %v2819, %v3171
      %v3173 = vpop.f32.mrb[0].mxu0
      %v3174 = vadd.f32 %v2821, %v3173
      %v3175 = vpop.f32.mrb[0].mxu0
      %v3176 = vadd.f32 %v2823, %v3175
      %v3177 = vpop.f32.mrb[0].mxu0
      %v3178 = vadd.f32 %v2825, %v3177
      %3179 = vmatprep.mubr.bf16.mxu0 0
      %3180 = vmatmul.mubr.bf16.gmra.mrb[0].mxu0 %v2172
      %v3181 = vpop.f32.mrb[0].mxu0
      %v3182 = vadd.f32 %v2829, %v3181
      %v3183 = vpop.f32.mrb[0].mxu0
      %v3184 = vadd.f32 %v2831, %v3183
      %v3185 = vpop.f32.mrb[0].mxu0
      %v3186 = vadd.f32 %v2833, %v3185
      %v3187 = vpop.f32.mrb[0].mxu0
      %v3188 = vadd.f32 %v2835, %v3187
      %3189 = vmatprep.mubr.bf16.mxu0 0
      %3190 = vmatmul.mubr.bf16.gmra.mrb[0].mxu0 %v2175
      %v3191 = vpop.f32.mrb[0].mxu0
      %v3192 = vadd.f32 %v2839, %v3191
      %v3193 = vpop.f32.mrb[0].mxu0
      %v3194 = vadd.f32 %v2841, %v3193
      %v3195 = vpop.f32.mrb[0].mxu0
      %v3196 = vadd.f32 %v2843, %v3195
      %v3197 = vpop.f32.mrb[0].mxu0
      %v3198 = vadd.f32 %v2845, %v3197
      %3199 = vmatprep.mubr.bf16.mxu0 0
      %3200 = vmatmul.mubr.bf16.gmra.mrb[0].mxu0 %v2178
      %v3201 = vpop.f32.mrb[0].mxu0
      %v3202 = vadd.f32 %v2849, %v3201
      %v3203 = vpop.f32.mrb[0].mxu0
      %v3204 = vadd.f32 %v2851, %v3203
      %v3205 = vpop.f32.mrb[0].mxu0
      %v3206 = vadd.f32 %v2853, %v3205
      %v3207 = vpop.f32.mrb[0].mxu0
      %v3208 = vadd.f32 %v2855, %v3207
      %3209 = vmatprep.mubr.bf16.mxu0 0
      %3210 = vmatmul.mubr.bf16.gmra.mrb[0].mxu0 %v2181
      %v3211 = vpop.f32.mrb[0].mxu0
      %v3212 = vadd.f32 %v2859, %v3211
      %v3213 = vpop.f32.mrb[0].mxu0
      %v3214 = vadd.f32 %v2861, %v3213
      %v3215 = vpop.f32.mrb[0].mxu0
      %v3216 = vadd.f32 %v2863, %v3215
      %v3217 = vpop.f32.mrb[0].mxu0
      %v3218 = vadd.f32 %v2865, %v3217
      %3219 = vmatprep.mubr.bf16.mxu0 0
      %3220 = vmatmul.mubr.bf16.gmra.mrb[0].mxu0 %v2184
      %v3221 = vpop.f32.mrb[0].mxu0
      %v3222 = vadd.f32 %v2869, %v3221
      %v3223 = vpop.f32.mrb[0].mxu0
      %v3224 = vadd.f32 %v2871, %v3223
      %v3225 = vpop.f32.mrb[0].mxu0
      %v3226 = vadd.f32 %v2873, %v3225
      %v3227 = vpop.f32.mrb[0].mxu0
      %v3228 = vadd.f32 %v2875, %v3227
      %3229 = vmatprep.mubr.bf16.mxu0 0
      %3230 = vmatmul.mubr.bf16.gmra.mrb[0].mxu0 %v2187
      %v3231 = vpop.f32.mrb[0].mxu0
      %v3232 = vadd.f32 %v2879, %v3231
      %v3233 = vpop.f32.mrb[0].mxu0
      %v3234 = vadd.f32 %v2881, %v3233
      %v3235 = vpop.f32.mrb[0].mxu0
      %v3236 = vadd.f32 %v2883, %v3235
      %v3237 = vpop.f32.mrb[0].mxu0
      %v3238 = vadd.f32 %v2885, %v3237
      %3239 = vmatprep.mubr.bf16.mxu0 0
      %3240 = vmatmul.mubr.bf16.gmra.mrb[0].mxu0 %v2190
      %v3241 = vpop.f32.mrb[0].mxu0
      %v3242 = vadd.f32 %v2889, %v3241
      %v3243 = vpop.f32.mrb[0].mxu0
      %v3244 = vadd.f32 %v2891, %v3243
      %v3245 = vpop.f32.mrb[0].mxu0
      %v3246 = vadd.f32 %v2893, %v3245
      %v3247 = vpop.f32.mrb[0].mxu0
      %v3248 = vadd.f32 %v2895, %v3247
      %3249 = vmatprep.mubr.bf16.mxu0 0
      %3250 = vmatmul.mubr.bf16.gmra.mrb[0].mxu0 %v2193
      %v3251 = vpop.f32.mrb[0].mxu0
      %v3252 = vadd.f32 %v2899, %v3251
      %v3253 = vpop.f32.mrb[0].mxu0
      %v3254 = vadd.f32 %v2901, %v3253
      %v3255 = vpop.f32.mrb[0].mxu0
      %v3256 = vadd.f32 %v2903, %v3255
      %v3257 = vpop.f32.mrb[0].mxu0
      %v3258 = vadd.f32 %v2905, %v3257
      %3259 = vmatprep.mubr.bf16.mxu0 0
      %3260 = vmatmul.mubr.bf16.gmra.mrb[0].mxu0 %v2196
      %v3261 = vpop.f32.mrb[0].mxu0
      %v3262 = vadd.f32 %v2909, %v3261
      %v3263 = vpop.f32.mrb[0].mxu0
      %v3264 = vadd.f32 %v2911, %v3263
      %v3265 = vpop.f32.mrb[0].mxu0
      %v3266 = vadd.f32 %v2913, %v3265
      %v3267 = vpop.f32.mrb[0].mxu0
      %v3268 = vadd.f32 %v2915, %v3267
      %3269 = vdwg.mxu0
      %3270 = vmatprep.subr.bf16.mxu0 0
      %3271 = vmatpush1.bf16.msra.mxu0 %v516
      %3272 = vmatprep.subr.bf16.mxu0 0
      %3273 = vmatpush1.bf16.msra.mxu0 %v519
      %3274 = vmatprep.subr.bf16.mxu0 0
      %3275 = vmatpush1.bf16.msra.mxu0 %v522
      %3276 = vmatprep.subr.bf16.mxu0 0
      %3277 = vmatpush1.bf16.msra.mxu0 %v525
      %3278 = vmatprep.subr.bf16.mxu0 0
      %3279 = vmatpush1.bf16.msra.mxu0 %v528
      %3280 = vmatprep.subr.bf16.mxu0 0
      %3281 = vmatpush1.bf16.msra.mxu0 %v531
      %3282 = vmatprep.subr.bf16.mxu0 0
      %3283 = vmatpush1.bf16.msra.mxu0 %v534
      %3284 = vmatprep.subr.bf16.mxu0 0
      %3285 = vmatpush1.bf16.msra.mxu0 %v537
      %3286 = vmatprep.subr.bf16.mxu0 0
      %3287 = vmatpush1.bf16.msra.mxu0 %v540
      %3288 = vmatprep.subr.bf16.mxu0 0
      %3289 = vmatpush1.bf16.msra.mxu0 %v543
      %3290 = vmatprep.subr.bf16.mxu0 0
      %3291 = vmatpush1.bf16.msra.mxu0 %v546
      %3292 = vmatprep.subr.bf16.mxu0 0
      %3293 = vmatpush1.bf16.msra.mxu0 %v549
      %3294 = vmatprep.subr.bf16.mxu0 0
      %3295 = vmatpush1.bf16.msra.mxu0 %v552
      %3296 = vmatprep.subr.bf16.mxu0 0
      %3297 = vmatpush1.bf16.msra.mxu0 %v555
      %3298 = vmatprep.subr.bf16.mxu0 0
      %3299 = vmatpush1.bf16.msra.mxu0 %v558
      %3300 = vmatprep.subr.bf16.mxu0 0
      %3301 = vmatpush1.bf16.msra.mxu0 %v561
      %3302 = vmatprep.mubr.bf16.mxu0 %v1853
      %3303 = vmatmul.mubr.bf16.gmra.mrb[0].mxu0 %v1789
      %v3304 = vpop.f32.mrb[0].mxu0
      %v3305 = vadd.f32 %v810, %v3304
      %v3306 = vpop.f32.mrb[0].mxu0
      %v3307 = vpop.f32.mrb[0].mxu0
      %v3308 = vadd.f32 %v815, %v3307
      %v3309 = vpop.f32.mrb[0].mxu0
      %3310 = vmatprep.mubr.bf16.mxu0 %v1854
      %3311 = vmatmul.mubr.bf16.gmra.mrb[0].mxu0 %v1790
      %v3312 = vpop.f32.mrb[0].mxu0
      %v3313 = vadd.f32 %v820, %v3312
      %v3314 = vpop.f32.mrb[0].mxu0
      %v3315 = vpop.f32.mrb[0].mxu0
      %v3316 = vadd.f32 %v825, %v3315
      %v3317 = vpop.f32.mrb[0].mxu0
      %3318 = vmatprep.mubr.bf16.mxu0 %v1855
      %3319 = vmatmul.mubr.bf16.gmra.mrb[0].mxu0 %v1791
      %v3320 = vpop.f32.mrb[0].mxu0
      %v3321 = vadd.f32 %v830, %v3320
      %v3322 = vpop.f32.mrb[0].mxu0
      %v3323 = vpop.f32.mrb[0].mxu0
      %v3324 = vadd.f32 %v835, %v3323
      %v3325 = vpop.f32.mrb[0].mxu0
      %3326 = vmatprep.mubr.bf16.mxu0 %v1856
      %3327 = vmatmul.mubr.bf16.gmra.mrb[0].mxu0 %v1792
      %v3328 = vpop.f32.mrb[0].mxu0
      %v3329 = vadd.f32 %v840, %v3328
      %v3330 = vpop.f32.mrb[0].mxu0
      %v3331 = vpop.f32.mrb[0].mxu0
      %v3332 = vadd.f32 %v845, %v3331
      %v3333 = vpop.f32.mrb[0].mxu0
      %3334 = vmatprep.mubr.bf16.mxu0 %v1857
      %3335 = vmatmul.mubr.bf16.gmra.mrb[0].mxu0 %v1793
      %v3336 = vpop.f32.mrb[0].mxu0
      %v3337 = vadd.f32 %v850, %v3336
      %v3338 = vpop.f32.mrb[0].mxu0
      %v3339 = vpop.f32.mrb[0].mxu0
      %v3340 = vadd.f32 %v855, %v3339
      %v3341 = vpop.f32.mrb[0].mxu0
      %3342 = vmatprep.mubr.bf16.mxu0 %v1858
      %3343 = vmatmul.mubr.bf16.gmra.mrb[0].mxu0 %v1794
      %v3344 = vpop.f32.mrb[0].mxu0
      %v3345 = vadd.f32 %v860, %v3344
      %v3346 = vpop.f32.mrb[0].mxu0
      %v3347 = vpop.f32.mrb[0].mxu0
      %v3348 = vadd.f32 %v865, %v3347
      %v3349 = vpop.f32.mrb[0].mxu0
      %3350 = vmatprep.mubr.bf16.mxu0 %v1859
      %3351 = vmatmul.mubr.bf16.gmra.mrb[0].mxu0 %v1795
      %v3352 = vpop.f32.mrb[0].mxu0
      %v3353 = vadd.f32 %v870, %v3352
      %v3354 = vpop.f32.mrb[0].mxu0
      %v3355 = vpop.f32.mrb[0].mxu0
      %v3356 = vadd.f32 %v875, %v3355
      %v3357 = vpop.f32.mrb[0].mxu0
      %3358 = vmatprep.mubr.bf16.mxu0 %v1860
      %3359 = vmatmul.mubr.bf16.gmra.mrb[0].mxu0 %v1796
      %v3360 = vpop.f32.mrb[0].mxu0
      %v3361 = vadd.f32 %v880, %v3360
      %v3362 = vpop.f32.mrb[0].mxu0
      %v3363 = vpop.f32.mrb[0].mxu0
      %v3364 = vadd.f32 %v885, %v3363
      %v3365 = vpop.f32.mrb[0].mxu0
      %3366 = vmatprep.mubr.bf16.mxu0 %v1869
      %3367 = vmatmul.mubr.bf16.gmra.mrb[0].mxu0 %v1805
      %v3368 = vpop.f32.mrb[0].mxu0
      %v3369 = vadd.f32 %v890, %v3368
      %v3370 = vpop.f32.mrb[0].mxu0
      %v3371 = vpop.f32.mrb[0].mxu0
      %v3372 = vadd.f32 %v895, %v3371
      %v3373 = vpop.f32.mrb[0].mxu0
      %3374 = vmatprep.mubr.bf16.mxu0 %v1870
      %3375 = vmatmul.mubr.bf16.gmra.mrb[0].mxu0 %v1806
      %v3376 = vpop.f32.mrb[0].mxu0
      %v3377 = vadd.f32 %v900, %v3376
      %v3378 = vpop.f32.mrb[0].mxu0
      %v3379 = vpop.f32.mrb[0].mxu0
      %v3380 = vadd.f32 %v905, %v3379
      %v3381 = vpop.f32.mrb[0].mxu0
      %3382 = vmatprep.mubr.bf16.mxu0 %v1871
      %3383 = vmatmul.mubr.bf16.gmra.mrb[0].mxu0 %v1807
      %v3384 = vpop.f32.mrb[0].mxu0
      %v3385 = vadd.f32 %v910, %v3384
      %v3386 = vpop.f32.mrb[0].mxu0
      %v3387 = vpop.f32.mrb[0].mxu0
      %v3388 = vadd.f32 %v915, %v3387
      %v3389 = vpop.f32.mrb[0].mxu0
      %3390 = vmatprep.mubr.bf16.mxu0 %v1872
      %3391 = vmatmul.mubr.bf16.gmra.mrb[0].mxu0 %v1808
      %v3392 = vpop.f32.mrb[0].mxu0
      %v3393 = vadd.f32 %v920, %v3392
      %v3394 = vpop.f32.mrb[0].mxu0
      %v3395 = vpop.f32.mrb[0].mxu0
      %v3396 = vadd.f32 %v925, %v3395
      %v3397 = vpop.f32.mrb[0].mxu0
      %3398 = vmatprep.mubr.bf16.mxu0 %v1873
      %3399 = vmatmul.mubr.bf16.gmra.mrb[0].mxu0 %v1809
      %v3400 = vpop.f32.mrb[0].mxu0
      %v3401 = vadd.f32 %v930, %v3400
      %v3402 = vpop.f32.mrb[0].mxu0
      %v3403 = vpop.f32.mrb[0].mxu0
      %v3404 = vadd.f32 %v935, %v3403
      %v3405 = vpop.f32.mrb[0].mxu0
      %3406 = vmatprep.mubr.bf16.mxu0 %v1874
      %3407 = vmatmul.mubr.bf16.gmra.mrb[0].mxu0 %v1810
      %v3408 = vpop.f32.mrb[0].mxu0
      %v3409 = vadd.f32 %v940, %v3408
      %v3410 = vpop.f32.mrb[0].mxu0
      %v3411 = vpop.f32.mrb[0].mxu0
      %v3412 = vadd.f32 %v945, %v3411
      %v3413 = vpop.f32.mrb[0].mxu0
      %3414 = vmatprep.mubr.bf16.mxu0 %v1875
      %3415 = vmatmul.mubr.bf16.gmra.mrb[0].mxu0 %v1811
      %v3416 = vpop.f32.mrb[0].mxu0
      %v3417 = vadd.f32 %v950, %v3416
      %v3418 = vpop.f32.mrb[0].mxu0
      %v3419 = vpop.f32.mrb[0].mxu0
      %v3420 = vadd.f32 %v955, %v3419
      %v3421 = vpop.f32.mrb[0].mxu0
      %3422 = vmatprep.mubr.bf16.mxu0 %v1876
      %3423 = vmatmul.mubr.bf16.gmra.mrb[0].mxu0 %v1812
      %v3424 = vpop.f32.mrb[0].mxu0
      %v3425 = vadd.f32 %v960, %v3424
      %v3426 = vpop.f32.mrb[0].mxu0
      %v3427 = vpop.f32.mrb[0].mxu0
      %v3428 = vadd.f32 %v965, %v3427
      %v3429 = vpop.f32.mrb[0].mxu0
      %3430 = vmatprep.mubr.bf16.mxu0 %v1885
      %3431 = vmatmul.mubr.bf16.gmra.mrb[0].mxu0 %v1821
      %v3432 = vpop.f32.mrb[0].mxu0
      %v3433 = vadd.f32 %v970, %v3432
      %v3434 = vpop.f32.mrb[0].mxu0
      %v3435 = vpop.f32.mrb[0].mxu0
      %v3436 = vadd.f32 %v975, %v3435
      %v3437 = vpop.f32.mrb[0].mxu0
      %3438 = vmatprep.mubr.bf16.mxu0 %v1886
      %3439 = vmatmul.mubr.bf16.gmra.mrb[0].mxu0 %v1822
      %v3440 = vpop.f32.mrb[0].mxu0
      %v3441 = vadd.f32 %v980, %v3440
      %v3442 = vpop.f32.mrb[0].mxu0
      %v3443 = vpop.f32.mrb[0].mxu0
      %v3444 = vadd.f32 %v985, %v3443
      %v3445 = vpop.f32.mrb[0].mxu0
      %3446 = vmatprep.mubr.bf16.mxu0 %v1887
      %3447 = vmatmul.mubr.bf16.gmra.mrb[0].mxu0 %v1823
      %v3448 = vpop.f32.mrb[0].mxu0
      %v3449 = vadd.f32 %v990, %v3448
      %v3450 = vpop.f32.mrb[0].mxu0
      %v3451 = vpop.f32.mrb[0].mxu0
      %v3452 = vadd.f32 %v995, %v3451
      %v3453 = vpop.f32.mrb[0].mxu0
      %3454 = vmatprep.mubr.bf16.mxu0 %v1888
      %3455 = vmatmul.mubr.bf16.gmra.mrb[0].mxu0 %v1824
      %v3456 = vpop.f32.mrb[0].mxu0
      %v3457 = vadd.f32 %v1000, %v3456
      %v3458 = vpop.f32.mrb[0].mxu0
      %v3459 = vpop.f32.mrb[0].mxu0
      %v3460 = vadd.f32 %v1005, %v3459
      %v3461 = vpop.f32.mrb[0].mxu0
      %3462 = vmatprep.mubr.bf16.mxu0 %v1889
      %3463 = vmatmul.mubr.bf16.gmra.mrb[0].mxu0 %v1825
      %v3464 = vpop.f32.mrb[0].mxu0
      %v3465 = vadd.f32 %v1010, %v3464
      %v3466 = vpop.f32.mrb[0].mxu0
      %v3467 = vpop.f32.mrb[0].mxu0
      %v3468 = vadd.f32 %v1015, %v3467
      %v3469 = vpop.f32.mrb[0].mxu0
      %3470 = vmatprep.mubr.bf16.mxu0 %v1890
      %3471 = vmatmul.mubr.bf16.gmra.mrb[0].mxu0 %v1826
      %v3472 = vpop.f32.mrb[0].mxu0
      %v3473 = vadd.f32 %v1020, %v3472
      %v3474 = vpop.f32.mrb[0].mxu0
      %v3475 = vpop.f32.mrb[0].mxu0
      %v3476 = vadd.f32 %v1025, %v3475
      %v3477 = vpop.f32.mrb[0].mxu0
      %3478 = vmatprep.mubr.bf16.mxu0 %v1891
      %3479 = vmatmul.mubr.bf16.gmra.mrb[0].mxu0 %v1827
      %v3480 = vpop.f32.mrb[0].mxu0
      %v3481 = vadd.f32 %v1030, %v3480
      %v3482 = vpop.f32.mrb[0].mxu0
      %v3483 = vpop.f32.mrb[0].mxu0
      %v3484 = vadd.f32 %v1035, %v3483
      %v3485 = vpop.f32.mrb[0].mxu0
      %3486 = vmatprep.mubr.bf16.mxu0 %v1892
      %3487 = vmatmul.mubr.bf16.gmra.mrb[0].mxu0 %v1828
      %v3488 = vpop.f32.mrb[0].mxu0
      %v3489 = vadd.f32 %v1040, %v3488
      %v3490 = vpop.f32.mrb[0].mxu0
      %v3491 = vpop.f32.mrb[0].mxu0
      %v3492 = vadd.f32 %v1045, %v3491
      %v3493 = vpop.f32.mrb[0].mxu0
      %3494 = vmatprep.mubr.bf16.mxu0 %v1901
      %3495 = vmatmul.mubr.bf16.gmra.mrb[0].mxu0 %v1837
      %v3496 = vpop.f32.mrb[0].mxu0
      %v3497 = vadd.f32 %v1050, %v3496
      %v3498 = vpop.f32.mrb[0].mxu0
      %v3499 = vpop.f32.mrb[0].mxu0
      %v3500 = vadd.f32 %v1055, %v3499
      %v3501 = vpop.f32.mrb[0].mxu0
      %3502 = vmatprep.mubr.bf16.mxu0 %v1902
      %3503 = vmatmul.mubr.bf16.gmra.mrb[0].mxu0 %v1838
      %v3504 = vpop.f32.mrb[0].mxu0
      %v3505 = vadd.f32 %v1060, %v3504
      %v3506 = vpop.f32.mrb[0].mxu0
      %v3507 = vpop.f32.mrb[0].mxu0
      %v3508 = vadd.f32 %v1065, %v3507
      %v3509 = vpop.f32.mrb[0].mxu0
      %3510 = vmatprep.mubr.bf16.mxu0 %v1903
      %3511 = vmatmul.mubr.bf16.gmra.mrb[0].mxu0 %v1839
      %v3512 = vpop.f32.mrb[0].mxu0
      %v3513 = vadd.f32 %v1070, %v3512
      %v3514 = vpop.f32.mrb[0].mxu0
      %v3515 = vpop.f32.mrb[0].mxu0
      %v3516 = vadd.f32 %v1075, %v3515
      %v3517 = vpop.f32.mrb[0].mxu0
      %3518 = vmatprep.mubr.bf16.mxu0 %v1904
      %3519 = vmatmul.mubr.bf16.gmra.mrb[0].mxu0 %v1840
      %v3520 = vpop.f32.mrb[0].mxu0
      %v3521 = vadd.f32 %v1080, %v3520
      %v3522 = vpop.f32.mrb[0].mxu0
      %v3523 = vpop.f32.mrb[0].mxu0
      %v3524 = vadd.f32 %v1085, %v3523
      %v3525 = vpop.f32.mrb[0].mxu0
      %3526 = vmatprep.mubr.bf16.mxu0 %v1905
      %3527 = vmatmul.mubr.bf16.gmra.mrb[0].mxu0 %v1841
      %v3528 = vpop.f32.mrb[0].mxu0
      %v3529 = vadd.f32 %v1090, %v3528
      %v3530 = vpop.f32.mrb[0].mxu0
      %v3531 = vpop.f32.mrb[0].mxu0
      %v3532 = vadd.f32 %v1095, %v3531
      %v3533 = vpop.f32.mrb[0].mxu0
      %3534 = vmatprep.mubr.bf16.mxu0 %v1906
      %3535 = vmatmul.mubr.bf16.gmra.mrb[0].mxu0 %v1842
      %v3536 = vpop.f32.mrb[0].mxu0
      %v3537 = vadd.f32 %v1100, %v3536
      %v3538 = vpop.f32.mrb[0].mxu0
      %v3539 = vpop.f32.mrb[0].mxu0
      %v3540 = vadd.f32 %v1105, %v3539
      %v3541 = vpop.f32.mrb[0].mxu0
      %3542 = vmatprep.mubr.bf16.mxu0 %v1907
      %3543 = vmatmul.mubr.bf16.gmra.mrb[0].mxu0 %v1843
      %v3544 = vpop.f32.mrb[0].mxu0
      %v3545 = vadd.f32 %v1110, %v3544
      %v3546 = vpop.f32.mrb[0].mxu0
      %v3547 = vpop.f32.mrb[0].mxu0
      %v3548 = vadd.f32 %v1115, %v3547
      %v3549 = vpop.f32.mrb[0].mxu0
      %3550 = vmatprep.mubr.bf16.mxu0 %v1908
      %3551 = vmatmul.mubr.bf16.gmra.mrb[0].mxu0 %v1844
      %v3552 = vpop.f32.mrb[0].mxu0
      %v3553 = vadd.f32 %v1120, %v3552
      %v3554 = vpop.f32.mrb[0].mxu0
      %v3555 = vpop.f32.mrb[0].mxu0
      %v3556 = vadd.f32 %v1125, %v3555
      %v3557 = vpop.f32.mrb[0].mxu0
      %3558 = vdwg.mxu0
      %3559 = vmatprep.subr.bf16.mxu0 0
      %3560 = vmatpush1.bf16.msra.mxu0 %v564
      %3561 = vmatprep.subr.bf16.mxu0 0
      %3562 = vmatpush1.bf16.msra.mxu0 %v567
      %3563 = vmatprep.subr.bf16.mxu0 0
      %3564 = vmatpush1.bf16.msra.mxu0 %v570
      %3565 = vmatprep.subr.bf16.mxu0 0
      %3566 = vmatpush1.bf16.msra.mxu0 %v573
      %3567 = vmatprep.subr.bf16.mxu0 0
      %3568 = vmatpush1.bf16.msra.mxu0 %v576
      %3569 = vmatprep.subr.bf16.mxu0 0
      %3570 = vmatpush1.bf16.msra.mxu0 %v579
      %3571 = vmatprep.subr.bf16.mxu0 0
      %3572 = vmatpush1.bf16.msra.mxu0 %v582
      %3573 = vmatprep.subr.bf16.mxu0 0
      %3574 = vmatpush1.bf16.msra.mxu0 %v585
      %3575 = vmatprep.subr.bf16.mxu0 0
      %3576 = vmatpush1.bf16.msra.mxu0 %v588
      %3577 = vmatprep.subr.bf16.mxu0 0
      %3578 = vmatpush1.bf16.msra.mxu0 %v591
      %3579 = vmatprep.subr.bf16.mxu0 0
      %3580 = vmatpush1.bf16.msra.mxu0 %v594
      %3581 = vmatprep.subr.bf16.mxu0 0
      %3582 = vmatpush1.bf16.msra.mxu0 %v597
      %3583 = vmatprep.subr.bf16.mxu0 0
      %3584 = vmatpush1.bf16.msra.mxu0 %v600
      %3585 = vmatprep.subr.bf16.mxu0 0
      %3586 = vmatpush1.bf16.msra.mxu0 %v603
      %3587 = vmatprep.subr.bf16.mxu0 0
      %3588 = vmatpush1.bf16.msra.mxu0 %v606
      %3589 = vmatprep.subr.bf16.mxu0 0
      %3590 = vmatpush1.bf16.msra.mxu0 %v609
      %3591 = vmatprep.mubr.bf16.mxu0 %v1981
      %3592 = vmatmul.mubr.bf16.gmra.mrb[0].mxu0 %v1917
      %v3593 = vpop.f32.mrb[0].mxu0
      %v3594 = vadd.f32 %v3305, %v3593
      %v3595 = vpop.f32.mrb[0].mxu0
      %v3596 = vpop.f32.mrb[0].mxu0
      %v3597 = vadd.f32 %v3308, %v3596
      %v3598 = vpop.f32.mrb[0].mxu0
      %3599 = vmatprep.mubr.bf16.mxu0 %v1982
      %3600 = vmatmul.mubr.bf16.gmra.mrb[0].mxu0 %v1918
      %v3601 = vpop.f32.mrb[0].mxu0
      %v3602 = vadd.f32 %v3313, %v3601
      %v3603 = vpop.f32.mrb[0].mxu0
      %v3604 = vpop.f32.mrb[0].mxu0
      %v3605 = vadd.f32 %v3316, %v3604
      %v3606 = vpop.f32.mrb[0].mxu0
      %3607 = vmatprep.mubr.bf16.mxu0 %v1983
      %3608 = vmatmul.mubr.bf16.gmra.mrb[0].mxu0 %v1919
      %v3609 = vpop.f32.mrb[0].mxu0
      %v3610 = vadd.f32 %v3321, %v3609
      %v3611 = vpop.f32.mrb[0].mxu0
      %v3612 = vpop.f32.mrb[0].mxu0
      %v3613 = vadd.f32 %v3324, %v3612
      %v3614 = vpop.f32.mrb[0].mxu0
      %3615 = vmatprep.mubr.bf16.mxu0 %v1984
      %3616 = vmatmul.mubr.bf16.gmra.mrb[0].mxu0 %v1920
      %v3617 = vpop.f32.mrb[0].mxu0
      %v3618 = vadd.f32 %v3329, %v3617
      %v3619 = vpop.f32.mrb[0].mxu0
      %v3620 = vpop.f32.mrb[0].mxu0
      %v3621 = vadd.f32 %v3332, %v3620
      %v3622 = vpop.f32.mrb[0].mxu0
      %3623 = vmatprep.mubr.bf16.mxu0 %v1985
      %3624 = vmatmul.mubr.bf16.gmra.mrb[0].mxu0 %v1921
      %v3625 = vpop.f32.mrb[0].mxu0
      %v3626 = vadd.f32 %v3337, %v3625
      %v3627 = vpop.f32.mrb[0].mxu0
      %v3628 = vpop.f32.mrb[0].mxu0
      %v3629 = vadd.f32 %v3340, %v3628
      %v3630 = vpop.f32.mrb[0].mxu0
      %3631 = vmatprep.mubr.bf16.mxu0 %v1986
      %3632 = vmatmul.mubr.bf16.gmra.mrb[0].mxu0 %v1922
      %v3633 = vpop.f32.mrb[0].mxu0
      %v3634 = vadd.f32 %v3345, %v3633
      %v3635 = vpop.f32.mrb[0].mxu0
      %v3636 = vpop.f32.mrb[0].mxu0
      %v3637 = vadd.f32 %v3348, %v3636
      %v3638 = vpop.f32.mrb[0].mxu0
      %3639 = vmatprep.mubr.bf16.mxu0 %v1987
      %3640 = vmatmul.mubr.bf16.gmra.mrb[0].mxu0 %v1923
      %v3641 = vpop.f32.mrb[0].mxu0
      %v3642 = vadd.f32 %v3353, %v3641
      %v3643 = vpop.f32.mrb[0].mxu0
      %v3644 = vpop.f32.mrb[0].mxu0
      %v3645 = vadd.f32 %v3356, %v3644
      %v3646 = vpop.f32.mrb[0].mxu0
      %3647 = vmatprep.mubr.bf16.mxu0 %v1988
      %3648 = vmatmul.mubr.bf16.gmra.mrb[0].mxu0 %v1924
      %v3649 = vpop.f32.mrb[0].mxu0
      %v3650 = vadd.f32 %v3361, %v3649
      %v3651 = vpop.f32.mrb[0].mxu0
      %v3652 = vpop.f32.mrb[0].mxu0
      %v3653 = vadd.f32 %v3364, %v3652
      %v3654 = vpop.f32.mrb[0].mxu0
      %3655 = vmatprep.mubr.bf16.mxu0 %v1997
      %3656 = vmatmul.mubr.bf16.gmra.mrb[0].mxu0 %v1933
      %v3657 = vpop.f32.mrb[0].mxu0
      %v3658 = vadd.f32 %v3369, %v3657
      %v3659 = vpop.f32.mrb[0].mxu0
      %v3660 = vpop.f32.mrb[0].mxu0
      %v3661 = vadd.f32 %v3372, %v3660
      %v3662 = vpop.f32.mrb[0].mxu0
      %3663 = vmatprep.mubr.bf16.mxu0 %v1998
      %3664 = vmatmul.mubr.bf16.gmra.mrb[0].mxu0 %v1934
      %v3665 = vpop.f32.mrb[0].mxu0
      %v3666 = vadd.f32 %v3377, %v3665
      %v3667 = vpop.f32.mrb[0].mxu0
      %v3668 = vpop.f32.mrb[0].mxu0
      %v3669 = vadd.f32 %v3380, %v3668
      %v3670 = vpop.f32.mrb[0].mxu0
      %3671 = vmatprep.mubr.bf16.mxu0 %v1999
      %3672 = vmatmul.mubr.bf16.gmra.mrb[0].mxu0 %v1935
      %v3673 = vpop.f32.mrb[0].mxu0
      %v3674 = vadd.f32 %v3385, %v3673
      %v3675 = vpop.f32.mrb[0].mxu0
      %v3676 = vpop.f32.mrb[0].mxu0
      %v3677 = vadd.f32 %v3388, %v3676
      %v3678 = vpop.f32.mrb[0].mxu0
      %3679 = vmatprep.mubr.bf16.mxu0 %v2000
      %3680 = vmatmul.mubr.bf16.gmra.mrb[0].mxu0 %v1936
      %v3681 = vpop.f32.mrb[0].mxu0
      %v3682 = vadd.f32 %v3393, %v3681
      %v3683 = vpop.f32.mrb[0].mxu0
      %v3684 = vpop.f32.mrb[0].mxu0
      %v3685 = vadd.f32 %v3396, %v3684
      %v3686 = vpop.f32.mrb[0].mxu0
      %3687 = vmatprep.mubr.bf16.mxu0 %v2001
      %3688 = vmatmul.mubr.bf16.gmra.mrb[0].mxu0 %v1937
      %v3689 = vpop.f32.mrb[0].mxu0
      %v3690 = vadd.f32 %v3401, %v3689
      %v3691 = vpop.f32.mrb[0].mxu0
      %v3692 = vpop.f32.mrb[0].mxu0
      %v3693 = vadd.f32 %v3404, %v3692
      %v3694 = vpop.f32.mrb[0].mxu0
      %3695 = vmatprep.mubr.bf16.mxu0 %v2002
      %3696 = vmatmul.mubr.bf16.gmra.mrb[0].mxu0 %v1938
      %v3697 = vpop.f32.mrb[0].mxu0
      %v3698 = vadd.f32 %v3409, %v3697
      %v3699 = vpop.f32.mrb[0].mxu0
      %v3700 = vpop.f32.mrb[0].mxu0
      %v3701 = vadd.f32 %v3412, %v3700
      %v3702 = vpop.f32.mrb[0].mxu0
      %3703 = vmatprep.mubr.bf16.mxu0 %v2003
      %3704 = vmatmul.mubr.bf16.gmra.mrb[0].mxu0 %v1939
      %v3705 = vpop.f32.mrb[0].mxu0
      %v3706 = vadd.f32 %v3417, %v3705
      %v3707 = vpop.f32.mrb[0].mxu0
      %v3708 = vpop.f32.mrb[0].mxu0
      %v3709 = vadd.f32 %v3420, %v3708
      %v3710 = vpop.f32.mrb[0].mxu0
      %3711 = vmatprep.mubr.bf16.mxu0 %v2004
      %3712 = vmatmul.mubr.bf16.gmra.mrb[0].mxu0 %v1940
      %v3713 = vpop.f32.mrb[0].mxu0
      %v3714 = vadd.f32 %v3425, %v3713
      %v3715 = vpop.f32.mrb[0].mxu0
      %v3716 = vpop.f32.mrb[0].mxu0
      %v3717 = vadd.f32 %v3428, %v3716
      %v3718 = vpop.f32.mrb[0].mxu0
      %3719 = vmatprep.mubr.bf16.mxu0 %v2013
      %3720 = vmatmul.mubr.bf16.gmra.mrb[0].mxu0 %v1949
      %v3721 = vpop.f32.mrb[0].mxu0
      %v3722 = vadd.f32 %v3433, %v3721
      %v3723 = vpop.f32.mrb[0].mxu0
      %v3724 = vpop.f32.mrb[0].mxu0
      %v3725 = vadd.f32 %v3436, %v3724
      %v3726 = vpop.f32.mrb[0].mxu0
      %3727 = vmatprep.mubr.bf16.mxu0 %v2014
      %3728 = vmatmul.mubr.bf16.gmra.mrb[0].mxu0 %v1950
      %v3729 = vpop.f32.mrb[0].mxu0
      %v3730 = vadd.f32 %v3441, %v3729
      %v3731 = vpop.f32.mrb[0].mxu0
      %v3732 = vpop.f32.mrb[0].mxu0
      %v3733 = vadd.f32 %v3444, %v3732
      %v3734 = vpop.f32.mrb[0].mxu0
      %3735 = vmatprep.mubr.bf16.mxu0 %v2015
      %3736 = vmatmul.mubr.bf16.gmra.mrb[0].mxu0 %v1951
      %v3737 = vpop.f32.mrb[0].mxu0
      %v3738 = vadd.f32 %v3449, %v3737
      %v3739 = vpop.f32.mrb[0].mxu0
      %v3740 = vpop.f32.mrb[0].mxu0
      %v3741 = vadd.f32 %v3452, %v3740
      %v3742 = vpop.f32.mrb[0].mxu0
      %3743 = vmatprep.mubr.bf16.mxu0 %v2016
      %3744 = vmatmul.mubr.bf16.gmra.mrb[0].mxu0 %v1952
      %v3745 = vpop.f32.mrb[0].mxu0
      %v3746 = vadd.f32 %v3457, %v3745
      %v3747 = vpop.f32.mrb[0].mxu0
      %v3748 = vpop.f32.mrb[0].mxu0
      %v3749 = vadd.f32 %v3460, %v3748
      %v3750 = vpop.f32.mrb[0].mxu0
      %3751 = vmatprep.mubr.bf16.mxu0 %v2017
      %3752 = vmatmul.mubr.bf16.gmra.mrb[0].mxu0 %v1953
      %v3753 = vpop.f32.mrb[0].mxu0
      %v3754 = vadd.f32 %v3465, %v3753
      %v3755 = vpop.f32.mrb[0].mxu0
      %v3756 = vpop.f32.mrb[0].mxu0
      %v3757 = vadd.f32 %v3468, %v3756
      %v3758 = vpop.f32.mrb[0].mxu0
      %3759 = vmatprep.mubr.bf16.mxu0 %v2018
      %3760 = vmatmul.mubr.bf16.gmra.mrb[0].mxu0 %v1954
      %v3761 = vpop.f32.mrb[0].mxu0
      %v3762 = vadd.f32 %v3473, %v3761
      %v3763 = vpop.f32.mrb[0].mxu0
      %v3764 = vpop.f32.mrb[0].mxu0
      %v3765 = vadd.f32 %v3476, %v3764
      %v3766 = vpop.f32.mrb[0].mxu0
      %3767 = vmatprep.mubr.bf16.mxu0 %v2019
      %3768 = vmatmul.mubr.bf16.gmra.mrb[0].mxu0 %v1955
      %v3769 = vpop.f32.mrb[0].mxu0
      %v3770 = vadd.f32 %v3481, %v3769
      %v3771 = vpop.f32.mrb[0].mxu0
      %v3772 = vpop.f32.mrb[0].mxu0
      %v3773 = vadd.f32 %v3484, %v3772
      %v3774 = vpop.f32.mrb[0].mxu0
      %3775 = vmatprep.mubr.bf16.mxu0 %v2020
      %3776 = vmatmul.mubr.bf16.gmra.mrb[0].mxu0 %v1956
      %v3777 = vpop.f32.mrb[0].mxu0
      %v3778 = vadd.f32 %v3489, %v3777
      %v3779 = vpop.f32.mrb[0].mxu0
      %v3780 = vpop.f32.mrb[0].mxu0
      %v3781 = vadd.f32 %v3492, %v3780
      %v3782 = vpop.f32.mrb[0].mxu0
      %3783 = vmatprep.mubr.bf16.mxu0 %v2029
      %3784 = vmatmul.mubr.bf16.gmra.mrb[0].mxu0 %v1965
      %v3785 = vpop.f32.mrb[0].mxu0
      %v3786 = vadd.f32 %v3497, %v3785
      %v3787 = vpop.f32.mrb[0].mxu0
      %v3788 = vpop.f32.mrb[0].mxu0
      %v3789 = vadd.f32 %v3500, %v3788
      %v3790 = vpop.f32.mrb[0].mxu0
      %3791 = vmatprep.mubr.bf16.mxu0 %v2030
      %3792 = vmatmul.mubr.bf16.gmra.mrb[0].mxu0 %v1966
      %v3793 = vpop.f32.mrb[0].mxu0
      %v3794 = vadd.f32 %v3505, %v3793
      %v3795 = vpop.f32.mrb[0].mxu0
      %v3796 = vpop.f32.mrb[0].mxu0
      %v3797 = vadd.f32 %v3508, %v3796
      %v3798 = vpop.f32.mrb[0].mxu0
      %3799 = vmatprep.mubr.bf16.mxu0 %v2031
      %3800 = vmatmul.mubr.bf16.gmra.mrb[0].mxu0 %v1967
      %v3801 = vpop.f32.mrb[0].mxu0
      %v3802 = vadd.f32 %v3513, %v3801
      %v3803 = vpop.f32.mrb[0].mxu0
      %v3804 = vpop.f32.mrb[0].mxu0
      %v3805 = vadd.f32 %v3516, %v3804
      %v3806 = vpop.f32.mrb[0].mxu0
      %3807 = vmatprep.mubr.bf16.mxu0 %v2032
      %3808 = vmatmul.mubr.bf16.gmra.mrb[0].mxu0 %v1968
      %v3809 = vpop.f32.mrb[0].mxu0
      %v3810 = vadd.f32 %v3521, %v3809
      %v3811 = vpop.f32.mrb[0].mxu0
      %v3812 = vpop.f32.mrb[0].mxu0
      %v3813 = vadd.f32 %v3524, %v3812
      %v3814 = vpop.f32.mrb[0].mxu0
      %3815 = vmatprep.mubr.bf16.mxu0 %v2033
      %3816 = vmatmul.mubr.bf16.gmra.mrb[0].mxu0 %v1969
      %v3817 = vpop.f32.mrb[0].mxu0
      %v3818 = vadd.f32 %v3529, %v3817
      %v3819 = vpop.f32.mrb[0].mxu0
      %v3820 = vpop.f32.mrb[0].mxu0
      %v3821 = vadd.f32 %v3532, %v3820
      %v3822 = vpop.f32.mrb[0].mxu0
      %3823 = vmatprep.mubr.bf16.mxu0 %v2034
      %3824 = vmatmul.mubr.bf16.gmra.mrb[0].mxu0 %v1970
      %v3825 = vpop.f32.mrb[0].mxu0
      %v3826 = vadd.f32 %v3537, %v3825
      %v3827 = vpop.f32.mrb[0].mxu0
      %v3828 = vpop.f32.mrb[0].mxu0
      %v3829 = vadd.f32 %v3540, %v3828
      %v3830 = vpop.f32.mrb[0].mxu0
      %3831 = vmatprep.mubr.bf16.mxu0 %v2035
      %3832 = vmatmul.mubr.bf16.gmra.mrb[0].mxu0 %v1971
      %v3833 = vpop.f32.mrb[0].mxu0
      %v3834 = vadd.f32 %v3545, %v3833
      %v3835 = vpop.f32.mrb[0].mxu0
      %v3836 = vpop.f32.mrb[0].mxu0
      %v3837 = vadd.f32 %v3548, %v3836
      %v3838 = vpop.f32.mrb[0].mxu0
      %3839 = vmatprep.mubr.bf16.mxu0 %v2036
      %3840 = vmatmul.mubr.bf16.gmra.mrb[0].mxu0 %v1972
      %v3841 = vpop.f32.mrb[0].mxu0
      %v3842 = vadd.f32 %v3553, %v3841
      %v3843 = vpop.f32.mrb[0].mxu0
      %v3844 = vpop.f32.mrb[0].mxu0
      %v3845 = vadd.f32 %v3556, %v3844
      %v3846 = vpop.f32.mrb[0].mxu0
      %3847 = vdwg.mxu0
      %3848 = vmatprep.subr.bf16.mxu0 0
      %3849 = vmatpush1.bf16.msra.mxu0 %v2209
      %3850 = vmatprep.subr.bf16.mxu0 0
      %3851 = vmatpush1.bf16.msra.mxu0 0
      %3852 = vmatprep.subr.bf16.mxu0 0
      %3853 = vmatpush1.bf16.msra.mxu0 0
      %3854 = vmatprep.subr.bf16.mxu0 0
      %3855 = vmatpush1.bf16.msra.mxu0 0
      %3856 = vmatprep.subr.bf16.mxu0 0
      %3857 = vmatpush1.bf16.msra.mxu0 0
      %3858 = vmatprep.subr.bf16.mxu0 0
      %3859 = vmatpush1.bf16.msra.mxu0 0
      %3860 = vmatprep.subr.bf16.mxu0 0
      %3861 = vmatpush1.bf16.msra.mxu0 0
      %3862 = vmatprep.subr.bf16.mxu0 0
      %3863 = vmatpush1.bf16.msra.mxu0 0
      %3864 = vmatprep.subr.bf16.mxu0 0
      %3865 = vmatpush1.bf16.msra.mxu0 0
      %3866 = vmatprep.subr.bf16.mxu0 0
      %3867 = vmatpush1.bf16.msra.mxu0 0
      %3868 = vmatprep.subr.bf16.mxu0 0
      %3869 = vmatpush1.bf16.msra.mxu0 0
      %3870 = vmatprep.subr.bf16.mxu0 0
      %3871 = vmatpush1.bf16.msra.mxu0 0
      %3872 = vmatprep.subr.bf16.mxu0 0
      %3873 = vmatpush1.bf16.msra.mxu0 0
      %3874 = vmatprep.subr.bf16.mxu0 0
      %3875 = vmatpush1.bf16.msra.mxu0 0
      %3876 = vmatprep.subr.bf16.mxu0 0
      %3877 = vmatpush1.bf16.msra.mxu0 0
      %3878 = vmatprep.subr.bf16.mxu0 0
      %3879 = vmatpush1.bf16.msra.mxu0 0
      %3880 = vmatprep.mubr.bf16.mxu0 0
      %3881 = vmatmul.mubr.bf16.gmra.mrb[0].mxu0 %v2103
      %v3882 = vpop.f32.mrb[0].mxu0
      %v3883 = vadd.f32 %v3594, %v3882
      %v3884 = vpop.f32.mrb[0].mxu0
      %v3885 = vpop.f32.mrb[0].mxu0
      %v3886 = vadd.f32 %v3597, %v3885
      %v3887 = vpop.f32.mrb[0].mxu0
      %3888 = vmatprep.mubr.bf16.mxu0 0
      %3889 = vmatmul.mubr.bf16.gmra.mrb[0].mxu0 %v2106
      %v3890 = vpop.f32.mrb[0].mxu0
      %v3891 = vadd.f32 %v3602, %v3890
      %v3892 = vpop.f32.mrb[0].mxu0
      %v3893 = vpop.f32.mrb[0].mxu0
      %v3894 = vadd.f32 %v3605, %v3893
      %v3895 = vpop.f32.mrb[0].mxu0
      %3896 = vmatprep.mubr.bf16.mxu0 0
      %3897 = vmatmul.mubr.bf16.gmra.mrb[0].mxu0 %v2109
      %v3898 = vpop.f32.mrb[0].mxu0
      %v3899 = vadd.f32 %v3610, %v3898
      %v3900 = vpop.f32.mrb[0].mxu0
      %v3901 = vpop.f32.mrb[0].mxu0
      %v3902 = vadd.f32 %v3613, %v3901
      %v3903 = vpop.f32.mrb[0].mxu0
      %3904 = vmatprep.mubr.bf16.mxu0 0
      %3905 = vmatmul.mubr.bf16.gmra.mrb[0].mxu0 %v2112
      %v3906 = vpop.f32.mrb[0].mxu0
      %v3907 = vadd.f32 %v3618, %v3906
      %v3908 = vpop.f32.mrb[0].mxu0
      %v3909 = vpop.f32.mrb[0].mxu0
      %v3910 = vadd.f32 %v3621, %v3909
      %v3911 = vpop.f32.mrb[0].mxu0
      %3912 = vmatprep.mubr.bf16.mxu0 0
      %3913 = vmatmul.mubr.bf16.gmra.mrb[0].mxu0 %v2115
      %v3914 = vpop.f32.mrb[0].mxu0
      %v3915 = vadd.f32 %v3626, %v3914
      %v3916 = vpop.f32.mrb[0].mxu0
      %v3917 = vpop.f32.mrb[0].mxu0
      %v3918 = vadd.f32 %v3629, %v3917
      %v3919 = vpop.f32.mrb[0].mxu0
      %3920 = vmatprep.mubr.bf16.mxu0 0
      %3921 = vmatmul.mubr.bf16.gmra.mrb[0].mxu0 %v2118
      %v3922 = vpop.f32.mrb[0].mxu0
      %v3923 = vadd.f32 %v3634, %v3922
      %v3924 = vpop.f32.mrb[0].mxu0
      %v3925 = vpop.f32.mrb[0].mxu0
      %v3926 = vadd.f32 %v3637, %v3925
      %v3927 = vpop.f32.mrb[0].mxu0
      %3928 = vmatprep.mubr.bf16.mxu0 0
      %3929 = vmatmul.mubr.bf16.gmra.mrb[0].mxu0 %v2121
      %v3930 = vpop.f32.mrb[0].mxu0
      %v3931 = vadd.f32 %v3642, %v3930
      %v3932 = vpop.f32.mrb[0].mxu0
      %v3933 = vpop.f32.mrb[0].mxu0
      %v3934 = vadd.f32 %v3645, %v3933
      %v3935 = vpop.f32.mrb[0].mxu0
      %3936 = vmatprep.mubr.bf16.mxu0 0
      %3937 = vmatmul.mubr.bf16.gmra.mrb[0].mxu0 %v2124
      %v3938 = vpop.f32.mrb[0].mxu0
      %v3939 = vadd.f32 %v3650, %v3938
      %v3940 = vpop.f32.mrb[0].mxu0
      %v3941 = vpop.f32.mrb[0].mxu0
      %v3942 = vadd.f32 %v3653, %v3941
      %v3943 = vpop.f32.mrb[0].mxu0
      %3944 = vmatprep.mubr.bf16.mxu0 0
      %3945 = vmatmul.mubr.bf16.gmra.mrb[0].mxu0 %v2127
      %v3946 = vpop.f32.mrb[0].mxu0
      %v3947 = vadd.f32 %v3658, %v3946
      %v3948 = vpop.f32.mrb[0].mxu0
      %v3949 = vpop.f32.mrb[0].mxu0
      %v3950 = vadd.f32 %v3661, %v3949
      %v3951 = vpop.f32.mrb[0].mxu0
      %3952 = vmatprep.mubr.bf16.mxu0 0
      %3953 = vmatmul.mubr.bf16.gmra.mrb[0].mxu0 %v2130
      %v3954 = vpop.f32.mrb[0].mxu0
      %v3955 = vadd.f32 %v3666, %v3954
      %v3956 = vpop.f32.mrb[0].mxu0
      %v3957 = vpop.f32.mrb[0].mxu0
      %v3958 = vadd.f32 %v3669, %v3957
      %v3959 = vpop.f32.mrb[0].mxu0
      %3960 = vmatprep.mubr.bf16.mxu0 0
      %3961 = vmatmul.mubr.bf16.gmra.mrb[0].mxu0 %v2133
      %v3962 = vpop.f32.mrb[0].mxu0
      %v3963 = vadd.f32 %v3674, %v3962
      %v3964 = vpop.f32.mrb[0].mxu0
      %v3965 = vpop.f32.mrb[0].mxu0
      %v3966 = vadd.f32 %v3677, %v3965
      %v3967 = vpop.f32.mrb[0].mxu0
      %3968 = vmatprep.mubr.bf16.mxu0 0
      %3969 = vmatmul.mubr.bf16.gmra.mrb[0].mxu0 %v2136
      %v3970 = vpop.f32.mrb[0].mxu0
      %v3971 = vadd.f32 %v3682, %v3970
      %v3972 = vpop.f32.mrb[0].mxu0
      %v3973 = vpop.f32.mrb[0].mxu0
      %v3974 = vadd.f32 %v3685, %v3973
      %v3975 = vpop.f32.mrb[0].mxu0
      %3976 = vmatprep.mubr.bf16.mxu0 0
      %3977 = vmatmul.mubr.bf16.gmra.mrb[0].mxu0 %v2139
      %v3978 = vpop.f32.mrb[0].mxu0
      %v3979 = vadd.f32 %v3690, %v3978
      %v3980 = vpop.f32.mrb[0].mxu0
      %v3981 = vpop.f32.mrb[0].mxu0
      %v3982 = vadd.f32 %v3693, %v3981
      %v3983 = vpop.f32.mrb[0].mxu0
      %3984 = vmatprep.mubr.bf16.mxu0 0
      %3985 = vmatmul.mubr.bf16.gmra.mrb[0].mxu0 %v2142
      %v3986 = vpop.f32.mrb[0].mxu0
      %v3987 = vadd.f32 %v3698, %v3986
      %v3988 = vpop.f32.mrb[0].mxu0
      %v3989 = vpop.f32.mrb[0].mxu0
      %v3990 = vadd.f32 %v3701, %v3989
      %v3991 = vpop.f32.mrb[0].mxu0
      %3992 = vmatprep.mubr.bf16.mxu0 0
      %3993 = vmatmul.mubr.bf16.gmra.mrb[0].mxu0 %v2145
      %v3994 = vpop.f32.mrb[0].mxu0
      %v3995 = vadd.f32 %v3706, %v3994
      %v3996 = vpop.f32.mrb[0].mxu0
      %v3997 = vpop.f32.mrb[0].mxu0
      %v3998 = vadd.f32 %v3709, %v3997
      %v3999 = vpop.f32.mrb[0].mxu0
      %4000 = vmatprep.mubr.bf16.mxu0 0
      %4001 = vmatmul.mubr.bf16.gmra.mrb[0].mxu0 %v2148
      %v4002 = vpop.f32.mrb[0].mxu0
      %v4003 = vadd.f32 %v3714, %v4002
      %v4004 = vpop.f32.mrb[0].mxu0
      %v4005 = vpop.f32.mrb[0].mxu0
      %v4006 = vadd.f32 %v3717, %v4005
      %v4007 = vpop.f32.mrb[0].mxu0
      %4008 = vmatprep.mubr.bf16.mxu0 0
      %4009 = vmatmul.mubr.bf16.gmra.mrb[0].mxu0 %v2151
      %v4010 = vpop.f32.mrb[0].mxu0
      %v4011 = vadd.f32 %v3722, %v4010
      %v4012 = vpop.f32.mrb[0].mxu0
      %v4013 = vpop.f32.mrb[0].mxu0
      %v4014 = vadd.f32 %v3725, %v4013
      %v4015 = vpop.f32.mrb[0].mxu0
      %4016 = vmatprep.mubr.bf16.mxu0 0
      %4017 = vmatmul.mubr.bf16.gmra.mrb[0].mxu0 %v2154
      %v4018 = vpop.f32.mrb[0].mxu0
      %v4019 = vadd.f32 %v3730, %v4018
      %v4020 = vpop.f32.mrb[0].mxu0
      %v4021 = vpop.f32.mrb[0].mxu0
      %v4022 = vadd.f32 %v3733, %v4021
      %v4023 = vpop.f32.mrb[0].mxu0
      %4024 = vmatprep.mubr.bf16.mxu0 0
      %4025 = vmatmul.mubr.bf16.gmra.mrb[0].mxu0 %v2157
      %v4026 = vpop.f32.mrb[0].mxu0
      %v4027 = vadd.f32 %v3738, %v4026
      %v4028 = vpop.f32.mrb[0].mxu0
      %v4029 = vpop.f32.mrb[0].mxu0
      %v4030 = vadd.f32 %v3741, %v4029
      %v4031 = vpop.f32.mrb[0].mxu0
      %4032 = vmatprep.mubr.bf16.mxu0 0
      %4033 = vmatmul.mubr.bf16.gmra.mrb[0].mxu0 %v2160
      %v4034 = vpop.f32.mrb[0].mxu0
      %v4035 = vadd.f32 %v3746, %v4034
      %v4036 = vpop.f32.mrb[0].mxu0
      %v4037 = vpop.f32.mrb[0].mxu0
      %v4038 = vadd.f32 %v3749, %v4037
      %v4039 = vpop.f32.mrb[0].mxu0
      %4040 = vmatprep.mubr.bf16.mxu0 0
      %4041 = vmatmul.mubr.bf16.gmra.mrb[0].mxu0 %v2163
      %v4042 = vpop.f32.mrb[0].mxu0
      %v4043 = vadd.f32 %v3754, %v4042
      %v4044 = vpop.f32.mrb[0].mxu0
      %v4045 = vpop.f32.mrb[0].mxu0
      %v4046 = vadd.f32 %v3757, %v4045
      %v4047 = vpop.f32.mrb[0].mxu0
      %4048 = vmatprep.mubr.bf16.mxu0 0
      %4049 = vmatmul.mubr.bf16.gmra.mrb[0].mxu0 %v2166
      %v4050 = vpop.f32.mrb[0].mxu0
      %v4051 = vadd.f32 %v3762, %v4050
      %v4052 = vpop.f32.mrb[0].mxu0
      %v4053 = vpop.f32.mrb[0].mxu0
      %v4054 = vadd.f32 %v3765, %v4053
      %v4055 = vpop.f32.mrb[0].mxu0
      %4056 = vmatprep.mubr.bf16.mxu0 0
      %4057 = vmatmul.mubr.bf16.gmra.mrb[0].mxu0 %v2169
      %v4058 = vpop.f32.mrb[0].mxu0
      %v4059 = vadd.f32 %v3770, %v4058
      %v4060 = vpop.f32.mrb[0].mxu0
      %v4061 = vpop.f32.mrb[0].mxu0
      %v4062 = vadd.f32 %v3773, %v4061
      %v4063 = vpop.f32.mrb[0].mxu0
      %4064 = vmatprep.mubr.bf16.mxu0 0
      %4065 = vmatmul.mubr.bf16.gmra.mrb[0].mxu0 %v2172
      %v4066 = vpop.f32.mrb[0].mxu0
      %v4067 = vadd.f32 %v3778, %v4066
      %v4068 = vpop.f32.mrb[0].mxu0
      %v4069 = vpop.f32.mrb[0].mxu0
      %v4070 = vadd.f32 %v3781, %v4069
      %v4071 = vpop.f32.mrb[0].mxu0
      %4072 = vmatprep.mubr.bf16.mxu0 0
      %4073 = vmatmul.mubr.bf16.gmra.mrb[0].mxu0 %v2175
      %v4074 = vpop.f32.mrb[0].mxu0
      %v4075 = vadd.f32 %v3786, %v4074
      %v4076 = vpop.f32.mrb[0].mxu0
      %v4077 = vpop.f32.mrb[0].mxu0
      %v4078 = vadd.f32 %v3789, %v4077
      %v4079 = vpop.f32.mrb[0].mxu0
      %4080 = vmatprep.mubr.bf16.mxu0 0
      %4081 = vmatmul.mubr.bf16.gmra.mrb[0].mxu0 %v2178
      %v4082 = vpop.f32.mrb[0].mxu0
      %v4083 = vadd.f32 %v3794, %v4082
      %v4084 = vpop.f32.mrb[0].mxu0
      %v4085 = vpop.f32.mrb[0].mxu0
      %v4086 = vadd.f32 %v3797, %v4085
      %v4087 = vpop.f32.mrb[0].mxu0
      %4088 = vmatprep.mubr.bf16.mxu0 0
      %4089 = vmatmul.mubr.bf16.gmra.mrb[0].mxu0 %v2181
      %v4090 = vpop.f32.mrb[0].mxu0
      %v4091 = vadd.f32 %v3802, %v4090
      %v4092 = vpop.f32.mrb[0].mxu0
      %v4093 = vpop.f32.mrb[0].mxu0
      %v4094 = vadd.f32 %v3805, %v4093
      %v4095 = vpop.f32.mrb[0].mxu0
      %4096 = vmatprep.mubr.bf16.mxu0 0
      %4097 = vmatmul.mubr.bf16.gmra.mrb[0].mxu0 %v2184
      %v4098 = vpop.f32.mrb[0].mxu0
      %v4099 = vadd.f32 %v3810, %v4098
      %v4100 = vpop.f32.mrb[0].mxu0
      %v4101 = vpop.f32.mrb[0].mxu0
      %v4102 = vadd.f32 %v3813, %v4101
      %v4103 = vpop.f32.mrb[0].mxu0
      %4104 = vmatprep.mubr.bf16.mxu0 0
      %4105 = vmatmul.mubr.bf16.gmra.mrb[0].mxu0 %v2187
      %v4106 = vpop.f32.mrb[0].mxu0
      %v4107 = vadd.f32 %v3818, %v4106
      %v4108 = vpop.f32.mrb[0].mxu0
      %v4109 = vpop.f32.mrb[0].mxu0
      %v4110 = vadd.f32 %v3821, %v4109
      %v4111 = vpop.f32.mrb[0].mxu0
      %4112 = vmatprep.mubr.bf16.mxu0 0
      %4113 = vmatmul.mubr.bf16.gmra.mrb[0].mxu0 %v2190
      %v4114 = vpop.f32.mrb[0].mxu0
      %v4115 = vadd.f32 %v3826, %v4114
      %v4116 = vpop.f32.mrb[0].mxu0
      %v4117 = vpop.f32.mrb[0].mxu0
      %v4118 = vadd.f32 %v3829, %v4117
      %v4119 = vpop.f32.mrb[0].mxu0
      %4120 = vmatprep.mubr.bf16.mxu0 0
      %4121 = vmatmul.mubr.bf16.gmra.mrb[0].mxu0 %v2193
      %v4122 = vpop.f32.mrb[0].mxu0
      %v4123 = vadd.f32 %v3834, %v4122
      %v4124 = vpop.f32.mrb[0].mxu0
      %v4125 = vpop.f32.mrb[0].mxu0
      %v4126 = vadd.f32 %v3837, %v4125
      %v4127 = vpop.f32.mrb[0].mxu0
      %4128 = vmatprep.mubr.bf16.mxu0 0
      %4129 = vmatmul.mubr.bf16.gmra.mrb[0].mxu0 %v2196
      %v4130 = vpop.f32.mrb[0].mxu0
      %v4131 = vadd.f32 %v3842, %v4130
      %v4132 = vpop.f32.mrb[0].mxu0
      %v4133 = vpop.f32.mrb[0].mxu0
      %v4134 = vadd.f32 %v3845, %v4133
      %v4135 = vpop.f32.mrb[0].mxu0
      %4136 = vdwg.mxu0
      %v4137 = vmax.f32 %v2952, 0.0
      %v4138 = vmax.f32 %v2954, 0.0
      %v4139 = vmax.f32 %v3883, 0.0
      %v4140 = vmax.f32 %v2956, 0.0
      %v4141 = vmax.f32 %v2958, 0.0
      %v4142 = vmax.f32 %v3886, 0.0
      %v4143 = vmax.f32 %v2962, 0.0
      %v4144 = vmax.f32 %v2964, 0.0
      %v4145 = vmax.f32 %v3891, 0.0
      %v4146 = vmax.f32 %v2966, 0.0
      %v4147 = vmax.f32 %v2968, 0.0
      %v4148 = vmax.f32 %v3894, 0.0
      %v4149 = vmax.f32 %v2972, 0.0
      %v4150 = vmax.f32 %v2974, 0.0
      %v4151 = vmax.f32 %v3899, 0.0
      %v4152 = vmax.f32 %v2976, 0.0
      %v4153 = vmax.f32 %v2978, 0.0
      %v4154 = vmax.f32 %v3902, 0.0
      %v4155 = vmax.f32 %v2982, 0.0
      %v4156 = vmax.f32 %v2984, 0.0
      %v4157 = vmax.f32 %v3907, 0.0
      %v4158 = vmax.f32 %v2986, 0.0
      %v4159 = vmax.f32 %v2988, 0.0
      %v4160 = vmax.f32 %v3910, 0.0
      %v4161 = vmax.f32 %v2992, 0.0
      %v4162 = vmax.f32 %v2994, 0.0
      %v4163 = vmax.f32 %v3915, 0.0
      %v4164 = vmax.f32 %v2996, 0.0
      %v4165 = vmax.f32 %v2998, 0.0
      %v4166 = vmax.f32 %v3918, 0.0
      %v4167 = vmax.f32 %v3002, 0.0
      %v4168 = vmax.f32 %v3004, 0.0
      %v4169 = vmax.f32 %v3923, 0.0
      %v4170 = vmax.f32 %v3006, 0.0
      %v4171 = vmax.f32 %v3008, 0.0
      %v4172 = vmax.f32 %v3926, 0.0
      %v4173 = vmax.f32 %v3012, 0.0
      %v4174 = vmax.f32 %v3014, 0.0
      %v4175 = vmax.f32 %v3931, 0.0
      %v4176 = vmax.f32 %v3016, 0.0
      %v4177 = vmax.f32 %v3018, 0.0
      %v4178 = vmax.f32 %v3934, 0.0
      %v4179 = vmax.f32 %v3022, 0.0
      %v4180 = vmax.f32 %v3024, 0.0
      %v4181 = vmax.f32 %v3939, 0.0
      %v4182 = vmax.f32 %v3026, 0.0
      %v4183 = vmax.f32 %v3028, 0.0
      %v4184 = vmax.f32 %v3942, 0.0
      %v4185 = vmax.f32 %v3032, 0.0
      %v4186 = vmax.f32 %v3034, 0.0
      %v4187 = vmax.f32 %v3947, 0.0
      %v4188 = vmax.f32 %v3036, 0.0
      %v4189 = vmax.f32 %v3038, 0.0
      %v4190 = vmax.f32 %v3950, 0.0
      %v4191 = vmax.f32 %v3042, 0.0
      %v4192 = vmax.f32 %v3044, 0.0
      %v4193 = vmax.f32 %v3955, 0.0
      %v4194 = vmax.f32 %v3046, 0.0
      %v4195 = vmax.f32 %v3048, 0.0
      %v4196 = vmax.f32 %v3958, 0.0
      %v4197 = vmax.f32 %v3052, 0.0
      %v4198 = vmax.f32 %v3054, 0.0
      %v4199 = vmax.f32 %v3963, 0.0
      %v4200 = vmax.f32 %v3056, 0.0
      %v4201 = vmax.f32 %v3058, 0.0
      %v4202 = vmax.f32 %v3966, 0.0
      %v4203 = vmax.f32 %v3062, 0.0
      %v4204 = vmax.f32 %v3064, 0.0
      %v4205 = vmax.f32 %v3971, 0.0
      %v4206 = vmax.f32 %v3066, 0.0
      %v4207 = vmax.f32 %v3068, 0.0
      %v4208 = vmax.f32 %v3974, 0.0
      %v4209 = vmax.f32 %v3072, 0.0
      %v4210 = vmax.f32 %v3074, 0.0
      %v4211 = vmax.f32 %v3979, 0.0
      %v4212 = vmax.f32 %v3076, 0.0
      %v4213 = vmax.f32 %v3078, 0.0
      %v4214 = vmax.f32 %v3982, 0.0
      %v4215 = vmax.f32 %v3082, 0.0
      %v4216 = vmax.f32 %v3084, 0.0
      %v4217 = vmax.f32 %v3987, 0.0
      %v4218 = vmax.f32 %v3086, 0.0
      %v4219 = vmax.f32 %v3088, 0.0
      %v4220 = vmax.f32 %v3990, 0.0
      %v4221 = vmax.f32 %v3092, 0.0
      %v4222 = vmax.f32 %v3094, 0.0
      %v4223 = vmax.f32 %v3995, 0.0
      %v4224 = vmax.f32 %v3096, 0.0
      %v4225 = vmax.f32 %v3098, 0.0
      %v4226 = vmax.f32 %v3998, 0.0
      %v4227 = vmax.f32 %v3102, 0.0
      %v4228 = vmax.f32 %v3104, 0.0
      %v4229 = vmax.f32 %v4003, 0.0
      %v4230 = vmax.f32 %v3106, 0.0
      %v4231 = vmax.f32 %v3108, 0.0
      %v4232 = vmax.f32 %v4006, 0.0
      %v4233 = vmax.f32 %v3112, 0.0
      %v4234 = vmax.f32 %v3114, 0.0
      %v4235 = vmax.f32 %v4011, 0.0
      %v4236 = vmax.f32 %v3116, 0.0
      %v4237 = vmax.f32 %v3118, 0.0
      %v4238 = vmax.f32 %v4014, 0.0
      %v4239 = vmax.f32 %v3122, 0.0
      %v4240 = vmax.f32 %v3124, 0.0
      %v4241 = vmax.f32 %v4019, 0.0
      %v4242 = vmax.f32 %v3126, 0.0
      %v4243 = vmax.f32 %v3128, 0.0
      %v4244 = vmax.f32 %v4022, 0.0
      %v4245 = vmax.f32 %v3132, 0.0
      %v4246 = vmax.f32 %v3134, 0.0
      %v4247 = vmax.f32 %v4027, 0.0
      %v4248 = vmax.f32 %v3136, 0.0
      %v4249 = vmax.f32 %v3138, 0.0
      %v4250 = vmax.f32 %v4030, 0.0
      %v4251 = vmax.f32 %v3142, 0.0
      %v4252 = vmax.f32 %v3144, 0.0
      %v4253 = vmax.f32 %v4035, 0.0
      %v4254 = vmax.f32 %v3146, 0.0
      %v4255 = vmax.f32 %v3148, 0.0
      %v4256 = vmax.f32 %v4038, 0.0
      %v4257 = vmax.f32 %v3152, 0.0
      %v4258 = vmax.f32 %v3154, 0.0
      %v4259 = vmax.f32 %v4043, 0.0
      %v4260 = vmax.f32 %v3156, 0.0
      %v4261 = vmax.f32 %v3158, 0.0
      %v4262 = vmax.f32 %v4046, 0.0
      %v4263 = vmax.f32 %v3162, 0.0
      %v4264 = vmax.f32 %v3164, 0.0
      %v4265 = vmax.f32 %v4051, 0.0
      %v4266 = vmax.f32 %v3166, 0.0
      %v4267 = vmax.f32 %v3168, 0.0
      %v4268 = vmax.f32 %v4054, 0.0
      %v4269 = vmax.f32 %v3172, 0.0
      %v4270 = vmax.f32 %v3174, 0.0
      %v4271 = vmax.f32 %v4059, 0.0
      %v4272 = vmax.f32 %v3176, 0.0
      %v4273 = vmax.f32 %v3178, 0.0
      %v4274 = vmax.f32 %v4062, 0.0
      %v4275 = vmax.f32 %v3182, 0.0
      %v4276 = vmax.f32 %v3184, 0.0
      %v4277 = vmax.f32 %v4067, 0.0
      %v4278 = vmax.f32 %v3186, 0.0
      %v4279 = vmax.f32 %v3188, 0.0
      %v4280 = vmax.f32 %v4070, 0.0
      %v4281 = vmax.f32 %v3192, 0.0
      %v4282 = vmax.f32 %v3194, 0.0
      %v4283 = vmax.f32 %v4075, 0.0
      %v4284 = vmax.f32 %v3196, 0.0
      %v4285 = vmax.f32 %v3198, 0.0
      %v4286 = vmax.f32 %v4078, 0.0
      %v4287 = vmax.f32 %v3202, 0.0
      %v4288 = vmax.f32 %v3204, 0.0
      %v4289 = vmax.f32 %v4083, 0.0
      %v4290 = vmax.f32 %v3206, 0.0
      %v4291 = vmax.f32 %v3208, 0.0
      %v4292 = vmax.f32 %v4086, 0.0
      %v4293 = vmax.f32 %v3212, 0.0
      %v4294 = vmax.f32 %v3214, 0.0
      %v4295 = vmax.f32 %v4091, 0.0
      %v4296 = vmax.f32 %v3216, 0.0
      %v4297 = vmax.f32 %v3218, 0.0
      %v4298 = vmax.f32 %v4094, 0.0
      %v4299 = vmax.f32 %v3222, 0.0
      %v4300 = vmax.f32 %v3224, 0.0
      %v4301 = vmax.f32 %v4099, 0.0
      %v4302 = vmax.f32 %v3226, 0.0
      %v4303 = vmax.f32 %v3228, 0.0
      %v4304 = vmax.f32 %v4102, 0.0
      %v4305 = vmax.f32 %v3232, 0.0
      %v4306 = vmax.f32 %v3234, 0.0
      %v4307 = vmax.f32 %v4107, 0.0
      %v4308 = vmax.f32 %v3236, 0.0
      %v4309 = vmax.f32 %v3238, 0.0
      %v4310 = vmax.f32 %v4110, 0.0
      %v4311 = vmax.f32 %v3242, 0.0
      %v4312 = vmax.f32 %v3244, 0.0
      %v4313 = vmax.f32 %v4115, 0.0
      %v4314 = vmax.f32 %v3246, 0.0
      %v4315 = vmax.f32 %v3248, 0.0
      %v4316 = vmax.f32 %v4118, 0.0
      %v4317 = vmax.f32 %v3252, 0.0
      %v4318 = vmax.f32 %v3254, 0.0
      %v4319 = vmax.f32 %v4123, 0.0
      %v4320 = vmax.f32 %v3256, 0.0
      %v4321 = vmax.f32 %v3258, 0.0
      %v4322 = vmax.f32 %v4126, 0.0
      %v4323 = vmax.f32 %v3262, 0.0
      %v4324 = vmax.f32 %v3264, 0.0
      %v4325 = vmax.f32 %v4131, 0.0
      %v4326 = vmax.f32 %v3266, 0.0
      %v4327 = vmax.f32 %v3268, 0.0
      %v4328 = vmax.f32 %v4134, 0.0
      %v4329 = vpack.c.bf16 %v4140, %v4137
      %v4330 = vpack.c.bf16 %v4141, %v4138
      %v4331 = vpack.c.bf16 %v4142, %v4139
      %v4332 = vpack.c.bf16 %v4146, %v4143
      %v4333 = vpack.c.bf16 %v4147, %v4144
      %v4334 = vpack.c.bf16 %v4148, %v4145
      %v4335 = vpack.c.bf16 %v4152, %v4149
      %v4336 = vpack.c.bf16 %v4153, %v4150
      %v4337 = vpack.c.bf16 %v4154, %v4151
      %v4338 = vpack.c.bf16 %v4158, %v4155
      %v4339 = vpack.c.bf16 %v4159, %v4156
      %v4340 = vpack.c.bf16 %v4160, %v4157
      %v4341 = vpack.c.bf16 %v4164, %v4161
      %v4342 = vpack.c.bf16 %v4165, %v4162
      %v4343 = vpack.c.bf16 %v4166, %v4163
      %v4344 = vpack.c.bf16 %v4170, %v4167
      %v4345 = vpack.c.bf16 %v4171, %v4168
      %v4346 = vpack.c.bf16 %v4172, %v4169
      %v4347 = vpack.c.bf16 %v4176, %v4173
      %v4348 = vpack.c.bf16 %v4177, %v4174
      %v4349 = vpack.c.bf16 %v4178, %v4175
      %v4350 = vpack.c.bf16 %v4182, %v4179
      %v4351 = vpack.c.bf16 %v4183, %v4180
      %v4352 = vpack.c.bf16 %v4184, %v4181
      %v4353 = vpack.c.bf16 %v4188, %v4185
      %v4354 = vpack.c.bf16 %v4189, %v4186
      %v4355 = vpack.c.bf16 %v4190, %v4187
      %v4356 = vpack.c.bf16 %v4194, %v4191
      %v4357 = vpack.c.bf16 %v4195, %v4192
      %v4358 = vpack.c.bf16 %v4196, %v4193
      %v4359 = vpack.c.bf16 %v4200, %v4197
      %v4360 = vpack.c.bf16 %v4201, %v4198
      %v4361 = vpack.c.bf16 %v4202, %v4199
      %v4362 = vpack.c.bf16 %v4206, %v4203
      %v4363 = vpack.c.bf16 %v4207, %v4204
      %v4364 = vpack.c.bf16 %v4208, %v4205
      %v4365 = vpack.c.bf16 %v4212, %v4209
      %v4366 = vpack.c.bf16 %v4213, %v4210
      %v4367 = vpack.c.bf16 %v4214, %v4211
      %v4368 = vpack.c.bf16 %v4218, %v4215
      %v4369 = vpack.c.bf16 %v4219, %v4216
      %v4370 = vpack.c.bf16 %v4220, %v4217
      %v4371 = vpack.c.bf16 %v4224, %v4221
      %v4372 = vpack.c.bf16 %v4225, %v4222
      %v4373 = vpack.c.bf16 %v4226, %v4223
      %v4374 = vpack.c.bf16 %v4230, %v4227
      %v4375 = vpack.c.bf16 %v4231, %v4228
      %v4376 = vpack.c.bf16 %v4232, %v4229
      %v4377 = vpack.c.bf16 %v4236, %v4233
      %v4378 = vpack.c.bf16 %v4237, %v4234
      %v4379 = vpack.c.bf16 %v4238, %v4235
      %v4380 = vpack.c.bf16 %v4242, %v4239
      %v4381 = vpack.c.bf16 %v4243, %v4240
      %v4382 = vpack.c.bf16 %v4244, %v4241
      %v4383 = vpack.c.bf16 %v4248, %v4245
      %v4384 = vpack.c.bf16 %v4249, %v4246
      %v4385 = vpack.c.bf16 %v4250, %v4247
      %v4386 = vpack.c.bf16 %v4254, %v4251
      %v4387 = vpack.c.bf16 %v4255, %v4252
      %v4388 = vpack.c.bf16 %v4256, %v4253
      %v4389 = vpack.c.bf16 %v4260, %v4257
      %v4390 = vpack.c.bf16 %v4261, %v4258
      %v4391 = vpack.c.bf16 %v4262, %v4259
      %v4392 = vpack.c.bf16 %v4266, %v4263
      %v4393 = vpack.c.bf16 %v4267, %v4264
      %v4394 = vpack.c.bf16 %v4268, %v4265
      %v4395 = vpack.c.bf16 %v4272, %v4269
      %v4396 = vpack.c.bf16 %v4273, %v4270
      %v4397 = vpack.c.bf16 %v4274, %v4271
      %v4398 = vpack.c.bf16 %v4278, %v4275
      %v4399 = vpack.c.bf16 %v4279, %v4276
      %v4400 = vpack.c.bf16 %v4280, %v4277
      %v4401 = vpack.c.bf16 %v4284, %v4281
      %v4402 = vpack.c.bf16 %v4285, %v4282
      %v4403 = vpack.c.bf16 %v4286, %v4283
      %v4404 = vpack.c.bf16 %v4290, %v4287
      %v4405 = vpack.c.bf16 %v4291, %v4288
      %v4406 = vpack.c.bf16 %v4292, %v4289
      %v4407 = vpack.c.bf16 %v4296, %v4293
      %v4408 = vpack.c.bf16 %v4297, %v4294
      %v4409 = vpack.c.bf16 %v4298, %v4295
      %v4410 = vpack.c.bf16 %v4302, %v4299
      %v4411 = vpack.c.bf16 %v4303, %v4300
      %v4412 = vpack.c.bf16 %v4304, %v4301
      %v4413 = vpack.c.bf16 %v4308, %v4305
      %v4414 = vpack.c.bf16 %v4309, %v4306
      %v4415 = vpack.c.bf16 %v4310, %v4307
      %v4416 = vpack.c.bf16 %v4314, %v4311
      %v4417 = vpack.c.bf16 %v4315, %v4312
      %v4418 = vpack.c.bf16 %v4316, %v4313
      %v4419 = vpack.c.bf16 %v4320, %v4317
      %v4420 = vpack.c.bf16 %v4321, %v4318
      %v4421 = vpack.c.bf16 %v4322, %v4319
      %v4422 = vpack.c.bf16 %v4326, %v4323
      %v4423 = vpack.c.bf16 %v4327, %v4324
      %v4424 = vpack.c.bf16 %v4328, %v4325
      %v4425 = vld [vmem:[%s3] sm:$0xff]
      %v4426 = vld [vmem:[%s3 + $0x8] sm:$0xff]
      %v4427 = vld [vmem:[%s3 + $0x10] sm:$0xff]
      %v4428 = vld [vmem:[%s3 + $0x18] sm:$0xff]
      %v4429 = vld [vmem:[%s3 + $0x20] sm:$0xff]
      %v4430 = vld [vmem:[%s3 + $0x28] sm:$0xff]
      %v4431 = vld [vmem:[%s3 + $0x30] sm:$0xff]
      %v4432 = vld [vmem:[%s3 + $0x38] sm:$0xff]
      %v4433 = vld [vmem:[%s3 + $0x40] sm:$0xff]
      %v4434 = vld [vmem:[%s3 + $0x48] sm:$0xff]
      %v4435 = vld [vmem:[%s3 + $0x50] sm:$0xff]
      %v4436 = vld [vmem:[%s3 + $0x58] sm:$0xff]
      %v4437 = vld [vmem:[%s3 + $0x60] sm:$0xff]
      %v4438 = vld [vmem:[%s3 + $0x68] sm:$0xff]
      %v4439 = vld [vmem:[%s3 + $0x70] sm:$0xff]
      %v4440 = vld [vmem:[%s3 + $0x78] sm:$0xff]
      %v4441 = vld [vmem:[%s3 + $0x80] sm:$0xff]
      %v4442 = vld [vmem:[%s3 + $0x88] sm:$0xff]
      %v4443 = vld [vmem:[%s3 + $0x90] sm:$0xff]
      %v4444 = vld [vmem:[%s3 + $0x98] sm:$0xff]
      %v4445 = vld [vmem:[%s3 + $0xa0] sm:$0xff]
      %v4446 = vld [vmem:[%s3 + $0xa8] sm:$0xff]
      %v4447 = vld [vmem:[%s3 + $0xb0] sm:$0xff]
      %v4448 = vld [vmem:[%s3 + $0xb8] sm:$0xff]
      %v4449 = vld [vmem:[%s3 + $0xc0] sm:$0xff]
      %v4450 = vld [vmem:[%s3 + $0xc8] sm:$0xff]
      %v4451 = vld [vmem:[%s3 + $0xd0] sm:$0xff]
      %v4452 = vld [vmem:[%s3 + $0xd8] sm:$0xff]
      %v4453 = vld [vmem:[%s3 + $0xe0] sm:$0xff]
      %v4454 = vld [vmem:[%s3 + $0xe8] sm:$0xff]
      %v4455 = vld [vmem:[%s3 + $0xf0] sm:$0xff]
      %v4456 = vld [vmem:[%s3 + $0xf8] sm:$0xff]
      %v4457 = vld [vmem:[%s3 + $0x100] sm:$0xff]
      %v4458 = vld [vmem:[%s3 + $0x108] sm:$0xff]
      %v4459 = vld [vmem:[%s3 + $0x110] sm:$0xff]
      %v4460 = vld [vmem:[%s3 + $0x118] sm:$0xff]
      %v4461 = vld [vmem:[%s3 + $0x120] sm:$0xff]
      %v4462 = vld [vmem:[%s3 + $0x128] sm:$0xff]
      %v4463 = vld [vmem:[%s3 + $0x130] sm:$0xff]
      %v4464 = vld [vmem:[%s3 + $0x138] sm:$0xff]
      %v4465 = vld [vmem:[%s3 + $0x140] sm:$0xff]
      %v4466 = vld [vmem:[%s3 + $0x148] sm:$0xff]
      %v4467 = vld [vmem:[%s3 + $0x150] sm:$0xff]
      %v4468 = vld [vmem:[%s3 + $0x158] sm:$0xff]
      %v4469 = vld [vmem:[%s3 + $0x160] sm:$0xff]
      %v4470 = vld [vmem:[%s3 + $0x168] sm:$0xff]
      %v4471 = vld [vmem:[%s3 + $0x170] sm:$0xff]
      %v4472 = vld [vmem:[%s3 + $0x178] sm:$0xff]
      %v4473 = vld [vmem:[%s3 + $0x180] sm:$0xff]
      %v4474 = vld [vmem:[%s3 + $0x188] sm:$0xff]
      %v4475 = vld [vmem:[%s3 + $0x190] sm:$0xff]
      %v4476 = vld [vmem:[%s3 + $0x198] sm:$0xff]
      %v4477 = vld [vmem:[%s3 + $0x1a0] sm:$0xff]
      %v4478 = vld [vmem:[%s3 + $0x1a8] sm:$0xff]
      %v4479 = vld [vmem:[%s3 + $0x1b0] sm:$0xff]
      %v4480 = vld [vmem:[%s3 + $0x1b8] sm:$0xff]
      %v4481 = vld [vmem:[%s3 + $0x1c0] sm:$0xff]
      %v4482 = vld [vmem:[%s3 + $0x1c8] sm:$0xff]
      %v4483 = vld [vmem:[%s3 + $0x1d0] sm:$0xff]
      %v4484 = vld [vmem:[%s3 + $0x1d8] sm:$0xff]
      %v4485 = vld [vmem:[%s3 + $0x1e0] sm:$0xff]
      %v4486 = vld [vmem:[%s3 + $0x1e8] sm:$0xff]
      %v4487 = vld [vmem:[%s3 + $0x1f0] sm:$0xff]
      %v4488 = vld [vmem:[%s3 + $0x1f8] sm:$0xff]
      %v4489 = vld [vmem:[%s3 + $0x200] sm:$0xff]
      %v4490 = vld [vmem:[%s3 + $0x208] sm:$0xff]
      %v4491 = vld [vmem:[%s3 + $0x210] sm:$0xff]
      %v4492 = vld [vmem:[%s3 + $0x218] sm:$0xff]
      %v4493 = vld [vmem:[%s3 + $0x220] sm:$0xff]
      %v4494 = vld [vmem:[%s3 + $0x228] sm:$0xff]
      %v4495 = vld [vmem:[%s3 + $0x230] sm:$0xff]
      %v4496 = vld [vmem:[%s3 + $0x238] sm:$0xff]
      %v4497 = vld [vmem:[%s3 + $0x240] sm:$0xff]
      %v4498 = vld [vmem:[%s3 + $0x248] sm:$0xff]
      %v4499 = vld [vmem:[%s3 + $0x250] sm:$0xff]
      %v4500 = vld [vmem:[%s3 + $0x258] sm:$0xff]
      %v4501 = vld [vmem:[%s3 + $0x260] sm:$0xff]
      %v4502 = vld [vmem:[%s3 + $0x268] sm:$0xff]
      %v4503 = vld [vmem:[%s3 + $0x270] sm:$0xff]
      %v4504 = vld [vmem:[%s3 + $0x278] sm:$0xff]
      %v4505 = vld [vmem:[%s3 + $0x280] sm:$0xff]
      %v4506 = vld [vmem:[%s3 + $0x288] sm:$0xff]
      %v4507 = vld [vmem:[%s3 + $0x290] sm:$0xff]
      %v4508 = vld [vmem:[%s3 + $0x298] sm:$0xff]
      %v4509 = vld [vmem:[%s3 + $0x2a0] sm:$0xff]
      %v4510 = vld [vmem:[%s3 + $0x2a8] sm:$0xff]
      %v4511 = vld [vmem:[%s3 + $0x2b0] sm:$0xff]
      %v4512 = vld [vmem:[%s3 + $0x2b8] sm:$0xff]
      %v4513 = vld [vmem:[%s3 + $0x2c0] sm:$0xff]
      %v4514 = vld [vmem:[%s3 + $0x2c8] sm:$0xff]
      %v4515 = vld [vmem:[%s3 + $0x2d0] sm:$0xff]
      %v4516 = vld [vmem:[%s3 + $0x2d8] sm:$0xff]
      %v4517 = vld [vmem:[%s3 + $0x2e0] sm:$0xff]
      %v4518 = vld [vmem:[%s3 + $0x2e8] sm:$0xff]
      %v4519 = vld [vmem:[%s3 + $0x2f0] sm:$0xff]
      %v4520 = vld [vmem:[%s3 + $0x2f8] sm:$0xff]
      %v4521 = vld [vmem:[%s3 + $0x300] sm:$0xff]
      %v4522 = vld [vmem:[%s3 + $0x308] sm:$0xff]
      %v4523 = vld [vmem:[%s3 + $0x310] sm:$0xff]
      %v4524 = vld [vmem:[%s3 + $0x318] sm:$0xff]
      %v4525 = vld [vmem:[%s3 + $0x320] sm:$0xff]
      %v4526 = vld [vmem:[%s3 + $0x328] sm:$0xff]
      %v4527 = vld [vmem:[%s3 + $0x330] sm:$0xff]
      %v4528 = vld [vmem:[%s3 + $0x338] sm:$0xff]
      %v4529 = vld [vmem:[%s3 + $0x340] sm:$0xff]
      %v4530 = vld [vmem:[%s3 + $0x348] sm:$0xff]
      %v4531 = vld [vmem:[%s3 + $0x350] sm:$0xff]
      %v4532 = vld [vmem:[%s3 + $0x358] sm:$0xff]
      %v4533 = vld [vmem:[%s3 + $0x360] sm:$0xff]
      %v4534 = vld [vmem:[%s3 + $0x368] sm:$0xff]
      %v4535 = vld [vmem:[%s3 + $0x370] sm:$0xff]
      %v4536 = vld [vmem:[%s3 + $0x378] sm:$0xff]
      %v4537 = vld [vmem:[%s3 + $0x380] sm:$0xff]
      %v4538 = vld [vmem:[%s3 + $0x388] sm:$0xff]
      %v4539 = vld [vmem:[%s3 + $0x390] sm:$0xff]
      %v4540 = vld [vmem:[%s3 + $0x398] sm:$0xff]
      %v4541 = vld [vmem:[%s3 + $0x3a0] sm:$0xff]
      %v4542 = vld [vmem:[%s3 + $0x3a8] sm:$0xff]
      %v4543 = vld [vmem:[%s3 + $0x3b0] sm:$0xff]
      %v4544 = vld [vmem:[%s3 + $0x3b8] sm:$0xff]
      %v4545 = vld [vmem:[%s3 + $0x3c0] sm:$0xff]
      %v4546 = vld [vmem:[%s3 + $0x3c8] sm:$0xff]
      %v4547 = vld [vmem:[%s3 + $0x3d0] sm:$0xff]
      %v4548 = vld [vmem:[%s3 + $0x3d8] sm:$0xff]
      %v4549 = vld [vmem:[%s3 + $0x3e0] sm:$0xff]
      %v4550 = vld [vmem:[%s3 + $0x3e8] sm:$0xff]
      %v4551 = vld [vmem:[%s3 + $0x3f0] sm:$0xff]
      %v4552 = vld [vmem:[%s3 + $0x3f8] sm:$0xff]
      %v4553 = vld [vmem:[%s4] sm:$0xff]
      %v4554 = vld [vmem:[%s4 + $0x8] sm:$0xff]
      %v4555 = vld [vmem:[%s4 + $0x10] sm:$0xff]
      %v4556 = vld [vmem:[%s4 + $0x18] sm:$0xff]
      %v4557 = vld [vmem:[%s4 + $0x20] sm:$0xff]
      %v4558 = vld [vmem:[%s4 + $0x28] sm:$0xff]
      %v4559 = vld [vmem:[%s4 + $0x30] sm:$0xff]
      %v4560 = vld [vmem:[%s4 + $0x38] sm:$0xff]
      %v4561 = vld [vmem:[%s4 + $0x40] sm:$0xff]
      %v4562 = vld [vmem:[%s4 + $0x48] sm:$0xff]
      %v4563 = vld [vmem:[%s4 + $0x50] sm:$0xff]
      %v4564 = vld [vmem:[%s4 + $0x58] sm:$0xff]
      %v4565 = vld [vmem:[%s4 + $0x60] sm:$0xff]
      %v4566 = vld [vmem:[%s4 + $0x68] sm:$0xff]
      %v4567 = vld [vmem:[%s4 + $0x70] sm:$0xff]
      %v4568 = vld [vmem:[%s4 + $0x78] sm:$0xff]
      %v4569 = vld [vmem:[%s4 + $0x80] sm:$0xff]
      %v4570 = vld [vmem:[%s4 + $0x88] sm:$0xff]
      %v4571 = vld [vmem:[%s4 + $0x90] sm:$0xff]
      %v4572 = vld [vmem:[%s4 + $0x98] sm:$0xff]
      %v4573 = vld [vmem:[%s4 + $0xa0] sm:$0xff]
      %v4574 = vld [vmem:[%s4 + $0xa8] sm:$0xff]
      %v4575 = vld [vmem:[%s4 + $0xb0] sm:$0xff]
      %v4576 = vld [vmem:[%s4 + $0xb8] sm:$0xff]
      %v4577 = vld [vmem:[%s4 + $0xc0] sm:$0xff]
      %v4578 = vld [vmem:[%s4 + $0xc8] sm:$0xff]
      %v4579 = vld [vmem:[%s4 + $0xd0] sm:$0xff]
      %v4580 = vld [vmem:[%s4 + $0xd8] sm:$0xff]
      %v4581 = vld [vmem:[%s4 + $0xe0] sm:$0xff]
      %v4582 = vld [vmem:[%s4 + $0xe8] sm:$0xff]
      %v4583 = vld [vmem:[%s4 + $0xf0] sm:$0xff]
      %v4584 = vld [vmem:[%s4 + $0xf8] sm:$0xff]
      %v4585 = vld [vmem:[%s4 + $0x100] sm:$0xff]
      %v4586 = vld [vmem:[%s4 + $0x108] sm:$0xff]
      %v4587 = vld [vmem:[%s4 + $0x110] sm:$0xff]
      %v4588 = vld [vmem:[%s4 + $0x118] sm:$0xff]
      %v4589 = vld [vmem:[%s4 + $0x120] sm:$0xff]
      %v4590 = vld [vmem:[%s4 + $0x128] sm:$0xff]
      %v4591 = vld [vmem:[%s4 + $0x130] sm:$0xff]
      %v4592 = vld [vmem:[%s4 + $0x138] sm:$0xff]
      %v4593 = vld [vmem:[%s4 + $0x140] sm:$0xff]
      %v4594 = vld [vmem:[%s4 + $0x148] sm:$0xff]
      %v4595 = vld [vmem:[%s4 + $0x150] sm:$0xff]
      %v4596 = vld [vmem:[%s4 + $0x158] sm:$0xff]
      %v4597 = vld [vmem:[%s4 + $0x160] sm:$0xff]
      %v4598 = vld [vmem:[%s4 + $0x168] sm:$0xff]
      %v4599 = vld [vmem:[%s4 + $0x170] sm:$0xff]
      %v4600 = vld [vmem:[%s4 + $0x178] sm:$0xff]
      %v4601 = vld [vmem:[%s4 + $0x180] sm:$0xff]
      %v4602 = vld [vmem:[%s4 + $0x188] sm:$0xff]
      %v4603 = vld [vmem:[%s4 + $0x190] sm:$0xff]
      %v4604 = vld [vmem:[%s4 + $0x198] sm:$0xff]
      %v4605 = vld [vmem:[%s4 + $0x1a0] sm:$0xff]
      %v4606 = vld [vmem:[%s4 + $0x1a8] sm:$0xff]
      %v4607 = vld [vmem:[%s4 + $0x1b0] sm:$0xff]
      %v4608 = vld [vmem:[%s4 + $0x1b8] sm:$0xff]
      %v4609 = vld [vmem:[%s4 + $0x1c0] sm:$0xff]
      %v4610 = vld [vmem:[%s4 + $0x1c8] sm:$0xff]
      %v4611 = vld [vmem:[%s4 + $0x1d0] sm:$0xff]
      %v4612 = vld [vmem:[%s4 + $0x1d8] sm:$0xff]
      %v4613 = vld [vmem:[%s4 + $0x1e0] sm:$0xff]
      %v4614 = vld [vmem:[%s4 + $0x1e8] sm:$0xff]
      %v4615 = vld [vmem:[%s4 + $0x1f0] sm:$0xff]
      %v4616 = vld [vmem:[%s4 + $0x1f8] sm:$0xff]
      %4618 = vset.pattern.permute.xlu0 0
      %4619 = vperm.xlu0 %4618, %v4553
      %v4620 = vpop.permute.xlu0 %4619
      %4623 = vset.pattern.permute.xlu0 0
      %4624 = vperm.xlu0 %4623, %v4554
      %v4625 = vpop.permute.xlu0 %4624
      %4628 = vset.pattern.permute.xlu0 0
      %4629 = vperm.xlu0 %4628, %v4555
      %v4630 = vpop.permute.xlu0 %4629
      %4633 = vset.pattern.permute.xlu0 0
      %4634 = vperm.xlu0 %4633, %v4556
      %v4635 = vpop.permute.xlu0 %4634
      %4638 = vset.pattern.permute.xlu0 0
      %4639 = vperm.xlu0 %4638, %v4557
      %v4640 = vpop.permute.xlu0 %4639
      %4643 = vset.pattern.permute.xlu0 0
      %4644 = vperm.xlu0 %4643, %v4558
      %v4645 = vpop.permute.xlu0 %4644
      %4648 = vset.pattern.permute.xlu0 0
      %4649 = vperm.xlu0 %4648, %v4559
      %v4650 = vpop.permute.xlu0 %4649
      %4653 = vset.pattern.permute.xlu0 0
      %4654 = vperm.xlu0 %4653, %v4560
      %v4655 = vpop.permute.xlu0 %4654
      %4658 = vset.pattern.permute.xlu0 0
      %4659 = vperm.xlu0 %4658, %v4561
      %v4660 = vpop.permute.xlu0 %4659
      %4663 = vset.pattern.permute.xlu0 0
      %4664 = vperm.xlu0 %4663, %v4562
      %v4665 = vpop.permute.xlu0 %4664
      %4668 = vset.pattern.permute.xlu0 0
      %4669 = vperm.xlu0 %4668, %v4563
      %v4670 = vpop.permute.xlu0 %4669
      %4673 = vset.pattern.permute.xlu0 0
      %4674 = vperm.xlu0 %4673, %v4564
      %v4675 = vpop.permute.xlu0 %4674
      %4678 = vset.pattern.permute.xlu0 0
      %4679 = vperm.xlu0 %4678, %v4565
      %v4680 = vpop.permute.xlu0 %4679
      %4683 = vset.pattern.permute.xlu0 0
      %4684 = vperm.xlu0 %4683, %v4566
      %v4685 = vpop.permute.xlu0 %4684
      %4688 = vset.pattern.permute.xlu0 0
      %4689 = vperm.xlu0 %4688, %v4567
      %v4690 = vpop.permute.xlu0 %4689
      %4693 = vset.pattern.permute.xlu0 0
      %4694 = vperm.xlu0 %4693, %v4568
      %v4695 = vpop.permute.xlu0 %4694
      %4698 = vset.pattern.permute.xlu0 0
      %4699 = vperm.xlu0 %4698, %v4569
      %v4700 = vpop.permute.xlu0 %4699
      %4703 = vset.pattern.permute.xlu0 0
      %4704 = vperm.xlu0 %4703, %v4570
      %v4705 = vpop.permute.xlu0 %4704
      %4708 = vset.pattern.permute.xlu0 0
      %4709 = vperm.xlu0 %4708, %v4571
      %v4710 = vpop.permute.xlu0 %4709
      %4713 = vset.pattern.permute.xlu0 0
      %4714 = vperm.xlu0 %4713, %v4572
      %v4715 = vpop.permute.xlu0 %4714
      %4718 = vset.pattern.permute.xlu0 0
      %4719 = vperm.xlu0 %4718, %v4573
      %v4720 = vpop.permute.xlu0 %4719
      %4723 = vset.pattern.permute.xlu0 0
      %4724 = vperm.xlu0 %4723, %v4574
      %v4725 = vpop.permute.xlu0 %4724
      %4728 = vset.pattern.permute.xlu0 0
      %4729 = vperm.xlu0 %4728, %v4575
      %v4730 = vpop.permute.xlu0 %4729
      %4733 = vset.pattern.permute.xlu0 0
      %4734 = vperm.xlu0 %4733, %v4576
      %v4735 = vpop.permute.xlu0 %4734
      %4738 = vset.pattern.permute.xlu0 0
      %4739 = vperm.xlu0 %4738, %v4577
      %v4740 = vpop.permute.xlu0 %4739
      %4743 = vset.pattern.permute.xlu0 0
      %4744 = vperm.xlu0 %4743, %v4578
      %v4745 = vpop.permute.xlu0 %4744
      %4748 = vset.pattern.permute.xlu0 0
      %4749 = vperm.xlu0 %4748, %v4579
      %v4750 = vpop.permute.xlu0 %4749
      %4753 = vset.pattern.permute.xlu0 0
      %4754 = vperm.xlu0 %4753, %v4580
      %v4755 = vpop.permute.xlu0 %4754
      %4758 = vset.pattern.permute.xlu0 0
      %4759 = vperm.xlu0 %4758, %v4581
      %v4760 = vpop.permute.xlu0 %4759
      %4763 = vset.pattern.permute.xlu0 0
      %4764 = vperm.xlu0 %4763, %v4582
      %v4765 = vpop.permute.xlu0 %4764
      %4768 = vset.pattern.permute.xlu0 0
      %4769 = vperm.xlu0 %4768, %v4583
      %v4770 = vpop.permute.xlu0 %4769
      %4773 = vset.pattern.permute.xlu0 0
      %4774 = vperm.xlu0 %4773, %v4584
      %v4775 = vpop.permute.xlu0 %4774
      %4778 = vset.pattern.permute.xlu0 0
      %4779 = vperm.xlu0 %4778, %v4585
      %v4780 = vpop.permute.xlu0 %4779
      %4783 = vset.pattern.permute.xlu0 0
      %4784 = vperm.xlu0 %4783, %v4586
      %v4785 = vpop.permute.xlu0 %4784
      %4788 = vset.pattern.permute.xlu0 0
      %4789 = vperm.xlu0 %4788, %v4587
      %v4790 = vpop.permute.xlu0 %4789
      %4793 = vset.pattern.permute.xlu0 0
      %4794 = vperm.xlu0 %4793, %v4588
      %v4795 = vpop.permute.xlu0 %4794
      %4798 = vset.pattern.permute.xlu0 0
      %4799 = vperm.xlu0 %4798, %v4589
      %v4800 = vpop.permute.xlu0 %4799
      %4803 = vset.pattern.permute.xlu0 0
      %4804 = vperm.xlu0 %4803, %v4590
      %v4805 = vpop.permute.xlu0 %4804
      %4808 = vset.pattern.permute.xlu0 0
      %4809 = vperm.xlu0 %4808, %v4591
      %v4810 = vpop.permute.xlu0 %4809
      %4813 = vset.pattern.permute.xlu0 0
      %4814 = vperm.xlu0 %4813, %v4592
      %v4815 = vpop.permute.xlu0 %4814
      %4818 = vset.pattern.permute.xlu0 0
      %4819 = vperm.xlu0 %4818, %v4593
      %v4820 = vpop.permute.xlu0 %4819
      %4823 = vset.pattern.permute.xlu0 0
      %4824 = vperm.xlu0 %4823, %v4594
      %v4825 = vpop.permute.xlu0 %4824
      %4828 = vset.pattern.permute.xlu0 0
      %4829 = vperm.xlu0 %4828, %v4595
      %v4830 = vpop.permute.xlu0 %4829
      %4833 = vset.pattern.permute.xlu0 0
      %4834 = vperm.xlu0 %4833, %v4596
      %v4835 = vpop.permute.xlu0 %4834
      %4838 = vset.pattern.permute.xlu0 0
      %4839 = vperm.xlu0 %4838, %v4597
      %v4840 = vpop.permute.xlu0 %4839
      %4843 = vset.pattern.permute.xlu0 0
      %4844 = vperm.xlu0 %4843, %v4598
      %v4845 = vpop.permute.xlu0 %4844
      %4848 = vset.pattern.permute.xlu0 0
      %4849 = vperm.xlu0 %4848, %v4599
      %v4850 = vpop.permute.xlu0 %4849
      %4853 = vset.pattern.permute.xlu0 0
      %4854 = vperm.xlu0 %4853, %v4600
      %v4855 = vpop.permute.xlu0 %4854
      %4858 = vset.pattern.permute.xlu0 0
      %4859 = vperm.xlu0 %4858, %v4601
      %v4860 = vpop.permute.xlu0 %4859
      %4863 = vset.pattern.permute.xlu0 0
      %4864 = vperm.xlu0 %4863, %v4602
      %v4865 = vpop.permute.xlu0 %4864
      %4868 = vset.pattern.permute.xlu0 0
      %4869 = vperm.xlu0 %4868, %v4603
      %v4870 = vpop.permute.xlu0 %4869
      %4873 = vset.pattern.permute.xlu0 0
      %4874 = vperm.xlu0 %4873, %v4604
      %v4875 = vpop.permute.xlu0 %4874
      %4878 = vset.pattern.permute.xlu0 0
      %4879 = vperm.xlu0 %4878, %v4605
      %v4880 = vpop.permute.xlu0 %4879
      %4883 = vset.pattern.permute.xlu0 0
      %4884 = vperm.xlu0 %4883, %v4606
      %v4885 = vpop.permute.xlu0 %4884
      %4888 = vset.pattern.permute.xlu0 0
      %4889 = vperm.xlu0 %4888, %v4607
      %v4890 = vpop.permute.xlu0 %4889
      %4893 = vset.pattern.permute.xlu0 0
      %4894 = vperm.xlu0 %4893, %v4608
      %v4895 = vpop.permute.xlu0 %4894
      %4898 = vset.pattern.permute.xlu0 0
      %4899 = vperm.xlu0 %4898, %v4609
      %v4900 = vpop.permute.xlu0 %4899
      %4903 = vset.pattern.permute.xlu0 0
      %4904 = vperm.xlu0 %4903, %v4610
      %v4905 = vpop.permute.xlu0 %4904
      %4908 = vset.pattern.permute.xlu0 0
      %4909 = vperm.xlu0 %4908, %v4611
      %v4910 = vpop.permute.xlu0 %4909
      %4913 = vset.pattern.permute.xlu0 0
      %4914 = vperm.xlu0 %4913, %v4612
      %v4915 = vpop.permute.xlu0 %4914
      %4918 = vset.pattern.permute.xlu0 0
      %4919 = vperm.xlu0 %4918, %v4613
      %v4920 = vpop.permute.xlu0 %4919
      %4923 = vset.pattern.permute.xlu0 0
      %4924 = vperm.xlu0 %4923, %v4614
      %v4925 = vpop.permute.xlu0 %4924
      %4928 = vset.pattern.permute.xlu0 0
      %4929 = vperm.xlu0 %4928, %v4615
      %v4930 = vpop.permute.xlu0 %4929
      %4933 = vset.pattern.permute.xlu0 0
      %4934 = vperm.xlu0 %4933, %v4616
      %v4935 = vpop.permute.xlu0 %4934
      %v5065 = vunpack.c.l.b16 %v4425
      %v5066 = vunpack.c.h.b16 %v4425
      %v5067 = vunpack.c.l.b16 %v4426
      %v5068 = vunpack.c.h.b16 %v4426
      %v5069 = vunpack.c.l.b16 %v4427
      %v5070 = vunpack.c.h.b16 %v4427
      %v5071 = vunpack.c.l.b16 %v4428
      %v5072 = vunpack.c.h.b16 %v4428
      %v5073 = vunpack.c.l.b16 %v4429
      %v5074 = vunpack.c.h.b16 %v4429
      %v5075 = vunpack.c.l.b16 %v4430
      %v5076 = vunpack.c.h.b16 %v4430
      %v5077 = vunpack.c.l.b16 %v4431
      %v5078 = vunpack.c.h.b16 %v4431
      %v5079 = vunpack.c.l.b16 %v4432
      %v5080 = vunpack.c.h.b16 %v4432
      %v5081 = vunpack.c.l.b16 %v4433
      %v5082 = vunpack.c.h.b16 %v4433
      %v5083 = vunpack.c.l.b16 %v4434
      %v5084 = vunpack.c.h.b16 %v4434
      %v5085 = vunpack.c.l.b16 %v4435
      %v5086 = vunpack.c.h.b16 %v4435
      %v5087 = vunpack.c.l.b16 %v4436
      %v5088 = vunpack.c.h.b16 %v4436
      %v5089 = vunpack.c.l.b16 %v4437
      %v5090 = vunpack.c.h.b16 %v4437
      %v5091 = vunpack.c.l.b16 %v4438
      %v5092 = vunpack.c.h.b16 %v4438
      %v5093 = vunpack.c.l.b16 %v4439
      %v5094 = vunpack.c.h.b16 %v4439
      %v5095 = vunpack.c.l.b16 %v4440
      %v5096 = vunpack.c.h.b16 %v4440
      %v5097 = vunpack.c.l.b16 %v4441
      %v5098 = vunpack.c.h.b16 %v4441
      %v5099 = vunpack.c.l.b16 %v4442
      %v5100 = vunpack.c.h.b16 %v4442
      %v5101 = vunpack.c.l.b16 %v4443
      %v5102 = vunpack.c.h.b16 %v4443
      %v5103 = vunpack.c.l.b16 %v4444
      %v5104 = vunpack.c.h.b16 %v4444
      %v5105 = vunpack.c.l.b16 %v4445
      %v5106 = vunpack.c.h.b16 %v4445
      %v5107 = vunpack.c.l.b16 %v4446
      %v5108 = vunpack.c.h.b16 %v4446
      %v5109 = vunpack.c.l.b16 %v4447
      %v5110 = vunpack.c.h.b16 %v4447
      %v5111 = vunpack.c.l.b16 %v4448
      %v5112 = vunpack.c.h.b16 %v4448
      %v5113 = vunpack.c.l.b16 %v4449
      %v5114 = vunpack.c.h.b16 %v4449
      %v5115 = vunpack.c.l.b16 %v4450
      %v5116 = vunpack.c.h.b16 %v4450
      %v5117 = vunpack.c.l.b16 %v4451
      %v5118 = vunpack.c.h.b16 %v4451
      %v5119 = vunpack.c.l.b16 %v4452
      %v5120 = vunpack.c.h.b16 %v4452
      %v5121 = vunpack.c.l.b16 %v4453
      %v5122 = vunpack.c.h.b16 %v4453
      %v5123 = vunpack.c.l.b16 %v4454
      %v5124 = vunpack.c.h.b16 %v4454
      %v5125 = vunpack.c.l.b16 %v4455
      %v5126 = vunpack.c.h.b16 %v4455
      %v5127 = vunpack.c.l.b16 %v4456
      %v5128 = vunpack.c.h.b16 %v4456
      %v5129 = vunpack.c.l.b16 %v4457
      %v5130 = vunpack.c.h.b16 %v4457
      %v5131 = vunpack.c.l.b16 %v4458
      %v5132 = vunpack.c.h.b16 %v4458
      %v5133 = vunpack.c.l.b16 %v4459
      %v5134 = vunpack.c.h.b16 %v4459
      %v5135 = vunpack.c.l.b16 %v4460
      %v5136 = vunpack.c.h.b16 %v4460
      %v5137 = vunpack.c.l.b16 %v4461
      %v5138 = vunpack.c.h.b16 %v4461
      %v5139 = vunpack.c.l.b16 %v4462
      %v5140 = vunpack.c.h.b16 %v4462
      %v5141 = vunpack.c.l.b16 %v4463
      %v5142 = vunpack.c.h.b16 %v4463
      %v5143 = vunpack.c.l.b16 %v4464
      %v5144 = vunpack.c.h.b16 %v4464
      %v5145 = vunpack.c.l.b16 %v4465
      %v5146 = vunpack.c.h.b16 %v4465
      %v5147 = vunpack.c.l.b16 %v4466
      %v5148 = vunpack.c.h.b16 %v4466
      %v5149 = vunpack.c.l.b16 %v4467
      %v5150 = vunpack.c.h.b16 %v4467
      %v5151 = vunpack.c.l.b16 %v4468
      %v5152 = vunpack.c.h.b16 %v4468
      %v5153 = vunpack.c.l.b16 %v4469
      %v5154 = vunpack.c.h.b16 %v4469
      %v5155 = vunpack.c.l.b16 %v4470
      %v5156 = vunpack.c.h.b16 %v4470
      %v5157 = vunpack.c.l.b16 %v4471
      %v5158 = vunpack.c.h.b16 %v4471
      %v5159 = vunpack.c.l.b16 %v4472
      %v5160 = vunpack.c.h.b16 %v4472
      %v5161 = vunpack.c.l.b16 %v4473
      %v5162 = vunpack.c.h.b16 %v4473
      %v5163 = vunpack.c.l.b16 %v4474
      %v5164 = vunpack.c.h.b16 %v4474
      %v5165 = vunpack.c.l.b16 %v4475
      %v5166 = vunpack.c.h.b16 %v4475
      %v5167 = vunpack.c.l.b16 %v4476
      %v5168 = vunpack.c.h.b16 %v4476
      %v5169 = vunpack.c.l.b16 %v4477
      %v5170 = vunpack.c.h.b16 %v4477
      %v5171 = vunpack.c.l.b16 %v4478
      %v5172 = vunpack.c.h.b16 %v4478
      %v5173 = vunpack.c.l.b16 %v4479
      %v5174 = vunpack.c.h.b16 %v4479
      %v5175 = vunpack.c.l.b16 %v4480
      %v5176 = vunpack.c.h.b16 %v4480
      %v5177 = vunpack.c.l.b16 %v4481
      %v5178 = vunpack.c.h.b16 %v4481
      %v5179 = vunpack.c.l.b16 %v4482
      %v5180 = vunpack.c.h.b16 %v4482
      %v5181 = vunpack.c.l.b16 %v4483
      %v5182 = vunpack.c.h.b16 %v4483
      %v5183 = vunpack.c.l.b16 %v4484
      %v5184 = vunpack.c.h.b16 %v4484
      %v5185 = vunpack.c.l.b16 %v4485
      %v5186 = vunpack.c.h.b16 %v4485
      %v5187 = vunpack.c.l.b16 %v4486
      %v5188 = vunpack.c.h.b16 %v4486
      %v5189 = vunpack.c.l.b16 %v4487
      %v5190 = vunpack.c.h.b16 %v4487
      %v5191 = vunpack.c.l.b16 %v4488
      %v5192 = vunpack.c.h.b16 %v4488
      %v5193 = vunpack.c.l.b16 %v4489
      %v5194 = vunpack.c.h.b16 %v4489
      %v5195 = vunpack.c.l.b16 %v4490
      %v5196 = vunpack.c.h.b16 %v4490
      %v5197 = vunpack.c.l.b16 %v4491
      %v5198 = vunpack.c.h.b16 %v4491
      %v5199 = vunpack.c.l.b16 %v4492
      %v5200 = vunpack.c.h.b16 %v4492
      %v5201 = vunpack.c.l.b16 %v4493
      %v5202 = vunpack.c.h.b16 %v4493
      %v5203 = vunpack.c.l.b16 %v4494
      %v5204 = vunpack.c.h.b16 %v4494
      %v5205 = vunpack.c.l.b16 %v4495
      %v5206 = vunpack.c.h.b16 %v4495
      %v5207 = vunpack.c.l.b16 %v4496
      %v5208 = vunpack.c.h.b16 %v4496
      %v5209 = vunpack.c.l.b16 %v4497
      %v5210 = vunpack.c.h.b16 %v4497
      %v5211 = vunpack.c.l.b16 %v4498
      %v5212 = vunpack.c.h.b16 %v4498
      %v5213 = vunpack.c.l.b16 %v4499
      %v5214 = vunpack.c.h.b16 %v4499
      %v5215 = vunpack.c.l.b16 %v4500
      %v5216 = vunpack.c.h.b16 %v4500
      %v5217 = vunpack.c.l.b16 %v4501
      %v5218 = vunpack.c.h.b16 %v4501
      %v5219 = vunpack.c.l.b16 %v4502
      %v5220 = vunpack.c.h.b16 %v4502
      %v5221 = vunpack.c.l.b16 %v4503
      %v5222 = vunpack.c.h.b16 %v4503
      %v5223 = vunpack.c.l.b16 %v4504
      %v5224 = vunpack.c.h.b16 %v4504
      %v5225 = vunpack.c.l.b16 %v4505
      %v5226 = vunpack.c.h.b16 %v4505
      %v5227 = vunpack.c.l.b16 %v4506
      %v5228 = vunpack.c.h.b16 %v4506
      %v5229 = vunpack.c.l.b16 %v4507
      %v5230 = vunpack.c.h.b16 %v4507
      %v5231 = vunpack.c.l.b16 %v4508
      %v5232 = vunpack.c.h.b16 %v4508
      %v5233 = vunpack.c.l.b16 %v4509
      %v5234 = vunpack.c.h.b16 %v4509
      %v5235 = vunpack.c.l.b16 %v4510
      %v5236 = vunpack.c.h.b16 %v4510
      %v5237 = vunpack.c.l.b16 %v4511
      %v5238 = vunpack.c.h.b16 %v4511
      %v5239 = vunpack.c.l.b16 %v4512
      %v5240 = vunpack.c.h.b16 %v4512
      %v5241 = vunpack.c.l.b16 %v4513
      %v5242 = vunpack.c.h.b16 %v4513
      %v5243 = vunpack.c.l.b16 %v4514
      %v5244 = vunpack.c.h.b16 %v4514
      %v5245 = vunpack.c.l.b16 %v4515
      %v5246 = vunpack.c.h.b16 %v4515
      %v5247 = vunpack.c.l.b16 %v4516
      %v5248 = vunpack.c.h.b16 %v4516
      %v5249 = vunpack.c.l.b16 %v4517
      %v5250 = vunpack.c.h.b16 %v4517
      %v5251 = vunpack.c.l.b16 %v4518
      %v5252 = vunpack.c.h.b16 %v4518
      %v5253 = vunpack.c.l.b16 %v4519
      %v5254 = vunpack.c.h.b16 %v4519
      %v5255 = vunpack.c.l.b16 %v4520
      %v5256 = vunpack.c.h.b16 %v4520
      %v5257 = vunpack.c.l.b16 %v4521
      %v5258 = vunpack.c.h.b16 %v4521
      %v5259 = vunpack.c.l.b16 %v4522
      %v5260 = vunpack.c.h.b16 %v4522
      %v5261 = vunpack.c.l.b16 %v4523
      %v5262 = vunpack.c.h.b16 %v4523
      %v5263 = vunpack.c.l.b16 %v4524
      %v5264 = vunpack.c.h.b16 %v4524
      %v5265 = vunpack.c.l.b16 %v4525
      %v5266 = vunpack.c.h.b16 %v4525
      %v5267 = vunpack.c.l.b16 %v4526
      %v5268 = vunpack.c.h.b16 %v4526
      %v5269 = vunpack.c.l.b16 %v4527
      %v5270 = vunpack.c.h.b16 %v4527
      %v5271 = vunpack.c.l.b16 %v4528
      %v5272 = vunpack.c.h.b16 %v4528
      %v5273 = vunpack.c.l.b16 %v4529
      %v5274 = vunpack.c.h.b16 %v4529
      %v5275 = vunpack.c.l.b16 %v4530
      %v5276 = vunpack.c.h.b16 %v4530
      %v5277 = vunpack.c.l.b16 %v4531
      %v5278 = vunpack.c.h.b16 %v4531
      %v5279 = vunpack.c.l.b16 %v4532
      %v5280 = vunpack.c.h.b16 %v4532
      %v5281 = vunpack.c.l.b16 %v4533
      %v5282 = vunpack.c.h.b16 %v4533
      %v5283 = vunpack.c.l.b16 %v4534
      %v5284 = vunpack.c.h.b16 %v4534
      %v5285 = vunpack.c.l.b16 %v4535
      %v5286 = vunpack.c.h.b16 %v4535
      %v5287 = vunpack.c.l.b16 %v4536
      %v5288 = vunpack.c.h.b16 %v4536
      %v5289 = vunpack.c.l.b16 %v4537
      %v5290 = vunpack.c.h.b16 %v4537
      %v5291 = vunpack.c.l.b16 %v4538
      %v5292 = vunpack.c.h.b16 %v4538
      %v5293 = vunpack.c.l.b16 %v4539
      %v5294 = vunpack.c.h.b16 %v4539
      %v5295 = vunpack.c.l.b16 %v4540
      %v5296 = vunpack.c.h.b16 %v4540
      %v5297 = vunpack.c.l.b16 %v4541
      %v5298 = vunpack.c.h.b16 %v4541
      %v5299 = vunpack.c.l.b16 %v4542
      %v5300 = vunpack.c.h.b16 %v4542
      %v5301 = vunpack.c.l.b16 %v4543
      %v5302 = vunpack.c.h.b16 %v4543
      %v5303 = vunpack.c.l.b16 %v4544
      %v5304 = vunpack.c.h.b16 %v4544
      %v5305 = vunpack.c.l.b16 %v4545
      %v5306 = vunpack.c.h.b16 %v4545
      %v5307 = vunpack.c.l.b16 %v4546
      %v5308 = vunpack.c.h.b16 %v4546
      %v5309 = vunpack.c.l.b16 %v4547
      %v5310 = vunpack.c.h.b16 %v4547
      %v5311 = vunpack.c.l.b16 %v4548
      %v5312 = vunpack.c.h.b16 %v4548
      %v5313 = vunpack.c.l.b16 %v4549
      %v5314 = vunpack.c.h.b16 %v4549
      %v5315 = vunpack.c.l.b16 %v4550
      %v5316 = vunpack.c.h.b16 %v4550
      %v5317 = vunpack.c.l.b16 %v4551
      %v5318 = vunpack.c.h.b16 %v4551
      %v5319 = vunpack.c.l.b16 %v4552
      %v5320 = vunpack.c.h.b16 %v4552
      %v5321 = vpack.c.b16 %v5069, %v5065
      %v5322 = vpack.c.b16 %v5070, %v5066
      %v5323 = vpack.c.b16 %v5071, %v5067
      %v5324 = vpack.c.b16 %v5072, %v5068
      %v5325 = vpack.c.b16 %v5077, %v5073
      %v5326 = vpack.c.b16 %v5078, %v5074
      %v5327 = vpack.c.b16 %v5079, %v5075
      %v5328 = vpack.c.b16 %v5080, %v5076
      %v5329 = vpack.c.b16 %v5085, %v5081
      %v5330 = vpack.c.b16 %v5086, %v5082
      %v5331 = vpack.c.b16 %v5087, %v5083
      %v5332 = vpack.c.b16 %v5088, %v5084
      %v5333 = vpack.c.b16 %v5093, %v5089
      %v5334 = vpack.c.b16 %v5094, %v5090
      %v5335 = vpack.c.b16 %v5095, %v5091
      %v5336 = vpack.c.b16 %v5096, %v5092
      %v5337 = vpack.c.b16 %v5101, %v5097
      %v5338 = vpack.c.b16 %v5102, %v5098
      %v5339 = vpack.c.b16 %v5103, %v5099
      %v5340 = vpack.c.b16 %v5104, %v5100
      %v5341 = vpack.c.b16 %v5109, %v5105
      %v5342 = vpack.c.b16 %v5110, %v5106
      %v5343 = vpack.c.b16 %v5111, %v5107
      %v5344 = vpack.c.b16 %v5112, %v5108
      %v5345 = vpack.c.b16 %v5117, %v5113
      %v5346 = vpack.c.b16 %v5118, %v5114
      %v5347 = vpack.c.b16 %v5119, %v5115
      %v5348 = vpack.c.b16 %v5120, %v5116
      %v5349 = vpack.c.b16 %v5125, %v5121
      %v5350 = vpack.c.b16 %v5126, %v5122
      %v5351 = vpack.c.b16 %v5127, %v5123
      %v5352 = vpack.c.b16 %v5128, %v5124
      %v5353 = vpack.c.b16 %v5133, %v5129
      %v5354 = vpack.c.b16 %v5134, %v5130
      %v5355 = vpack.c.b16 %v5135, %v5131
      %v5356 = vpack.c.b16 %v5136, %v5132
      %v5357 = vpack.c.b16 %v5141, %v5137
      %v5358 = vpack.c.b16 %v5142, %v5138
      %v5359 = vpack.c.b16 %v5143, %v5139
      %v5360 = vpack.c.b16 %v5144, %v5140
      %v5361 = vpack.c.b16 %v5149, %v5145
      %v5362 = vpack.c.b16 %v5150, %v5146
      %v5363 = vpack.c.b16 %v5151, %v5147
      %v5364 = vpack.c.b16 %v5152, %v5148
      %v5365 = vpack.c.b16 %v5157, %v5153
      %v5366 = vpack.c.b16 %v5158, %v5154
      %v5367 = vpack.c.b16 %v5159, %v5155
      %v5368 = vpack.c.b16 %v5160, %v5156
      %v5369 = vpack.c.b16 %v5165, %v5161
      %v5370 = vpack.c.b16 %v5166, %v5162
      %v5371 = vpack.c.b16 %v5167, %v5163
      %v5372 = vpack.c.b16 %v5168, %v5164
      %v5373 = vpack.c.b16 %v5173, %v5169
      %v5374 = vpack.c.b16 %v5174, %v5170
      %v5375 = vpack.c.b16 %v5175, %v5171
      %v5376 = vpack.c.b16 %v5176, %v5172
      %v5377 = vpack.c.b16 %v5181, %v5177
      %v5378 = vpack.c.b16 %v5182, %v5178
      %v5379 = vpack.c.b16 %v5183, %v5179
      %v5380 = vpack.c.b16 %v5184, %v5180
      %v5381 = vpack.c.b16 %v5189, %v5185
      %v5382 = vpack.c.b16 %v5190, %v5186
      %v5383 = vpack.c.b16 %v5191, %v5187
      %v5384 = vpack.c.b16 %v5192, %v5188
      %v5385 = vpack.c.b16 %v5197, %v5193
      %v5386 = vpack.c.b16 %v5198, %v5194
      %v5387 = vpack.c.b16 %v5199, %v5195
      %v5388 = vpack.c.b16 %v5200, %v5196
      %v5389 = vpack.c.b16 %v5205, %v5201
      %v5390 = vpack.c.b16 %v5206, %v5202
      %v5391 = vpack.c.b16 %v5207, %v5203
      %v5392 = vpack.c.b16 %v5208, %v5204
      %v5393 = vpack.c.b16 %v5213, %v5209
      %v5394 = vpack.c.b16 %v5214, %v5210
      %v5395 = vpack.c.b16 %v5215, %v5211
      %v5396 = vpack.c.b16 %v5216, %v5212
      %v5397 = vpack.c.b16 %v5221, %v5217
      %v5398 = vpack.c.b16 %v5222, %v5218
      %v5399 = vpack.c.b16 %v5223, %v5219
      %v5400 = vpack.c.b16 %v5224, %v5220
      %v5401 = vpack.c.b16 %v5229, %v5225
      %v5402 = vpack.c.b16 %v5230, %v5226
      %v5403 = vpack.c.b16 %v5231, %v5227
      %v5404 = vpack.c.b16 %v5232, %v5228
      %v5405 = vpack.c.b16 %v5237, %v5233
      %v5406 = vpack.c.b16 %v5238, %v5234
      %v5407 = vpack.c.b16 %v5239, %v5235
      %v5408 = vpack.c.b16 %v5240, %v5236
      %v5409 = vpack.c.b16 %v5245, %v5241
      %v5410 = vpack.c.b16 %v5246, %v5242
      %v5411 = vpack.c.b16 %v5247, %v5243
      %v5412 = vpack.c.b16 %v5248, %v5244
      %v5413 = vpack.c.b16 %v5253, %v5249
      %v5414 = vpack.c.b16 %v5254, %v5250
      %v5415 = vpack.c.b16 %v5255, %v5251
      %v5416 = vpack.c.b16 %v5256, %v5252
      %v5417 = vpack.c.b16 %v5261, %v5257
      %v5418 = vpack.c.b16 %v5262, %v5258
      %v5419 = vpack.c.b16 %v5263, %v5259
      %v5420 = vpack.c.b16 %v5264, %v5260
      %v5421 = vpack.c.b16 %v5269, %v5265
      %v5422 = vpack.c.b16 %v5270, %v5266
      %v5423 = vpack.c.b16 %v5271, %v5267
      %v5424 = vpack.c.b16 %v5272, %v5268
      %v5425 = vpack.c.b16 %v5277, %v5273
      %v5426 = vpack.c.b16 %v5278, %v5274
      %v5427 = vpack.c.b16 %v5279, %v5275
      %v5428 = vpack.c.b16 %v5280, %v5276
      %v5429 = vpack.c.b16 %v5285, %v5281
      %v5430 = vpack.c.b16 %v5286, %v5282
      %v5431 = vpack.c.b16 %v5287, %v5283
      %v5432 = vpack.c.b16 %v5288, %v5284
      %v5433 = vpack.c.b16 %v5293, %v5289
      %v5434 = vpack.c.b16 %v5294, %v5290
      %v5435 = vpack.c.b16 %v5295, %v5291
      %v5436 = vpack.c.b16 %v5296, %v5292
      %v5437 = vpack.c.b16 %v5301, %v5297
      %v5438 = vpack.c.b16 %v5302, %v5298
      %v5439 = vpack.c.b16 %v5303, %v5299
      %v5440 = vpack.c.b16 %v5304, %v5300
      %v5441 = vpack.c.b16 %v5309, %v5305
      %v5442 = vpack.c.b16 %v5310, %v5306
      %v5443 = vpack.c.b16 %v5311, %v5307
      %v5444 = vpack.c.b16 %v5312, %v5308
      %v5445 = vpack.c.b16 %v5317, %v5313
      %v5446 = vpack.c.b16 %v5318, %v5314
      %v5447 = vpack.c.b16 %v5319, %v5315
      %v5448 = vpack.c.b16 %v5320, %v5316
      %5577 = vmatprep.subr.bf16.mxu0 %v4330
      %5578 = vmatpush1.bf16.msra.mxu0 %v4329
      %5579 = vmatprep.subr.bf16.mxu0 %v4333
      %5580 = vmatpush1.bf16.msra.mxu0 %v4332
      %5581 = vmatprep.subr.bf16.mxu0 %v4336
      %5582 = vmatpush1.bf16.msra.mxu0 %v4335
      %5583 = vmatprep.subr.bf16.mxu0 %v4339
      %5584 = vmatpush1.bf16.msra.mxu0 %v4338
      %5585 = vmatprep.subr.bf16.mxu0 %v4342
      %5586 = vmatpush1.bf16.msra.mxu0 %v4341
      %5587 = vmatprep.subr.bf16.mxu0 %v4345
      %5588 = vmatpush1.bf16.msra.mxu0 %v4344
      %5589 = vmatprep.subr.bf16.mxu0 %v4348
      %5590 = vmatpush1.bf16.msra.mxu0 %v4347
      %5591 = vmatprep.subr.bf16.mxu0 %v4351
      %5592 = vmatpush1.bf16.msra.mxu0 %v4350
      %5593 = vmatprep.subr.bf16.mxu0 %v4354
      %5594 = vmatpush1.bf16.msra.mxu0 %v4353
      %5595 = vmatprep.subr.bf16.mxu0 %v4357
      %5596 = vmatpush1.bf16.msra.mxu0 %v4356
      %5597 = vmatprep.subr.bf16.mxu0 %v4360
      %5598 = vmatpush1.bf16.msra.mxu0 %v4359
      %5599 = vmatprep.subr.bf16.mxu0 %v4363
      %5600 = vmatpush1.bf16.msra.mxu0 %v4362
      %5601 = vmatprep.subr.bf16.mxu0 %v4366
      %5602 = vmatpush1.bf16.msra.mxu0 %v4365
      %5603 = vmatprep.subr.bf16.mxu0 %v4369
      %5604 = vmatpush1.bf16.msra.mxu0 %v4368
      %5605 = vmatprep.subr.bf16.mxu0 %v4372
      %5606 = vmatpush1.bf16.msra.mxu0 %v4371
      %5607 = vmatprep.subr.bf16.mxu0 %v4375
      %5608 = vmatpush1.bf16.msra.mxu0 %v4374
      %5609 = vmatprep.mubr.bf16.mxu0 %v5322
      %5610 = vmatmul.mubr.bf16.gmra.mrb[0].mxu0 %v5321
      %v5611 = vpop.f32.mrb[0].mxu0
      %v5612 = vadd.f32 %v4620, %v5611
      %v5613 = vpop.f32.mrb[0].mxu0
      %v5614 = vadd.f32 %v4620, %v5613
      %v5615 = vpop.f32.mrb[0].mxu0
      %v5616 = vadd.f32 %v4625, %v5615
      %v5617 = vpop.f32.mrb[0].mxu0
      %v5618 = vadd.f32 %v4625, %v5617
      %5619 = vmatprep.mubr.bf16.mxu0 %v5326
      %5620 = vmatmul.mubr.bf16.gmra.mrb[0].mxu0 %v5325
      %v5621 = vpop.f32.mrb[0].mxu0
      %v5622 = vadd.f32 %v4630, %v5621
      %v5623 = vpop.f32.mrb[0].mxu0
      %v5624 = vadd.f32 %v4630, %v5623
      %v5625 = vpop.f32.mrb[0].mxu0
      %v5626 = vadd.f32 %v4635, %v5625
      %v5627 = vpop.f32.mrb[0].mxu0
      %v5628 = vadd.f32 %v4635, %v5627
      %5629 = vmatprep.mubr.bf16.mxu0 %v5330
      %5630 = vmatmul.mubr.bf16.gmra.mrb[0].mxu0 %v5329
      %v5631 = vpop.f32.mrb[0].mxu0
      %v5632 = vadd.f32 %v4640, %v5631
      %v5633 = vpop.f32.mrb[0].mxu0
      %v5634 = vadd.f32 %v4640, %v5633
      %v5635 = vpop.f32.mrb[0].mxu0
      %v5636 = vadd.f32 %v4645, %v5635
      %v5637 = vpop.f32.mrb[0].mxu0
      %v5638 = vadd.f32 %v4645, %v5637
      %5639 = vmatprep.mubr.bf16.mxu0 %v5334
      %5640 = vmatmul.mubr.bf16.gmra.mrb[0].mxu0 %v5333
      %v5641 = vpop.f32.mrb[0].mxu0
      %v5642 = vadd.f32 %v4650, %v5641
      %v5643 = vpop.f32.mrb[0].mxu0
      %v5644 = vadd.f32 %v4650, %v5643
      %v5645 = vpop.f32.mrb[0].mxu0
      %v5646 = vadd.f32 %v4655, %v5645
      %v5647 = vpop.f32.mrb[0].mxu0
      %v5648 = vadd.f32 %v4655, %v5647
      %5649 = vmatprep.mubr.bf16.mxu0 %v5338
      %5650 = vmatmul.mubr.bf16.gmra.mrb[0].mxu0 %v5337
      %v5651 = vpop.f32.mrb[0].mxu0
      %v5652 = vadd.f32 %v4660, %v5651
      %v5653 = vpop.f32.mrb[0].mxu0
      %v5654 = vadd.f32 %v4660, %v5653
      %v5655 = vpop.f32.mrb[0].mxu0
      %v5656 = vadd.f32 %v4665, %v5655
      %v5657 = vpop.f32.mrb[0].mxu0
      %v5658 = vadd.f32 %v4665, %v5657
      %5659 = vmatprep.mubr.bf16.mxu0 %v5342
      %5660 = vmatmul.mubr.bf16.gmra.mrb[0].mxu0 %v5341
      %v5661 = vpop.f32.mrb[0].mxu0
      %v5662 = vadd.f32 %v4670, %v5661
      %v5663 = vpop.f32.mrb[0].mxu0
      %v5664 = vadd.f32 %v4670, %v5663
      %v5665 = vpop.f32.mrb[0].mxu0
      %v5666 = vadd.f32 %v4675, %v5665
      %v5667 = vpop.f32.mrb[0].mxu0
      %v5668 = vadd.f32 %v4675, %v5667
      %5669 = vmatprep.mubr.bf16.mxu0 %v5346
      %5670 = vmatmul.mubr.bf16.gmra.mrb[0].mxu0 %v5345
      %v5671 = vpop.f32.mrb[0].mxu0
      %v5672 = vadd.f32 %v4680, %v5671
      %v5673 = vpop.f32.mrb[0].mxu0
      %v5674 = vadd.f32 %v4680, %v5673
      %v5675 = vpop.f32.mrb[0].mxu0
      %v5676 = vadd.f32 %v4685, %v5675
      %v5677 = vpop.f32.mrb[0].mxu0
      %v5678 = vadd.f32 %v4685, %v5677
      %5679 = vmatprep.mubr.bf16.mxu0 %v5350
      %5680 = vmatmul.mubr.bf16.gmra.mrb[0].mxu0 %v5349
      %v5681 = vpop.f32.mrb[0].mxu0
      %v5682 = vadd.f32 %v4690, %v5681
      %v5683 = vpop.f32.mrb[0].mxu0
      %v5684 = vadd.f32 %v4690, %v5683
      %v5685 = vpop.f32.mrb[0].mxu0
      %v5686 = vadd.f32 %v4695, %v5685
      %v5687 = vpop.f32.mrb[0].mxu0
      %v5688 = vadd.f32 %v4695, %v5687
      %5689 = vmatprep.mubr.bf16.mxu0 %v5354
      %5690 = vmatmul.mubr.bf16.gmra.mrb[0].mxu0 %v5353
      %v5691 = vpop.f32.mrb[0].mxu0
      %v5692 = vadd.f32 %v4700, %v5691
      %v5693 = vpop.f32.mrb[0].mxu0
      %v5694 = vadd.f32 %v4700, %v5693
      %v5695 = vpop.f32.mrb[0].mxu0
      %v5696 = vadd.f32 %v4705, %v5695
      %v5697 = vpop.f32.mrb[0].mxu0
      %v5698 = vadd.f32 %v4705, %v5697
      %5699 = vmatprep.mubr.bf16.mxu0 %v5358
      %5700 = vmatmul.mubr.bf16.gmra.mrb[0].mxu0 %v5357
      %v5701 = vpop.f32.mrb[0].mxu0
      %v5702 = vadd.f32 %v4710, %v5701
      %v5703 = vpop.f32.mrb[0].mxu0
      %v5704 = vadd.f32 %v4710, %v5703
      %v5705 = vpop.f32.mrb[0].mxu0
      %v5706 = vadd.f32 %v4715, %v5705
      %v5707 = vpop.f32.mrb[0].mxu0
      %v5708 = vadd.f32 %v4715, %v5707
      %5709 = vmatprep.mubr.bf16.mxu0 %v5362
      %5710 = vmatmul.mubr.bf16.gmra.mrb[0].mxu0 %v5361
      %v5711 = vpop.f32.mrb[0].mxu0
      %v5712 = vadd.f32 %v4720, %v5711
      %v5713 = vpop.f32.mrb[0].mxu0
      %v5714 = vadd.f32 %v4720, %v5713
      %v5715 = vpop.f32.mrb[0].mxu0
      %v5716 = vadd.f32 %v4725, %v5715
      %v5717 = vpop.f32.mrb[0].mxu0
      %v5718 = vadd.f32 %v4725, %v5717
      %5719 = vmatprep.mubr.bf16.mxu0 %v5366
      %5720 = vmatmul.mubr.bf16.gmra.mrb[0].mxu0 %v5365
      %v5721 = vpop.f32.mrb[0].mxu0
      %v5722 = vadd.f32 %v4730, %v5721
      %v5723 = vpop.f32.mrb[0].mxu0
      %v5724 = vadd.f32 %v4730, %v5723
      %v5725 = vpop.f32.mrb[0].mxu0
      %v5726 = vadd.f32 %v4735, %v5725
      %v5727 = vpop.f32.mrb[0].mxu0
      %v5728 = vadd.f32 %v4735, %v5727
      %5729 = vmatprep.mubr.bf16.mxu0 %v5370
      %5730 = vmatmul.mubr.bf16.gmra.mrb[0].mxu0 %v5369
      %v5731 = vpop.f32.mrb[0].mxu0
      %v5732 = vadd.f32 %v4740, %v5731
      %v5733 = vpop.f32.mrb[0].mxu0
      %v5734 = vadd.f32 %v4740, %v5733
      %v5735 = vpop.f32.mrb[0].mxu0
      %v5736 = vadd.f32 %v4745, %v5735
      %v5737 = vpop.f32.mrb[0].mxu0
      %v5738 = vadd.f32 %v4745, %v5737
      %5739 = vmatprep.mubr.bf16.mxu0 %v5374
      %5740 = vmatmul.mubr.bf16.gmra.mrb[0].mxu0 %v5373
      %v5741 = vpop.f32.mrb[0].mxu0
      %v5742 = vadd.f32 %v4750, %v5741
      %v5743 = vpop.f32.mrb[0].mxu0
      %v5744 = vadd.f32 %v4750, %v5743
      %v5745 = vpop.f32.mrb[0].mxu0
      %v5746 = vadd.f32 %v4755, %v5745
      %v5747 = vpop.f32.mrb[0].mxu0
      %v5748 = vadd.f32 %v4755, %v5747
      %5749 = vmatprep.mubr.bf16.mxu0 %v5378
      %5750 = vmatmul.mubr.bf16.gmra.mrb[0].mxu0 %v5377
      %v5751 = vpop.f32.mrb[0].mxu0
      %v5752 = vadd.f32 %v4760, %v5751
      %v5753 = vpop.f32.mrb[0].mxu0
      %v5754 = vadd.f32 %v4760, %v5753
      %v5755 = vpop.f32.mrb[0].mxu0
      %v5756 = vadd.f32 %v4765, %v5755
      %v5757 = vpop.f32.mrb[0].mxu0
      %v5758 = vadd.f32 %v4765, %v5757
      %5759 = vmatprep.mubr.bf16.mxu0 %v5382
      %5760 = vmatmul.mubr.bf16.gmra.mrb[0].mxu0 %v5381
      %v5761 = vpop.f32.mrb[0].mxu0
      %v5762 = vadd.f32 %v4770, %v5761
      %v5763 = vpop.f32.mrb[0].mxu0
      %v5764 = vadd.f32 %v4770, %v5763
      %v5765 = vpop.f32.mrb[0].mxu0
      %v5766 = vadd.f32 %v4775, %v5765
      %v5767 = vpop.f32.mrb[0].mxu0
      %v5768 = vadd.f32 %v4775, %v5767
      %5769 = vmatprep.mubr.bf16.mxu0 %v5386
      %5770 = vmatmul.mubr.bf16.gmra.mrb[0].mxu0 %v5385
      %v5771 = vpop.f32.mrb[0].mxu0
      %v5772 = vadd.f32 %v4780, %v5771
      %v5773 = vpop.f32.mrb[0].mxu0
      %v5774 = vadd.f32 %v4780, %v5773
      %v5775 = vpop.f32.mrb[0].mxu0
      %v5776 = vadd.f32 %v4785, %v5775
      %v5777 = vpop.f32.mrb[0].mxu0
      %v5778 = vadd.f32 %v4785, %v5777
      %5779 = vmatprep.mubr.bf16.mxu0 %v5390
      %5780 = vmatmul.mubr.bf16.gmra.mrb[0].mxu0 %v5389
      %v5781 = vpop.f32.mrb[0].mxu0
      %v5782 = vadd.f32 %v4790, %v5781
      %v5783 = vpop.f32.mrb[0].mxu0
      %v5784 = vadd.f32 %v4790, %v5783
      %v5785 = vpop.f32.mrb[0].mxu0
      %v5786 = vadd.f32 %v4795, %v5785
      %v5787 = vpop.f32.mrb[0].mxu0
      %v5788 = vadd.f32 %v4795, %v5787
      %5789 = vmatprep.mubr.bf16.mxu0 %v5394
      %5790 = vmatmul.mubr.bf16.gmra.mrb[0].mxu0 %v5393
      %v5791 = vpop.f32.mrb[0].mxu0
      %v5792 = vadd.f32 %v4800, %v5791
      %v5793 = vpop.f32.mrb[0].mxu0
      %v5794 = vadd.f32 %v4800, %v5793
      %v5795 = vpop.f32.mrb[0].mxu0
      %v5796 = vadd.f32 %v4805, %v5795
      %v5797 = vpop.f32.mrb[0].mxu0
      %v5798 = vadd.f32 %v4805, %v5797
      %5799 = vmatprep.mubr.bf16.mxu0 %v5398
      %5800 = vmatmul.mubr.bf16.gmra.mrb[0].mxu0 %v5397
      %v5801 = vpop.f32.mrb[0].mxu0
      %v5802 = vadd.f32 %v4810, %v5801
      %v5803 = vpop.f32.mrb[0].mxu0
      %v5804 = vadd.f32 %v4810, %v5803
      %v5805 = vpop.f32.mrb[0].mxu0
      %v5806 = vadd.f32 %v4815, %v5805
      %v5807 = vpop.f32.mrb[0].mxu0
      %v5808 = vadd.f32 %v4815, %v5807
      %5809 = vmatprep.mubr.bf16.mxu0 %v5402
      %5810 = vmatmul.mubr.bf16.gmra.mrb[0].mxu0 %v5401
      %v5811 = vpop.f32.mrb[0].mxu0
      %v5812 = vadd.f32 %v4820, %v5811
      %v5813 = vpop.f32.mrb[0].mxu0
      %v5814 = vadd.f32 %v4820, %v5813
      %v5815 = vpop.f32.mrb[0].mxu0
      %v5816 = vadd.f32 %v4825, %v5815
      %v5817 = vpop.f32.mrb[0].mxu0
      %v5818 = vadd.f32 %v4825, %v5817
      %5819 = vmatprep.mubr.bf16.mxu0 %v5406
      %5820 = vmatmul.mubr.bf16.gmra.mrb[0].mxu0 %v5405
      %v5821 = vpop.f32.mrb[0].mxu0
      %v5822 = vadd.f32 %v4830, %v5821
      %v5823 = vpop.f32.mrb[0].mxu0
      %v5824 = vadd.f32 %v4830, %v5823
      %v5825 = vpop.f32.mrb[0].mxu0
      %v5826 = vadd.f32 %v4835, %v5825
      %v5827 = vpop.f32.mrb[0].mxu0
      %v5828 = vadd.f32 %v4835, %v5827
      %5829 = vmatprep.mubr.bf16.mxu0 %v5410
      %5830 = vmatmul.mubr.bf16.gmra.mrb[0].mxu0 %v5409
      %v5831 = vpop.f32.mrb[0].mxu0
      %v5832 = vadd.f32 %v4840, %v5831
      %v5833 = vpop.f32.mrb[0].mxu0
      %v5834 = vadd.f32 %v4840, %v5833
      %v5835 = vpop.f32.mrb[0].mxu0
      %v5836 = vadd.f32 %v4845, %v5835
      %v5837 = vpop.f32.mrb[0].mxu0
      %v5838 = vadd.f32 %v4845, %v5837
      %5839 = vmatprep.mubr.bf16.mxu0 %v5414
      %5840 = vmatmul.mubr.bf16.gmra.mrb[0].mxu0 %v5413
      %v5841 = vpop.f32.mrb[0].mxu0
      %v5842 = vadd.f32 %v4850, %v5841
      %v5843 = vpop.f32.mrb[0].mxu0
      %v5844 = vadd.f32 %v4850, %v5843
      %v5845 = vpop.f32.mrb[0].mxu0
      %v5846 = vadd.f32 %v4855, %v5845
      %v5847 = vpop.f32.mrb[0].mxu0
      %v5848 = vadd.f32 %v4855, %v5847
      %5849 = vmatprep.mubr.bf16.mxu0 %v5418
      %5850 = vmatmul.mubr.bf16.gmra.mrb[0].mxu0 %v5417
      %v5851 = vpop.f32.mrb[0].mxu0
      %v5852 = vadd.f32 %v4860, %v5851
      %v5853 = vpop.f32.mrb[0].mxu0
      %v5854 = vadd.f32 %v4860, %v5853
      %v5855 = vpop.f32.mrb[0].mxu0
      %v5856 = vadd.f32 %v4865, %v5855
      %v5857 = vpop.f32.mrb[0].mxu0
      %v5858 = vadd.f32 %v4865, %v5857
      %5859 = vmatprep.mubr.bf16.mxu0 %v5422
      %5860 = vmatmul.mubr.bf16.gmra.mrb[0].mxu0 %v5421
      %v5861 = vpop.f32.mrb[0].mxu0
      %v5862 = vadd.f32 %v4870, %v5861
      %v5863 = vpop.f32.mrb[0].mxu0
      %v5864 = vadd.f32 %v4870, %v5863
      %v5865 = vpop.f32.mrb[0].mxu0
      %v5866 = vadd.f32 %v4875, %v5865
      %v5867 = vpop.f32.mrb[0].mxu0
      %v5868 = vadd.f32 %v4875, %v5867
      %5869 = vmatprep.mubr.bf16.mxu0 %v5426
      %5870 = vmatmul.mubr.bf16.gmra.mrb[0].mxu0 %v5425
      %v5871 = vpop.f32.mrb[0].mxu0
      %v5872 = vadd.f32 %v4880, %v5871
      %v5873 = vpop.f32.mrb[0].mxu0
      %v5874 = vadd.f32 %v4880, %v5873
      %v5875 = vpop.f32.mrb[0].mxu0
      %v5876 = vadd.f32 %v4885, %v5875
      %v5877 = vpop.f32.mrb[0].mxu0
      %v5878 = vadd.f32 %v4885, %v5877
      %5879 = vmatprep.mubr.bf16.mxu0 %v5430
      %5880 = vmatmul.mubr.bf16.gmra.mrb[0].mxu0 %v5429
      %v5881 = vpop.f32.mrb[0].mxu0
      %v5882 = vadd.f32 %v4890, %v5881
      %v5883 = vpop.f32.mrb[0].mxu0
      %v5884 = vadd.f32 %v4890, %v5883
      %v5885 = vpop.f32.mrb[0].mxu0
      %v5886 = vadd.f32 %v4895, %v5885
      %v5887 = vpop.f32.mrb[0].mxu0
      %v5888 = vadd.f32 %v4895, %v5887
      %5889 = vmatprep.mubr.bf16.mxu0 %v5434
      %5890 = vmatmul.mubr.bf16.gmra.mrb[0].mxu0 %v5433
      %v5891 = vpop.f32.mrb[0].mxu0
      %v5892 = vadd.f32 %v4900, %v5891
      %v5893 = vpop.f32.mrb[0].mxu0
      %v5894 = vadd.f32 %v4900, %v5893
      %v5895 = vpop.f32.mrb[0].mxu0
      %v5896 = vadd.f32 %v4905, %v5895
      %v5897 = vpop.f32.mrb[0].mxu0
      %v5898 = vadd.f32 %v4905, %v5897
      %5899 = vmatprep.mubr.bf16.mxu0 %v5438
      %5900 = vmatmul.mubr.bf16.gmra.mrb[0].mxu0 %v5437
      %v5901 = vpop.f32.mrb[0].mxu0
      %v5902 = vadd.f32 %v4910, %v5901
      %v5903 = vpop.f32.mrb[0].mxu0
      %v5904 = vadd.f32 %v4910, %v5903
      %v5905 = vpop.f32.mrb[0].mxu0
      %v5906 = vadd.f32 %v4915, %v5905
      %v5907 = vpop.f32.mrb[0].mxu0
      %v5908 = vadd.f32 %v4915, %v5907
      %5909 = vmatprep.mubr.bf16.mxu0 %v5442
      %5910 = vmatmul.mubr.bf16.gmra.mrb[0].mxu0 %v5441
      %v5911 = vpop.f32.mrb[0].mxu0
      %v5912 = vadd.f32 %v4920, %v5911
      %v5913 = vpop.f32.mrb[0].mxu0
      %v5914 = vadd.f32 %v4920, %v5913
      %v5915 = vpop.f32.mrb[0].mxu0
      %v5916 = vadd.f32 %v4925, %v5915
      %v5917 = vpop.f32.mrb[0].mxu0
      %v5918 = vadd.f32 %v4925, %v5917
      %5919 = vmatprep.mubr.bf16.mxu0 %v5446
      %5920 = vmatmul.mubr.bf16.gmra.mrb[0].mxu0 %v5445
      %v5921 = vpop.f32.mrb[0].mxu0
      %v5922 = vadd.f32 %v4930, %v5921
      %v5923 = vpop.f32.mrb[0].mxu0
      %v5924 = vadd.f32 %v4930, %v5923
      %v5925 = vpop.f32.mrb[0].mxu0
      %v5926 = vadd.f32 %v4935, %v5925
      %v5927 = vpop.f32.mrb[0].mxu0
      %v5928 = vadd.f32 %v4935, %v5927
      %5929 = vdwg.mxu0
      %5930 = vmatprep.subr.bf16.mxu0 %v4378
      %5931 = vmatpush1.bf16.msra.mxu0 %v4377
      %5932 = vmatprep.subr.bf16.mxu0 %v4381
      %5933 = vmatpush1.bf16.msra.mxu0 %v4380
      %5934 = vmatprep.subr.bf16.mxu0 %v4384
      %5935 = vmatpush1.bf16.msra.mxu0 %v4383
      %5936 = vmatprep.subr.bf16.mxu0 %v4387
      %5937 = vmatpush1.bf16.msra.mxu0 %v4386
      %5938 = vmatprep.subr.bf16.mxu0 %v4390
      %5939 = vmatpush1.bf16.msra.mxu0 %v4389
      %5940 = vmatprep.subr.bf16.mxu0 %v4393
      %5941 = vmatpush1.bf16.msra.mxu0 %v4392
      %5942 = vmatprep.subr.bf16.mxu0 %v4396
      %5943 = vmatpush1.bf16.msra.mxu0 %v4395
      %5944 = vmatprep.subr.bf16.mxu0 %v4399
      %5945 = vmatpush1.bf16.msra.mxu0 %v4398
      %5946 = vmatprep.subr.bf16.mxu0 %v4402
      %5947 = vmatpush1.bf16.msra.mxu0 %v4401
      %5948 = vmatprep.subr.bf16.mxu0 %v4405
      %5949 = vmatpush1.bf16.msra.mxu0 %v4404
      %5950 = vmatprep.subr.bf16.mxu0 %v4408
      %5951 = vmatpush1.bf16.msra.mxu0 %v4407
      %5952 = vmatprep.subr.bf16.mxu0 %v4411
      %5953 = vmatpush1.bf16.msra.mxu0 %v4410
      %5954 = vmatprep.subr.bf16.mxu0 %v4414
      %5955 = vmatpush1.bf16.msra.mxu0 %v4413
      %5956 = vmatprep.subr.bf16.mxu0 %v4417
      %5957 = vmatpush1.bf16.msra.mxu0 %v4416
      %5958 = vmatprep.subr.bf16.mxu0 %v4420
      %5959 = vmatpush1.bf16.msra.mxu0 %v4419
      %5960 = vmatprep.subr.bf16.mxu0 %v4423
      %5961 = vmatpush1.bf16.msra.mxu0 %v4422
      %5962 = vmatprep.mubr.bf16.mxu0 %v5324
      %5963 = vmatmul.mubr.bf16.gmra.mrb[0].mxu0 %v5323
      %v5964 = vpop.f32.mrb[0].mxu0
      %v5965 = vadd.f32 %v5612, %v5964
      %v5966 = vpop.f32.mrb[0].mxu0
      %v5967 = vadd.f32 %v5614, %v5966
      %v5968 = vpop.f32.mrb[0].mxu0
      %v5969 = vadd.f32 %v5616, %v5968
      %v5970 = vpop.f32.mrb[0].mxu0
      %v5971 = vadd.f32 %v5618, %v5970
      %5972 = vmatprep.mubr.bf16.mxu0 %v5328
      %5973 = vmatmul.mubr.bf16.gmra.mrb[0].mxu0 %v5327
      %v5974 = vpop.f32.mrb[0].mxu0
      %v5975 = vadd.f32 %v5622, %v5974
      %v5976 = vpop.f32.mrb[0].mxu0
      %v5977 = vadd.f32 %v5624, %v5976
      %v5978 = vpop.f32.mrb[0].mxu0
      %v5979 = vadd.f32 %v5626, %v5978
      %v5980 = vpop.f32.mrb[0].mxu0
      %v5981 = vadd.f32 %v5628, %v5980
      %5982 = vmatprep.mubr.bf16.mxu0 %v5332
      %5983 = vmatmul.mubr.bf16.gmra.mrb[0].mxu0 %v5331
      %v5984 = vpop.f32.mrb[0].mxu0
      %v5985 = vadd.f32 %v5632, %v5984
      %v5986 = vpop.f32.mrb[0].mxu0
      %v5987 = vadd.f32 %v5634, %v5986
      %v5988 = vpop.f32.mrb[0].mxu0
      %v5989 = vadd.f32 %v5636, %v5988
      %v5990 = vpop.f32.mrb[0].mxu0
      %v5991 = vadd.f32 %v5638, %v5990
      %5992 = vmatprep.mubr.bf16.mxu0 %v5336
      %5993 = vmatmul.mubr.bf16.gmra.mrb[0].mxu0 %v5335
      %v5994 = vpop.f32.mrb[0].mxu0
      %v5995 = vadd.f32 %v5642, %v5994
      %v5996 = vpop.f32.mrb[0].mxu0
      %v5997 = vadd.f32 %v5644, %v5996
      %v5998 = vpop.f32.mrb[0].mxu0
      %v5999 = vadd.f32 %v5646, %v5998
      %v6000 = vpop.f32.mrb[0].mxu0
      %v6001 = vadd.f32 %v5648, %v6000
      %6002 = vmatprep.mubr.bf16.mxu0 %v5340
      %6003 = vmatmul.mubr.bf16.gmra.mrb[0].mxu0 %v5339
      %v6004 = vpop.f32.mrb[0].mxu0
      %v6005 = vadd.f32 %v5652, %v6004
      %v6006 = vpop.f32.mrb[0].mxu0
      %v6007 = vadd.f32 %v5654, %v6006
      %v6008 = vpop.f32.mrb[0].mxu0
      %v6009 = vadd.f32 %v5656, %v6008
      %v6010 = vpop.f32.mrb[0].mxu0
      %v6011 = vadd.f32 %v5658, %v6010
      %6012 = vmatprep.mubr.bf16.mxu0 %v5344
      %6013 = vmatmul.mubr.bf16.gmra.mrb[0].mxu0 %v5343
      %v6014 = vpop.f32.mrb[0].mxu0
      %v6015 = vadd.f32 %v5662, %v6014
      %v6016 = vpop.f32.mrb[0].mxu0
      %v6017 = vadd.f32 %v5664, %v6016
      %v6018 = vpop.f32.mrb[0].mxu0
      %v6019 = vadd.f32 %v5666, %v6018
      %v6020 = vpop.f32.mrb[0].mxu0
      %v6021 = vadd.f32 %v5668, %v6020
      %6022 = vmatprep.mubr.bf16.mxu0 %v5348
      %6023 = vmatmul.mubr.bf16.gmra.mrb[0].mxu0 %v5347
      %v6024 = vpop.f32.mrb[0].mxu0
      %v6025 = vadd.f32 %v5672, %v6024
      %v6026 = vpop.f32.mrb[0].mxu0
      %v6027 = vadd.f32 %v5674, %v6026
      %v6028 = vpop.f32.mrb[0].mxu0
      %v6029 = vadd.f32 %v5676, %v6028
      %v6030 = vpop.f32.mrb[0].mxu0
      %v6031 = vadd.f32 %v5678, %v6030
      %6032 = vmatprep.mubr.bf16.mxu0 %v5352
      %6033 = vmatmul.mubr.bf16.gmra.mrb[0].mxu0 %v5351
      %v6034 = vpop.f32.mrb[0].mxu0
      %v6035 = vadd.f32 %v5682, %v6034
      %v6036 = vpop.f32.mrb[0].mxu0
      %v6037 = vadd.f32 %v5684, %v6036
      %v6038 = vpop.f32.mrb[0].mxu0
      %v6039 = vadd.f32 %v5686, %v6038
      %v6040 = vpop.f32.mrb[0].mxu0
      %v6041 = vadd.f32 %v5688, %v6040
      %6042 = vmatprep.mubr.bf16.mxu0 %v5356
      %6043 = vmatmul.mubr.bf16.gmra.mrb[0].mxu0 %v5355
      %v6044 = vpop.f32.mrb[0].mxu0
      %v6045 = vadd.f32 %v5692, %v6044
      %v6046 = vpop.f32.mrb[0].mxu0
      %v6047 = vadd.f32 %v5694, %v6046
      %v6048 = vpop.f32.mrb[0].mxu0
      %v6049 = vadd.f32 %v5696, %v6048
      %v6050 = vpop.f32.mrb[0].mxu0
      %v6051 = vadd.f32 %v5698, %v6050
      %6052 = vmatprep.mubr.bf16.mxu0 %v5360
      %6053 = vmatmul.mubr.bf16.gmra.mrb[0].mxu0 %v5359
      %v6054 = vpop.f32.mrb[0].mxu0
      %v6055 = vadd.f32 %v5702, %v6054
      %v6056 = vpop.f32.mrb[0].mxu0
      %v6057 = vadd.f32 %v5704, %v6056
      %v6058 = vpop.f32.mrb[0].mxu0
      %v6059 = vadd.f32 %v5706, %v6058
      %v6060 = vpop.f32.mrb[0].mxu0
      %v6061 = vadd.f32 %v5708, %v6060
      %6062 = vmatprep.mubr.bf16.mxu0 %v5364
      %6063 = vmatmul.mubr.bf16.gmra.mrb[0].mxu0 %v5363
      %v6064 = vpop.f32.mrb[0].mxu0
      %v6065 = vadd.f32 %v5712, %v6064
      %v6066 = vpop.f32.mrb[0].mxu0
      %v6067 = vadd.f32 %v5714, %v6066
      %v6068 = vpop.f32.mrb[0].mxu0
      %v6069 = vadd.f32 %v5716, %v6068
      %v6070 = vpop.f32.mrb[0].mxu0
      %v6071 = vadd.f32 %v5718, %v6070
      %6072 = vmatprep.mubr.bf16.mxu0 %v5368
      %6073 = vmatmul.mubr.bf16.gmra.mrb[0].mxu0 %v5367
      %v6074 = vpop.f32.mrb[0].mxu0
      %v6075 = vadd.f32 %v5722, %v6074
      %v6076 = vpop.f32.mrb[0].mxu0
      %v6077 = vadd.f32 %v5724, %v6076
      %v6078 = vpop.f32.mrb[0].mxu0
      %v6079 = vadd.f32 %v5726, %v6078
      %v6080 = vpop.f32.mrb[0].mxu0
      %v6081 = vadd.f32 %v5728, %v6080
      %6082 = vmatprep.mubr.bf16.mxu0 %v5372
      %6083 = vmatmul.mubr.bf16.gmra.mrb[0].mxu0 %v5371
      %v6084 = vpop.f32.mrb[0].mxu0
      %v6085 = vadd.f32 %v5732, %v6084
      %v6086 = vpop.f32.mrb[0].mxu0
      %v6087 = vadd.f32 %v5734, %v6086
      %v6088 = vpop.f32.mrb[0].mxu0
      %v6089 = vadd.f32 %v5736, %v6088
      %v6090 = vpop.f32.mrb[0].mxu0
      %v6091 = vadd.f32 %v5738, %v6090
      %6092 = vmatprep.mubr.bf16.mxu0 %v5376
      %6093 = vmatmul.mubr.bf16.gmra.mrb[0].mxu0 %v5375
      %v6094 = vpop.f32.mrb[0].mxu0
      %v6095 = vadd.f32 %v5742, %v6094
      %v6096 = vpop.f32.mrb[0].mxu0
      %v6097 = vadd.f32 %v5744, %v6096
      %v6098 = vpop.f32.mrb[0].mxu0
      %v6099 = vadd.f32 %v5746, %v6098
      %v6100 = vpop.f32.mrb[0].mxu0
      %v6101 = vadd.f32 %v5748, %v6100
      %6102 = vmatprep.mubr.bf16.mxu0 %v5380
      %6103 = vmatmul.mubr.bf16.gmra.mrb[0].mxu0 %v5379
      %v6104 = vpop.f32.mrb[0].mxu0
      %v6105 = vadd.f32 %v5752, %v6104
      %v6106 = vpop.f32.mrb[0].mxu0
      %v6107 = vadd.f32 %v5754, %v6106
      %v6108 = vpop.f32.mrb[0].mxu0
      %v6109 = vadd.f32 %v5756, %v6108
      %v6110 = vpop.f32.mrb[0].mxu0
      %v6111 = vadd.f32 %v5758, %v6110
      %6112 = vmatprep.mubr.bf16.mxu0 %v5384
      %6113 = vmatmul.mubr.bf16.gmra.mrb[0].mxu0 %v5383
      %v6114 = vpop.f32.mrb[0].mxu0
      %v6115 = vadd.f32 %v5762, %v6114
      %v6116 = vpop.f32.mrb[0].mxu0
      %v6117 = vadd.f32 %v5764, %v6116
      %v6118 = vpop.f32.mrb[0].mxu0
      %v6119 = vadd.f32 %v5766, %v6118
      %v6120 = vpop.f32.mrb[0].mxu0
      %v6121 = vadd.f32 %v5768, %v6120
      %6122 = vmatprep.mubr.bf16.mxu0 %v5388
      %6123 = vmatmul.mubr.bf16.gmra.mrb[0].mxu0 %v5387
      %v6124 = vpop.f32.mrb[0].mxu0
      %v6125 = vadd.f32 %v5772, %v6124
      %v6126 = vpop.f32.mrb[0].mxu0
      %v6127 = vadd.f32 %v5774, %v6126
      %v6128 = vpop.f32.mrb[0].mxu0
      %v6129 = vadd.f32 %v5776, %v6128
      %v6130 = vpop.f32.mrb[0].mxu0
      %v6131 = vadd.f32 %v5778, %v6130
      %6132 = vmatprep.mubr.bf16.mxu0 %v5392
      %6133 = vmatmul.mubr.bf16.gmra.mrb[0].mxu0 %v5391
      %v6134 = vpop.f32.mrb[0].mxu0
      %v6135 = vadd.f32 %v5782, %v6134
      %v6136 = vpop.f32.mrb[0].mxu0
      %v6137 = vadd.f32 %v5784, %v6136
      %v6138 = vpop.f32.mrb[0].mxu0
      %v6139 = vadd.f32 %v5786, %v6138
      %v6140 = vpop.f32.mrb[0].mxu0
      %v6141 = vadd.f32 %v5788, %v6140
      %6142 = vmatprep.mubr.bf16.mxu0 %v5396
      %6143 = vmatmul.mubr.bf16.gmra.mrb[0].mxu0 %v5395
      %v6144 = vpop.f32.mrb[0].mxu0
      %v6145 = vadd.f32 %v5792, %v6144
      %v6146 = vpop.f32.mrb[0].mxu0
      %v6147 = vadd.f32 %v5794, %v6146
      %v6148 = vpop.f32.mrb[0].mxu0
      %v6149 = vadd.f32 %v5796, %v6148
      %v6150 = vpop.f32.mrb[0].mxu0
      %v6151 = vadd.f32 %v5798, %v6150
      %6152 = vmatprep.mubr.bf16.mxu0 %v5400
      %6153 = vmatmul.mubr.bf16.gmra.mrb[0].mxu0 %v5399
      %v6154 = vpop.f32.mrb[0].mxu0
      %v6155 = vadd.f32 %v5802, %v6154
      %v6156 = vpop.f32.mrb[0].mxu0
      %v6157 = vadd.f32 %v5804, %v6156
      %v6158 = vpop.f32.mrb[0].mxu0
      %v6159 = vadd.f32 %v5806, %v6158
      %v6160 = vpop.f32.mrb[0].mxu0
      %v6161 = vadd.f32 %v5808, %v6160
      %6162 = vmatprep.mubr.bf16.mxu0 %v5404
      %6163 = vmatmul.mubr.bf16.gmra.mrb[0].mxu0 %v5403
      %v6164 = vpop.f32.mrb[0].mxu0
      %v6165 = vadd.f32 %v5812, %v6164
      %v6166 = vpop.f32.mrb[0].mxu0
      %v6167 = vadd.f32 %v5814, %v6166
      %v6168 = vpop.f32.mrb[0].mxu0
      %v6169 = vadd.f32 %v5816, %v6168
      %v6170 = vpop.f32.mrb[0].mxu0
      %v6171 = vadd.f32 %v5818, %v6170
      %6172 = vmatprep.mubr.bf16.mxu0 %v5408
      %6173 = vmatmul.mubr.bf16.gmra.mrb[0].mxu0 %v5407
      %v6174 = vpop.f32.mrb[0].mxu0
      %v6175 = vadd.f32 %v5822, %v6174
      %v6176 = vpop.f32.mrb[0].mxu0
      %v6177 = vadd.f32 %v5824, %v6176
      %v6178 = vpop.f32.mrb[0].mxu0
      %v6179 = vadd.f32 %v5826, %v6178
      %v6180 = vpop.f32.mrb[0].mxu0
      %v6181 = vadd.f32 %v5828, %v6180
      %6182 = vmatprep.mubr.bf16.mxu0 %v5412
      %6183 = vmatmul.mubr.bf16.gmra.mrb[0].mxu0 %v5411
      %v6184 = vpop.f32.mrb[0].mxu0
      %v6185 = vadd.f32 %v5832, %v6184
      %v6186 = vpop.f32.mrb[0].mxu0
      %v6187 = vadd.f32 %v5834, %v6186
      %v6188 = vpop.f32.mrb[0].mxu0
      %v6189 = vadd.f32 %v5836, %v6188
      %v6190 = vpop.f32.mrb[0].mxu0
      %v6191 = vadd.f32 %v5838, %v6190
      %6192 = vmatprep.mubr.bf16.mxu0 %v5416
      %6193 = vmatmul.mubr.bf16.gmra.mrb[0].mxu0 %v5415
      %v6194 = vpop.f32.mrb[0].mxu0
      %v6195 = vadd.f32 %v5842, %v6194
      %v6196 = vpop.f32.mrb[0].mxu0
      %v6197 = vadd.f32 %v5844, %v6196
      %v6198 = vpop.f32.mrb[0].mxu0
      %v6199 = vadd.f32 %v5846, %v6198
      %v6200 = vpop.f32.mrb[0].mxu0
      %v6201 = vadd.f32 %v5848, %v6200
      %6202 = vmatprep.mubr.bf16.mxu0 %v5420
      %6203 = vmatmul.mubr.bf16.gmra.mrb[0].mxu0 %v5419
      %v6204 = vpop.f32.mrb[0].mxu0
      %v6205 = vadd.f32 %v5852, %v6204
      %v6206 = vpop.f32.mrb[0].mxu0
      %v6207 = vadd.f32 %v5854, %v6206
      %v6208 = vpop.f32.mrb[0].mxu0
      %v6209 = vadd.f32 %v5856, %v6208
      %v6210 = vpop.f32.mrb[0].mxu0
      %v6211 = vadd.f32 %v5858, %v6210
      %6212 = vmatprep.mubr.bf16.mxu0 %v5424
      %6213 = vmatmul.mubr.bf16.gmra.mrb[0].mxu0 %v5423
      %v6214 = vpop.f32.mrb[0].mxu0
      %v6215 = vadd.f32 %v5862, %v6214
      %v6216 = vpop.f32.mrb[0].mxu0
      %v6217 = vadd.f32 %v5864, %v6216
      %v6218 = vpop.f32.mrb[0].mxu0
      %v6219 = vadd.f32 %v5866, %v6218
      %v6220 = vpop.f32.mrb[0].mxu0
      %v6221 = vadd.f32 %v5868, %v6220
      %6222 = vmatprep.mubr.bf16.mxu0 %v5428
      %6223 = vmatmul.mubr.bf16.gmra.mrb[0].mxu0 %v5427
      %v6224 = vpop.f32.mrb[0].mxu0
      %v6225 = vadd.f32 %v5872, %v6224
      %v6226 = vpop.f32.mrb[0].mxu0
      %v6227 = vadd.f32 %v5874, %v6226
      %v6228 = vpop.f32.mrb[0].mxu0
      %v6229 = vadd.f32 %v5876, %v6228
      %v6230 = vpop.f32.mrb[0].mxu0
      %v6231 = vadd.f32 %v5878, %v6230
      %6232 = vmatprep.mubr.bf16.mxu0 %v5432
      %6233 = vmatmul.mubr.bf16.gmra.mrb[0].mxu0 %v5431
      %v6234 = vpop.f32.mrb[0].mxu0
      %v6235 = vadd.f32 %v5882, %v6234
      %v6236 = vpop.f32.mrb[0].mxu0
      %v6237 = vadd.f32 %v5884, %v6236
      %v6238 = vpop.f32.mrb[0].mxu0
      %v6239 = vadd.f32 %v5886, %v6238
      %v6240 = vpop.f32.mrb[0].mxu0
      %v6241 = vadd.f32 %v5888, %v6240
      %6242 = vmatprep.mubr.bf16.mxu0 %v5436
      %6243 = vmatmul.mubr.bf16.gmra.mrb[0].mxu0 %v5435
      %v6244 = vpop.f32.mrb[0].mxu0
      %v6245 = vadd.f32 %v5892, %v6244
      %v6246 = vpop.f32.mrb[0].mxu0
      %v6247 = vadd.f32 %v5894, %v6246
      %v6248 = vpop.f32.mrb[0].mxu0
      %v6249 = vadd.f32 %v5896, %v6248
      %v6250 = vpop.f32.mrb[0].mxu0
      %v6251 = vadd.f32 %v5898, %v6250
      %6252 = vmatprep.mubr.bf16.mxu0 %v5440
      %6253 = vmatmul.mubr.bf16.gmra.mrb[0].mxu0 %v5439
      %v6254 = vpop.f32.mrb[0].mxu0
      %v6255 = vadd.f32 %v5902, %v6254
      %v6256 = vpop.f32.mrb[0].mxu0
      %v6257 = vadd.f32 %v5904, %v6256
      %v6258 = vpop.f32.mrb[0].mxu0
      %v6259 = vadd.f32 %v5906, %v6258
      %v6260 = vpop.f32.mrb[0].mxu0
      %v6261 = vadd.f32 %v5908, %v6260
      %6262 = vmatprep.mubr.bf16.mxu0 %v5444
      %6263 = vmatmul.mubr.bf16.gmra.mrb[0].mxu0 %v5443
      %v6264 = vpop.f32.mrb[0].mxu0
      %v6265 = vadd.f32 %v5912, %v6264
      %v6266 = vpop.f32.mrb[0].mxu0
      %v6267 = vadd.f32 %v5914, %v6266
      %v6268 = vpop.f32.mrb[0].mxu0
      %v6269 = vadd.f32 %v5916, %v6268
      %v6270 = vpop.f32.mrb[0].mxu0
      %v6271 = vadd.f32 %v5918, %v6270
      %6272 = vmatprep.mubr.bf16.mxu0 %v5448
      %6273 = vmatmul.mubr.bf16.gmra.mrb[0].mxu0 %v5447
      %v6274 = vpop.f32.mrb[0].mxu0
      %v6275 = vadd.f32 %v5922, %v6274
      %v6276 = vpop.f32.mrb[0].mxu0
      %v6277 = vadd.f32 %v5924, %v6276
      %v6278 = vpop.f32.mrb[0].mxu0
      %v6279 = vadd.f32 %v5926, %v6278
      %v6280 = vpop.f32.mrb[0].mxu0
      %v6281 = vadd.f32 %v5928, %v6280
      %6282 = vdwg.mxu0
      %6283 = vmatprep.subr.bf16.mxu0 0
      %6284 = vmatpush1.bf16.msra.mxu0 %v4331
      %6285 = vmatprep.subr.bf16.mxu0 0
      %6286 = vmatpush1.bf16.msra.mxu0 %v4334
      %6287 = vmatprep.subr.bf16.mxu0 0
      %6288 = vmatpush1.bf16.msra.mxu0 %v4337
      %6289 = vmatprep.subr.bf16.mxu0 0
      %6290 = vmatpush1.bf16.msra.mxu0 %v4340
      %6291 = vmatprep.subr.bf16.mxu0 0
      %6292 = vmatpush1.bf16.msra.mxu0 %v4343
      %6293 = vmatprep.subr.bf16.mxu0 0
      %6294 = vmatpush1.bf16.msra.mxu0 %v4346
      %6295 = vmatprep.subr.bf16.mxu0 0
      %6296 = vmatpush1.bf16.msra.mxu0 %v4349
      %6297 = vmatprep.subr.bf16.mxu0 0
      %6298 = vmatpush1.bf16.msra.mxu0 %v4352
      %6299 = vmatprep.subr.bf16.mxu0 0
      %6300 = vmatpush1.bf16.msra.mxu0 %v4355
      %6301 = vmatprep.subr.bf16.mxu0 0
      %6302 = vmatpush1.bf16.msra.mxu0 %v4358
      %6303 = vmatprep.subr.bf16.mxu0 0
      %6304 = vmatpush1.bf16.msra.mxu0 %v4361
      %6305 = vmatprep.subr.bf16.mxu0 0
      %6306 = vmatpush1.bf16.msra.mxu0 %v4364
      %6307 = vmatprep.subr.bf16.mxu0 0
      %6308 = vmatpush1.bf16.msra.mxu0 %v4367
      %6309 = vmatprep.subr.bf16.mxu0 0
      %6310 = vmatpush1.bf16.msra.mxu0 %v4370
      %6311 = vmatprep.subr.bf16.mxu0 0
      %6312 = vmatpush1.bf16.msra.mxu0 %v4373
      %6313 = vmatprep.subr.bf16.mxu0 0
      %6314 = vmatpush1.bf16.msra.mxu0 %v4376
      %6315 = vmatprep.mubr.bf16.mxu0 %v5322
      %6316 = vmatmul.mubr.bf16.gmra.mrb[0].mxu0 %v5321
      %v6317 = vpop.f32.mrb[0].mxu0
      %v6318 = vadd.f32 %v4620, %v6317
      %v6319 = vpop.f32.mrb[0].mxu0
      %v6320 = vpop.f32.mrb[0].mxu0
      %v6321 = vadd.f32 %v4625, %v6320
      %v6322 = vpop.f32.mrb[0].mxu0
      %6323 = vmatprep.mubr.bf16.mxu0 %v5326
      %6324 = vmatmul.mubr.bf16.gmra.mrb[0].mxu0 %v5325
      %v6325 = vpop.f32.mrb[0].mxu0
      %v6326 = vadd.f32 %v4630, %v6325
      %v6327 = vpop.f32.mrb[0].mxu0
      %v6328 = vpop.f32.mrb[0].mxu0
      %v6329 = vadd.f32 %v4635, %v6328
      %v6330 = vpop.f32.mrb[0].mxu0
      %6331 = vmatprep.mubr.bf16.mxu0 %v5330
      %6332 = vmatmul.mubr.bf16.gmra.mrb[0].mxu0 %v5329
      %v6333 = vpop.f32.mrb[0].mxu0
      %v6334 = vadd.f32 %v4640, %v6333
      %v6335 = vpop.f32.mrb[0].mxu0
      %v6336 = vpop.f32.mrb[0].mxu0
      %v6337 = vadd.f32 %v4645, %v6336
      %v6338 = vpop.f32.mrb[0].mxu0
      %6339 = vmatprep.mubr.bf16.mxu0 %v5334
      %6340 = vmatmul.mubr.bf16.gmra.mrb[0].mxu0 %v5333
      %v6341 = vpop.f32.mrb[0].mxu0
      %v6342 = vadd.f32 %v4650, %v6341
      %v6343 = vpop.f32.mrb[0].mxu0
      %v6344 = vpop.f32.mrb[0].mxu0
      %v6345 = vadd.f32 %v4655, %v6344
      %v6346 = vpop.f32.mrb[0].mxu0
      %6347 = vmatprep.mubr.bf16.mxu0 %v5338
      %6348 = vmatmul.mubr.bf16.gmra.mrb[0].mxu0 %v5337
      %v6349 = vpop.f32.mrb[0].mxu0
      %v6350 = vadd.f32 %v4660, %v6349
      %v6351 = vpop.f32.mrb[0].mxu0
      %v6352 = vpop.f32.mrb[0].mxu0
      %v6353 = vadd.f32 %v4665, %v6352
      %v6354 = vpop.f32.mrb[0].mxu0
      %6355 = vmatprep.mubr.bf16.mxu0 %v5342
      %6356 = vmatmul.mubr.bf16.gmra.mrb[0].mxu0 %v5341
      %v6357 = vpop.f32.mrb[0].mxu0
      %v6358 = vadd.f32 %v4670, %v6357
      %v6359 = vpop.f32.mrb[0].mxu0
      %v6360 = vpop.f32.mrb[0].mxu0
      %v6361 = vadd.f32 %v4675, %v6360
      %v6362 = vpop.f32.mrb[0].mxu0
      %6363 = vmatprep.mubr.bf16.mxu0 %v5346
      %6364 = vmatmul.mubr.bf16.gmra.mrb[0].mxu0 %v5345
      %v6365 = vpop.f32.mrb[0].mxu0
      %v6366 = vadd.f32 %v4680, %v6365
      %v6367 = vpop.f32.mrb[0].mxu0
      %v6368 = vpop.f32.mrb[0].mxu0
      %v6369 = vadd.f32 %v4685, %v6368
      %v6370 = vpop.f32.mrb[0].mxu0
      %6371 = vmatprep.mubr.bf16.mxu0 %v5350
      %6372 = vmatmul.mubr.bf16.gmra.mrb[0].mxu0 %v5349
      %v6373 = vpop.f32.mrb[0].mxu0
      %v6374 = vadd.f32 %v4690, %v6373
      %v6375 = vpop.f32.mrb[0].mxu0
      %v6376 = vpop.f32.mrb[0].mxu0
      %v6377 = vadd.f32 %v4695, %v6376
      %v6378 = vpop.f32.mrb[0].mxu0
      %6379 = vmatprep.mubr.bf16.mxu0 %v5354
      %6380 = vmatmul.mubr.bf16.gmra.mrb[0].mxu0 %v5353
      %v6381 = vpop.f32.mrb[0].mxu0
      %v6382 = vadd.f32 %v4700, %v6381
      %v6383 = vpop.f32.mrb[0].mxu0
      %v6384 = vpop.f32.mrb[0].mxu0
      %v6385 = vadd.f32 %v4705, %v6384
      %v6386 = vpop.f32.mrb[0].mxu0
      %6387 = vmatprep.mubr.bf16.mxu0 %v5358
      %6388 = vmatmul.mubr.bf16.gmra.mrb[0].mxu0 %v5357
      %v6389 = vpop.f32.mrb[0].mxu0
      %v6390 = vadd.f32 %v4710, %v6389
      %v6391 = vpop.f32.mrb[0].mxu0
      %v6392 = vpop.f32.mrb[0].mxu0
      %v6393 = vadd.f32 %v4715, %v6392
      %v6394 = vpop.f32.mrb[0].mxu0
      %6395 = vmatprep.mubr.bf16.mxu0 %v5362
      %6396 = vmatmul.mubr.bf16.gmra.mrb[0].mxu0 %v5361
      %v6397 = vpop.f32.mrb[0].mxu0
      %v6398 = vadd.f32 %v4720, %v6397
      %v6399 = vpop.f32.mrb[0].mxu0
      %v6400 = vpop.f32.mrb[0].mxu0
      %v6401 = vadd.f32 %v4725, %v6400
      %v6402 = vpop.f32.mrb[0].mxu0
      %6403 = vmatprep.mubr.bf16.mxu0 %v5366
      %6404 = vmatmul.mubr.bf16.gmra.mrb[0].mxu0 %v5365
      %v6405 = vpop.f32.mrb[0].mxu0
      %v6406 = vadd.f32 %v4730, %v6405
      %v6407 = vpop.f32.mrb[0].mxu0
      %v6408 = vpop.f32.mrb[0].mxu0
      %v6409 = vadd.f32 %v4735, %v6408
      %v6410 = vpop.f32.mrb[0].mxu0
      %6411 = vmatprep.mubr.bf16.mxu0 %v5370
      %6412 = vmatmul.mubr.bf16.gmra.mrb[0].mxu0 %v5369
      %v6413 = vpop.f32.mrb[0].mxu0
      %v6414 = vadd.f32 %v4740, %v6413
      %v6415 = vpop.f32.mrb[0].mxu0
      %v6416 = vpop.f32.mrb[0].mxu0
      %v6417 = vadd.f32 %v4745, %v6416
      %v6418 = vpop.f32.mrb[0].mxu0
      %6419 = vmatprep.mubr.bf16.mxu0 %v5374
      %6420 = vmatmul.mubr.bf16.gmra.mrb[0].mxu0 %v5373
      %v6421 = vpop.f32.mrb[0].mxu0
      %v6422 = vadd.f32 %v4750, %v6421
      %v6423 = vpop.f32.mrb[0].mxu0
      %v6424 = vpop.f32.mrb[0].mxu0
      %v6425 = vadd.f32 %v4755, %v6424
      %v6426 = vpop.f32.mrb[0].mxu0
      %6427 = vmatprep.mubr.bf16.mxu0 %v5378
      %6428 = vmatmul.mubr.bf16.gmra.mrb[0].mxu0 %v5377
      %v6429 = vpop.f32.mrb[0].mxu0
      %v6430 = vadd.f32 %v4760, %v6429
      %v6431 = vpop.f32.mrb[0].mxu0
      %v6432 = vpop.f32.mrb[0].mxu0
      %v6433 = vadd.f32 %v4765, %v6432
      %v6434 = vpop.f32.mrb[0].mxu0
      %6435 = vmatprep.mubr.bf16.mxu0 %v5382
      %6436 = vmatmul.mubr.bf16.gmra.mrb[0].mxu0 %v5381
      %v6437 = vpop.f32.mrb[0].mxu0
      %v6438 = vadd.f32 %v4770, %v6437
      %v6439 = vpop.f32.mrb[0].mxu0
      %v6440 = vpop.f32.mrb[0].mxu0
      %v6441 = vadd.f32 %v4775, %v6440
      %v6442 = vpop.f32.mrb[0].mxu0
      %6443 = vmatprep.mubr.bf16.mxu0 %v5386
      %6444 = vmatmul.mubr.bf16.gmra.mrb[0].mxu0 %v5385
      %v6445 = vpop.f32.mrb[0].mxu0
      %v6446 = vadd.f32 %v4780, %v6445
      %v6447 = vpop.f32.mrb[0].mxu0
      %v6448 = vpop.f32.mrb[0].mxu0
      %v6449 = vadd.f32 %v4785, %v6448
      %v6450 = vpop.f32.mrb[0].mxu0
      %6451 = vmatprep.mubr.bf16.mxu0 %v5390
      %6452 = vmatmul.mubr.bf16.gmra.mrb[0].mxu0 %v5389
      %v6453 = vpop.f32.mrb[0].mxu0
      %v6454 = vadd.f32 %v4790, %v6453
      %v6455 = vpop.f32.mrb[0].mxu0
      %v6456 = vpop.f32.mrb[0].mxu0
      %v6457 = vadd.f32 %v4795, %v6456
      %v6458 = vpop.f32.mrb[0].mxu0
      %6459 = vmatprep.mubr.bf16.mxu0 %v5394
      %6460 = vmatmul.mubr.bf16.gmra.mrb[0].mxu0 %v5393
      %v6461 = vpop.f32.mrb[0].mxu0
      %v6462 = vadd.f32 %v4800, %v6461
      %v6463 = vpop.f32.mrb[0].mxu0
      %v6464 = vpop.f32.mrb[0].mxu0
      %v6465 = vadd.f32 %v4805, %v6464
      %v6466 = vpop.f32.mrb[0].mxu0
      %6467 = vmatprep.mubr.bf16.mxu0 %v5398
      %6468 = vmatmul.mubr.bf16.gmra.mrb[0].mxu0 %v5397
      %v6469 = vpop.f32.mrb[0].mxu0
      %v6470 = vadd.f32 %v4810, %v6469
      %v6471 = vpop.f32.mrb[0].mxu0
      %v6472 = vpop.f32.mrb[0].mxu0
      %v6473 = vadd.f32 %v4815, %v6472
      %v6474 = vpop.f32.mrb[0].mxu0
      %6475 = vmatprep.mubr.bf16.mxu0 %v5402
      %6476 = vmatmul.mubr.bf16.gmra.mrb[0].mxu0 %v5401
      %v6477 = vpop.f32.mrb[0].mxu0
      %v6478 = vadd.f32 %v4820, %v6477
      %v6479 = vpop.f32.mrb[0].mxu0
      %v6480 = vpop.f32.mrb[0].mxu0
      %v6481 = vadd.f32 %v4825, %v6480
      %v6482 = vpop.f32.mrb[0].mxu0
      %6483 = vmatprep.mubr.bf16.mxu0 %v5406
      %6484 = vmatmul.mubr.bf16.gmra.mrb[0].mxu0 %v5405
      %v6485 = vpop.f32.mrb[0].mxu0
      %v6486 = vadd.f32 %v4830, %v6485
      %v6487 = vpop.f32.mrb[0].mxu0
      %v6488 = vpop.f32.mrb[0].mxu0
      %v6489 = vadd.f32 %v4835, %v6488
      %v6490 = vpop.f32.mrb[0].mxu0
      %6491 = vmatprep.mubr.bf16.mxu0 %v5410
      %6492 = vmatmul.mubr.bf16.gmra.mrb[0].mxu0 %v5409
      %v6493 = vpop.f32.mrb[0].mxu0
      %v6494 = vadd.f32 %v4840, %v6493
      %v6495 = vpop.f32.mrb[0].mxu0
      %v6496 = vpop.f32.mrb[0].mxu0
      %v6497 = vadd.f32 %v4845, %v6496
      %v6498 = vpop.f32.mrb[0].mxu0
      %6499 = vmatprep.mubr.bf16.mxu0 %v5414
      %6500 = vmatmul.mubr.bf16.gmra.mrb[0].mxu0 %v5413
      %v6501 = vpop.f32.mrb[0].mxu0
      %v6502 = vadd.f32 %v4850, %v6501
      %v6503 = vpop.f32.mrb[0].mxu0
      %v6504 = vpop.f32.mrb[0].mxu0
      %v6505 = vadd.f32 %v4855, %v6504
      %v6506 = vpop.f32.mrb[0].mxu0
      %6507 = vmatprep.mubr.bf16.mxu0 %v5418
      %6508 = vmatmul.mubr.bf16.gmra.mrb[0].mxu0 %v5417
      %v6509 = vpop.f32.mrb[0].mxu0
      %v6510 = vadd.f32 %v4860, %v6509
      %v6511 = vpop.f32.mrb[0].mxu0
      %v6512 = vpop.f32.mrb[0].mxu0
      %v6513 = vadd.f32 %v4865, %v6512
      %v6514 = vpop.f32.mrb[0].mxu0
      %6515 = vmatprep.mubr.bf16.mxu0 %v5422
      %6516 = vmatmul.mubr.bf16.gmra.mrb[0].mxu0 %v5421
      %v6517 = vpop.f32.mrb[0].mxu0
      %v6518 = vadd.f32 %v4870, %v6517
      %v6519 = vpop.f32.mrb[0].mxu0
      %v6520 = vpop.f32.mrb[0].mxu0
      %v6521 = vadd.f32 %v4875, %v6520
      %v6522 = vpop.f32.mrb[0].mxu0
      %6523 = vmatprep.mubr.bf16.mxu0 %v5426
      %6524 = vmatmul.mubr.bf16.gmra.mrb[0].mxu0 %v5425
      %v6525 = vpop.f32.mrb[0].mxu0
      %v6526 = vadd.f32 %v4880, %v6525
      %v6527 = vpop.f32.mrb[0].mxu0
      %v6528 = vpop.f32.mrb[0].mxu0
      %v6529 = vadd.f32 %v4885, %v6528
      %v6530 = vpop.f32.mrb[0].mxu0
      %6531 = vmatprep.mubr.bf16.mxu0 %v5430
      %6532 = vmatmul.mubr.bf16.gmra.mrb[0].mxu0 %v5429
      %v6533 = vpop.f32.mrb[0].mxu0
      %v6534 = vadd.f32 %v4890, %v6533
      %v6535 = vpop.f32.mrb[0].mxu0
      %v6536 = vpop.f32.mrb[0].mxu0
      %v6537 = vadd.f32 %v4895, %v6536
      %v6538 = vpop.f32.mrb[0].mxu0
      %6539 = vmatprep.mubr.bf16.mxu0 %v5434
      %6540 = vmatmul.mubr.bf16.gmra.mrb[0].mxu0 %v5433
      %v6541 = vpop.f32.mrb[0].mxu0
      %v6542 = vadd.f32 %v4900, %v6541
      %v6543 = vpop.f32.mrb[0].mxu0
      %v6544 = vpop.f32.mrb[0].mxu0
      %v6545 = vadd.f32 %v4905, %v6544
      %v6546 = vpop.f32.mrb[0].mxu0
      %6547 = vmatprep.mubr.bf16.mxu0 %v5438
      %6548 = vmatmul.mubr.bf16.gmra.mrb[0].mxu0 %v5437
      %v6549 = vpop.f32.mrb[0].mxu0
      %v6550 = vadd.f32 %v4910, %v6549
      %v6551 = vpop.f32.mrb[0].mxu0
      %v6552 = vpop.f32.mrb[0].mxu0
      %v6553 = vadd.f32 %v4915, %v6552
      %v6554 = vpop.f32.mrb[0].mxu0
      %6555 = vmatprep.mubr.bf16.mxu0 %v5442
      %6556 = vmatmul.mubr.bf16.gmra.mrb[0].mxu0 %v5441
      %v6557 = vpop.f32.mrb[0].mxu0
      %v6558 = vadd.f32 %v4920, %v6557
      %v6559 = vpop.f32.mrb[0].mxu0
      %v6560 = vpop.f32.mrb[0].mxu0
      %v6561 = vadd.f32 %v4925, %v6560
      %v6562 = vpop.f32.mrb[0].mxu0
      %6563 = vmatprep.mubr.bf16.mxu0 %v5446
      %6564 = vmatmul.mubr.bf16.gmra.mrb[0].mxu0 %v5445
      %v6565 = vpop.f32.mrb[0].mxu0
      %v6566 = vadd.f32 %v4930, %v6565
      %v6567 = vpop.f32.mrb[0].mxu0
      %v6568 = vpop.f32.mrb[0].mxu0
      %v6569 = vadd.f32 %v4935, %v6568
      %v6570 = vpop.f32.mrb[0].mxu0
      %6571 = vdwg.mxu0
      %6572 = vmatprep.subr.bf16.mxu0 0
      %6573 = vmatpush1.bf16.msra.mxu0 %v4379
      %6574 = vmatprep.subr.bf16.mxu0 0
      %6575 = vmatpush1.bf16.msra.mxu0 %v4382
      %6576 = vmatprep.subr.bf16.mxu0 0
      %6577 = vmatpush1.bf16.msra.mxu0 %v4385
      %6578 = vmatprep.subr.bf16.mxu0 0
      %6579 = vmatpush1.bf16.msra.mxu0 %v4388
      %6580 = vmatprep.subr.bf16.mxu0 0
      %6581 = vmatpush1.bf16.msra.mxu0 %v4391
      %6582 = vmatprep.subr.bf16.mxu0 0
      %6583 = vmatpush1.bf16.msra.mxu0 %v4394
      %6584 = vmatprep.subr.bf16.mxu0 0
      %6585 = vmatpush1.bf16.msra.mxu0 %v4397
      %6586 = vmatprep.subr.bf16.mxu0 0
      %6587 = vmatpush1.bf16.msra.mxu0 %v4400
      %6588 = vmatprep.subr.bf16.mxu0 0
      %6589 = vmatpush1.bf16.msra.mxu0 %v4403
      %6590 = vmatprep.subr.bf16.mxu0 0
      %6591 = vmatpush1.bf16.msra.mxu0 %v4406
      %6592 = vmatprep.subr.bf16.mxu0 0
      %6593 = vmatpush1.bf16.msra.mxu0 %v4409
      %6594 = vmatprep.subr.bf16.mxu0 0
      %6595 = vmatpush1.bf16.msra.mxu0 %v4412
      %6596 = vmatprep.subr.bf16.mxu0 0
      %6597 = vmatpush1.bf16.msra.mxu0 %v4415
      %6598 = vmatprep.subr.bf16.mxu0 0
      %6599 = vmatpush1.bf16.msra.mxu0 %v4418
      %6600 = vmatprep.subr.bf16.mxu0 0
      %6601 = vmatpush1.bf16.msra.mxu0 %v4421
      %6602 = vmatprep.subr.bf16.mxu0 0
      %6603 = vmatpush1.bf16.msra.mxu0 %v4424
      %6604 = vmatprep.mubr.bf16.mxu0 %v5324
      %6605 = vmatmul.mubr.bf16.gmra.mrb[0].mxu0 %v5323
      %v6606 = vpop.f32.mrb[0].mxu0
      %v6607 = vadd.f32 %v6318, %v6606
      %v6608 = vpop.f32.mrb[0].mxu0
      %v6609 = vpop.f32.mrb[0].mxu0
      %v6610 = vadd.f32 %v6321, %v6609
      %v6611 = vpop.f32.mrb[0].mxu0
      %6612 = vmatprep.mubr.bf16.mxu0 %v5328
      %6613 = vmatmul.mubr.bf16.gmra.mrb[0].mxu0 %v5327
      %v6614 = vpop.f32.mrb[0].mxu0
      %v6615 = vadd.f32 %v6326, %v6614
      %v6616 = vpop.f32.mrb[0].mxu0
      %v6617 = vpop.f32.mrb[0].mxu0
      %v6618 = vadd.f32 %v6329, %v6617
      %v6619 = vpop.f32.mrb[0].mxu0
      %6620 = vmatprep.mubr.bf16.mxu0 %v5332
      %6621 = vmatmul.mubr.bf16.gmra.mrb[0].mxu0 %v5331
      %v6622 = vpop.f32.mrb[0].mxu0
      %v6623 = vadd.f32 %v6334, %v6622
      %v6624 = vpop.f32.mrb[0].mxu0
      %v6625 = vpop.f32.mrb[0].mxu0
      %v6626 = vadd.f32 %v6337, %v6625
      %v6627 = vpop.f32.mrb[0].mxu0
      %6628 = vmatprep.mubr.bf16.mxu0 %v5336
      %6629 = vmatmul.mubr.bf16.gmra.mrb[0].mxu0 %v5335
      %v6630 = vpop.f32.mrb[0].mxu0
      %v6631 = vadd.f32 %v6342, %v6630
      %v6632 = vpop.f32.mrb[0].mxu0
      %v6633 = vpop.f32.mrb[0].mxu0
      %v6634 = vadd.f32 %v6345, %v6633
      %v6635 = vpop.f32.mrb[0].mxu0
      %6636 = vmatprep.mubr.bf16.mxu0 %v5340
      %6637 = vmatmul.mubr.bf16.gmra.mrb[0].mxu0 %v5339
      %v6638 = vpop.f32.mrb[0].mxu0
      %v6639 = vadd.f32 %v6350, %v6638
      %v6640 = vpop.f32.mrb[0].mxu0
      %v6641 = vpop.f32.mrb[0].mxu0
      %v6642 = vadd.f32 %v6353, %v6641
      %v6643 = vpop.f32.mrb[0].mxu0
      %6644 = vmatprep.mubr.bf16.mxu0 %v5344
      %6645 = vmatmul.mubr.bf16.gmra.mrb[0].mxu0 %v5343
      %v6646 = vpop.f32.mrb[0].mxu0
      %v6647 = vadd.f32 %v6358, %v6646
      %v6648 = vpop.f32.mrb[0].mxu0
      %v6649 = vpop.f32.mrb[0].mxu0
      %v6650 = vadd.f32 %v6361, %v6649
      %v6651 = vpop.f32.mrb[0].mxu0
      %6652 = vmatprep.mubr.bf16.mxu0 %v5348
      %6653 = vmatmul.mubr.bf16.gmra.mrb[0].mxu0 %v5347
      %v6654 = vpop.f32.mrb[0].mxu0
      %v6655 = vadd.f32 %v6366, %v6654
      %v6656 = vpop.f32.mrb[0].mxu0
      %v6657 = vpop.f32.mrb[0].mxu0
      %v6658 = vadd.f32 %v6369, %v6657
      %v6659 = vpop.f32.mrb[0].mxu0
      %6660 = vmatprep.mubr.bf16.mxu0 %v5352
      %6661 = vmatmul.mubr.bf16.gmra.mrb[0].mxu0 %v5351
      %v6662 = vpop.f32.mrb[0].mxu0
      %v6663 = vadd.f32 %v6374, %v6662
      %v6664 = vpop.f32.mrb[0].mxu0
      %v6665 = vpop.f32.mrb[0].mxu0
      %v6666 = vadd.f32 %v6377, %v6665
      %v6667 = vpop.f32.mrb[0].mxu0
      %6668 = vmatprep.mubr.bf16.mxu0 %v5356
      %6669 = vmatmul.mubr.bf16.gmra.mrb[0].mxu0 %v5355
      %v6670 = vpop.f32.mrb[0].mxu0
      %v6671 = vadd.f32 %v6382, %v6670
      %v6672 = vpop.f32.mrb[0].mxu0
      %v6673 = vpop.f32.mrb[0].mxu0
      %v6674 = vadd.f32 %v6385, %v6673
      %v6675 = vpop.f32.mrb[0].mxu0
      %6676 = vmatprep.mubr.bf16.mxu0 %v5360
      %6677 = vmatmul.mubr.bf16.gmra.mrb[0].mxu0 %v5359
      %v6678 = vpop.f32.mrb[0].mxu0
      %v6679 = vadd.f32 %v6390, %v6678
      %v6680 = vpop.f32.mrb[0].mxu0
      %v6681 = vpop.f32.mrb[0].mxu0
      %v6682 = vadd.f32 %v6393, %v6681
      %v6683 = vpop.f32.mrb[0].mxu0
      %6684 = vmatprep.mubr.bf16.mxu0 %v5364
      %6685 = vmatmul.mubr.bf16.gmra.mrb[0].mxu0 %v5363
      %v6686 = vpop.f32.mrb[0].mxu0
      %v6687 = vadd.f32 %v6398, %v6686
      %v6688 = vpop.f32.mrb[0].mxu0
      %v6689 = vpop.f32.mrb[0].mxu0
      %v6690 = vadd.f32 %v6401, %v6689
      %v6691 = vpop.f32.mrb[0].mxu0
      %6692 = vmatprep.mubr.bf16.mxu0 %v5368
      %6693 = vmatmul.mubr.bf16.gmra.mrb[0].mxu0 %v5367
      %v6694 = vpop.f32.mrb[0].mxu0
      %v6695 = vadd.f32 %v6406, %v6694
      %v6696 = vpop.f32.mrb[0].mxu0
      %v6697 = vpop.f32.mrb[0].mxu0
      %v6698 = vadd.f32 %v6409, %v6697
      %v6699 = vpop.f32.mrb[0].mxu0
      %6700 = vmatprep.mubr.bf16.mxu0 %v5372
      %6701 = vmatmul.mubr.bf16.gmra.mrb[0].mxu0 %v5371
      %v6702 = vpop.f32.mrb[0].mxu0
      %v6703 = vadd.f32 %v6414, %v6702
      %v6704 = vpop.f32.mrb[0].mxu0
      %v6705 = vpop.f32.mrb[0].mxu0
      %v6706 = vadd.f32 %v6417, %v6705
      %v6707 = vpop.f32.mrb[0].mxu0
      %6708 = vmatprep.mubr.bf16.mxu0 %v5376
      %6709 = vmatmul.mubr.bf16.gmra.mrb[0].mxu0 %v5375
      %v6710 = vpop.f32.mrb[0].mxu0
      %v6711 = vadd.f32 %v6422, %v6710
      %v6712 = vpop.f32.mrb[0].mxu0
      %v6713 = vpop.f32.mrb[0].mxu0
      %v6714 = vadd.f32 %v6425, %v6713
      %v6715 = vpop.f32.mrb[0].mxu0
      %6716 = vmatprep.mubr.bf16.mxu0 %v5380
      %6717 = vmatmul.mubr.bf16.gmra.mrb[0].mxu0 %v5379
      %v6718 = vpop.f32.mrb[0].mxu0
      %v6719 = vadd.f32 %v6430, %v6718
      %v6720 = vpop.f32.mrb[0].mxu0
      %v6721 = vpop.f32.mrb[0].mxu0
      %v6722 = vadd.f32 %v6433, %v6721
      %v6723 = vpop.f32.mrb[0].mxu0
      %6724 = vmatprep.mubr.bf16.mxu0 %v5384
      %6725 = vmatmul.mubr.bf16.gmra.mrb[0].mxu0 %v5383
      %v6726 = vpop.f32.mrb[0].mxu0
      %v6727 = vadd.f32 %v6438, %v6726
      %v6728 = vpop.f32.mrb[0].mxu0
      %v6729 = vpop.f32.mrb[0].mxu0
      %v6730 = vadd.f32 %v6441, %v6729
      %v6731 = vpop.f32.mrb[0].mxu0
      %6732 = vmatprep.mubr.bf16.mxu0 %v5388
      %6733 = vmatmul.mubr.bf16.gmra.mrb[0].mxu0 %v5387
      %v6734 = vpop.f32.mrb[0].mxu0
      %v6735 = vadd.f32 %v6446, %v6734
      %v6736 = vpop.f32.mrb[0].mxu0
      %v6737 = vpop.f32.mrb[0].mxu0
      %v6738 = vadd.f32 %v6449, %v6737
      %v6739 = vpop.f32.mrb[0].mxu0
      %6740 = vmatprep.mubr.bf16.mxu0 %v5392
      %6741 = vmatmul.mubr.bf16.gmra.mrb[0].mxu0 %v5391
      %v6742 = vpop.f32.mrb[0].mxu0
      %v6743 = vadd.f32 %v6454, %v6742
      %v6744 = vpop.f32.mrb[0].mxu0
      %v6745 = vpop.f32.mrb[0].mxu0
      %v6746 = vadd.f32 %v6457, %v6745
      %v6747 = vpop.f32.mrb[0].mxu0
      %6748 = vmatprep.mubr.bf16.mxu0 %v5396
      %6749 = vmatmul.mubr.bf16.gmra.mrb[0].mxu0 %v5395
      %v6750 = vpop.f32.mrb[0].mxu0
      %v6751 = vadd.f32 %v6462, %v6750
      %v6752 = vpop.f32.mrb[0].mxu0
      %v6753 = vpop.f32.mrb[0].mxu0
      %v6754 = vadd.f32 %v6465, %v6753
      %v6755 = vpop.f32.mrb[0].mxu0
      %6756 = vmatprep.mubr.bf16.mxu0 %v5400
      %6757 = vmatmul.mubr.bf16.gmra.mrb[0].mxu0 %v5399
      %v6758 = vpop.f32.mrb[0].mxu0
      %v6759 = vadd.f32 %v6470, %v6758
      %v6760 = vpop.f32.mrb[0].mxu0
      %v6761 = vpop.f32.mrb[0].mxu0
      %v6762 = vadd.f32 %v6473, %v6761
      %v6763 = vpop.f32.mrb[0].mxu0
      %6764 = vmatprep.mubr.bf16.mxu0 %v5404
      %6765 = vmatmul.mubr.bf16.gmra.mrb[0].mxu0 %v5403
      %v6766 = vpop.f32.mrb[0].mxu0
      %v6767 = vadd.f32 %v6478, %v6766
      %v6768 = vpop.f32.mrb[0].mxu0
      %v6769 = vpop.f32.mrb[0].mxu0
      %v6770 = vadd.f32 %v6481, %v6769
      %v6771 = vpop.f32.mrb[0].mxu0
      %6772 = vmatprep.mubr.bf16.mxu0 %v5408
      %6773 = vmatmul.mubr.bf16.gmra.mrb[0].mxu0 %v5407
      %v6774 = vpop.f32.mrb[0].mxu0
      %v6775 = vadd.f32 %v6486, %v6774
      %v6776 = vpop.f32.mrb[0].mxu0
      %v6777 = vpop.f32.mrb[0].mxu0
      %v6778 = vadd.f32 %v6489, %v6777
      %v6779 = vpop.f32.mrb[0].mxu0
      %6780 = vmatprep.mubr.bf16.mxu0 %v5412
      %6781 = vmatmul.mubr.bf16.gmra.mrb[0].mxu0 %v5411
      %v6782 = vpop.f32.mrb[0].mxu0
      %v6783 = vadd.f32 %v6494, %v6782
      %v6784 = vpop.f32.mrb[0].mxu0
      %v6785 = vpop.f32.mrb[0].mxu0
      %v6786 = vadd.f32 %v6497, %v6785
      %v6787 = vpop.f32.mrb[0].mxu0
      %6788 = vmatprep.mubr.bf16.mxu0 %v5416
      %6789 = vmatmul.mubr.bf16.gmra.mrb[0].mxu0 %v5415
      %v6790 = vpop.f32.mrb[0].mxu0
      %v6791 = vadd.f32 %v6502, %v6790
      %v6792 = vpop.f32.mrb[0].mxu0
      %v6793 = vpop.f32.mrb[0].mxu0
      %v6794 = vadd.f32 %v6505, %v6793
      %v6795 = vpop.f32.mrb[0].mxu0
      %6796 = vmatprep.mubr.bf16.mxu0 %v5420
      %6797 = vmatmul.mubr.bf16.gmra.mrb[0].mxu0 %v5419
      %v6798 = vpop.f32.mrb[0].mxu0
      %v6799 = vadd.f32 %v6510, %v6798
      %v6800 = vpop.f32.mrb[0].mxu0
      %v6801 = vpop.f32.mrb[0].mxu0
      %v6802 = vadd.f32 %v6513, %v6801
      %v6803 = vpop.f32.mrb[0].mxu0
      %6804 = vmatprep.mubr.bf16.mxu0 %v5424
      %6805 = vmatmul.mubr.bf16.gmra.mrb[0].mxu0 %v5423
      %v6806 = vpop.f32.mrb[0].mxu0
      %v6807 = vadd.f32 %v6518, %v6806
      %v6808 = vpop.f32.mrb[0].mxu0
      %v6809 = vpop.f32.mrb[0].mxu0
      %v6810 = vadd.f32 %v6521, %v6809
      %v6811 = vpop.f32.mrb[0].mxu0
      %6812 = vmatprep.mubr.bf16.mxu0 %v5428
      %6813 = vmatmul.mubr.bf16.gmra.mrb[0].mxu0 %v5427
      %v6814 = vpop.f32.mrb[0].mxu0
      %v6815 = vadd.f32 %v6526, %v6814
      %v6816 = vpop.f32.mrb[0].mxu0
      %v6817 = vpop.f32.mrb[0].mxu0
      %v6818 = vadd.f32 %v6529, %v6817
      %v6819 = vpop.f32.mrb[0].mxu0
      %6820 = vmatprep.mubr.bf16.mxu0 %v5432
      %6821 = vmatmul.mubr.bf16.gmra.mrb[0].mxu0 %v5431
      %v6822 = vpop.f32.mrb[0].mxu0
      %v6823 = vadd.f32 %v6534, %v6822
      %v6824 = vpop.f32.mrb[0].mxu0
      %v6825 = vpop.f32.mrb[0].mxu0
      %v6826 = vadd.f32 %v6537, %v6825
      %v6827 = vpop.f32.mrb[0].mxu0
      %6828 = vmatprep.mubr.bf16.mxu0 %v5436
      %6829 = vmatmul.mubr.bf16.gmra.mrb[0].mxu0 %v5435
      %v6830 = vpop.f32.mrb[0].mxu0
      %v6831 = vadd.f32 %v6542, %v6830
      %v6832 = vpop.f32.mrb[0].mxu0
      %v6833 = vpop.f32.mrb[0].mxu0
      %v6834 = vadd.f32 %v6545, %v6833
      %v6835 = vpop.f32.mrb[0].mxu0
      %6836 = vmatprep.mubr.bf16.mxu0 %v5440
      %6837 = vmatmul.mubr.bf16.gmra.mrb[0].mxu0 %v5439
      %v6838 = vpop.f32.mrb[0].mxu0
      %v6839 = vadd.f32 %v6550, %v6838
      %v6840 = vpop.f32.mrb[0].mxu0
      %v6841 = vpop.f32.mrb[0].mxu0
      %v6842 = vadd.f32 %v6553, %v6841
      %v6843 = vpop.f32.mrb[0].mxu0
      %6844 = vmatprep.mubr.bf16.mxu0 %v5444
      %6845 = vmatmul.mubr.bf16.gmra.mrb[0].mxu0 %v5443
      %v6846 = vpop.f32.mrb[0].mxu0
      %v6847 = vadd.f32 %v6558, %v6846
      %v6848 = vpop.f32.mrb[0].mxu0
      %v6849 = vpop.f32.mrb[0].mxu0
      %v6850 = vadd.f32 %v6561, %v6849
      %v6851 = vpop.f32.mrb[0].mxu0
      %6852 = vmatprep.mubr.bf16.mxu0 %v5448
      %6853 = vmatmul.mubr.bf16.gmra.mrb[0].mxu0 %v5447
      %v6854 = vpop.f32.mrb[0].mxu0
      %v6855 = vadd.f32 %v6566, %v6854
      %v6856 = vpop.f32.mrb[0].mxu0
      %v6857 = vpop.f32.mrb[0].mxu0
      %v6858 = vadd.f32 %v6569, %v6857
      %v6859 = vpop.f32.mrb[0].mxu0
      %6860 = vdwg.mxu0
      %v6861 = vmax.f32 %v5965, 0.0
      %v6862 = vmax.f32 %v5967, 0.0
      %v6863 = vmax.f32 %v6607, 0.0
      %v6864 = vmax.f32 %v5969, 0.0
      %v6865 = vmax.f32 %v5971, 0.0
      %v6866 = vmax.f32 %v6610, 0.0
      %v6867 = vmax.f32 %v5975, 0.0
      %v6868 = vmax.f32 %v5977, 0.0
      %v6869 = vmax.f32 %v6615, 0.0
      %v6870 = vmax.f32 %v5979, 0.0
      %v6871 = vmax.f32 %v5981, 0.0
      %v6872 = vmax.f32 %v6618, 0.0
      %v6873 = vmax.f32 %v5985, 0.0
      %v6874 = vmax.f32 %v5987, 0.0
      %v6875 = vmax.f32 %v6623, 0.0
      %v6876 = vmax.f32 %v5989, 0.0
      %v6877 = vmax.f32 %v5991, 0.0
      %v6878 = vmax.f32 %v6626, 0.0
      %v6879 = vmax.f32 %v5995, 0.0
      %v6880 = vmax.f32 %v5997, 0.0
      %v6881 = vmax.f32 %v6631, 0.0
      %v6882 = vmax.f32 %v5999, 0.0
      %v6883 = vmax.f32 %v6001, 0.0
      %v6884 = vmax.f32 %v6634, 0.0
      %v6885 = vmax.f32 %v6005, 0.0
      %v6886 = vmax.f32 %v6007, 0.0
      %v6887 = vmax.f32 %v6639, 0.0
      %v6888 = vmax.f32 %v6009, 0.0
      %v6889 = vmax.f32 %v6011, 0.0
      %v6890 = vmax.f32 %v6642, 0.0
      %v6891 = vmax.f32 %v6015, 0.0
      %v6892 = vmax.f32 %v6017, 0.0
      %v6893 = vmax.f32 %v6647, 0.0
      %v6894 = vmax.f32 %v6019, 0.0
      %v6895 = vmax.f32 %v6021, 0.0
      %v6896 = vmax.f32 %v6650, 0.0
      %v6897 = vmax.f32 %v6025, 0.0
      %v6898 = vmax.f32 %v6027, 0.0
      %v6899 = vmax.f32 %v6655, 0.0
      %v6900 = vmax.f32 %v6029, 0.0
      %v6901 = vmax.f32 %v6031, 0.0
      %v6902 = vmax.f32 %v6658, 0.0
      %v6903 = vmax.f32 %v6035, 0.0
      %v6904 = vmax.f32 %v6037, 0.0
      %v6905 = vmax.f32 %v6663, 0.0
      %v6906 = vmax.f32 %v6039, 0.0
      %v6907 = vmax.f32 %v6041, 0.0
      %v6908 = vmax.f32 %v6666, 0.0
      %v6909 = vmax.f32 %v6045, 0.0
      %v6910 = vmax.f32 %v6047, 0.0
      %v6911 = vmax.f32 %v6671, 0.0
      %v6912 = vmax.f32 %v6049, 0.0
      %v6913 = vmax.f32 %v6051, 0.0
      %v6914 = vmax.f32 %v6674, 0.0
      %v6915 = vmax.f32 %v6055, 0.0
      %v6916 = vmax.f32 %v6057, 0.0
      %v6917 = vmax.f32 %v6679, 0.0
      %v6918 = vmax.f32 %v6059, 0.0
      %v6919 = vmax.f32 %v6061, 0.0
      %v6920 = vmax.f32 %v6682, 0.0
      %v6921 = vmax.f32 %v6065, 0.0
      %v6922 = vmax.f32 %v6067, 0.0
      %v6923 = vmax.f32 %v6687, 0.0
      %v6924 = vmax.f32 %v6069, 0.0
      %v6925 = vmax.f32 %v6071, 0.0
      %v6926 = vmax.f32 %v6690, 0.0
      %v6927 = vmax.f32 %v6075, 0.0
      %v6928 = vmax.f32 %v6077, 0.0
      %v6929 = vmax.f32 %v6695, 0.0
      %v6930 = vmax.f32 %v6079, 0.0
      %v6931 = vmax.f32 %v6081, 0.0
      %v6932 = vmax.f32 %v6698, 0.0
      %v6933 = vmax.f32 %v6085, 0.0
      %v6934 = vmax.f32 %v6087, 0.0
      %v6935 = vmax.f32 %v6703, 0.0
      %v6936 = vmax.f32 %v6089, 0.0
      %v6937 = vmax.f32 %v6091, 0.0
      %v6938 = vmax.f32 %v6706, 0.0
      %v6939 = vmax.f32 %v6095, 0.0
      %v6940 = vmax.f32 %v6097, 0.0
      %v6941 = vmax.f32 %v6711, 0.0
      %v6942 = vmax.f32 %v6099, 0.0
      %v6943 = vmax.f32 %v6101, 0.0
      %v6944 = vmax.f32 %v6714, 0.0
      %v6945 = vmax.f32 %v6105, 0.0
      %v6946 = vmax.f32 %v6107, 0.0
      %v6947 = vmax.f32 %v6719, 0.0
      %v6948 = vmax.f32 %v6109, 0.0
      %v6949 = vmax.f32 %v6111, 0.0
      %v6950 = vmax.f32 %v6722, 0.0
      %v6951 = vmax.f32 %v6115, 0.0
      %v6952 = vmax.f32 %v6117, 0.0
      %v6953 = vmax.f32 %v6727, 0.0
      %v6954 = vmax.f32 %v6119, 0.0
      %v6955 = vmax.f32 %v6121, 0.0
      %v6956 = vmax.f32 %v6730, 0.0
      %v6957 = vmax.f32 %v6125, 0.0
      %v6958 = vmax.f32 %v6127, 0.0
      %v6959 = vmax.f32 %v6735, 0.0
      %v6960 = vmax.f32 %v6129, 0.0
      %v6961 = vmax.f32 %v6131, 0.0
      %v6962 = vmax.f32 %v6738, 0.0
      %v6963 = vmax.f32 %v6135, 0.0
      %v6964 = vmax.f32 %v6137, 0.0
      %v6965 = vmax.f32 %v6743, 0.0
      %v6966 = vmax.f32 %v6139, 0.0
      %v6967 = vmax.f32 %v6141, 0.0
      %v6968 = vmax.f32 %v6746, 0.0
      %v6969 = vmax.f32 %v6145, 0.0
      %v6970 = vmax.f32 %v6147, 0.0
      %v6971 = vmax.f32 %v6751, 0.0
      %v6972 = vmax.f32 %v6149, 0.0
      %v6973 = vmax.f32 %v6151, 0.0
      %v6974 = vmax.f32 %v6754, 0.0
      %v6975 = vmax.f32 %v6155, 0.0
      %v6976 = vmax.f32 %v6157, 0.0
      %v6977 = vmax.f32 %v6759, 0.0
      %v6978 = vmax.f32 %v6159, 0.0
      %v6979 = vmax.f32 %v6161, 0.0
      %v6980 = vmax.f32 %v6762, 0.0
      %v6981 = vmax.f32 %v6165, 0.0
      %v6982 = vmax.f32 %v6167, 0.0
      %v6983 = vmax.f32 %v6767, 0.0
      %v6984 = vmax.f32 %v6169, 0.0
      %v6985 = vmax.f32 %v6171, 0.0
      %v6986 = vmax.f32 %v6770, 0.0
      %v6987 = vmax.f32 %v6175, 0.0
      %v6988 = vmax.f32 %v6177, 0.0
      %v6989 = vmax.f32 %v6775, 0.0
      %v6990 = vmax.f32 %v6179, 0.0
      %v6991 = vmax.f32 %v6181, 0.0
      %v6992 = vmax.f32 %v6778, 0.0
      %v6993 = vmax.f32 %v6185, 0.0
      %v6994 = vmax.f32 %v6187, 0.0
      %v6995 = vmax.f32 %v6783, 0.0
      %v6996 = vmax.f32 %v6189, 0.0
      %v6997 = vmax.f32 %v6191, 0.0
      %v6998 = vmax.f32 %v6786, 0.0
      %v6999 = vmax.f32 %v6195, 0.0
      %v7000 = vmax.f32 %v6197, 0.0
      %v7001 = vmax.f32 %v6791, 0.0
      %v7002 = vmax.f32 %v6199, 0.0
      %v7003 = vmax.f32 %v6201, 0.0
      %v7004 = vmax.f32 %v6794, 0.0
      %v7005 = vmax.f32 %v6205, 0.0
      %v7006 = vmax.f32 %v6207, 0.0
      %v7007 = vmax.f32 %v6799, 0.0
      %v7008 = vmax.f32 %v6209, 0.0
      %v7009 = vmax.f32 %v6211, 0.0
      %v7010 = vmax.f32 %v6802, 0.0
      %v7011 = vmax.f32 %v6215, 0.0
      %v7012 = vmax.f32 %v6217, 0.0
      %v7013 = vmax.f32 %v6807, 0.0
      %v7014 = vmax.f32 %v6219, 0.0
      %v7015 = vmax.f32 %v6221, 0.0
      %v7016 = vmax.f32 %v6810, 0.0
      %v7017 = vmax.f32 %v6225, 0.0
      %v7018 = vmax.f32 %v6227, 0.0
      %v7019 = vmax.f32 %v6815, 0.0
      %v7020 = vmax.f32 %v6229, 0.0
      %v7021 = vmax.f32 %v6231, 0.0
      %v7022 = vmax.f32 %v6818, 0.0
      %v7023 = vmax.f32 %v6235, 0.0
      %v7024 = vmax.f32 %v6237, 0.0
      %v7025 = vmax.f32 %v6823, 0.0
      %v7026 = vmax.f32 %v6239, 0.0
      %v7027 = vmax.f32 %v6241, 0.0
      %v7028 = vmax.f32 %v6826, 0.0
      %v7029 = vmax.f32 %v6245, 0.0
      %v7030 = vmax.f32 %v6247, 0.0
      %v7031 = vmax.f32 %v6831, 0.0
      %v7032 = vmax.f32 %v6249, 0.0
      %v7033 = vmax.f32 %v6251, 0.0
      %v7034 = vmax.f32 %v6834, 0.0
      %v7035 = vmax.f32 %v6255, 0.0
      %v7036 = vmax.f32 %v6257, 0.0
      %v7037 = vmax.f32 %v6839, 0.0
      %v7038 = vmax.f32 %v6259, 0.0
      %v7039 = vmax.f32 %v6261, 0.0
      %v7040 = vmax.f32 %v6842, 0.0
      %v7041 = vmax.f32 %v6265, 0.0
      %v7042 = vmax.f32 %v6267, 0.0
      %v7043 = vmax.f32 %v6847, 0.0
      %v7044 = vmax.f32 %v6269, 0.0
      %v7045 = vmax.f32 %v6271, 0.0
      %v7046 = vmax.f32 %v6850, 0.0
      %v7047 = vmax.f32 %v6275, 0.0
      %v7048 = vmax.f32 %v6277, 0.0
      %v7049 = vmax.f32 %v6855, 0.0
      %v7050 = vmax.f32 %v6279, 0.0
      %v7051 = vmax.f32 %v6281, 0.0
      %v7052 = vmax.f32 %v6858, 0.0
      %v7053 = vpack.c.bf16 %v6864, %v6861
      %v7054 = vpack.c.bf16 %v6865, %v6862
      %v7055 = vpack.c.bf16 %v6866, %v6863
      %v7056 = vpack.c.bf16 %v6870, %v6867
      %v7057 = vpack.c.bf16 %v6871, %v6868
      %v7058 = vpack.c.bf16 %v6872, %v6869
      %v7059 = vpack.c.bf16 %v6876, %v6873
      %v7060 = vpack.c.bf16 %v6877, %v6874
      %v7061 = vpack.c.bf16 %v6878, %v6875
      %v7062 = vpack.c.bf16 %v6882, %v6879
      %v7063 = vpack.c.bf16 %v6883, %v6880
      %v7064 = vpack.c.bf16 %v6884, %v6881
      %v7065 = vpack.c.bf16 %v6888, %v6885
      %v7066 = vpack.c.bf16 %v6889, %v6886
      %v7067 = vpack.c.bf16 %v6890, %v6887
      %v7068 = vpack.c.bf16 %v6894, %v6891
      %v7069 = vpack.c.bf16 %v6895, %v6892
      %v7070 = vpack.c.bf16 %v6896, %v6893
      %v7071 = vpack.c.bf16 %v6900, %v6897
      %v7072 = vpack.c.bf16 %v6901, %v6898
      %v7073 = vpack.c.bf16 %v6902, %v6899
      %v7074 = vpack.c.bf16 %v6906, %v6903
      %v7075 = vpack.c.bf16 %v6907, %v6904
      %v7076 = vpack.c.bf16 %v6908, %v6905
      %v7077 = vpack.c.bf16 %v6912, %v6909
      %v7078 = vpack.c.bf16 %v6913, %v6910
      %v7079 = vpack.c.bf16 %v6914, %v6911
      %v7080 = vpack.c.bf16 %v6918, %v6915
      %v7081 = vpack.c.bf16 %v6919, %v6916
      %v7082 = vpack.c.bf16 %v6920, %v6917
      %v7083 = vpack.c.bf16 %v6924, %v6921
      %v7084 = vpack.c.bf16 %v6925, %v6922
      %v7085 = vpack.c.bf16 %v6926, %v6923
      %v7086 = vpack.c.bf16 %v6930, %v6927
      %v7087 = vpack.c.bf16 %v6931, %v6928
      %v7088 = vpack.c.bf16 %v6932, %v6929
      %v7089 = vpack.c.bf16 %v6936, %v6933
      %v7090 = vpack.c.bf16 %v6937, %v6934
      %v7091 = vpack.c.bf16 %v6938, %v6935
      %v7092 = vpack.c.bf16 %v6942, %v6939
      %v7093 = vpack.c.bf16 %v6943, %v6940
      %v7094 = vpack.c.bf16 %v6944, %v6941
      %v7095 = vpack.c.bf16 %v6948, %v6945
      %v7096 = vpack.c.bf16 %v6949, %v6946
      %v7097 = vpack.c.bf16 %v6950, %v6947
      %v7098 = vpack.c.bf16 %v6954, %v6951
      %v7099 = vpack.c.bf16 %v6955, %v6952
      %v7100 = vpack.c.bf16 %v6956, %v6953
      %v7101 = vpack.c.bf16 %v6960, %v6957
      %v7102 = vpack.c.bf16 %v6961, %v6958
      %v7103 = vpack.c.bf16 %v6962, %v6959
      %v7104 = vpack.c.bf16 %v6966, %v6963
      %v7105 = vpack.c.bf16 %v6967, %v6964
      %v7106 = vpack.c.bf16 %v6968, %v6965
      %v7107 = vpack.c.bf16 %v6972, %v6969
      %v7108 = vpack.c.bf16 %v6973, %v6970
      %v7109 = vpack.c.bf16 %v6974, %v6971
      %v7110 = vpack.c.bf16 %v6978, %v6975
      %v7111 = vpack.c.bf16 %v6979, %v6976
      %v7112 = vpack.c.bf16 %v6980, %v6977
      %v7113 = vpack.c.bf16 %v6984, %v6981
      %v7114 = vpack.c.bf16 %v6985, %v6982
      %v7115 = vpack.c.bf16 %v6986, %v6983
      %v7116 = vpack.c.bf16 %v6990, %v6987
      %v7117 = vpack.c.bf16 %v6991, %v6988
      %v7118 = vpack.c.bf16 %v6992, %v6989
      %v7119 = vpack.c.bf16 %v6996, %v6993
      %v7120 = vpack.c.bf16 %v6997, %v6994
      %v7121 = vpack.c.bf16 %v6998, %v6995
      %v7122 = vpack.c.bf16 %v7002, %v6999
      %v7123 = vpack.c.bf16 %v7003, %v7000
      %v7124 = vpack.c.bf16 %v7004, %v7001
      %v7125 = vpack.c.bf16 %v7008, %v7005
      %v7126 = vpack.c.bf16 %v7009, %v7006
      %v7127 = vpack.c.bf16 %v7010, %v7007
      %v7128 = vpack.c.bf16 %v7014, %v7011
      %v7129 = vpack.c.bf16 %v7015, %v7012
      %v7130 = vpack.c.bf16 %v7016, %v7013
      %v7131 = vpack.c.bf16 %v7020, %v7017
      %v7132 = vpack.c.bf16 %v7021, %v7018
      %v7133 = vpack.c.bf16 %v7022, %v7019
      %v7134 = vpack.c.bf16 %v7026, %v7023
      %v7135 = vpack.c.bf16 %v7027, %v7024
      %v7136 = vpack.c.bf16 %v7028, %v7025
      %v7137 = vpack.c.bf16 %v7032, %v7029
      %v7138 = vpack.c.bf16 %v7033, %v7030
      %v7139 = vpack.c.bf16 %v7034, %v7031
      %v7140 = vpack.c.bf16 %v7038, %v7035
      %v7141 = vpack.c.bf16 %v7039, %v7036
      %v7142 = vpack.c.bf16 %v7040, %v7037
      %v7143 = vpack.c.bf16 %v7044, %v7041
      %v7144 = vpack.c.bf16 %v7045, %v7042
      %v7145 = vpack.c.bf16 %v7046, %v7043
      %v7146 = vpack.c.bf16 %v7050, %v7047
      %v7147 = vpack.c.bf16 %v7051, %v7048
      %v7148 = vpack.c.bf16 %v7052, %v7049
      %v7149 = vld [vmem:[%s5] sm:$0xff]
      %v7150 = vld [vmem:[%s6] sm:$0x7]
      %7152 = vset.pattern.permute.xlu0 0
      %7153 = vperm.xlu0 %7152, %v7150
      %v7154 = vpop.permute.xlu0 %7153
      %v7157 = vcombine.high %v7149, %v7149
      %v7159 = vunpack.c.l.s4 1983009808
      %v7160 = vunpack.c.0.s8 %v7159
      %v7161 = vlaneseq
      %v7162 = vshrl.u32 %v7161, 7
      %v7163 = vsub.s32 %v7160, %v7162
      %v7164 = vrot.slane %v7149, %v7163
      %v7166 = vunpack.c.l.s4 1983009808
      %v7167 = vunpack.c.0.s8 %v7166
      %v7168 = vlaneseq
      %v7169 = vshrl.u32 %v7168, 7
      %v7170 = vsub.s32 %v7167, %v7169
      %v7171 = vrot.slane %v7157, %v7170
      %v7172 = vcombine.high %v7164, %v7164
      %v7173 = vcombine.high %v7171, %v7171
      %7178 = vmatprep.subr.bf16.mxu0 %v7054
      %7179 = vmatpush1.bf16.msra.mxu0 %v7053
      %7180 = vmatprep.subr.bf16.mxu0 %v7057
      %7181 = vmatpush1.bf16.msra.mxu0 %v7056
      %7182 = vmatprep.subr.bf16.mxu0 %v7060
      %7183 = vmatpush1.bf16.msra.mxu0 %v7059
      %7184 = vmatprep.subr.bf16.mxu0 %v7063
      %7185 = vmatpush1.bf16.msra.mxu0 %v7062
      %7186 = vmatprep.subr.bf16.mxu0 %v7066
      %7187 = vmatpush1.bf16.msra.mxu0 %v7065
      %7188 = vmatprep.subr.bf16.mxu0 %v7069
      %7189 = vmatpush1.bf16.msra.mxu0 %v7068
      %7190 = vmatprep.subr.bf16.mxu0 %v7072
      %7191 = vmatpush1.bf16.msra.mxu0 %v7071
      %7192 = vmatprep.subr.bf16.mxu0 %v7075
      %7193 = vmatpush1.bf16.msra.mxu0 %v7074
      %7194 = vmatprep.subr.bf16.mxu0 %v7078
      %7195 = vmatpush1.bf16.msra.mxu0 %v7077
      %7196 = vmatprep.subr.bf16.mxu0 %v7081
      %7197 = vmatpush1.bf16.msra.mxu0 %v7080
      %7198 = vmatprep.subr.bf16.mxu0 %v7084
      %7199 = vmatpush1.bf16.msra.mxu0 %v7083
      %7200 = vmatprep.subr.bf16.mxu0 %v7087
      %7201 = vmatpush1.bf16.msra.mxu0 %v7086
      %7202 = vmatprep.subr.bf16.mxu0 %v7090
      %7203 = vmatpush1.bf16.msra.mxu0 %v7089
      %7204 = vmatprep.subr.bf16.mxu0 %v7093
      %7205 = vmatpush1.bf16.msra.mxu0 %v7092
      %7206 = vmatprep.subr.bf16.mxu0 %v7096
      %7207 = vmatpush1.bf16.msra.mxu0 %v7095
      %7208 = vmatprep.subr.bf16.mxu0 %v7099
      %7209 = vmatpush1.bf16.msra.mxu0 %v7098
      %7210 = vmatprep.mubr.bf16.mxu0 %v7172
      %7211 = vmatmul.mubr.bf16.gmra.mrb[0].mxu0 %v7164
      %v7212 = vpop.f32.mrb[0].mxu0
      %v7213 = vadd.f32 %v7154, %v7212
      %v7214 = vpop.f32.mrb[0].mxu0
      %v7215 = vadd.f32 %v7154, %v7214
      %v7216 = vpop.f32.mrb[0].mxu0
      %v7217 = vpop.f32.mrb[0].mxu0
      %7218 = vdwg.mxu0
      %7219 = vmatprep.subr.bf16.mxu0 %v7102
      %7220 = vmatpush1.bf16.msra.mxu0 %v7101
      %7221 = vmatprep.subr.bf16.mxu0 %v7105
      %7222 = vmatpush1.bf16.msra.mxu0 %v7104
      %7223 = vmatprep.subr.bf16.mxu0 %v7108
      %7224 = vmatpush1.bf16.msra.mxu0 %v7107
      %7225 = vmatprep.subr.bf16.mxu0 %v7111
      %7226 = vmatpush1.bf16.msra.mxu0 %v7110
      %7227 = vmatprep.subr.bf16.mxu0 %v7114
      %7228 = vmatpush1.bf16.msra.mxu0 %v7113
      %7229 = vmatprep.subr.bf16.mxu0 %v7117
      %7230 = vmatpush1.bf16.msra.mxu0 %v7116
      %7231 = vmatprep.subr.bf16.mxu0 %v7120
      %7232 = vmatpush1.bf16.msra.mxu0 %v7119
      %7233 = vmatprep.subr.bf16.mxu0 %v7123
      %7234 = vmatpush1.bf16.msra.mxu0 %v7122
      %7235 = vmatprep.subr.bf16.mxu0 %v7126
      %7236 = vmatpush1.bf16.msra.mxu0 %v7125
      %7237 = vmatprep.subr.bf16.mxu0 %v7129
      %7238 = vmatpush1.bf16.msra.mxu0 %v7128
      %7239 = vmatprep.subr.bf16.mxu0 %v7132
      %7240 = vmatpush1.bf16.msra.mxu0 %v7131
      %7241 = vmatprep.subr.bf16.mxu0 %v7135
      %7242 = vmatpush1.bf16.msra.mxu0 %v7134
      %7243 = vmatprep.subr.bf16.mxu0 %v7138
      %7244 = vmatpush1.bf16.msra.mxu0 %v7137
      %7245 = vmatprep.subr.bf16.mxu0 %v7141
      %7246 = vmatpush1.bf16.msra.mxu0 %v7140
      %7247 = vmatprep.subr.bf16.mxu0 %v7144
      %7248 = vmatpush1.bf16.msra.mxu0 %v7143
      %7249 = vmatprep.subr.bf16.mxu0 %v7147
      %7250 = vmatpush1.bf16.msra.mxu0 %v7146
      %7251 = vmatprep.mubr.bf16.mxu0 %v7173
      %7252 = vmatmul.mubr.bf16.gmra.mrb[0].mxu0 %v7171
      %v7253 = vpop.f32.mrb[0].mxu0
      %v7254 = vadd.f32 %v7213, %v7253
      %v7255 = vpop.f32.mrb[0].mxu0
      %v7256 = vadd.f32 %v7215, %v7255
      %v7257 = vpop.f32.mrb[0].mxu0
      %v7258 = vpop.f32.mrb[0].mxu0
      %7259 = vdwg.mxu0
      %7260 = vmatprep.subr.bf16.mxu0 0
      %7261 = vmatpush1.bf16.msra.mxu0 %v7055
      %7262 = vmatprep.subr.bf16.mxu0 0
      %7263 = vmatpush1.bf16.msra.mxu0 %v7058
      %7264 = vmatprep.subr.bf16.mxu0 0
      %7265 = vmatpush1.bf16.msra.mxu0 %v7061
      %7266 = vmatprep.subr.bf16.mxu0 0
      %7267 = vmatpush1.bf16.msra.mxu0 %v7064
      %7268 = vmatprep.subr.bf16.mxu0 0
      %7269 = vmatpush1.bf16.msra.mxu0 %v7067
      %7270 = vmatprep.subr.bf16.mxu0 0
      %7271 = vmatpush1.bf16.msra.mxu0 %v7070
      %7272 = vmatprep.subr.bf16.mxu0 0
      %7273 = vmatpush1.bf16.msra.mxu0 %v7073
      %7274 = vmatprep.subr.bf16.mxu0 0
      %7275 = vmatpush1.bf16.msra.mxu0 %v7076
      %7276 = vmatprep.subr.bf16.mxu0 0
      %7277 = vmatpush1.bf16.msra.mxu0 %v7079
      %7278 = vmatprep.subr.bf16.mxu0 0
      %7279 = vmatpush1.bf16.msra.mxu0 %v7082
      %7280 = vmatprep.subr.bf16.mxu0 0
      %7281 = vmatpush1.bf16.msra.mxu0 %v7085
      %7282 = vmatprep.subr.bf16.mxu0 0
      %7283 = vmatpush1.bf16.msra.mxu0 %v7088
      %7284 = vmatprep.subr.bf16.mxu0 0
      %7285 = vmatpush1.bf16.msra.mxu0 %v7091
      %7286 = vmatprep.subr.bf16.mxu0 0
      %7287 = vmatpush1.bf16.msra.mxu0 %v7094
      %7288 = vmatprep.subr.bf16.mxu0 0
      %7289 = vmatpush1.bf16.msra.mxu0 %v7097
      %7290 = vmatprep.subr.bf16.mxu0 0
      %7291 = vmatpush1.bf16.msra.mxu0 %v7100
      %7292 = vmatprep.mubr.bf16.mxu0 %v7172
      %7293 = vmatmul.mubr.bf16.gmra.mrb[0].mxu0 %v7164
      %v7294 = vpop.f32.mrb[0].mxu0
      %v7295 = vadd.f32 %v7154, %v7294
      %v7296 = vpop.f32.mrb[0].mxu0
      %v7297 = vpop.f32.mrb[0].mxu0
      %v7298 = vpop.f32.mrb[0].mxu0
      %7299 = vdwg.mxu0
      %7300 = vmatprep.subr.bf16.mxu0 0
      %7301 = vmatpush1.bf16.msra.mxu0 %v7103
      %7302 = vmatprep.subr.bf16.mxu0 0
      %7303 = vmatpush1.bf16.msra.mxu0 %v7106
      %7304 = vmatprep.subr.bf16.mxu0 0
      %7305 = vmatpush1.bf16.msra.mxu0 %v7109
      %7306 = vmatprep.subr.bf16.mxu0 0
      %7307 = vmatpush1.bf16.msra.mxu0 %v7112
      %7308 = vmatprep.subr.bf16.mxu0 0
      %7309 = vmatpush1.bf16.msra.mxu0 %v7115
      %7310 = vmatprep.subr.bf16.mxu0 0
      %7311 = vmatpush1.bf16.msra.mxu0 %v7118
      %7312 = vmatprep.subr.bf16.mxu0 0
      %7313 = vmatpush1.bf16.msra.mxu0 %v7121
      %7314 = vmatprep.subr.bf16.mxu0 0
      %7315 = vmatpush1.bf16.msra.mxu0 %v7124
      %7316 = vmatprep.subr.bf16.mxu0 0
      %7317 = vmatpush1.bf16.msra.mxu0 %v7127
      %7318 = vmatprep.subr.bf16.mxu0 0
      %7319 = vmatpush1.bf16.msra.mxu0 %v7130
      %7320 = vmatprep.subr.bf16.mxu0 0
      %7321 = vmatpush1.bf16.msra.mxu0 %v7133
      %7322 = vmatprep.subr.bf16.mxu0 0
      %7323 = vmatpush1.bf16.msra.mxu0 %v7136
      %7324 = vmatprep.subr.bf16.mxu0 0
      %7325 = vmatpush1.bf16.msra.mxu0 %v7139
      %7326 = vmatprep.subr.bf16.mxu0 0
      %7327 = vmatpush1.bf16.msra.mxu0 %v7142
      %7328 = vmatprep.subr.bf16.mxu0 0
      %7329 = vmatpush1.bf16.msra.mxu0 %v7145
      %7330 = vmatprep.subr.bf16.mxu0 0
      %7331 = vmatpush1.bf16.msra.mxu0 %v7148
      %7332 = vmatprep.mubr.bf16.mxu0 %v7173
      %7333 = vmatmul.mubr.bf16.gmra.mrb[0].mxu0 %v7171
      %v7334 = vpop.f32.mrb[0].mxu0
      %v7335 = vadd.f32 %v7295, %v7334
      %v7336 = vpop.f32.mrb[0].mxu0
      %v7337 = vpop.f32.mrb[0].mxu0
      %v7338 = vpop.f32.mrb[0].mxu0
      %7339 = vdwg.mxu0
      %v7342 = vcombine.low %v7254, %v7256
      %7344 = vst [vmem:[%s316] sm:$0x77] %v7342
      %7345 = vst [vmem:[%s316 + $0x8] sm:$0x7] %v7335
      %s7346 = smul.u32 3, %s23
      %p7347 = scmp.lt.s32.totalorder %s22, 1
      %s7348 = scalar_select %p7347, %s22, 1
      %p7349 = scmp.lt.s32.totalorder %s7346, 2
      %s7350 = scalar_select %p7349, %s7346, 2
      %s7351 = smul.addr %s7348, 3
      %s7352 = sadd.s32 %s7350, %s7351
      %s7353 = smul.addr %s7352, 4
      %s7354 = scalar_lea.vmem %s7, %s7353
      // Predicated region
      $region49: #{folding_net_dec_fold2.1} parent=47 // pred_check
        %p7355 = pneg %p204
      $region50: #{folding_net_dec_fold2.1} parent=47 // pred_check_branch
        %7357 = sbr.rel (%p7355) target = $region52
      $region51: #{folding_net_dec_fold2.1} parent=47 // pred_region
        %s7358 = smul.u32 3, %s23
      $region52: #{folding_net_dec_fold2.1} parent=47 // pred_fallthru
        _
    $region48: #{folding_net_dec_fold2.1} parent=5 // pred_fallthru
      _
    %p7359 = scmp.le.s32.totalorder 2, %s13
    // Predicated region
    $region53: #{folding_net_dec_fold2.1} parent=5 // pred_check
      %p7360 = pneg %p7359
    $region54: #{folding_net_dec_fold2.1} parent=5 // pred_check_branch
      %7362 = sbr.rel (%p7360) target = $region56
    $region55: #{folding_net_dec_fold2.1} parent=5 // pred_region
      %s7363 = ssub.s32 %s13, 2
      // Predicated region
      $region57: #{folding_net_dec_fold2.1} parent=55 // pred_check
        %p7364 = pneg %p210
      $region58: #{folding_net_dec_fold2.1} parent=55 // pred_check_branch
        %7366 = sbr.rel (%p7364) target = $region60
      $region59: #{folding_net_dec_fold2.1} parent=55 // pred_region
        %s7367 = smul.u32 3, %s25
        %p7368 = scmp.lt.s32.totalorder %s24, 1
        %s7369 = scalar_select %p7368, %s24, 1
        %p7370 = scmp.lt.s32.totalorder %s7367, 2
        %s7371 = scalar_select %p7370, %s7367, 2
        %s7372 = smul.addr %s7369, 3
        %s7373 = sadd.s32 %s7371, %s7372
        %s7374 = smul.addr %s7373, 4
        %s7375 = scalar_lea.vmem %s7, %s7374
      $region60: #{folding_net_dec_fold2.1} parent=55 // pred_fallthru
        _
    $region56: #{folding_net_dec_fold2.1} parent=5 // pred_fallthru
      _
  $region6: #{folding_net_dec_fold2.1} parent=0 // loop_footer
    %s17 = sadd.s32 1, %s13
  $region7: #{folding_net_dec_fold2.1} parent=0 // loop_footer_branch
    %12 = sbr.rel target = $region3
  $region8: #{folding_net_dec_fold2.1} parent=0 // loop_exit
    _

</llo_original>
